<compile_context>
chip_gen: v5e
topology: v5e:2x2
jax: 0.10.0
libtpu: 0.0.40
codegen_flags: <defaults>
</compile_context>

<pallas_src>
import jax
import jax.numpy as jnp
from jax import lax
from jax.experimental import pallas as pl
from jax.experimental.pallas import tpu as pltpu

L_IN = 500                    # input length implied by fc1 = Linear(59*128, 128)
K = 5                         # conv kernel size
L1, L2, L3 = 496, 244, 118    # valid-conv output lengths
P1, P2, P3 = 248, 122, 59     # pooled lengths


# ---------------------------------------------------------------- kernel utils

def _conv_slab(load_fn, w_ref, b_ref, lout):
    """Valid 1-D conv as K accumulated MXU matmuls.

    load_fn(k, lout) -> (lout, Cin) input window starting at row k (ref slice).
    w_ref[k] is the (Cin, Cout) slab for tap k; b_ref is (1, Cout).
    Returns (lout, Cout) in f32.
    """
    acc = jnp.dot(load_fn(0, lout), w_ref[0], preferred_element_type=jnp.float32)
    for k in range(1, K):
        acc = acc + jnp.dot(load_fn(k, lout), w_ref[k],
                            preferred_element_type=jnp.float32)
    return acc + b_ref[...]


def _pool2_relu(c_ref, pair_ref, lc):
    """MaxPool1d(2) + ReLU with zero MXU cost.

    Pairwise max of adjacent rows -> pair_ref; a base-0, stride-2 sublane read
    then picks every second row.  Exact (no arithmetic beyond max).
    """
    half = lc // 2
    pair_ref[...] = jnp.maximum(c_ref[pl.ds(0, lc - 1), :],
                                c_ref[pl.ds(1, lc - 1), :])
    return jnp.maximum(pair_ref[pl.ds(0, half, stride=2), :], 0.0)


def _const_spec(shape):
    zeros = (0,) * len(shape)
    return pl.BlockSpec(shape, lambda i, _z=zeros: _z)


def _pick_batch_tile(batch):
    """2 balanced grid steps when possible (v7x megacore); else largest tile <= 8."""
    if batch % 2 == 0 and batch // 2 <= 8:
        return batch // 2
    best = 1
    for t in range(2, min(batch, 8) + 1):
        if batch % t == 0:
            best = t
    return best


def _pick_head_tile(batch):
    """min(B, 128), shrunk to a divisor of B for larger batches."""
    if batch <= 128:
        return batch
    for t in range(128, 0, -1):
        if batch % t == 0:
            return t
    return batch


# ------------------------------------------------------------------ kernels

def _make_feature_kernel(bt):
    """conv1 -> pool/relu -> conv2 -> pool/relu -> conv3 -> pool/relu per sample."""

    def kernel(x_ref, w1_ref, b1_ref, w2_ref, b2_ref, w3_ref, b3_ref, out_ref,
               c1_ref, m1_ref, p1_ref, c2_ref, m2_ref, p2_ref, c3_ref, m3_ref):
        # TODO(synk): batch the bt samples' rows into one matmul per layer.
        for i in range(bt):
            c1_ref[...] = _conv_slab(
                lambda k, lo, i=i: x_ref[i, pl.ds(k, lo), :], w1_ref, b1_ref, L1)
            p1_ref[...] = _pool2_relu(c1_ref, m1_ref, L1)            # (248, 32)
            c2_ref[...] = _conv_slab(
                lambda k, lo: p1_ref[pl.ds(k, lo), :], w2_ref, b2_ref, L2)
            p2_ref[...] = _pool2_relu(c2_ref, m2_ref, L2)            # (122, 64)
            c3_ref[...] = _conv_slab(
                lambda k, lo: p2_ref[pl.ds(k, lo), :], w3_ref, b3_ref, L3)
            out_ref[i] = _pool2_relu(c3_ref, m3_ref, L3)             # (59, 128)

    return kernel


def _head_kernel(f_ref, w1_ref, b1_ref, w2_ref, b2_ref, w3_ref, b3_ref, out_ref):
    """fc1 -> relu -> fc2 -> fc3 -> L2 normalize (dim=1)."""
    h = jnp.dot(f_ref[...], w1_ref[...],
                preferred_element_type=jnp.float32) + b1_ref[...]
    h = jnp.maximum(h, 0.0)                                          # (Bh, 128)
    h = jnp.dot(h, w2_ref[...], preferred_element_type=jnp.float32) + b2_ref[...]
    h = jnp.dot(h, w3_ref[...], preferred_element_type=jnp.float32) + b3_ref[...]
    # torch.nn.functional.normalize: x / max(||x||_2, 1e-12)
    nrm2 = jnp.sum(h * h, axis=1, keepdims=True)
    out_ref[...] = h * lax.rsqrt(jnp.maximum(nrm2, 1e-24))


# ------------------------------------------------------------------ wrapper

def pixelnet_forward(x, params):
    (w1, b1, w2, b2, w3, b3, fw1, fb1, fw2, fb2, fw3, fb3) = params
    B, cin, L = x.shape
    assert L == L_IN, "fc1 = Linear(59*128, 128) implies input length 500"

    # Length-major activations (B, L, Cin); conv weight slabs (K, Cin, Cout).
    xt = jnp.transpose(x, (0, 2, 1))
    w1s = jnp.transpose(w1, (2, 1, 0))        # (5, cin, 32)
    w2s = jnp.transpose(w2, (2, 1, 0))        # (5, 32, 64)
    w3s = jnp.transpose(w3, (2, 1, 0))        # (5, 64, 128)
    b1r = b1.reshape(1, -1)
    b2r = b2.reshape(1, -1)
    b3r = b3.reshape(1, -1)

    bt = _pick_batch_tile(B)
    grid_b = B // bt

    feats = pl.pallas_call(
        _make_feature_kernel(bt),
        out_shape=jax.ShapeDtypeStruct((B, P3, 128), jnp.float32),
        grid_spec=pltpu.PrefetchScalarGridSpec(
            num_scalar_prefetch=0,
            grid=(grid_b,),
            in_specs=[
                pl.BlockSpec((bt, L_IN, cin), lambda b: (b, 0, 0)),
                _const_spec(w1s.shape), _const_spec(b1r.shape),
                _const_spec(w2s.shape), _const_spec(b2r.shape),
                _const_spec(w3s.shape), _const_spec(b3r.shape),
            ],
            out_specs=pl.BlockSpec((bt, P3, 128), lambda b: (b, 0, 0)),
            scratch_shapes=[
                pltpu.VMEM((L1, 32), jnp.float32),       # conv1 out
                pltpu.VMEM((L1 - 1, 32), jnp.float32),   # pairwise max 1
                pltpu.VMEM((P1, 32), jnp.float32),       # pooled 1
                pltpu.VMEM((L2, 64), jnp.float32),       # conv2 out
                pltpu.VMEM((L2 - 1, 64), jnp.float32),   # pairwise max 2
                pltpu.VMEM((P2, 64), jnp.float32),       # pooled 2
                pltpu.VMEM((L3, 128), jnp.float32),      # conv3 out
                pltpu.VMEM((L3 - 1, 128), jnp.float32),  # pairwise max 3
            ]),
        compiler_params=pltpu.CompilerParams(
            dimension_semantics=("parallel",)),
    )(xt, w1s, b1r, w2s, b2r, w3s, b3r)

    # Glue: flatten (B, 59, 128) -> (B, 7552), flat index = l*128 + c.
    flat = feats.reshape(B, P3 * 128)

    # Permute fc1 columns from torch's (c*59 + l) order to our (l*128 + c) order.
    fw1_perm = fw1.reshape(fw1.shape[0], 128, P3).transpose(0, 2, 1)
    fw1t = fw1_perm.reshape(fw1.shape[0], P3 * 128).T     # (7552, 128)
    fw2t = fw2.T                                          # (128, 32)
    fw3t = fw3.T                                          # (32, n_outputs)
    fb1r = fb1.reshape(1, -1)
    fb2r = fb2.reshape(1, -1)
    fb3r = fb3.reshape(1, -1)
    n_out = fw3.shape[0]

    bh = _pick_head_tile(B)
    grid_h = B // bh

    out = pl.pallas_call(
        _head_kernel,
        out_shape=jax.ShapeDtypeStruct((B, n_out), jnp.float32),
        grid_spec=pltpu.PrefetchScalarGridSpec(
            num_scalar_prefetch=0,
            grid=(grid_h,),
            in_specs=[
                pl.BlockSpec((bh, P3 * 128), lambda i: (i, 0)),
                _const_spec(fw1t.shape), _const_spec(fb1r.shape),
                _const_spec(fw2t.shape), _const_spec(fb2r.shape),
                _const_spec(fw3t.shape), _const_spec(fb3r.shape),
            ],
            out_specs=pl.BlockSpec((bh, n_out), lambda i: (i, 0)),
        ),
        compiler_params=pltpu.CompilerParams(
            dimension_semantics=("parallel",),
            vmem_limit_bytes=32 * 1024 * 1024),
    )(flat, fw1t, fb1r, fw2t, fb2r, fw3t, fb3r)
    return out


# -------------------------------------------------------- reference & params

def reference_forward(x, params):
    """Pure-JAX reference mirroring the PyTorch forward (for validation)."""
    (w1, b1, w2, b2, w3, b3, fw1, fb1, fw2, fb2, fw3, fb3) = params

    def conv(h, w, b):
        y = lax.conv_general_dilated(
            h, w, window_strides=(1,), padding="VALID",
            dimension_numbers=("NCH", "OIH", "NCH"))
        return y + b[None, :, None]

    def pool(h):
        bsz, c, l = h.shape
        return jnp.max(h[:, :, : (l // 2) * 2].reshape(bsz, c, l // 2, 2), -1)

    h = jax.nn.relu(pool(conv(x, w1, b1)))
    h = jax.nn.relu(pool(conv(h, w2, b2)))
    h = jax.nn.relu(pool(conv(h, w3, b3)))
    h = h.reshape(h.shape[0], -1)
    h = jax.nn.relu(h @ fw1.T + fb1)
    h = h @ fw2.T + fb2
    h = h @ fw3.T + fb3
    nrm = jnp.maximum(jnp.linalg.norm(h, axis=1, keepdims=True), 1e-12)
    return h / nrm


def init_params(key, n_channels, n_outputs):
    """Deterministic synthetic parameters in PyTorch layer layouts."""
    ks = jax.random.split(key, 12)

    def u(k, shape, scale):
        return jax.random.uniform(k, shape, jnp.float32, -1.0, 1.0) * scale

    w1 = u(ks[0], (32, n_channels, K), 0.20)
    b1 = u(ks[1], (32,), 0.20)
    w2 = u(ks[2], (64, 32, K), 0.10)
    b2 = u(ks[3], (64,), 0.10)
    w3 = u(ks[4], (128, 64, K), 0.08)
    b3 = u(ks[5], (128,), 0.08)
    fw1 = u(ks[6], (128, 59 * 128), 0.02)
    fb1 = u(ks[7], (128,), 0.02)
    fw2 = u(ks[8], (32, 128), 0.10)
    fb2 = u(ks[9], (32,), 0.10)
    fw3 = u(ks[10], (n_outputs, 32), 0.20)
    fb3 = u(ks[11], (n_outputs,), 0.20)
    return (w1, b1, w2, b2, w3, b3, fw1, fb1, fw2, fb2, fw3, fb3)


if __name__ == "__main__":
    key = jax.random.PRNGKey(0)
    pkey, xkey = jax.random.split(key)

    B, n_channels, n_outputs = 2, 4, 8
    params = init_params(pkey, n_channels, n_outputs)
    x = jax.random.normal(xkey, (B, n_channels, L_IN), jnp.float32)

    fwd = jax.jit(pixelnet_forward)
    out = jax.block_until_ready(fwd(x, params))
    assert out.shape == (B, n_outputs)

    ref = jax.block_until_ready(reference_forward(x, params))
    assert jnp.allclose(out, ref, rtol=1e-3, atol=1e-4), (
        f"max abs err {jnp.max(jnp.abs(out - ref))}")

    print("KERNEL_OK")
</pallas_src>

<mosaic_0001>
module attributes {stable_mosaic.version = 11 : i64} {
  func.func @kernel(%arg0: i32, %arg1: memref<1x500x4xf32, #tpu.memory_space<vmem>>, %arg2: memref<5x4x32xf32, #tpu.memory_space<vmem>>, %arg3: memref<1x32xf32, #tpu.memory_space<vmem>>, %arg4: memref<5x32x64xf32, #tpu.memory_space<vmem>>, %arg5: memref<1x64xf32, #tpu.memory_space<vmem>>, %arg6: memref<5x64x128xf32, #tpu.memory_space<vmem>>, %arg7: memref<1x128xf32, #tpu.memory_space<vmem>>, %arg8: memref<1x59x128xf32, #tpu.memory_space<vmem>>, %arg9: memref<496x32xf32, #tpu.memory_space<vmem>>, %arg10: memref<495x32xf32, #tpu.memory_space<vmem>>, %arg11: memref<248x32xf32, #tpu.memory_space<vmem>>, %arg12: memref<244x64xf32, #tpu.memory_space<vmem>>, %arg13: memref<243x64xf32, #tpu.memory_space<vmem>>, %arg14: memref<122x64xf32, #tpu.memory_space<vmem>>, %arg15: memref<118x128xf32, #tpu.memory_space<vmem>>, %arg16: memref<117x128xf32, #tpu.memory_space<vmem>>) attributes {dimension_semantics = [#tpu.dimension_semantics<parallel>], iteration_bounds = array<i64: 2>, scalar_prefetch = 0 : i64, scratch_operands = 8 : i64, tpu.core_type = #tpu.core_type<tc>, window_params = [{transform_indices = @transform_0, window_bounds = array<i64: 1, 500, 4>}, {pipeline_mode = #tpu.pipeline_mode<synchronous>, transform_indices = @transform_1, window_bounds = array<i64: 5, 4, 32>}, {pipeline_mode = #tpu.pipeline_mode<synchronous>, transform_indices = @transform_2, window_bounds = array<i64: 1, 32>}, {pipeline_mode = #tpu.pipeline_mode<synchronous>, transform_indices = @transform_3, window_bounds = array<i64: 5, 32, 64>}, {pipeline_mode = #tpu.pipeline_mode<synchronous>, transform_indices = @transform_4, window_bounds = array<i64: 1, 64>}, {pipeline_mode = #tpu.pipeline_mode<synchronous>, transform_indices = @transform_5, window_bounds = array<i64: 5, 64, 128>}, {pipeline_mode = #tpu.pipeline_mode<synchronous>, transform_indices = @transform_6, window_bounds = array<i64: 1, 128>}, {transform_indices = @transform_7, window_bounds = array<i64: 1, 59, 128>}]} {
    %c0 = arith.constant 0 : index
    %c0_0 = arith.constant 0 : index
    %c0_1 = arith.constant 0 : index
    %0 = vector.load %arg1[%c0, %c0_0, %c0_1] : memref<1x500x4xf32, #tpu.memory_space<vmem>>, vector<1x496x4xf32>
    %1 = vector.shape_cast %0 : vector<1x496x4xf32> to vector<496x4xf32>
    %c0_2 = arith.constant 0 : index
    %c0_3 = arith.constant 0 : index
    %c0_4 = arith.constant 0 : index
    %2 = vector.load %arg2[%c0_2, %c0_3, %c0_4] : memref<5x4x32xf32, #tpu.memory_space<vmem>>, vector<1x4x32xf32>
    %3 = vector.shape_cast %2 : vector<1x4x32xf32> to vector<4x32xf32>
    %cst = arith.constant dense<0.000000e+00> : vector<496x32xf32>
    %4 = tpu.matmul %1, %3, %cst {dimension_numbers = #tpu.dot_dimension_numbers<[1], [0], [0], [1], [0, 0, 1, 1], [], []>} : vector<496x4xf32>, vector<4x32xf32>, vector<496x32xf32> -> vector<496x32xf32>
    %c0_5 = arith.constant 0 : index
    %c1 = arith.constant 1 : index
    %c0_6 = arith.constant 0 : index
    %5 = vector.load %arg1[%c0_5, %c1, %c0_6] : memref<1x500x4xf32, #tpu.memory_space<vmem>>, vector<1x496x4xf32>
    %6 = vector.shape_cast %5 : vector<1x496x4xf32> to vector<496x4xf32>
    %c1_7 = arith.constant 1 : index
    %c0_8 = arith.constant 0 : index
    %c0_9 = arith.constant 0 : index
    %7 = vector.load %arg2[%c1_7, %c0_8, %c0_9] : memref<5x4x32xf32, #tpu.memory_space<vmem>>, vector<1x4x32xf32>
    %8 = vector.shape_cast %7 : vector<1x4x32xf32> to vector<4x32xf32>
    %cst_10 = arith.constant dense<0.000000e+00> : vector<496x32xf32>
    %9 = tpu.matmul %6, %8, %cst_10 {dimension_numbers = #tpu.dot_dimension_numbers<[1], [0], [0], [1], [0, 0, 1, 1], [], []>} : vector<496x4xf32>, vector<4x32xf32>, vector<496x32xf32> -> vector<496x32xf32>
    %10 = arith.addf %4, %9 : vector<496x32xf32>
    %c0_11 = arith.constant 0 : index
    %c2 = arith.constant 2 : index
    %c0_12 = arith.constant 0 : index
    %11 = vector.load %arg1[%c0_11, %c2, %c0_12] : memref<1x500x4xf32, #tpu.memory_space<vmem>>, vector<1x496x4xf32>
    %12 = vector.shape_cast %11 : vector<1x496x4xf32> to vector<496x4xf32>
    %c2_13 = arith.constant 2 : index
    %c0_14 = arith.constant 0 : index
    %c0_15 = arith.constant 0 : index
    %13 = vector.load %arg2[%c2_13, %c0_14, %c0_15] : memref<5x4x32xf32, #tpu.memory_space<vmem>>, vector<1x4x32xf32>
    %14 = vector.shape_cast %13 : vector<1x4x32xf32> to vector<4x32xf32>
    %cst_16 = arith.constant dense<0.000000e+00> : vector<496x32xf32>
    %15 = tpu.matmul %12, %14, %cst_16 {dimension_numbers = #tpu.dot_dimension_numbers<[1], [0], [0], [1], [0, 0, 1, 1], [], []>} : vector<496x4xf32>, vector<4x32xf32>, vector<496x32xf32> -> vector<496x32xf32>
    %16 = arith.addf %10, %15 : vector<496x32xf32>
    %c0_17 = arith.constant 0 : index
    %c3 = arith.constant 3 : index
    %c0_18 = arith.constant 0 : index
    %17 = vector.load %arg1[%c0_17, %c3, %c0_18] : memref<1x500x4xf32, #tpu.memory_space<vmem>>, vector<1x496x4xf32>
    %18 = vector.shape_cast %17 : vector<1x496x4xf32> to vector<496x4xf32>
    %c3_19 = arith.constant 3 : index
    %c0_20 = arith.constant 0 : index
    %c0_21 = arith.constant 0 : index
    %19 = vector.load %arg2[%c3_19, %c0_20, %c0_21] : memref<5x4x32xf32, #tpu.memory_space<vmem>>, vector<1x4x32xf32>
    %20 = vector.shape_cast %19 : vector<1x4x32xf32> to vector<4x32xf32>
    %cst_22 = arith.constant dense<0.000000e+00> : vector<496x32xf32>
    %21 = tpu.matmul %18, %20, %cst_22 {dimension_numbers = #tpu.dot_dimension_numbers<[1], [0], [0], [1], [0, 0, 1, 1], [], []>} : vector<496x4xf32>, vector<4x32xf32>, vector<496x32xf32> -> vector<496x32xf32>
    %22 = arith.addf %16, %21 : vector<496x32xf32>
    %c0_23 = arith.constant 0 : index
    %c4 = arith.constant 4 : index
    %c0_24 = arith.constant 0 : index
    %23 = vector.load %arg1[%c0_23, %c4, %c0_24] : memref<1x500x4xf32, #tpu.memory_space<vmem>>, vector<1x496x4xf32>
    %24 = vector.shape_cast %23 : vector<1x496x4xf32> to vector<496x4xf32>
    %c4_25 = arith.constant 4 : index
    %c0_26 = arith.constant 0 : index
    %c0_27 = arith.constant 0 : index
    %25 = vector.load %arg2[%c4_25, %c0_26, %c0_27] : memref<5x4x32xf32, #tpu.memory_space<vmem>>, vector<1x4x32xf32>
    %26 = vector.shape_cast %25 : vector<1x4x32xf32> to vector<4x32xf32>
    %cst_28 = arith.constant dense<0.000000e+00> : vector<496x32xf32>
    %27 = tpu.matmul %24, %26, %cst_28 {dimension_numbers = #tpu.dot_dimension_numbers<[1], [0], [0], [1], [0, 0, 1, 1], [], []>} : vector<496x4xf32>, vector<4x32xf32>, vector<496x32xf32> -> vector<496x32xf32>
    %28 = arith.addf %22, %27 : vector<496x32xf32>
    %c0_29 = arith.constant 0 : index
    %c0_30 = arith.constant 0 : index
    %29 = vector.load %arg3[%c0_29, %c0_30] : memref<1x32xf32, #tpu.memory_space<vmem>>, vector<1x32xf32>
    %30 = vector.broadcast %29 : vector<1x32xf32> to vector<496x32xf32>
    %31 = arith.addf %28, %30 : vector<496x32xf32>
    %c0_31 = arith.constant 0 : index
    %c0_32 = arith.constant 0 : index
    %32 = vector.load %arg9[%c0_31, %c0_32] : memref<496x32xf32, #tpu.memory_space<vmem>>, vector<496x32xf32>
    tpu.vector_store %arg9[%c0_31, %c0_32], %31 {strides = array<i32>} : memref<496x32xf32, #tpu.memory_space<vmem>>, vector<496x32xf32>,
    %c0_33 = arith.constant 0 : index
    %c0_34 = arith.constant 0 : index
    %33 = vector.load %arg9[%c0_33, %c0_34] : memref<496x32xf32, #tpu.memory_space<vmem>>, vector<495x32xf32>
    %c1_35 = arith.constant 1 : index
    %c0_36 = arith.constant 0 : index
    %34 = vector.load %arg9[%c1_35, %c0_36] : memref<496x32xf32, #tpu.memory_space<vmem>>, vector<495x32xf32>
    %35 = arith.maximumf %33, %34 : vector<495x32xf32>
    %c0_37 = arith.constant 0 : index
    %c0_38 = arith.constant 0 : index
    %36 = vector.load %arg10[%c0_37, %c0_38] : memref<495x32xf32, #tpu.memory_space<vmem>>, vector<495x32xf32>
    tpu.vector_store %arg10[%c0_37, %c0_38], %35 {strides = array<i32>} : memref<495x32xf32, #tpu.memory_space<vmem>>, vector<495x32xf32>,
    %c0_39 = arith.constant 0 : index
    %c0_40 = arith.constant 0 : index
    %37 = tpu.strided_load %arg10[%c0_39, %c0_40] {strides = array<i32: 2, 1>} : memref<495x32xf32, #tpu.memory_space<vmem>>, vector<248x32xf32>
    %cst_41 = arith.constant 0.000000e+00 : f32
    %38 = vector.broadcast %cst_41 : f32 to vector<248x32xf32>
    %39 = arith.maximumf %37, %38 : vector<248x32xf32>
    %c0_42 = arith.constant 0 : index
    %c0_43 = arith.constant 0 : index
    %40 = vector.load %arg11[%c0_42, %c0_43] : memref<248x32xf32, #tpu.memory_space<vmem>>, vector<248x32xf32>
    tpu.vector_store %arg11[%c0_42, %c0_43], %39 {strides = array<i32>} : memref<248x32xf32, #tpu.memory_space<vmem>>, vector<248x32xf32>,
    %c0_44 = arith.constant 0 : index
    %c0_45 = arith.constant 0 : index
    %41 = vector.load %arg11[%c0_44, %c0_45] : memref<248x32xf32, #tpu.memory_space<vmem>>, vector<244x32xf32>
    %c0_46 = arith.constant 0 : index
    %c0_47 = arith.constant 0 : index
    %c0_48 = arith.constant 0 : index
    %42 = vector.load %arg4[%c0_46, %c0_47, %c0_48] : memref<5x32x64xf32, #tpu.memory_space<vmem>>, vector<1x32x64xf32>
    %43 = vector.shape_cast %42 : vector<1x32x64xf32> to vector<32x64xf32>
    %cst_49 = arith.constant dense<0.000000e+00> : vector<244x64xf32>
    %44 = tpu.matmul %41, %43, %cst_49 {dimension_numbers = #tpu.dot_dimension_numbers<[1], [0], [0], [1], [0, 0, 1, 1], [], []>} : vector<244x32xf32>, vector<32x64xf32>, vector<244x64xf32> -> vector<244x64xf32>
    %c1_50 = arith.constant 1 : index
    %c0_51 = arith.constant 0 : index
    %45 = vector.load %arg11[%c1_50, %c0_51] : memref<248x32xf32, #tpu.memory_space<vmem>>, vector<244x32xf32>
    %c1_52 = arith.constant 1 : index
    %c0_53 = arith.constant 0 : index
    %c0_54 = arith.constant 0 : index
    %46 = vector.load %arg4[%c1_52, %c0_53, %c0_54] : memref<5x32x64xf32, #tpu.memory_space<vmem>>, vector<1x32x64xf32>
    %47 = vector.shape_cast %46 : vector<1x32x64xf32> to vector<32x64xf32>
    %cst_55 = arith.constant dense<0.000000e+00> : vector<244x64xf32>
    %48 = tpu.matmul %45, %47, %cst_55 {dimension_numbers = #tpu.dot_dimension_numbers<[1], [0], [0], [1], [0, 0, 1, 1], [], []>} : vector<244x32xf32>, vector<32x64xf32>, vector<244x64xf32> -> vector<244x64xf32>
    %49 = arith.addf %44, %48 : vector<244x64xf32>
    %c2_56 = arith.constant 2 : index
    %c0_57 = arith.constant 0 : index
    %50 = vector.load %arg11[%c2_56, %c0_57] : memref<248x32xf32, #tpu.memory_space<vmem>>, vector<244x32xf32>
    %c2_58 = arith.constant 2 : index
    %c0_59 = arith.constant 0 : index
    %c0_60 = arith.constant 0 : index
    %51 = vector.load %arg4[%c2_58, %c0_59, %c0_60] : memref<5x32x64xf32, #tpu.memory_space<vmem>>, vector<1x32x64xf32>
    %52 = vector.shape_cast %51 : vector<1x32x64xf32> to vector<32x64xf32>
    %cst_61 = arith.constant dense<0.000000e+00> : vector<244x64xf32>
    %53 = tpu.matmul %50, %52, %cst_61 {dimension_numbers = #tpu.dot_dimension_numbers<[1], [0], [0], [1], [0, 0, 1, 1], [], []>} : vector<244x32xf32>, vector<32x64xf32>, vector<244x64xf32> -> vector<244x64xf32>
    %54 = arith.addf %49, %53 : vector<244x64xf32>
    %c3_62 = arith.constant 3 : index
    %c0_63 = arith.constant 0 : index
    %55 = vector.load %arg11[%c3_62, %c0_63] : memref<248x32xf32, #tpu.memory_space<vmem>>, vector<244x32xf32>
    %c3_64 = arith.constant 3 : index
    %c0_65 = arith.constant 0 : index
    %c0_66 = arith.constant 0 : index
    %56 = vector.load %arg4[%c3_64, %c0_65, %c0_66] : memref<5x32x64xf32, #tpu.memory_space<vmem>>, vector<1x32x64xf32>
    %57 = vector.shape_cast %56 : vector<1x32x64xf32> to vector<32x64xf32>
    %cst_67 = arith.constant dense<0.000000e+00> : vector<244x64xf32>
    %58 = tpu.matmul %55, %57, %cst_67 {dimension_numbers = #tpu.dot_dimension_numbers<[1], [0], [0], [1], [0, 0, 1, 1], [], []>} : vector<244x32xf32>, vector<32x64xf32>, vector<244x64xf32> -> vector<244x64xf32>
    %59 = arith.addf %54, %58 : vector<244x64xf32>
    %c4_68 = arith.constant 4 : index
    %c0_69 = arith.constant 0 : index
    %60 = vector.load %arg11[%c4_68, %c0_69] : memref<248x32xf32, #tpu.memory_space<vmem>>, vector<244x32xf32>
    %c4_70 = arith.constant 4 : index
    %c0_71 = arith.constant 0 : index
    %c0_72 = arith.constant 0 : index
    %61 = vector.load %arg4[%c4_70, %c0_71, %c0_72] : memref<5x32x64xf32, #tpu.memory_space<vmem>>, vector<1x32x64xf32>
    %62 = vector.shape_cast %61 : vector<1x32x64xf32> to vector<32x64xf32>
    %cst_73 = arith.constant dense<0.000000e+00> : vector<244x64xf32>
    %63 = tpu.matmul %60, %62, %cst_73 {dimension_numbers = #tpu.dot_dimension_numbers<[1], [0], [0], [1], [0, 0, 1, 1], [], []>} : vector<244x32xf32>, vector<32x64xf32>, vector<244x64xf32> -> vector<244x64xf32>
    %64 = arith.addf %59, %63 : vector<244x64xf32>
    %c0_74 = arith.constant 0 : index
    %c0_75 = arith.constant 0 : index
    %65 = vector.load %arg5[%c0_74, %c0_75] : memref<1x64xf32, #tpu.memory_space<vmem>>, vector<1x64xf32>
    %66 = vector.broadcast %65 : vector<1x64xf32> to vector<244x64xf32>
    %67 = arith.addf %64, %66 : vector<244x64xf32>
    %c0_76 = arith.constant 0 : index
    %c0_77 = arith.constant 0 : index
    %68 = vector.load %arg12[%c0_76, %c0_77] : memref<244x64xf32, #tpu.memory_space<vmem>>, vector<244x64xf32>
    tpu.vector_store %arg12[%c0_76, %c0_77], %67 {strides = array<i32>} : memref<244x64xf32, #tpu.memory_space<vmem>>, vector<244x64xf32>,
    %c0_78 = arith.constant 0 : index
    %c0_79 = arith.constant 0 : index
    %69 = vector.load %arg12[%c0_78, %c0_79] : memref<244x64xf32, #tpu.memory_space<vmem>>, vector<243x64xf32>
    %c1_80 = arith.constant 1 : index
    %c0_81 = arith.constant 0 : index
    %70 = vector.load %arg12[%c1_80, %c0_81] : memref<244x64xf32, #tpu.memory_space<vmem>>, vector<243x64xf32>
    %71 = arith.maximumf %69, %70 : vector<243x64xf32>
    %c0_82 = arith.constant 0 : index
    %c0_83 = arith.constant 0 : index
    %72 = vector.load %arg13[%c0_82, %c0_83] : memref<243x64xf32, #tpu.memory_space<vmem>>, vector<243x64xf32>
    tpu.vector_store %arg13[%c0_82, %c0_83], %71 {strides = array<i32>} : memref<243x64xf32, #tpu.memory_space<vmem>>, vector<243x64xf32>,
    %c0_84 = arith.constant 0 : index
    %c0_85 = arith.constant 0 : index
    %73 = tpu.strided_load %arg13[%c0_84, %c0_85] {strides = array<i32: 2, 1>} : memref<243x64xf32, #tpu.memory_space<vmem>>, vector<122x64xf32>
    %cst_86 = arith.constant 0.000000e+00 : f32
    %74 = vector.broadcast %cst_86 : f32 to vector<122x64xf32>
    %75 = arith.maximumf %73, %74 : vector<122x64xf32>
    %c0_87 = arith.constant 0 : index
    %c0_88 = arith.constant 0 : index
    %76 = vector.load %arg14[%c0_87, %c0_88] : memref<122x64xf32, #tpu.memory_space<vmem>>, vector<122x64xf32>
    tpu.vector_store %arg14[%c0_87, %c0_88], %75 {strides = array<i32>} : memref<122x64xf32, #tpu.memory_space<vmem>>, vector<122x64xf32>,
    %c0_89 = arith.constant 0 : index
    %c0_90 = arith.constant 0 : index
    %77 = vector.load %arg14[%c0_89, %c0_90] : memref<122x64xf32, #tpu.memory_space<vmem>>, vector<118x64xf32>
    %c0_91 = arith.constant 0 : index
    %c0_92 = arith.constant 0 : index
    %c0_93 = arith.constant 0 : index
    %78 = vector.load %arg6[%c0_91, %c0_92, %c0_93] : memref<5x64x128xf32, #tpu.memory_space<vmem>>, vector<1x64x128xf32>
    %79 = vector.shape_cast %78 : vector<1x64x128xf32> to vector<64x128xf32>
    %cst_94 = arith.constant dense<0.000000e+00> : vector<118x128xf32>
    %80 = tpu.matmul %77, %79, %cst_94 {dimension_numbers = #tpu.dot_dimension_numbers<[1], [0], [0], [1], [0, 0, 1, 1], [], []>} : vector<118x64xf32>, vector<64x128xf32>, vector<118x128xf32> -> vector<118x128xf32>
    %c1_95 = arith.constant 1 : index
    %c0_96 = arith.constant 0 : index
    %81 = vector.load %arg14[%c1_95, %c0_96] : memref<122x64xf32, #tpu.memory_space<vmem>>, vector<118x64xf32>
    %c1_97 = arith.constant 1 : index
    %c0_98 = arith.constant 0 : index
    %c0_99 = arith.constant 0 : index
    %82 = vector.load %arg6[%c1_97, %c0_98, %c0_99] : memref<5x64x128xf32, #tpu.memory_space<vmem>>, vector<1x64x128xf32>
    %83 = vector.shape_cast %82 : vector<1x64x128xf32> to vector<64x128xf32>
    %cst_100 = arith.constant dense<0.000000e+00> : vector<118x128xf32>
    %84 = tpu.matmul %81, %83, %cst_100 {dimension_numbers = #tpu.dot_dimension_numbers<[1], [0], [0], [1], [0, 0, 1, 1], [], []>} : vector<118x64xf32>, vector<64x128xf32>, vector<118x128xf32> -> vector<118x128xf32>
    %85 = arith.addf %80, %84 : vector<118x128xf32>
    %c2_101 = arith.constant 2 : index
    %c0_102 = arith.constant 0 : index
    %86 = vector.load %arg14[%c2_101, %c0_102] : memref<122x64xf32, #tpu.memory_space<vmem>>, vector<118x64xf32>
    %c2_103 = arith.constant 2 : index
    %c0_104 = arith.constant 0 : index
    %c0_105 = arith.constant 0 : index
    %87 = vector.load %arg6[%c2_103, %c0_104, %c0_105] : memref<5x64x128xf32, #tpu.memory_space<vmem>>, vector<1x64x128xf32>
    %88 = vector.shape_cast %87 : vector<1x64x128xf32> to vector<64x128xf32>
    %cst_106 = arith.constant dense<0.000000e+00> : vector<118x128xf32>
    %89 = tpu.matmul %86, %88, %cst_106 {dimension_numbers = #tpu.dot_dimension_numbers<[1], [0], [0], [1], [0, 0, 1, 1], [], []>} : vector<118x64xf32>, vector<64x128xf32>, vector<118x128xf32> -> vector<118x128xf32>
    %90 = arith.addf %85, %89 : vector<118x128xf32>
    %c3_107 = arith.constant 3 : index
    %c0_108 = arith.constant 0 : index
    %91 = vector.load %arg14[%c3_107, %c0_108] : memref<122x64xf32, #tpu.memory_space<vmem>>, vector<118x64xf32>
    %c3_109 = arith.constant 3 : index
    %c0_110 = arith.constant 0 : index
    %c0_111 = arith.constant 0 : index
    %92 = vector.load %arg6[%c3_109, %c0_110, %c0_111] : memref<5x64x128xf32, #tpu.memory_space<vmem>>, vector<1x64x128xf32>
    %93 = vector.shape_cast %92 : vector<1x64x128xf32> to vector<64x128xf32>
    %cst_112 = arith.constant dense<0.000000e+00> : vector<118x128xf32>
    %94 = tpu.matmul %91, %93, %cst_112 {dimension_numbers = #tpu.dot_dimension_numbers<[1], [0], [0], [1], [0, 0, 1, 1], [], []>} : vector<118x64xf32>, vector<64x128xf32>, vector<118x128xf32> -> vector<118x128xf32>
    %95 = arith.addf %90, %94 : vector<118x128xf32>
    %c4_113 = arith.constant 4 : index
    %c0_114 = arith.constant 0 : index
    %96 = vector.load %arg14[%c4_113, %c0_114] : memref<122x64xf32, #tpu.memory_space<vmem>>, vector<118x64xf32>
    %c4_115 = arith.constant 4 : index
    %c0_116 = arith.constant 0 : index
    %c0_117 = arith.constant 0 : index
    %97 = vector.load %arg6[%c4_115, %c0_116, %c0_117] : memref<5x64x128xf32, #tpu.memory_space<vmem>>, vector<1x64x128xf32>
    %98 = vector.shape_cast %97 : vector<1x64x128xf32> to vector<64x128xf32>
    %cst_118 = arith.constant dense<0.000000e+00> : vector<118x128xf32>
    %99 = tpu.matmul %96, %98, %cst_118 {dimension_numbers = #tpu.dot_dimension_numbers<[1], [0], [0], [1], [0, 0, 1, 1], [], []>} : vector<118x64xf32>, vector<64x128xf32>, vector<118x128xf32> -> vector<118x128xf32>
    %100 = arith.addf %95, %99 : vector<118x128xf32>
    %c0_119 = arith.constant 0 : index
    %c0_120 = arith.constant 0 : index
    %101 = vector.load %arg7[%c0_119, %c0_120] : memref<1x128xf32, #tpu.memory_space<vmem>>, vector<1x128xf32>
    %102 = vector.broadcast %101 : vector<1x128xf32> to vector<118x128xf32>
    %103 = arith.addf %100, %102 : vector<118x128xf32>
    %c0_121 = arith.constant 0 : index
    %c0_122 = arith.constant 0 : index
    %104 = vector.load %arg15[%c0_121, %c0_122] : memref<118x128xf32, #tpu.memory_space<vmem>>, vector<118x128xf32>
    tpu.vector_store %arg15[%c0_121, %c0_122], %103 {strides = array<i32>} : memref<118x128xf32, #tpu.memory_space<vmem>>, vector<118x128xf32>,
    %c0_123 = arith.constant 0 : index
    %c0_124 = arith.constant 0 : index
    %105 = vector.load %arg15[%c0_123, %c0_124] : memref<118x128xf32, #tpu.memory_space<vmem>>, vector<117x128xf32>
    %c1_125 = arith.constant 1 : index
    %c0_126 = arith.constant 0 : index
    %106 = vector.load %arg15[%c1_125, %c0_126] : memref<118x128xf32, #tpu.memory_space<vmem>>, vector<117x128xf32>
    %107 = arith.maximumf %105, %106 : vector<117x128xf32>
    %c0_127 = arith.constant 0 : index
    %c0_128 = arith.constant 0 : index
    %108 = vector.load %arg16[%c0_127, %c0_128] : memref<117x128xf32, #tpu.memory_space<vmem>>, vector<117x128xf32>
    tpu.vector_store %arg16[%c0_127, %c0_128], %107 {strides = array<i32>} : memref<117x128xf32, #tpu.memory_space<vmem>>, vector<117x128xf32>,
    %c0_129 = arith.constant 0 : index
    %c0_130 = arith.constant 0 : index
    %109 = tpu.strided_load %arg16[%c0_129, %c0_130] {strides = array<i32: 2, 1>} : memref<117x128xf32, #tpu.memory_space<vmem>>, vector<59x128xf32>
    %cst_131 = arith.constant 0.000000e+00 : f32
    %110 = vector.broadcast %cst_131 : f32 to vector<59x128xf32>
    %111 = arith.maximumf %109, %110 : vector<59x128xf32>
    %c0_132 = arith.constant 0 : index
    %c0_133 = arith.constant 0 : index
    %c0_134 = arith.constant 0 : index
    %112 = vector.load %arg8[%c0_132, %c0_133, %c0_134] : memref<1x59x128xf32, #tpu.memory_space<vmem>>, vector<1x59x128xf32>
    %113 = vector.shape_cast %112 : vector<1x59x128xf32> to vector<59x128xf32>
    %114 = vector.shape_cast %111 : vector<59x128xf32> to vector<1x59x128xf32>
    tpu.vector_store %arg8[%c0_132, %c0_133, %c0_134], %114 {strides = array<i32>} : memref<1x59x128xf32, #tpu.memory_space<vmem>>, vector<1x59x128xf32>,
    return
  }
  func.func @transform_0(%arg0: i32) -> (i32, i32, i32) {
    %c0_i32 = arith.constant 0 : i32
    %c0_i32_0 = arith.constant 0 : i32
    %c0_i32_1 = arith.constant 0 : i32
    return %arg0, %c0_i32, %c0_i32_0 : i32, i32, i32
  }
  func.func @transform_1(%arg0: i32) -> (i32, i32, i32) {
    %c0_i32 = arith.constant 0 : i32
    %c0_i32_0 = arith.constant 0 : i32
    %c0_i32_1 = arith.constant 0 : i32
    %c0_i32_2 = arith.constant 0 : i32
    return %c0_i32, %c0_i32_0, %c0_i32_1 : i32, i32, i32
  }
  func.func @transform_2(%arg0: i32) -> (i32, i32) {
    %c0_i32 = arith.constant 0 : i32
    %c0_i32_0 = arith.constant 0 : i32
    %c0_i32_1 = arith.constant 0 : i32
    return %c0_i32, %c0_i32_0 : i32, i32
  }
  func.func @transform_3(%arg0: i32) -> (i32, i32, i32) {
    %c0_i32 = arith.constant 0 : i32
    %c0_i32_0 = arith.constant 0 : i32
    %c0_i32_1 = arith.constant 0 : i32
    %c0_i32_2 = arith.constant 0 : i32
    return %c0_i32, %c0_i32_0, %c0_i32_1 : i32, i32, i32
  }
  func.func @transform_4(%arg0: i32) -> (i32, i32) {
    %c0_i32 = arith.constant 0 : i32
    %c0_i32_0 = arith.constant 0 : i32
    %c0_i32_1 = arith.constant 0 : i32
    return %c0_i32, %c0_i32_0 : i32, i32
  }
  func.func @transform_5(%arg0: i32) -> (i32, i32, i32) {
    %c0_i32 = arith.constant 0 : i32
    %c0_i32_0 = arith.constant 0 : i32
    %c0_i32_1 = arith.constant 0 : i32
    %c0_i32_2 = arith.constant 0 : i32
    return %c0_i32, %c0_i32_0, %c0_i32_1 : i32, i32, i32
  }
  func.func @transform_6(%arg0: i32) -> (i32, i32) {
    %c0_i32 = arith.constant 0 : i32
    %c0_i32_0 = arith.constant 0 : i32
    %c0_i32_1 = arith.constant 0 : i32
    return %c0_i32, %c0_i32_0 : i32, i32
  }
  func.func @transform_7(%arg0: i32) -> (i32, i32, i32) {
    %c0_i32 = arith.constant 0 : i32
    %c0_i32_0 = arith.constant 0 : i32
    %c0_i32_1 = arith.constant 0 : i32
    return %arg0, %c0_i32, %c0_i32_0 : i32, i32, i32
  }
}

module attributes {stable_mosaic.version = 11 : i64} {
  func.func @_head_kernel(%arg0: i32, %arg1: memref<2x7552xf32, #tpu.memory_space<vmem>>, %arg2: memref<7552x128xf32, #tpu.memory_space<vmem>>, %arg3: memref<1x128xf32, #tpu.memory_space<vmem>>, %arg4: memref<128x32xf32, #tpu.memory_space<vmem>>, %arg5: memref<1x32xf32, #tpu.memory_space<vmem>>, %arg6: memref<32x8xf32, #tpu.memory_space<vmem>>, %arg7: memref<1x8xf32, #tpu.memory_space<vmem>>, %arg8: memref<2x8xf32, #tpu.memory_space<vmem>>) attributes {dimension_semantics = [#tpu.dimension_semantics<parallel>], iteration_bounds = array<i64: 1>, scalar_prefetch = 0 : i64, scratch_operands = 0 : i64, tpu.core_type = #tpu.core_type<tc>, window_params = [{transform_indices = @transform_0, window_bounds = array<i64: 2, 7552>}, {pipeline_mode = #tpu.pipeline_mode<synchronous>, transform_indices = @transform_1, window_bounds = array<i64: 7552, 128>}, {pipeline_mode = #tpu.pipeline_mode<synchronous>, transform_indices = @transform_2, window_bounds = array<i64: 1, 128>}, {pipeline_mode = #tpu.pipeline_mode<synchronous>, transform_indices = @transform_3, window_bounds = array<i64: 128, 32>}, {pipeline_mode = #tpu.pipeline_mode<synchronous>, transform_indices = @transform_4, window_bounds = array<i64: 1, 32>}, {pipeline_mode = #tpu.pipeline_mode<synchronous>, transform_indices = @transform_5, window_bounds = array<i64: 32, 8>}, {pipeline_mode = #tpu.pipeline_mode<synchronous>, transform_indices = @transform_6, window_bounds = array<i64: 1, 8>}, {transform_indices = @transform_7, window_bounds = array<i64: 2, 8>}]} {
    %c0 = arith.constant 0 : index
    %c0_0 = arith.constant 0 : index
    %0 = vector.load %arg1[%c0, %c0_0] : memref<2x7552xf32, #tpu.memory_space<vmem>>, vector<2x7552xf32>
    %c0_1 = arith.constant 0 : index
    %c0_2 = arith.constant 0 : index
    %1 = vector.load %arg2[%c0_1, %c0_2] : memref<7552x128xf32, #tpu.memory_space<vmem>>, vector<7552x128xf32>
    %cst = arith.constant dense<0.000000e+00> : vector<2x128xf32>
    %2 = tpu.matmul %0, %1, %cst {dimension_numbers = #tpu.dot_dimension_numbers<[1], [0], [0], [1], [0, 0, 1, 1], [], []>} : vector<2x7552xf32>, vector<7552x128xf32>, vector<2x128xf32> -> vector<2x128xf32>
    %c0_3 = arith.constant 0 : index
    %c0_4 = arith.constant 0 : index
    %3 = vector.load %arg3[%c0_3, %c0_4] : memref<1x128xf32, #tpu.memory_space<vmem>>, vector<1x128xf32>
    %4 = vector.broadcast %3 : vector<1x128xf32> to vector<2x128xf32>
    %5 = arith.addf %2, %4 : vector<2x128xf32>
    %cst_5 = arith.constant 0.000000e+00 : f32
    %6 = vector.broadcast %cst_5 : f32 to vector<2x128xf32>
    %7 = arith.maximumf %5, %6 : vector<2x128xf32>
    %c0_6 = arith.constant 0 : index
    %c0_7 = arith.constant 0 : index
    %8 = vector.load %arg4[%c0_6, %c0_7] : memref<128x32xf32, #tpu.memory_space<vmem>>, vector<128x32xf32>
    %cst_8 = arith.constant dense<0.000000e+00> : vector<2x32xf32>
    %9 = tpu.matmul %7, %8, %cst_8 {dimension_numbers = #tpu.dot_dimension_numbers<[1], [0], [0], [1], [0, 0, 1, 1], [], []>} : vector<2x128xf32>, vector<128x32xf32>, vector<2x32xf32> -> vector<2x32xf32>
    %c0_9 = arith.constant 0 : index
    %c0_10 = arith.constant 0 : index
    %10 = vector.load %arg5[%c0_9, %c0_10] : memref<1x32xf32, #tpu.memory_space<vmem>>, vector<1x32xf32>
    %11 = vector.broadcast %10 : vector<1x32xf32> to vector<2x32xf32>
    %12 = arith.addf %9, %11 : vector<2x32xf32>
    %c0_11 = arith.constant 0 : index
    %c0_12 = arith.constant 0 : index
    %13 = vector.load %arg6[%c0_11, %c0_12] : memref<32x8xf32, #tpu.memory_space<vmem>>, vector<32x8xf32>
    %cst_13 = arith.constant dense<0.000000e+00> : vector<2x8xf32>
    %14 = tpu.matmul %12, %13, %cst_13 {dimension_numbers = #tpu.dot_dimension_numbers<[1], [0], [0], [1], [0, 0, 1, 1], [], []>} : vector<2x32xf32>, vector<32x8xf32>, vector<2x8xf32> -> vector<2x8xf32>
    %c0_14 = arith.constant 0 : index
    %c0_15 = arith.constant 0 : index
    %15 = vector.load %arg7[%c0_14, %c0_15] : memref<1x8xf32, #tpu.memory_space<vmem>>, vector<1x8xf32>
    %16 = vector.broadcast %15 : vector<1x8xf32> to vector<2x8xf32>
    %17 = arith.addf %14, %16 : vector<2x8xf32>
    %18 = arith.mulf %17, %17 : vector<2x8xf32>
    %cst_16 = arith.constant dense<0.000000e+00> : vector<2xf32>
    %19 = vector.multi_reduction <add>, %18, %cst_16 [1] : vector<2x8xf32> to vector<2xf32>
    %20 = vector.shape_cast %19 : vector<2xf32> to vector<2x1xf32>
    %cst_17 = arith.constant 1.000000e-24 : f32
    %21 = vector.broadcast %cst_17 : f32 to vector<2x1xf32>
    %22 = arith.maximumf %20, %21 : vector<2x1xf32>
    %23 = math.rsqrt %22 : vector<2x1xf32>
    %24 = vector.broadcast %23 : vector<2x1xf32> to vector<2x8xf32>
    %25 = arith.mulf %17, %24 : vector<2x8xf32>
    %c0_18 = arith.constant 0 : index
    %c0_19 = arith.constant 0 : index
    %26 = vector.load %arg8[%c0_18, %c0_19] : memref<2x8xf32, #tpu.memory_space<vmem>>, vector<2x8xf32>
    tpu.vector_store %arg8[%c0_18, %c0_19], %25 {strides = array<i32>} : memref<2x8xf32, #tpu.memory_space<vmem>>, vector<2x8xf32>,
    return
  }
  func.func @transform_0(%arg0: i32) -> (i32, i32) {
    %c0_i32 = arith.constant 0 : i32
    %c0_i32_0 = arith.constant 0 : i32
    return %arg0, %c0_i32 : i32, i32
  }
  func.func @transform_1(%arg0: i32) -> (i32, i32) {
    %c0_i32 = arith.constant 0 : i32
    %c0_i32_0 = arith.constant 0 : i32
    %c0_i32_1 = arith.constant 0 : i32
    return %c0_i32, %c0_i32_0 : i32, i32
  }
  func.func @transform_2(%arg0: i32) -> (i32, i32) {
    %c0_i32 = arith.constant 0 : i32
    %c0_i32_0 = arith.constant 0 : i32
    %c0_i32_1 = arith.constant 0 : i32
    return %c0_i32, %c0_i32_0 : i32, i32
  }
  func.func @transform_3(%arg0: i32) -> (i32, i32) {
    %c0_i32 = arith.constant 0 : i32
    %c0_i32_0 = arith.constant 0 : i32
    %c0_i32_1 = arith.constant 0 : i32
    return %c0_i32, %c0_i32_0 : i32, i32
  }
  func.func @transform_4(%arg0: i32) -> (i32, i32) {
    %c0_i32 = arith.constant 0 : i32
    %c0_i32_0 = arith.constant 0 : i32
    %c0_i32_1 = arith.constant 0 : i32
    return %c0_i32, %c0_i32_0 : i32, i32
  }
  func.func @transform_5(%arg0: i32) -> (i32, i32) {
    %c0_i32 = arith.constant 0 : i32
    %c0_i32_0 = arith.constant 0 : i32
    %c0_i32_1 = arith.constant 0 : i32
    return %c0_i32, %c0_i32_0 : i32, i32
  }
  func.func @transform_6(%arg0: i32) -> (i32, i32) {
    %c0_i32 = arith.constant 0 : i32
    %c0_i32_0 = arith.constant 0 : i32
    %c0_i32_1 = arith.constant 0 : i32
    return %c0_i32, %c0_i32_0 : i32, i32
  }
  func.func @transform_7(%arg0: i32) -> (i32, i32) {
    %c0_i32 = arith.constant 0 : i32
    %c0_i32_0 = arith.constant 0 : i32
    return %arg0, %c0_i32 : i32, i32
  }
}

</mosaic_0001>

<llo_original>
// kernel: pixelnet_forward.3
$region0: #{pixelnet_forward.3}
  #allocation0 [shape = 'u32[]', space=smem, size = 0x4, offset = 0x4, fixed_abs, tag = 'smem constant byte address 0x4 - core index']
  #allocation1 [shape = 'u32[72,128]{1,0:T(1,128)}', space=vmem, size = 0x9000, scoped, tag = 'internal scratch']
  %s0 = inlined_call_operand.vmem [shape: f32[2,7552], index: 0, kind: input, shape index: {}]
  %s1 = inlined_call_operand.vmem [shape: f32[7552,128], index: 1, kind: input, shape index: {}]
  %s2 = inlined_call_operand.vmem [shape: f32[1,128], index: 2, kind: input, shape index: {}]
  %s3 = inlined_call_operand.vmem [shape: f32[128,32], index: 3, kind: input, shape index: {}]
  %s4 = inlined_call_operand.vmem [shape: f32[1,32], index: 4, kind: input, shape index: {}]
  %s5 = inlined_call_operand.vmem [shape: f32[32,8], index: 5, kind: input, shape index: {}]
  %s6 = inlined_call_operand.vmem [shape: f32[1,8], index: 6, kind: input, shape index: {}]
  %s7 = inlined_call_operand.hbm [shape: f32[2,8], index: 7, kind: output, shape index: {}]
  %s8 = sld [smem:[#allocation0]]
  $region38: #{pixelnet_forward.3} parent=0
    _
  %s10 = ssub.s32 1, %s8
  %s11 = scalar_select 0, %s10, %s8
  $region1: #{pixelnet_forward.3} parent=0
    #allocation2 [shape = 'u8[1024]{0}', space=vmem, size = 0x400, scoped, tag = 'output window, operand 0, single buffered']
    #allocation3 [shape = 's32[1]{0}', space=sflag, size = 0x4, scoped, tag = 'scoped memory for pixelnet_forward.3']
    %12 = vsyncpa [#allocation3], 0
    // Predicated region
    $region2: #{pixelnet_forward.3} parent=1 // pred_check
      _
    $region3: #{pixelnet_forward.3} parent=1 // pred_check_branch
      %14 = sbr.rel (0) target = $region5
    $region4: #{pixelnet_forward.3} parent=1 // pred_region
      _
    $region5: #{pixelnet_forward.3} parent=1 // pred_fallthru
      _
    // Predicated region
    $region6: #{pixelnet_forward.3} parent=1 // pred_check
      _
    $region7: #{pixelnet_forward.3} parent=1 // pred_check_branch
      %16 = sbr.rel (0) target = $region9
    $region8: #{pixelnet_forward.3} parent=1 // pred_region
      _
    $region9: #{pixelnet_forward.3} parent=1 // pred_fallthru
      _
    // Predicated region
    $region10: #{pixelnet_forward.3} parent=1 // pred_check
      _
    $region11: #{pixelnet_forward.3} parent=1 // pred_check_branch
      %18 = sbr.rel (0) target = $region13
    $region12: #{pixelnet_forward.3} parent=1 // pred_region
      _
    $region13: #{pixelnet_forward.3} parent=1 // pred_fallthru
      _
    // Predicated region
    $region14: #{pixelnet_forward.3} parent=1 // pred_check
      _
    $region15: #{pixelnet_forward.3} parent=1 // pred_check_branch
      %20 = sbr.rel (0) target = $region17
    $region16: #{pixelnet_forward.3} parent=1 // pred_region
      _
    $region17: #{pixelnet_forward.3} parent=1 // pred_fallthru
      _
    // Predicated region
    $region18: #{pixelnet_forward.3} parent=1 // pred_check
      _
    $region19: #{pixelnet_forward.3} parent=1 // pred_check_branch
      %22 = sbr.rel (0) target = $region21
    $region20: #{pixelnet_forward.3} parent=1 // pred_region
      _
    $region21: #{pixelnet_forward.3} parent=1 // pred_fallthru
      _
    // Predicated region
    $region22: #{pixelnet_forward.3} parent=1 // pred_check
      _
    $region23: #{pixelnet_forward.3} parent=1 // pred_check_branch
      %24 = sbr.rel (0) target = $region25
    $region24: #{pixelnet_forward.3} parent=1 // pred_region
      _
    $region25: #{pixelnet_forward.3} parent=1 // pred_fallthru
      _
    // Predicated region
    $region26: #{pixelnet_forward.3} parent=1 // pred_check
      _
    $region27: #{pixelnet_forward.3} parent=1 // pred_check_branch
      %26 = sbr.rel (0) target = $region29
    $region28: #{pixelnet_forward.3} parent=1 // pred_region
      _
    $region29: #{pixelnet_forward.3} parent=1 // pred_fallthru
      _
    %v27 = vld [vmem:[%s0] sm:$0xff]
    %v28 = vld [vmem:[%s0 + $0x8] sm:$0xff]
    %v29 = vld [vmem:[%s0 + $0x10] sm:$0xff]
    %v30 = vld [vmem:[%s0 + $0x18] sm:$0xff]
    %v31 = vld [vmem:[%s0 + $0x20] sm:$0xff]
    %v32 = vld [vmem:[%s0 + $0x28] sm:$0xff]
    %v33 = vld [vmem:[%s0 + $0x30] sm:$0xff]
    %v34 = vld [vmem:[%s0 + $0x38] sm:$0xff]
    %v35 = vld [vmem:[%s0 + $0x40] sm:$0xff]
    %v36 = vld [vmem:[%s0 + $0x48] sm:$0xff]
    %v37 = vld [vmem:[%s0 + $0x50] sm:$0xff]
    %v38 = vld [vmem:[%s0 + $0x58] sm:$0xff]
    %v39 = vld [vmem:[%s0 + $0x60] sm:$0xff]
    %v40 = vld [vmem:[%s0 + $0x68] sm:$0xff]
    %v41 = vld [vmem:[%s0 + $0x70] sm:$0x3f]
    %v42 = vld [vmem:[%s1] sm:$0xff]
    %v43 = vld [vmem:[%s1 + $0x8] sm:$0xff]
    %v44 = vld [vmem:[%s1 + $0x10] sm:$0xff]
    %v45 = vld [vmem:[%s1 + $0x18] sm:$0xff]
    %v46 = vld [vmem:[%s1 + $0x20] sm:$0xff]
    %v47 = vld [vmem:[%s1 + $0x28] sm:$0xff]
    %v48 = vld [vmem:[%s1 + $0x30] sm:$0xff]
    %v49 = vld [vmem:[%s1 + $0x38] sm:$0xff]
    %v50 = vld [vmem:[%s1 + $0x40] sm:$0xff]
    %v51 = vld [vmem:[%s1 + $0x48] sm:$0xff]
    %v52 = vld [vmem:[%s1 + $0x50] sm:$0xff]
    %v53 = vld [vmem:[%s1 + $0x58] sm:$0xff]
    %v54 = vld [vmem:[%s1 + $0x60] sm:$0xff]
    %v55 = vld [vmem:[%s1 + $0x68] sm:$0xff]
    %v56 = vld [vmem:[%s1 + $0x70] sm:$0xff]
    %v57 = vld [vmem:[%s1 + $0x78] sm:$0xff]
    %v58 = vld [vmem:[%s1 + $0x80] sm:$0xff]
    %v59 = vld [vmem:[%s1 + $0x88] sm:$0xff]
    %v60 = vld [vmem:[%s1 + $0x90] sm:$0xff]
    %v61 = vld [vmem:[%s1 + $0x98] sm:$0xff]
    %v62 = vld [vmem:[%s1 + $0xa0] sm:$0xff]
    %v63 = vld [vmem:[%s1 + $0xa8] sm:$0xff]
    %v64 = vld [vmem:[%s1 + $0xb0] sm:$0xff]
    %v65 = vld [vmem:[%s1 + $0xb8] sm:$0xff]
    %v66 = vld [vmem:[%s1 + $0xc0] sm:$0xff]
    %v67 = vld [vmem:[%s1 + $0xc8] sm:$0xff]
    %v68 = vld [vmem:[%s1 + $0xd0] sm:$0xff]
    %v69 = vld [vmem:[%s1 + $0xd8] sm:$0xff]
    %v70 = vld [vmem:[%s1 + $0xe0] sm:$0xff]
    %v71 = vld [vmem:[%s1 + $0xe8] sm:$0xff]
    %v72 = vld [vmem:[%s1 + $0xf0] sm:$0xff]
    %v73 = vld [vmem:[%s1 + $0xf8] sm:$0xff]
    %v74 = vld [vmem:[%s1 + $0x100] sm:$0xff]
    %v75 = vld [vmem:[%s1 + $0x108] sm:$0xff]
    %v76 = vld [vmem:[%s1 + $0x110] sm:$0xff]
    %v77 = vld [vmem:[%s1 + $0x118] sm:$0xff]
    %v78 = vld [vmem:[%s1 + $0x120] sm:$0xff]
    %v79 = vld [vmem:[%s1 + $0x128] sm:$0xff]
    %v80 = vld [vmem:[%s1 + $0x130] sm:$0xff]
    %v81 = vld [vmem:[%s1 + $0x138] sm:$0xff]
    %v82 = vld [vmem:[%s1 + $0x140] sm:$0xff]
    %v83 = vld [vmem:[%s1 + $0x148] sm:$0xff]
    %v84 = vld [vmem:[%s1 + $0x150] sm:$0xff]
    %v85 = vld [vmem:[%s1 + $0x158] sm:$0xff]
    %v86 = vld [vmem:[%s1 + $0x160] sm:$0xff]
    %v87 = vld [vmem:[%s1 + $0x168] sm:$0xff]
    %v88 = vld [vmem:[%s1 + $0x170] sm:$0xff]
    %v89 = vld [vmem:[%s1 + $0x178] sm:$0xff]
    %v90 = vld [vmem:[%s1 + $0x180] sm:$0xff]
    %v91 = vld [vmem:[%s1 + $0x188] sm:$0xff]
    %v92 = vld [vmem:[%s1 + $0x190] sm:$0xff]
    %v93 = vld [vmem:[%s1 + $0x198] sm:$0xff]
    %v94 = vld [vmem:[%s1 + $0x1a0] sm:$0xff]
    %v95 = vld [vmem:[%s1 + $0x1a8] sm:$0xff]
    %v96 = vld [vmem:[%s1 + $0x1b0] sm:$0xff]
    %v97 = vld [vmem:[%s1 + $0x1b8] sm:$0xff]
    %v98 = vld [vmem:[%s1 + $0x1c0] sm:$0xff]
    %v99 = vld [vmem:[%s1 + $0x1c8] sm:$0xff]
    %v100 = vld [vmem:[%s1 + $0x1d0] sm:$0xff]
    %v101 = vld [vmem:[%s1 + $0x1d8] sm:$0xff]
    %v102 = vld [vmem:[%s1 + $0x1e0] sm:$0xff]
    %v103 = vld [vmem:[%s1 + $0x1e8] sm:$0xff]
    %v104 = vld [vmem:[%s1 + $0x1f0] sm:$0xff]
    %v105 = vld [vmem:[%s1 + $0x1f8] sm:$0xff]
    %v106 = vld [vmem:[%s1 + $0x200] sm:$0xff]
    %v107 = vld [vmem:[%s1 + $0x208] sm:$0xff]
    %v108 = vld [vmem:[%s1 + $0x210] sm:$0xff]
    %v109 = vld [vmem:[%s1 + $0x218] sm:$0xff]
    %v110 = vld [vmem:[%s1 + $0x220] sm:$0xff]
    %v111 = vld [vmem:[%s1 + $0x228] sm:$0xff]
    %v112 = vld [vmem:[%s1 + $0x230] sm:$0xff]
    %v113 = vld [vmem:[%s1 + $0x238] sm:$0xff]
    %v114 = vld [vmem:[%s1 + $0x240] sm:$0xff]
    %v115 = vld [vmem:[%s1 + $0x248] sm:$0xff]
    %v116 = vld [vmem:[%s1 + $0x250] sm:$0xff]
    %v117 = vld [vmem:[%s1 + $0x258] sm:$0xff]
    %v118 = vld [vmem:[%s1 + $0x260] sm:$0xff]
    %v119 = vld [vmem:[%s1 + $0x268] sm:$0xff]
    %v120 = vld [vmem:[%s1 + $0x270] sm:$0xff]
    %v121 = vld [vmem:[%s1 + $0x278] sm:$0xff]
    %v122 = vld [vmem:[%s1 + $0x280] sm:$0xff]
    %v123 = vld [vmem:[%s1 + $0x288] sm:$0xff]
    %v124 = vld [vmem:[%s1 + $0x290] sm:$0xff]
    %v125 = vld [vmem:[%s1 + $0x298] sm:$0xff]
    %v126 = vld [vmem:[%s1 + $0x2a0] sm:$0xff]
    %v127 = vld [vmem:[%s1 + $0x2a8] sm:$0xff]
    %v128 = vld [vmem:[%s1 + $0x2b0] sm:$0xff]
    %v129 = vld [vmem:[%s1 + $0x2b8] sm:$0xff]
    %v130 = vld [vmem:[%s1 + $0x2c0] sm:$0xff]
    %v131 = vld [vmem:[%s1 + $0x2c8] sm:$0xff]
    %v132 = vld [vmem:[%s1 + $0x2d0] sm:$0xff]
    %v133 = vld [vmem:[%s1 + $0x2d8] sm:$0xff]
    %v134 = vld [vmem:[%s1 + $0x2e0] sm:$0xff]
    %v135 = vld [vmem:[%s1 + $0x2e8] sm:$0xff]
    %v136 = vld [vmem:[%s1 + $0x2f0] sm:$0xff]
    %v137 = vld [vmem:[%s1 + $0x2f8] sm:$0xff]
    %v138 = vld [vmem:[%s1 + $0x300] sm:$0xff]
    %v139 = vld [vmem:[%s1 + $0x308] sm:$0xff]
    %v140 = vld [vmem:[%s1 + $0x310] sm:$0xff]
    %v141 = vld [vmem:[%s1 + $0x318] sm:$0xff]
    %v142 = vld [vmem:[%s1 + $0x320] sm:$0xff]
    %v143 = vld [vmem:[%s1 + $0x328] sm:$0xff]
    %v144 = vld [vmem:[%s1 + $0x330] sm:$0xff]
    %v145 = vld [vmem:[%s1 + $0x338] sm:$0xff]
    %v146 = vld [vmem:[%s1 + $0x340] sm:$0xff]
    %v147 = vld [vmem:[%s1 + $0x348] sm:$0xff]
    %v148 = vld [vmem:[%s1 + $0x350] sm:$0xff]
    %v149 = vld [vmem:[%s1 + $0x358] sm:$0xff]
    %v150 = vld [vmem:[%s1 + $0x360] sm:$0xff]
    %v151 = vld [vmem:[%s1 + $0x368] sm:$0xff]
    %v152 = vld [vmem:[%s1 + $0x370] sm:$0xff]
    %v153 = vld [vmem:[%s1 + $0x378] sm:$0xff]
    %v154 = vld [vmem:[%s1 + $0x380] sm:$0xff]
    %v155 = vld [vmem:[%s1 + $0x388] sm:$0xff]
    %v156 = vld [vmem:[%s1 + $0x390] sm:$0xff]
    %v157 = vld [vmem:[%s1 + $0x398] sm:$0xff]
    %v158 = vld [vmem:[%s1 + $0x3a0] sm:$0xff]
    %v159 = vld [vmem:[%s1 + $0x3a8] sm:$0xff]
    %v160 = vld [vmem:[%s1 + $0x3b0] sm:$0xff]
    %v161 = vld [vmem:[%s1 + $0x3b8] sm:$0xff]
    %v162 = vld [vmem:[%s1 + $0x3c0] sm:$0xff]
    %v163 = vld [vmem:[%s1 + $0x3c8] sm:$0xff]
    %v164 = vld [vmem:[%s1 + $0x3d0] sm:$0xff]
    %v165 = vld [vmem:[%s1 + $0x3d8] sm:$0xff]
    %v166 = vld [vmem:[%s1 + $0x3e0] sm:$0xff]
    %v167 = vld [vmem:[%s1 + $0x3e8] sm:$0xff]
    %v168 = vld [vmem:[%s1 + $0x3f0] sm:$0xff]
    %v169 = vld [vmem:[%s1 + $0x3f8] sm:$0xff]
    %v170 = vld [vmem:[%s1 + $0x400] sm:$0xff]
    %v171 = vld [vmem:[%s1 + $0x408] sm:$0xff]
    %v172 = vld [vmem:[%s1 + $0x410] sm:$0xff]
    %v173 = vld [vmem:[%s1 + $0x418] sm:$0xff]
    %v174 = vld [vmem:[%s1 + $0x420] sm:$0xff]
    %v175 = vld [vmem:[%s1 + $0x428] sm:$0xff]
    %v176 = vld [vmem:[%s1 + $0x430] sm:$0xff]
    %v177 = vld [vmem:[%s1 + $0x438] sm:$0xff]
    %v178 = vld [vmem:[%s1 + $0x440] sm:$0xff]
    %v179 = vld [vmem:[%s1 + $0x448] sm:$0xff]
    %v180 = vld [vmem:[%s1 + $0x450] sm:$0xff]
    %v181 = vld [vmem:[%s1 + $0x458] sm:$0xff]
    %v182 = vld [vmem:[%s1 + $0x460] sm:$0xff]
    %v183 = vld [vmem:[%s1 + $0x468] sm:$0xff]
    %v184 = vld [vmem:[%s1 + $0x470] sm:$0xff]
    %v185 = vld [vmem:[%s1 + $0x478] sm:$0xff]
    %v186 = vld [vmem:[%s1 + $0x480] sm:$0xff]
    %v187 = vld [vmem:[%s1 + $0x488] sm:$0xff]
    %v188 = vld [vmem:[%s1 + $0x490] sm:$0xff]
    %v189 = vld [vmem:[%s1 + $0x498] sm:$0xff]
    %v190 = vld [vmem:[%s1 + $0x4a0] sm:$0xff]
    %v191 = vld [vmem:[%s1 + $0x4a8] sm:$0xff]
    %v192 = vld [vmem:[%s1 + $0x4b0] sm:$0xff]
    %v193 = vld [vmem:[%s1 + $0x4b8] sm:$0xff]
    %v194 = vld [vmem:[%s1 + $0x4c0] sm:$0xff]
    %v195 = vld [vmem:[%s1 + $0x4c8] sm:$0xff]
    %v196 = vld [vmem:[%s1 + $0x4d0] sm:$0xff]
    %v197 = vld [vmem:[%s1 + $0x4d8] sm:$0xff]
    %v198 = vld [vmem:[%s1 + $0x4e0] sm:$0xff]
    %v199 = vld [vmem:[%s1 + $0x4e8] sm:$0xff]
    %v200 = vld [vmem:[%s1 + $0x4f0] sm:$0xff]
    %v201 = vld [vmem:[%s1 + $0x4f8] sm:$0xff]
    %v202 = vld [vmem:[%s1 + $0x500] sm:$0xff]
    %v203 = vld [vmem:[%s1 + $0x508] sm:$0xff]
    %v204 = vld [vmem:[%s1 + $0x510] sm:$0xff]
    %v205 = vld [vmem:[%s1 + $0x518] sm:$0xff]
    %v206 = vld [vmem:[%s1 + $0x520] sm:$0xff]
    %v207 = vld [vmem:[%s1 + $0x528] sm:$0xff]
    %v208 = vld [vmem:[%s1 + $0x530] sm:$0xff]
    %v209 = vld [vmem:[%s1 + $0x538] sm:$0xff]
    %v210 = vld [vmem:[%s1 + $0x540] sm:$0xff]
    %v211 = vld [vmem:[%s1 + $0x548] sm:$0xff]
    %v212 = vld [vmem:[%s1 + $0x550] sm:$0xff]
    %v213 = vld [vmem:[%s1 + $0x558] sm:$0xff]
    %v214 = vld [vmem:[%s1 + $0x560] sm:$0xff]
    %v215 = vld [vmem:[%s1 + $0x568] sm:$0xff]
    %v216 = vld [vmem:[%s1 + $0x570] sm:$0xff]
    %v217 = vld [vmem:[%s1 + $0x578] sm:$0xff]
    %v218 = vld [vmem:[%s1 + $0x580] sm:$0xff]
    %v219 = vld [vmem:[%s1 + $0x588] sm:$0xff]
    %v220 = vld [vmem:[%s1 + $0x590] sm:$0xff]
    %v221 = vld [vmem:[%s1 + $0x598] sm:$0xff]
    %v222 = vld [vmem:[%s1 + $0x5a0] sm:$0xff]
    %v223 = vld [vmem:[%s1 + $0x5a8] sm:$0xff]
    %v224 = vld [vmem:[%s1 + $0x5b0] sm:$0xff]
    %v225 = vld [vmem:[%s1 + $0x5b8] sm:$0xff]
    %v226 = vld [vmem:[%s1 + $0x5c0] sm:$0xff]
    %v227 = vld [vmem:[%s1 + $0x5c8] sm:$0xff]
    %v228 = vld [vmem:[%s1 + $0x5d0] sm:$0xff]
    %v229 = vld [vmem:[%s1 + $0x5d8] sm:$0xff]
    %v230 = vld [vmem:[%s1 + $0x5e0] sm:$0xff]
    %v231 = vld [vmem:[%s1 + $0x5e8] sm:$0xff]
    %v232 = vld [vmem:[%s1 + $0x5f0] sm:$0xff]
    %v233 = vld [vmem:[%s1 + $0x5f8] sm:$0xff]
    %v234 = vld [vmem:[%s1 + $0x600] sm:$0xff]
    %v235 = vld [vmem:[%s1 + $0x608] sm:$0xff]
    %v236 = vld [vmem:[%s1 + $0x610] sm:$0xff]
    %v237 = vld [vmem:[%s1 + $0x618] sm:$0xff]
    %v238 = vld [vmem:[%s1 + $0x620] sm:$0xff]
    %v239 = vld [vmem:[%s1 + $0x628] sm:$0xff]
    %v240 = vld [vmem:[%s1 + $0x630] sm:$0xff]
    %v241 = vld [vmem:[%s1 + $0x638] sm:$0xff]
    %v242 = vld [vmem:[%s1 + $0x640] sm:$0xff]
    %v243 = vld [vmem:[%s1 + $0x648] sm:$0xff]
    %v244 = vld [vmem:[%s1 + $0x650] sm:$0xff]
    %v245 = vld [vmem:[%s1 + $0x658] sm:$0xff]
    %v246 = vld [vmem:[%s1 + $0x660] sm:$0xff]
    %v247 = vld [vmem:[%s1 + $0x668] sm:$0xff]
    %v248 = vld [vmem:[%s1 + $0x670] sm:$0xff]
    %v249 = vld [vmem:[%s1 + $0x678] sm:$0xff]
    %v250 = vld [vmem:[%s1 + $0x680] sm:$0xff]
    %v251 = vld [vmem:[%s1 + $0x688] sm:$0xff]
    %v252 = vld [vmem:[%s1 + $0x690] sm:$0xff]
    %v253 = vld [vmem:[%s1 + $0x698] sm:$0xff]
    %v254 = vld [vmem:[%s1 + $0x6a0] sm:$0xff]
    %v255 = vld [vmem:[%s1 + $0x6a8] sm:$0xff]
    %v256 = vld [vmem:[%s1 + $0x6b0] sm:$0xff]
    %v257 = vld [vmem:[%s1 + $0x6b8] sm:$0xff]
    %v258 = vld [vmem:[%s1 + $0x6c0] sm:$0xff]
    %v259 = vld [vmem:[%s1 + $0x6c8] sm:$0xff]
    %v260 = vld [vmem:[%s1 + $0x6d0] sm:$0xff]
    %v261 = vld [vmem:[%s1 + $0x6d8] sm:$0xff]
    %v262 = vld [vmem:[%s1 + $0x6e0] sm:$0xff]
    %v263 = vld [vmem:[%s1 + $0x6e8] sm:$0xff]
    %v264 = vld [vmem:[%s1 + $0x6f0] sm:$0xff]
    %v265 = vld [vmem:[%s1 + $0x6f8] sm:$0xff]
    %v266 = vld [vmem:[%s1 + $0x700] sm:$0xff]
    %v267 = vld [vmem:[%s1 + $0x708] sm:$0xff]
    %v268 = vld [vmem:[%s1 + $0x710] sm:$0xff]
    %v269 = vld [vmem:[%s1 + $0x718] sm:$0xff]
    %v270 = vld [vmem:[%s1 + $0x720] sm:$0xff]
    %v271 = vld [vmem:[%s1 + $0x728] sm:$0xff]
    %v272 = vld [vmem:[%s1 + $0x730] sm:$0xff]
    %v273 = vld [vmem:[%s1 + $0x738] sm:$0xff]
    %v274 = vld [vmem:[%s1 + $0x740] sm:$0xff]
    %v275 = vld [vmem:[%s1 + $0x748] sm:$0xff]
    %v276 = vld [vmem:[%s1 + $0x750] sm:$0xff]
    %v277 = vld [vmem:[%s1 + $0x758] sm:$0xff]
    %v278 = vld [vmem:[%s1 + $0x760] sm:$0xff]
    %v279 = vld [vmem:[%s1 + $0x768] sm:$0xff]
    %v280 = vld [vmem:[%s1 + $0x770] sm:$0xff]
    %v281 = vld [vmem:[%s1 + $0x778] sm:$0xff]
    %v282 = vld [vmem:[%s1 + $0x780] sm:$0xff]
    %v283 = vld [vmem:[%s1 + $0x788] sm:$0xff]
    %v284 = vld [vmem:[%s1 + $0x790] sm:$0xff]
    %v285 = vld [vmem:[%s1 + $0x798] sm:$0xff]
    %v286 = vld [vmem:[%s1 + $0x7a0] sm:$0xff]
    %v287 = vld [vmem:[%s1 + $0x7a8] sm:$0xff]
    %v288 = vld [vmem:[%s1 + $0x7b0] sm:$0xff]
    %v289 = vld [vmem:[%s1 + $0x7b8] sm:$0xff]
    %v290 = vld [vmem:[%s1 + $0x7c0] sm:$0xff]
    %v291 = vld [vmem:[%s1 + $0x7c8] sm:$0xff]
    %v292 = vld [vmem:[%s1 + $0x7d0] sm:$0xff]
    %v293 = vld [vmem:[%s1 + $0x7d8] sm:$0xff]
    %v294 = vld [vmem:[%s1 + $0x7e0] sm:$0xff]
    %v295 = vld [vmem:[%s1 + $0x7e8] sm:$0xff]
    %v296 = vld [vmem:[%s1 + $0x7f0] sm:$0xff]
    %v297 = vld [vmem:[%s1 + $0x7f8] sm:$0xff]
    %v298 = vld [vmem:[%s1 + $0x800] sm:$0xff]
    %v299 = vld [vmem:[%s1 + $0x808] sm:$0xff]
    %v300 = vld [vmem:[%s1 + $0x810] sm:$0xff]
    %v301 = vld [vmem:[%s1 + $0x818] sm:$0xff]
    %v302 = vld [vmem:[%s1 + $0x820] sm:$0xff]
    %v303 = vld [vmem:[%s1 + $0x828] sm:$0xff]
    %v304 = vld [vmem:[%s1 + $0x830] sm:$0xff]
    %v305 = vld [vmem:[%s1 + $0x838] sm:$0xff]
    %v306 = vld [vmem:[%s1 + $0x840] sm:$0xff]
    %v307 = vld [vmem:[%s1 + $0x848] sm:$0xff]
    %v308 = vld [vmem:[%s1 + $0x850] sm:$0xff]
    %v309 = vld [vmem:[%s1 + $0x858] sm:$0xff]
    %v310 = vld [vmem:[%s1 + $0x860] sm:$0xff]
    %v311 = vld [vmem:[%s1 + $0x868] sm:$0xff]
    %v312 = vld [vmem:[%s1 + $0x870] sm:$0xff]
    %v313 = vld [vmem:[%s1 + $0x878] sm:$0xff]
    %v314 = vld [vmem:[%s1 + $0x880] sm:$0xff]
    %v315 = vld [vmem:[%s1 + $0x888] sm:$0xff]
    %v316 = vld [vmem:[%s1 + $0x890] sm:$0xff]
    %v317 = vld [vmem:[%s1 + $0x898] sm:$0xff]
    %v318 = vld [vmem:[%s1 + $0x8a0] sm:$0xff]
    %v319 = vld [vmem:[%s1 + $0x8a8] sm:$0xff]
    %v320 = vld [vmem:[%s1 + $0x8b0] sm:$0xff]
    %v321 = vld [vmem:[%s1 + $0x8b8] sm:$0xff]
    %v322 = vld [vmem:[%s1 + $0x8c0] sm:$0xff]
    %v323 = vld [vmem:[%s1 + $0x8c8] sm:$0xff]
    %v324 = vld [vmem:[%s1 + $0x8d0] sm:$0xff]
    %v325 = vld [vmem:[%s1 + $0x8d8] sm:$0xff]
    %v326 = vld [vmem:[%s1 + $0x8e0] sm:$0xff]
    %v327 = vld [vmem:[%s1 + $0x8e8] sm:$0xff]
    %v328 = vld [vmem:[%s1 + $0x8f0] sm:$0xff]
    %v329 = vld [vmem:[%s1 + $0x8f8] sm:$0xff]
    %v330 = vld [vmem:[%s1 + $0x900] sm:$0xff]
    %v331 = vld [vmem:[%s1 + $0x908] sm:$0xff]
    %v332 = vld [vmem:[%s1 + $0x910] sm:$0xff]
    %v333 = vld [vmem:[%s1 + $0x918] sm:$0xff]
    %v334 = vld [vmem:[%s1 + $0x920] sm:$0xff]
    %v335 = vld [vmem:[%s1 + $0x928] sm:$0xff]
    %v336 = vld [vmem:[%s1 + $0x930] sm:$0xff]
    %v337 = vld [vmem:[%s1 + $0x938] sm:$0xff]
    %v338 = vld [vmem:[%s1 + $0x940] sm:$0xff]
    %v339 = vld [vmem:[%s1 + $0x948] sm:$0xff]
    %v340 = vld [vmem:[%s1 + $0x950] sm:$0xff]
    %v341 = vld [vmem:[%s1 + $0x958] sm:$0xff]
    %v342 = vld [vmem:[%s1 + $0x960] sm:$0xff]
    %v343 = vld [vmem:[%s1 + $0x968] sm:$0xff]
    %v344 = vld [vmem:[%s1 + $0x970] sm:$0xff]
    %v345 = vld [vmem:[%s1 + $0x978] sm:$0xff]
    %v346 = vld [vmem:[%s1 + $0x980] sm:$0xff]
    %v347 = vld [vmem:[%s1 + $0x988] sm:$0xff]
    %v348 = vld [vmem:[%s1 + $0x990] sm:$0xff]
    %v349 = vld [vmem:[%s1 + $0x998] sm:$0xff]
    %v350 = vld [vmem:[%s1 + $0x9a0] sm:$0xff]
    %v351 = vld [vmem:[%s1 + $0x9a8] sm:$0xff]
    %v352 = vld [vmem:[%s1 + $0x9b0] sm:$0xff]
    %v353 = vld [vmem:[%s1 + $0x9b8] sm:$0xff]
    %v354 = vld [vmem:[%s1 + $0x9c0] sm:$0xff]
    %v355 = vld [vmem:[%s1 + $0x9c8] sm:$0xff]
    %v356 = vld [vmem:[%s1 + $0x9d0] sm:$0xff]
    %v357 = vld [vmem:[%s1 + $0x9d8] sm:$0xff]
    %v358 = vld [vmem:[%s1 + $0x9e0] sm:$0xff]
    %v359 = vld [vmem:[%s1 + $0x9e8] sm:$0xff]
    %v360 = vld [vmem:[%s1 + $0x9f0] sm:$0xff]
    %v361 = vld [vmem:[%s1 + $0x9f8] sm:$0xff]
    %v362 = vld [vmem:[%s1 + $0xa00] sm:$0xff]
    %v363 = vld [vmem:[%s1 + $0xa08] sm:$0xff]
    %v364 = vld [vmem:[%s1 + $0xa10] sm:$0xff]
    %v365 = vld [vmem:[%s1 + $0xa18] sm:$0xff]
    %v366 = vld [vmem:[%s1 + $0xa20] sm:$0xff]
    %v367 = vld [vmem:[%s1 + $0xa28] sm:$0xff]
    %v368 = vld [vmem:[%s1 + $0xa30] sm:$0xff]
    %v369 = vld [vmem:[%s1 + $0xa38] sm:$0xff]
    %v370 = vld [vmem:[%s1 + $0xa40] sm:$0xff]
    %v371 = vld [vmem:[%s1 + $0xa48] sm:$0xff]
    %v372 = vld [vmem:[%s1 + $0xa50] sm:$0xff]
    %v373 = vld [vmem:[%s1 + $0xa58] sm:$0xff]
    %v374 = vld [vmem:[%s1 + $0xa60] sm:$0xff]
    %v375 = vld [vmem:[%s1 + $0xa68] sm:$0xff]
    %v376 = vld [vmem:[%s1 + $0xa70] sm:$0xff]
    %v377 = vld [vmem:[%s1 + $0xa78] sm:$0xff]
    %v378 = vld [vmem:[%s1 + $0xa80] sm:$0xff]
    %v379 = vld [vmem:[%s1 + $0xa88] sm:$0xff]
    %v380 = vld [vmem:[%s1 + $0xa90] sm:$0xff]
    %v381 = vld [vmem:[%s1 + $0xa98] sm:$0xff]
    %v382 = vld [vmem:[%s1 + $0xaa0] sm:$0xff]
    %v383 = vld [vmem:[%s1 + $0xaa8] sm:$0xff]
    %v384 = vld [vmem:[%s1 + $0xab0] sm:$0xff]
    %v385 = vld [vmem:[%s1 + $0xab8] sm:$0xff]
    %v386 = vld [vmem:[%s1 + $0xac0] sm:$0xff]
    %v387 = vld [vmem:[%s1 + $0xac8] sm:$0xff]
    %v388 = vld [vmem:[%s1 + $0xad0] sm:$0xff]
    %v389 = vld [vmem:[%s1 + $0xad8] sm:$0xff]
    %v390 = vld [vmem:[%s1 + $0xae0] sm:$0xff]
    %v391 = vld [vmem:[%s1 + $0xae8] sm:$0xff]
    %v392 = vld [vmem:[%s1 + $0xaf0] sm:$0xff]
    %v393 = vld [vmem:[%s1 + $0xaf8] sm:$0xff]
    %v394 = vld [vmem:[%s1 + $0xb00] sm:$0xff]
    %v395 = vld [vmem:[%s1 + $0xb08] sm:$0xff]
    %v396 = vld [vmem:[%s1 + $0xb10] sm:$0xff]
    %v397 = vld [vmem:[%s1 + $0xb18] sm:$0xff]
    %v398 = vld [vmem:[%s1 + $0xb20] sm:$0xff]
    %v399 = vld [vmem:[%s1 + $0xb28] sm:$0xff]
    %v400 = vld [vmem:[%s1 + $0xb30] sm:$0xff]
    %v401 = vld [vmem:[%s1 + $0xb38] sm:$0xff]
    %v402 = vld [vmem:[%s1 + $0xb40] sm:$0xff]
    %v403 = vld [vmem:[%s1 + $0xb48] sm:$0xff]
    %v404 = vld [vmem:[%s1 + $0xb50] sm:$0xff]
    %v405 = vld [vmem:[%s1 + $0xb58] sm:$0xff]
    %v406 = vld [vmem:[%s1 + $0xb60] sm:$0xff]
    %v407 = vld [vmem:[%s1 + $0xb68] sm:$0xff]
    %v408 = vld [vmem:[%s1 + $0xb70] sm:$0xff]
    %v409 = vld [vmem:[%s1 + $0xb78] sm:$0xff]
    %v410 = vld [vmem:[%s1 + $0xb80] sm:$0xff]
    %v411 = vld [vmem:[%s1 + $0xb88] sm:$0xff]
    %v412 = vld [vmem:[%s1 + $0xb90] sm:$0xff]
    %v413 = vld [vmem:[%s1 + $0xb98] sm:$0xff]
    %v414 = vld [vmem:[%s1 + $0xba0] sm:$0xff]
    %v415 = vld [vmem:[%s1 + $0xba8] sm:$0xff]
    %v416 = vld [vmem:[%s1 + $0xbb0] sm:$0xff]
    %v417 = vld [vmem:[%s1 + $0xbb8] sm:$0xff]
    %v418 = vld [vmem:[%s1 + $0xbc0] sm:$0xff]
    %v419 = vld [vmem:[%s1 + $0xbc8] sm:$0xff]
    %v420 = vld [vmem:[%s1 + $0xbd0] sm:$0xff]
    %v421 = vld [vmem:[%s1 + $0xbd8] sm:$0xff]
    %v422 = vld [vmem:[%s1 + $0xbe0] sm:$0xff]
    %v423 = vld [vmem:[%s1 + $0xbe8] sm:$0xff]
    %v424 = vld [vmem:[%s1 + $0xbf0] sm:$0xff]
    %v425 = vld [vmem:[%s1 + $0xbf8] sm:$0xff]
    %v426 = vld [vmem:[%s1 + $0xc00] sm:$0xff]
    %v427 = vld [vmem:[%s1 + $0xc08] sm:$0xff]
    %v428 = vld [vmem:[%s1 + $0xc10] sm:$0xff]
    %v429 = vld [vmem:[%s1 + $0xc18] sm:$0xff]
    %v430 = vld [vmem:[%s1 + $0xc20] sm:$0xff]
    %v431 = vld [vmem:[%s1 + $0xc28] sm:$0xff]
    %v432 = vld [vmem:[%s1 + $0xc30] sm:$0xff]
    %v433 = vld [vmem:[%s1 + $0xc38] sm:$0xff]
    %v434 = vld [vmem:[%s1 + $0xc40] sm:$0xff]
    %v435 = vld [vmem:[%s1 + $0xc48] sm:$0xff]
    %v436 = vld [vmem:[%s1 + $0xc50] sm:$0xff]
    %v437 = vld [vmem:[%s1 + $0xc58] sm:$0xff]
    %v438 = vld [vmem:[%s1 + $0xc60] sm:$0xff]
    %v439 = vld [vmem:[%s1 + $0xc68] sm:$0xff]
    %v440 = vld [vmem:[%s1 + $0xc70] sm:$0xff]
    %v441 = vld [vmem:[%s1 + $0xc78] sm:$0xff]
    %v442 = vld [vmem:[%s1 + $0xc80] sm:$0xff]
    %v443 = vld [vmem:[%s1 + $0xc88] sm:$0xff]
    %v444 = vld [vmem:[%s1 + $0xc90] sm:$0xff]
    %v445 = vld [vmem:[%s1 + $0xc98] sm:$0xff]
    %v446 = vld [vmem:[%s1 + $0xca0] sm:$0xff]
    %v447 = vld [vmem:[%s1 + $0xca8] sm:$0xff]
    %v448 = vld [vmem:[%s1 + $0xcb0] sm:$0xff]
    %v449 = vld [vmem:[%s1 + $0xcb8] sm:$0xff]
    %v450 = vld [vmem:[%s1 + $0xcc0] sm:$0xff]
    %v451 = vld [vmem:[%s1 + $0xcc8] sm:$0xff]
    %v452 = vld [vmem:[%s1 + $0xcd0] sm:$0xff]
    %v453 = vld [vmem:[%s1 + $0xcd8] sm:$0xff]
    %v454 = vld [vmem:[%s1 + $0xce0] sm:$0xff]
    %v455 = vld [vmem:[%s1 + $0xce8] sm:$0xff]
    %v456 = vld [vmem:[%s1 + $0xcf0] sm:$0xff]
    %v457 = vld [vmem:[%s1 + $0xcf8] sm:$0xff]
    %v458 = vld [vmem:[%s1 + $0xd00] sm:$0xff]
    %v459 = vld [vmem:[%s1 + $0xd08] sm:$0xff]
    %v460 = vld [vmem:[%s1 + $0xd10] sm:$0xff]
    %v461 = vld [vmem:[%s1 + $0xd18] sm:$0xff]
    %v462 = vld [vmem:[%s1 + $0xd20] sm:$0xff]
    %v463 = vld [vmem:[%s1 + $0xd28] sm:$0xff]
    %v464 = vld [vmem:[%s1 + $0xd30] sm:$0xff]
    %v465 = vld [vmem:[%s1 + $0xd38] sm:$0xff]
    %v466 = vld [vmem:[%s1 + $0xd40] sm:$0xff]
    %v467 = vld [vmem:[%s1 + $0xd48] sm:$0xff]
    %v468 = vld [vmem:[%s1 + $0xd50] sm:$0xff]
    %v469 = vld [vmem:[%s1 + $0xd58] sm:$0xff]
    %v470 = vld [vmem:[%s1 + $0xd60] sm:$0xff]
    %v471 = vld [vmem:[%s1 + $0xd68] sm:$0xff]
    %v472 = vld [vmem:[%s1 + $0xd70] sm:$0xff]
    %v473 = vld [vmem:[%s1 + $0xd78] sm:$0xff]
    %v474 = vld [vmem:[%s1 + $0xd80] sm:$0xff]
    %v475 = vld [vmem:[%s1 + $0xd88] sm:$0xff]
    %v476 = vld [vmem:[%s1 + $0xd90] sm:$0xff]
    %v477 = vld [vmem:[%s1 + $0xd98] sm:$0xff]
    %v478 = vld [vmem:[%s1 + $0xda0] sm:$0xff]
    %v479 = vld [vmem:[%s1 + $0xda8] sm:$0xff]
    %v480 = vld [vmem:[%s1 + $0xdb0] sm:$0xff]
    %v481 = vld [vmem:[%s1 + $0xdb8] sm:$0xff]
    %v482 = vld [vmem:[%s1 + $0xdc0] sm:$0xff]
    %v483 = vld [vmem:[%s1 + $0xdc8] sm:$0xff]
    %v484 = vld [vmem:[%s1 + $0xdd0] sm:$0xff]
    %v485 = vld [vmem:[%s1 + $0xdd8] sm:$0xff]
    %v486 = vld [vmem:[%s1 + $0xde0] sm:$0xff]
    %v487 = vld [vmem:[%s1 + $0xde8] sm:$0xff]
    %v488 = vld [vmem:[%s1 + $0xdf0] sm:$0xff]
    %v489 = vld [vmem:[%s1 + $0xdf8] sm:$0xff]
    %v490 = vld [vmem:[%s1 + $0xe00] sm:$0xff]
    %v491 = vld [vmem:[%s1 + $0xe08] sm:$0xff]
    %v492 = vld [vmem:[%s1 + $0xe10] sm:$0xff]
    %v493 = vld [vmem:[%s1 + $0xe18] sm:$0xff]
    %v494 = vld [vmem:[%s1 + $0xe20] sm:$0xff]
    %v495 = vld [vmem:[%s1 + $0xe28] sm:$0xff]
    %v496 = vld [vmem:[%s1 + $0xe30] sm:$0xff]
    %v497 = vld [vmem:[%s1 + $0xe38] sm:$0xff]
    %v498 = vld [vmem:[%s1 + $0xe40] sm:$0xff]
    %v499 = vld [vmem:[%s1 + $0xe48] sm:$0xff]
    %v500 = vld [vmem:[%s1 + $0xe50] sm:$0xff]
    %v501 = vld [vmem:[%s1 + $0xe58] sm:$0xff]
    %v502 = vld [vmem:[%s1 + $0xe60] sm:$0xff]
    %v503 = vld [vmem:[%s1 + $0xe68] sm:$0xff]
    %v504 = vld [vmem:[%s1 + $0xe70] sm:$0xff]
    %v505 = vld [vmem:[%s1 + $0xe78] sm:$0xff]
    %v506 = vld [vmem:[%s1 + $0xe80] sm:$0xff]
    %v507 = vld [vmem:[%s1 + $0xe88] sm:$0xff]
    %v508 = vld [vmem:[%s1 + $0xe90] sm:$0xff]
    %v509 = vld [vmem:[%s1 + $0xe98] sm:$0xff]
    %v510 = vld [vmem:[%s1 + $0xea0] sm:$0xff]
    %v511 = vld [vmem:[%s1 + $0xea8] sm:$0xff]
    %v512 = vld [vmem:[%s1 + $0xeb0] sm:$0xff]
    %v513 = vld [vmem:[%s1 + $0xeb8] sm:$0xff]
    %v514 = vld [vmem:[%s1 + $0xec0] sm:$0xff]
    %v515 = vld [vmem:[%s1 + $0xec8] sm:$0xff]
    %v516 = vld [vmem:[%s1 + $0xed0] sm:$0xff]
    %v517 = vld [vmem:[%s1 + $0xed8] sm:$0xff]
    %v518 = vld [vmem:[%s1 + $0xee0] sm:$0xff]
    %v519 = vld [vmem:[%s1 + $0xee8] sm:$0xff]
    %v520 = vld [vmem:[%s1 + $0xef0] sm:$0xff]
    %v521 = vld [vmem:[%s1 + $0xef8] sm:$0xff]
    %v522 = vld [vmem:[%s1 + $0xf00] sm:$0xff]
    %v523 = vld [vmem:[%s1 + $0xf08] sm:$0xff]
    %v524 = vld [vmem:[%s1 + $0xf10] sm:$0xff]
    %v525 = vld [vmem:[%s1 + $0xf18] sm:$0xff]
    %v526 = vld [vmem:[%s1 + $0xf20] sm:$0xff]
    %v527 = vld [vmem:[%s1 + $0xf28] sm:$0xff]
    %v528 = vld [vmem:[%s1 + $0xf30] sm:$0xff]
    %v529 = vld [vmem:[%s1 + $0xf38] sm:$0xff]
    %v530 = vld [vmem:[%s1 + $0xf40] sm:$0xff]
    %v531 = vld [vmem:[%s1 + $0xf48] sm:$0xff]
    %v532 = vld [vmem:[%s1 + $0xf50] sm:$0xff]
    %v533 = vld [vmem:[%s1 + $0xf58] sm:$0xff]
    %v534 = vld [vmem:[%s1 + $0xf60] sm:$0xff]
    %v535 = vld [vmem:[%s1 + $0xf68] sm:$0xff]
    %v536 = vld [vmem:[%s1 + $0xf70] sm:$0xff]
    %v537 = vld [vmem:[%s1 + $0xf78] sm:$0xff]
    %v538 = vld [vmem:[%s1 + $0xf80] sm:$0xff]
    %v539 = vld [vmem:[%s1 + $0xf88] sm:$0xff]
    %v540 = vld [vmem:[%s1 + $0xf90] sm:$0xff]
    %v541 = vld [vmem:[%s1 + $0xf98] sm:$0xff]
    %v542 = vld [vmem:[%s1 + $0xfa0] sm:$0xff]
    %v543 = vld [vmem:[%s1 + $0xfa8] sm:$0xff]
    %v544 = vld [vmem:[%s1 + $0xfb0] sm:$0xff]
    %v545 = vld [vmem:[%s1 + $0xfb8] sm:$0xff]
    %v546 = vld [vmem:[%s1 + $0xfc0] sm:$0xff]
    %v547 = vld [vmem:[%s1 + $0xfc8] sm:$0xff]
    %v548 = vld [vmem:[%s1 + $0xfd0] sm:$0xff]
    %v549 = vld [vmem:[%s1 + $0xfd8] sm:$0xff]
    %v550 = vld [vmem:[%s1 + $0xfe0] sm:$0xff]
    %v551 = vld [vmem:[%s1 + $0xfe8] sm:$0xff]
    %v552 = vld [vmem:[%s1 + $0xff0] sm:$0xff]
    %v553 = vld [vmem:[%s1 + $0xff8] sm:$0xff]
    %v554 = vld [vmem:[%s1 + $0x1000] sm:$0xff]
    %v555 = vld [vmem:[%s1 + $0x1008] sm:$0xff]
    %v556 = vld [vmem:[%s1 + $0x1010] sm:$0xff]
    %v557 = vld [vmem:[%s1 + $0x1018] sm:$0xff]
    %v558 = vld [vmem:[%s1 + $0x1020] sm:$0xff]
    %v559 = vld [vmem:[%s1 + $0x1028] sm:$0xff]
    %v560 = vld [vmem:[%s1 + $0x1030] sm:$0xff]
    %v561 = vld [vmem:[%s1 + $0x1038] sm:$0xff]
    %v562 = vld [vmem:[%s1 + $0x1040] sm:$0xff]
    %v563 = vld [vmem:[%s1 + $0x1048] sm:$0xff]
    %v564 = vld [vmem:[%s1 + $0x1050] sm:$0xff]
    %v565 = vld [vmem:[%s1 + $0x1058] sm:$0xff]
    %v566 = vld [vmem:[%s1 + $0x1060] sm:$0xff]
    %v567 = vld [vmem:[%s1 + $0x1068] sm:$0xff]
    %v568 = vld [vmem:[%s1 + $0x1070] sm:$0xff]
    %v569 = vld [vmem:[%s1 + $0x1078] sm:$0xff]
    %v570 = vld [vmem:[%s1 + $0x1080] sm:$0xff]
    %v571 = vld [vmem:[%s1 + $0x1088] sm:$0xff]
    %v572 = vld [vmem:[%s1 + $0x1090] sm:$0xff]
    %v573 = vld [vmem:[%s1 + $0x1098] sm:$0xff]
    %v574 = vld [vmem:[%s1 + $0x10a0] sm:$0xff]
    %v575 = vld [vmem:[%s1 + $0x10a8] sm:$0xff]
    %v576 = vld [vmem:[%s1 + $0x10b0] sm:$0xff]
    %v577 = vld [vmem:[%s1 + $0x10b8] sm:$0xff]
    %v578 = vld [vmem:[%s1 + $0x10c0] sm:$0xff]
    %v579 = vld [vmem:[%s1 + $0x10c8] sm:$0xff]
    %v580 = vld [vmem:[%s1 + $0x10d0] sm:$0xff]
    %v581 = vld [vmem:[%s1 + $0x10d8] sm:$0xff]
    %v582 = vld [vmem:[%s1 + $0x10e0] sm:$0xff]
    %v583 = vld [vmem:[%s1 + $0x10e8] sm:$0xff]
    %v584 = vld [vmem:[%s1 + $0x10f0] sm:$0xff]
    %v585 = vld [vmem:[%s1 + $0x10f8] sm:$0xff]
    %v586 = vld [vmem:[%s1 + $0x1100] sm:$0xff]
    %v587 = vld [vmem:[%s1 + $0x1108] sm:$0xff]
    %v588 = vld [vmem:[%s1 + $0x1110] sm:$0xff]
    %v589 = vld [vmem:[%s1 + $0x1118] sm:$0xff]
    %v590 = vld [vmem:[%s1 + $0x1120] sm:$0xff]
    %v591 = vld [vmem:[%s1 + $0x1128] sm:$0xff]
    %v592 = vld [vmem:[%s1 + $0x1130] sm:$0xff]
    %v593 = vld [vmem:[%s1 + $0x1138] sm:$0xff]
    %v594 = vld [vmem:[%s1 + $0x1140] sm:$0xff]
    %v595 = vld [vmem:[%s1 + $0x1148] sm:$0xff]
    %v596 = vld [vmem:[%s1 + $0x1150] sm:$0xff]
    %v597 = vld [vmem:[%s1 + $0x1158] sm:$0xff]
    %v598 = vld [vmem:[%s1 + $0x1160] sm:$0xff]
    %v599 = vld [vmem:[%s1 + $0x1168] sm:$0xff]
    %v600 = vld [vmem:[%s1 + $0x1170] sm:$0xff]
    %v601 = vld [vmem:[%s1 + $0x1178] sm:$0xff]
    %v602 = vld [vmem:[%s1 + $0x1180] sm:$0xff]
    %v603 = vld [vmem:[%s1 + $0x1188] sm:$0xff]
    %v604 = vld [vmem:[%s1 + $0x1190] sm:$0xff]
    %v605 = vld [vmem:[%s1 + $0x1198] sm:$0xff]
    %v606 = vld [vmem:[%s1 + $0x11a0] sm:$0xff]
    %v607 = vld [vmem:[%s1 + $0x11a8] sm:$0xff]
    %v608 = vld [vmem:[%s1 + $0x11b0] sm:$0xff]
    %v609 = vld [vmem:[%s1 + $0x11b8] sm:$0xff]
    %v610 = vld [vmem:[%s1 + $0x11c0] sm:$0xff]
    %v611 = vld [vmem:[%s1 + $0x11c8] sm:$0xff]
    %v612 = vld [vmem:[%s1 + $0x11d0] sm:$0xff]
    %v613 = vld [vmem:[%s1 + $0x11d8] sm:$0xff]
    %v614 = vld [vmem:[%s1 + $0x11e0] sm:$0xff]
    %v615 = vld [vmem:[%s1 + $0x11e8] sm:$0xff]
    %v616 = vld [vmem:[%s1 + $0x11f0] sm:$0xff]
    %v617 = vld [vmem:[%s1 + $0x11f8] sm:$0xff]
    %v618 = vld [vmem:[%s1 + $0x1200] sm:$0xff]
    %v619 = vld [vmem:[%s1 + $0x1208] sm:$0xff]
    %v620 = vld [vmem:[%s1 + $0x1210] sm:$0xff]
    %v621 = vld [vmem:[%s1 + $0x1218] sm:$0xff]
    %v622 = vld [vmem:[%s1 + $0x1220] sm:$0xff]
    %v623 = vld [vmem:[%s1 + $0x1228] sm:$0xff]
    %v624 = vld [vmem:[%s1 + $0x1230] sm:$0xff]
    %v625 = vld [vmem:[%s1 + $0x1238] sm:$0xff]
    %v626 = vld [vmem:[%s1 + $0x1240] sm:$0xff]
    %v627 = vld [vmem:[%s1 + $0x1248] sm:$0xff]
    %v628 = vld [vmem:[%s1 + $0x1250] sm:$0xff]
    %v629 = vld [vmem:[%s1 + $0x1258] sm:$0xff]
    %v630 = vld [vmem:[%s1 + $0x1260] sm:$0xff]
    %v631 = vld [vmem:[%s1 + $0x1268] sm:$0xff]
    %v632 = vld [vmem:[%s1 + $0x1270] sm:$0xff]
    %v633 = vld [vmem:[%s1 + $0x1278] sm:$0xff]
    %v634 = vld [vmem:[%s1 + $0x1280] sm:$0xff]
    %v635 = vld [vmem:[%s1 + $0x1288] sm:$0xff]
    %v636 = vld [vmem:[%s1 + $0x1290] sm:$0xff]
    %v637 = vld [vmem:[%s1 + $0x1298] sm:$0xff]
    %v638 = vld [vmem:[%s1 + $0x12a0] sm:$0xff]
    %v639 = vld [vmem:[%s1 + $0x12a8] sm:$0xff]
    %v640 = vld [vmem:[%s1 + $0x12b0] sm:$0xff]
    %v641 = vld [vmem:[%s1 + $0x12b8] sm:$0xff]
    %v642 = vld [vmem:[%s1 + $0x12c0] sm:$0xff]
    %v643 = vld [vmem:[%s1 + $0x12c8] sm:$0xff]
    %v644 = vld [vmem:[%s1 + $0x12d0] sm:$0xff]
    %v645 = vld [vmem:[%s1 + $0x12d8] sm:$0xff]
    %v646 = vld [vmem:[%s1 + $0x12e0] sm:$0xff]
    %v647 = vld [vmem:[%s1 + $0x12e8] sm:$0xff]
    %v648 = vld [vmem:[%s1 + $0x12f0] sm:$0xff]
    %v649 = vld [vmem:[%s1 + $0x12f8] sm:$0xff]
    %v650 = vld [vmem:[%s1 + $0x1300] sm:$0xff]
    %v651 = vld [vmem:[%s1 + $0x1308] sm:$0xff]
    %v652 = vld [vmem:[%s1 + $0x1310] sm:$0xff]
    %v653 = vld [vmem:[%s1 + $0x1318] sm:$0xff]
    %v654 = vld [vmem:[%s1 + $0x1320] sm:$0xff]
    %v655 = vld [vmem:[%s1 + $0x1328] sm:$0xff]
    %v656 = vld [vmem:[%s1 + $0x1330] sm:$0xff]
    %v657 = vld [vmem:[%s1 + $0x1338] sm:$0xff]
    %v658 = vld [vmem:[%s1 + $0x1340] sm:$0xff]
    %v659 = vld [vmem:[%s1 + $0x1348] sm:$0xff]
    %v660 = vld [vmem:[%s1 + $0x1350] sm:$0xff]
    %v661 = vld [vmem:[%s1 + $0x1358] sm:$0xff]
    %v662 = vld [vmem:[%s1 + $0x1360] sm:$0xff]
    %v663 = vld [vmem:[%s1 + $0x1368] sm:$0xff]
    %v664 = vld [vmem:[%s1 + $0x1370] sm:$0xff]
    %v665 = vld [vmem:[%s1 + $0x1378] sm:$0xff]
    %v666 = vld [vmem:[%s1 + $0x1380] sm:$0xff]
    %v667 = vld [vmem:[%s1 + $0x1388] sm:$0xff]
    %v668 = vld [vmem:[%s1 + $0x1390] sm:$0xff]
    %v669 = vld [vmem:[%s1 + $0x1398] sm:$0xff]
    %v670 = vld [vmem:[%s1 + $0x13a0] sm:$0xff]
    %v671 = vld [vmem:[%s1 + $0x13a8] sm:$0xff]
    %v672 = vld [vmem:[%s1 + $0x13b0] sm:$0xff]
    %v673 = vld [vmem:[%s1 + $0x13b8] sm:$0xff]
    %v674 = vld [vmem:[%s1 + $0x13c0] sm:$0xff]
    %v675 = vld [vmem:[%s1 + $0x13c8] sm:$0xff]
    %v676 = vld [vmem:[%s1 + $0x13d0] sm:$0xff]
    %v677 = vld [vmem:[%s1 + $0x13d8] sm:$0xff]
    %v678 = vld [vmem:[%s1 + $0x13e0] sm:$0xff]
    %v679 = vld [vmem:[%s1 + $0x13e8] sm:$0xff]
    %v680 = vld [vmem:[%s1 + $0x13f0] sm:$0xff]
    %v681 = vld [vmem:[%s1 + $0x13f8] sm:$0xff]
    %v682 = vld [vmem:[%s1 + $0x1400] sm:$0xff]
    %v683 = vld [vmem:[%s1 + $0x1408] sm:$0xff]
    %v684 = vld [vmem:[%s1 + $0x1410] sm:$0xff]
    %v685 = vld [vmem:[%s1 + $0x1418] sm:$0xff]
    %v686 = vld [vmem:[%s1 + $0x1420] sm:$0xff]
    %v687 = vld [vmem:[%s1 + $0x1428] sm:$0xff]
    %v688 = vld [vmem:[%s1 + $0x1430] sm:$0xff]
    %v689 = vld [vmem:[%s1 + $0x1438] sm:$0xff]
    %v690 = vld [vmem:[%s1 + $0x1440] sm:$0xff]
    %v691 = vld [vmem:[%s1 + $0x1448] sm:$0xff]
    %v692 = vld [vmem:[%s1 + $0x1450] sm:$0xff]
    %v693 = vld [vmem:[%s1 + $0x1458] sm:$0xff]
    %v694 = vld [vmem:[%s1 + $0x1460] sm:$0xff]
    %v695 = vld [vmem:[%s1 + $0x1468] sm:$0xff]
    %v696 = vld [vmem:[%s1 + $0x1470] sm:$0xff]
    %v697 = vld [vmem:[%s1 + $0x1478] sm:$0xff]
    %v698 = vld [vmem:[%s1 + $0x1480] sm:$0xff]
    %v699 = vld [vmem:[%s1 + $0x1488] sm:$0xff]
    %v700 = vld [vmem:[%s1 + $0x1490] sm:$0xff]
    %v701 = vld [vmem:[%s1 + $0x1498] sm:$0xff]
    %v702 = vld [vmem:[%s1 + $0x14a0] sm:$0xff]
    %v703 = vld [vmem:[%s1 + $0x14a8] sm:$0xff]
    %v704 = vld [vmem:[%s1 + $0x14b0] sm:$0xff]
    %v705 = vld [vmem:[%s1 + $0x14b8] sm:$0xff]
    %v706 = vld [vmem:[%s1 + $0x14c0] sm:$0xff]
    %v707 = vld [vmem:[%s1 + $0x14c8] sm:$0xff]
    %v708 = vld [vmem:[%s1 + $0x14d0] sm:$0xff]
    %v709 = vld [vmem:[%s1 + $0x14d8] sm:$0xff]
    %v710 = vld [vmem:[%s1 + $0x14e0] sm:$0xff]
    %v711 = vld [vmem:[%s1 + $0x14e8] sm:$0xff]
    %v712 = vld [vmem:[%s1 + $0x14f0] sm:$0xff]
    %v713 = vld [vmem:[%s1 + $0x14f8] sm:$0xff]
    %v714 = vld [vmem:[%s1 + $0x1500] sm:$0xff]
    %v715 = vld [vmem:[%s1 + $0x1508] sm:$0xff]
    %v716 = vld [vmem:[%s1 + $0x1510] sm:$0xff]
    %v717 = vld [vmem:[%s1 + $0x1518] sm:$0xff]
    %v718 = vld [vmem:[%s1 + $0x1520] sm:$0xff]
    %v719 = vld [vmem:[%s1 + $0x1528] sm:$0xff]
    %v720 = vld [vmem:[%s1 + $0x1530] sm:$0xff]
    %v721 = vld [vmem:[%s1 + $0x1538] sm:$0xff]
    %v722 = vld [vmem:[%s1 + $0x1540] sm:$0xff]
    %v723 = vld [vmem:[%s1 + $0x1548] sm:$0xff]
    %v724 = vld [vmem:[%s1 + $0x1550] sm:$0xff]
    %v725 = vld [vmem:[%s1 + $0x1558] sm:$0xff]
    %v726 = vld [vmem:[%s1 + $0x1560] sm:$0xff]
    %v727 = vld [vmem:[%s1 + $0x1568] sm:$0xff]
    %v728 = vld [vmem:[%s1 + $0x1570] sm:$0xff]
    %v729 = vld [vmem:[%s1 + $0x1578] sm:$0xff]
    %v730 = vld [vmem:[%s1 + $0x1580] sm:$0xff]
    %v731 = vld [vmem:[%s1 + $0x1588] sm:$0xff]
    %v732 = vld [vmem:[%s1 + $0x1590] sm:$0xff]
    %v733 = vld [vmem:[%s1 + $0x1598] sm:$0xff]
    %v734 = vld [vmem:[%s1 + $0x15a0] sm:$0xff]
    %v735 = vld [vmem:[%s1 + $0x15a8] sm:$0xff]
    %v736 = vld [vmem:[%s1 + $0x15b0] sm:$0xff]
    %v737 = vld [vmem:[%s1 + $0x15b8] sm:$0xff]
    %v738 = vld [vmem:[%s1 + $0x15c0] sm:$0xff]
    %v739 = vld [vmem:[%s1 + $0x15c8] sm:$0xff]
    %v740 = vld [vmem:[%s1 + $0x15d0] sm:$0xff]
    %v741 = vld [vmem:[%s1 + $0x15d8] sm:$0xff]
    %v742 = vld [vmem:[%s1 + $0x15e0] sm:$0xff]
    %v743 = vld [vmem:[%s1 + $0x15e8] sm:$0xff]
    %v744 = vld [vmem:[%s1 + $0x15f0] sm:$0xff]
    %v745 = vld [vmem:[%s1 + $0x15f8] sm:$0xff]
    %v746 = vld [vmem:[%s1 + $0x1600] sm:$0xff]
    %v747 = vld [vmem:[%s1 + $0x1608] sm:$0xff]
    %v748 = vld [vmem:[%s1 + $0x1610] sm:$0xff]
    %v749 = vld [vmem:[%s1 + $0x1618] sm:$0xff]
    %v750 = vld [vmem:[%s1 + $0x1620] sm:$0xff]
    %v751 = vld [vmem:[%s1 + $0x1628] sm:$0xff]
    %v752 = vld [vmem:[%s1 + $0x1630] sm:$0xff]
    %v753 = vld [vmem:[%s1 + $0x1638] sm:$0xff]
    %v754 = vld [vmem:[%s1 + $0x1640] sm:$0xff]
    %v755 = vld [vmem:[%s1 + $0x1648] sm:$0xff]
    %v756 = vld [vmem:[%s1 + $0x1650] sm:$0xff]
    %v757 = vld [vmem:[%s1 + $0x1658] sm:$0xff]
    %v758 = vld [vmem:[%s1 + $0x1660] sm:$0xff]
    %v759 = vld [vmem:[%s1 + $0x1668] sm:$0xff]
    %v760 = vld [vmem:[%s1 + $0x1670] sm:$0xff]
    %v761 = vld [vmem:[%s1 + $0x1678] sm:$0xff]
    %v762 = vld [vmem:[%s1 + $0x1680] sm:$0xff]
    %v763 = vld [vmem:[%s1 + $0x1688] sm:$0xff]
    %v764 = vld [vmem:[%s1 + $0x1690] sm:$0xff]
    %v765 = vld [vmem:[%s1 + $0x1698] sm:$0xff]
    %v766 = vld [vmem:[%s1 + $0x16a0] sm:$0xff]
    %v767 = vld [vmem:[%s1 + $0x16a8] sm:$0xff]
    %v768 = vld [vmem:[%s1 + $0x16b0] sm:$0xff]
    %v769 = vld [vmem:[%s1 + $0x16b8] sm:$0xff]
    %v770 = vld [vmem:[%s1 + $0x16c0] sm:$0xff]
    %v771 = vld [vmem:[%s1 + $0x16c8] sm:$0xff]
    %v772 = vld [vmem:[%s1 + $0x16d0] sm:$0xff]
    %v773 = vld [vmem:[%s1 + $0x16d8] sm:$0xff]
    %v774 = vld [vmem:[%s1 + $0x16e0] sm:$0xff]
    %v775 = vld [vmem:[%s1 + $0x16e8] sm:$0xff]
    %v776 = vld [vmem:[%s1 + $0x16f0] sm:$0xff]
    %v777 = vld [vmem:[%s1 + $0x16f8] sm:$0xff]
    %v778 = vld [vmem:[%s1 + $0x1700] sm:$0xff]
    %v779 = vld [vmem:[%s1 + $0x1708] sm:$0xff]
    %v780 = vld [vmem:[%s1 + $0x1710] sm:$0xff]
    %v781 = vld [vmem:[%s1 + $0x1718] sm:$0xff]
    %v782 = vld [vmem:[%s1 + $0x1720] sm:$0xff]
    %v783 = vld [vmem:[%s1 + $0x1728] sm:$0xff]
    %v784 = vld [vmem:[%s1 + $0x1730] sm:$0xff]
    %v785 = vld [vmem:[%s1 + $0x1738] sm:$0xff]
    %v786 = vld [vmem:[%s1 + $0x1740] sm:$0xff]
    %v787 = vld [vmem:[%s1 + $0x1748] sm:$0xff]
    %v788 = vld [vmem:[%s1 + $0x1750] sm:$0xff]
    %v789 = vld [vmem:[%s1 + $0x1758] sm:$0xff]
    %v790 = vld [vmem:[%s1 + $0x1760] sm:$0xff]
    %v791 = vld [vmem:[%s1 + $0x1768] sm:$0xff]
    %v792 = vld [vmem:[%s1 + $0x1770] sm:$0xff]
    %v793 = vld [vmem:[%s1 + $0x1778] sm:$0xff]
    %v794 = vld [vmem:[%s1 + $0x1780] sm:$0xff]
    %v795 = vld [vmem:[%s1 + $0x1788] sm:$0xff]
    %v796 = vld [vmem:[%s1 + $0x1790] sm:$0xff]
    %v797 = vld [vmem:[%s1 + $0x1798] sm:$0xff]
    %v798 = vld [vmem:[%s1 + $0x17a0] sm:$0xff]
    %v799 = vld [vmem:[%s1 + $0x17a8] sm:$0xff]
    %v800 = vld [vmem:[%s1 + $0x17b0] sm:$0xff]
    %v801 = vld [vmem:[%s1 + $0x17b8] sm:$0xff]
    %v802 = vld [vmem:[%s1 + $0x17c0] sm:$0xff]
    %v803 = vld [vmem:[%s1 + $0x17c8] sm:$0xff]
    %v804 = vld [vmem:[%s1 + $0x17d0] sm:$0xff]
    %v805 = vld [vmem:[%s1 + $0x17d8] sm:$0xff]
    %v806 = vld [vmem:[%s1 + $0x17e0] sm:$0xff]
    %v807 = vld [vmem:[%s1 + $0x17e8] sm:$0xff]
    %v808 = vld [vmem:[%s1 + $0x17f0] sm:$0xff]
    %v809 = vld [vmem:[%s1 + $0x17f8] sm:$0xff]
    %v810 = vld [vmem:[%s1 + $0x1800] sm:$0xff]
    %v811 = vld [vmem:[%s1 + $0x1808] sm:$0xff]
    %v812 = vld [vmem:[%s1 + $0x1810] sm:$0xff]
    %v813 = vld [vmem:[%s1 + $0x1818] sm:$0xff]
    %v814 = vld [vmem:[%s1 + $0x1820] sm:$0xff]
    %v815 = vld [vmem:[%s1 + $0x1828] sm:$0xff]
    %v816 = vld [vmem:[%s1 + $0x1830] sm:$0xff]
    %v817 = vld [vmem:[%s1 + $0x1838] sm:$0xff]
    %v818 = vld [vmem:[%s1 + $0x1840] sm:$0xff]
    %v819 = vld [vmem:[%s1 + $0x1848] sm:$0xff]
    %v820 = vld [vmem:[%s1 + $0x1850] sm:$0xff]
    %v821 = vld [vmem:[%s1 + $0x1858] sm:$0xff]
    %v822 = vld [vmem:[%s1 + $0x1860] sm:$0xff]
    %v823 = vld [vmem:[%s1 + $0x1868] sm:$0xff]
    %v824 = vld [vmem:[%s1 + $0x1870] sm:$0xff]
    %v825 = vld [vmem:[%s1 + $0x1878] sm:$0xff]
    %v826 = vld [vmem:[%s1 + $0x1880] sm:$0xff]
    %v827 = vld [vmem:[%s1 + $0x1888] sm:$0xff]
    %v828 = vld [vmem:[%s1 + $0x1890] sm:$0xff]
    %v829 = vld [vmem:[%s1 + $0x1898] sm:$0xff]
    %v830 = vld [vmem:[%s1 + $0x18a0] sm:$0xff]
    %v831 = vld [vmem:[%s1 + $0x18a8] sm:$0xff]
    %v832 = vld [vmem:[%s1 + $0x18b0] sm:$0xff]
    %v833 = vld [vmem:[%s1 + $0x18b8] sm:$0xff]
    %v834 = vld [vmem:[%s1 + $0x18c0] sm:$0xff]
    %v835 = vld [vmem:[%s1 + $0x18c8] sm:$0xff]
    %v836 = vld [vmem:[%s1 + $0x18d0] sm:$0xff]
    %v837 = vld [vmem:[%s1 + $0x18d8] sm:$0xff]
    %v838 = vld [vmem:[%s1 + $0x18e0] sm:$0xff]
    %v839 = vld [vmem:[%s1 + $0x18e8] sm:$0xff]
    %v840 = vld [vmem:[%s1 + $0x18f0] sm:$0xff]
    %v841 = vld [vmem:[%s1 + $0x18f8] sm:$0xff]
    %v842 = vld [vmem:[%s1 + $0x1900] sm:$0xff]
    %v843 = vld [vmem:[%s1 + $0x1908] sm:$0xff]
    %v844 = vld [vmem:[%s1 + $0x1910] sm:$0xff]
    %v845 = vld [vmem:[%s1 + $0x1918] sm:$0xff]
    %v846 = vld [vmem:[%s1 + $0x1920] sm:$0xff]
    %v847 = vld [vmem:[%s1 + $0x1928] sm:$0xff]
    %v848 = vld [vmem:[%s1 + $0x1930] sm:$0xff]
    %v849 = vld [vmem:[%s1 + $0x1938] sm:$0xff]
    %v850 = vld [vmem:[%s1 + $0x1940] sm:$0xff]
    %v851 = vld [vmem:[%s1 + $0x1948] sm:$0xff]
    %v852 = vld [vmem:[%s1 + $0x1950] sm:$0xff]
    %v853 = vld [vmem:[%s1 + $0x1958] sm:$0xff]
    %v854 = vld [vmem:[%s1 + $0x1960] sm:$0xff]
    %v855 = vld [vmem:[%s1 + $0x1968] sm:$0xff]
    %v856 = vld [vmem:[%s1 + $0x1970] sm:$0xff]
    %v857 = vld [vmem:[%s1 + $0x1978] sm:$0xff]
    %v858 = vld [vmem:[%s1 + $0x1980] sm:$0xff]
    %v859 = vld [vmem:[%s1 + $0x1988] sm:$0xff]
    %v860 = vld [vmem:[%s1 + $0x1990] sm:$0xff]
    %v861 = vld [vmem:[%s1 + $0x1998] sm:$0xff]
    %v862 = vld [vmem:[%s1 + $0x19a0] sm:$0xff]
    %v863 = vld [vmem:[%s1 + $0x19a8] sm:$0xff]
    %v864 = vld [vmem:[%s1 + $0x19b0] sm:$0xff]
    %v865 = vld [vmem:[%s1 + $0x19b8] sm:$0xff]
    %v866 = vld [vmem:[%s1 + $0x19c0] sm:$0xff]
    %v867 = vld [vmem:[%s1 + $0x19c8] sm:$0xff]
    %v868 = vld [vmem:[%s1 + $0x19d0] sm:$0xff]
    %v869 = vld [vmem:[%s1 + $0x19d8] sm:$0xff]
    %v870 = vld [vmem:[%s1 + $0x19e0] sm:$0xff]
    %v871 = vld [vmem:[%s1 + $0x19e8] sm:$0xff]
    %v872 = vld [vmem:[%s1 + $0x19f0] sm:$0xff]
    %v873 = vld [vmem:[%s1 + $0x19f8] sm:$0xff]
    %v874 = vld [vmem:[%s1 + $0x1a00] sm:$0xff]
    %v875 = vld [vmem:[%s1 + $0x1a08] sm:$0xff]
    %v876 = vld [vmem:[%s1 + $0x1a10] sm:$0xff]
    %v877 = vld [vmem:[%s1 + $0x1a18] sm:$0xff]
    %v878 = vld [vmem:[%s1 + $0x1a20] sm:$0xff]
    %v879 = vld [vmem:[%s1 + $0x1a28] sm:$0xff]
    %v880 = vld [vmem:[%s1 + $0x1a30] sm:$0xff]
    %v881 = vld [vmem:[%s1 + $0x1a38] sm:$0xff]
    %v882 = vld [vmem:[%s1 + $0x1a40] sm:$0xff]
    %v883 = vld [vmem:[%s1 + $0x1a48] sm:$0xff]
    %v884 = vld [vmem:[%s1 + $0x1a50] sm:$0xff]
    %v885 = vld [vmem:[%s1 + $0x1a58] sm:$0xff]
    %v886 = vld [vmem:[%s1 + $0x1a60] sm:$0xff]
    %v887 = vld [vmem:[%s1 + $0x1a68] sm:$0xff]
    %v888 = vld [vmem:[%s1 + $0x1a70] sm:$0xff]
    %v889 = vld [vmem:[%s1 + $0x1a78] sm:$0xff]
    %v890 = vld [vmem:[%s1 + $0x1a80] sm:$0xff]
    %v891 = vld [vmem:[%s1 + $0x1a88] sm:$0xff]
    %v892 = vld [vmem:[%s1 + $0x1a90] sm:$0xff]
    %v893 = vld [vmem:[%s1 + $0x1a98] sm:$0xff]
    %v894 = vld [vmem:[%s1 + $0x1aa0] sm:$0xff]
    %v895 = vld [vmem:[%s1 + $0x1aa8] sm:$0xff]
    %v896 = vld [vmem:[%s1 + $0x1ab0] sm:$0xff]
    %v897 = vld [vmem:[%s1 + $0x1ab8] sm:$0xff]
    %v898 = vld [vmem:[%s1 + $0x1ac0] sm:$0xff]
    %v899 = vld [vmem:[%s1 + $0x1ac8] sm:$0xff]
    %v900 = vld [vmem:[%s1 + $0x1ad0] sm:$0xff]
    %v901 = vld [vmem:[%s1 + $0x1ad8] sm:$0xff]
    %v902 = vld [vmem:[%s1 + $0x1ae0] sm:$0xff]
    %v903 = vld [vmem:[%s1 + $0x1ae8] sm:$0xff]
    %v904 = vld [vmem:[%s1 + $0x1af0] sm:$0xff]
    %v905 = vld [vmem:[%s1 + $0x1af8] sm:$0xff]
    %v906 = vld [vmem:[%s1 + $0x1b00] sm:$0xff]
    %v907 = vld [vmem:[%s1 + $0x1b08] sm:$0xff]
    %v908 = vld [vmem:[%s1 + $0x1b10] sm:$0xff]
    %v909 = vld [vmem:[%s1 + $0x1b18] sm:$0xff]
    %v910 = vld [vmem:[%s1 + $0x1b20] sm:$0xff]
    %v911 = vld [vmem:[%s1 + $0x1b28] sm:$0xff]
    %v912 = vld [vmem:[%s1 + $0x1b30] sm:$0xff]
    %v913 = vld [vmem:[%s1 + $0x1b38] sm:$0xff]
    %v914 = vld [vmem:[%s1 + $0x1b40] sm:$0xff]
    %v915 = vld [vmem:[%s1 + $0x1b48] sm:$0xff]
    %v916 = vld [vmem:[%s1 + $0x1b50] sm:$0xff]
    %v917 = vld [vmem:[%s1 + $0x1b58] sm:$0xff]
    %v918 = vld [vmem:[%s1 + $0x1b60] sm:$0xff]
    %v919 = vld [vmem:[%s1 + $0x1b68] sm:$0xff]
    %v920 = vld [vmem:[%s1 + $0x1b70] sm:$0xff]
    %v921 = vld [vmem:[%s1 + $0x1b78] sm:$0xff]
    %v922 = vld [vmem:[%s1 + $0x1b80] sm:$0xff]
    %v923 = vld [vmem:[%s1 + $0x1b88] sm:$0xff]
    %v924 = vld [vmem:[%s1 + $0x1b90] sm:$0xff]
    %v925 = vld [vmem:[%s1 + $0x1b98] sm:$0xff]
    %v926 = vld [vmem:[%s1 + $0x1ba0] sm:$0xff]
    %v927 = vld [vmem:[%s1 + $0x1ba8] sm:$0xff]
    %v928 = vld [vmem:[%s1 + $0x1bb0] sm:$0xff]
    %v929 = vld [vmem:[%s1 + $0x1bb8] sm:$0xff]
    %v930 = vld [vmem:[%s1 + $0x1bc0] sm:$0xff]
    %v931 = vld [vmem:[%s1 + $0x1bc8] sm:$0xff]
    %v932 = vld [vmem:[%s1 + $0x1bd0] sm:$0xff]
    %v933 = vld [vmem:[%s1 + $0x1bd8] sm:$0xff]
    %v934 = vld [vmem:[%s1 + $0x1be0] sm:$0xff]
    %v935 = vld [vmem:[%s1 + $0x1be8] sm:$0xff]
    %v936 = vld [vmem:[%s1 + $0x1bf0] sm:$0xff]
    %v937 = vld [vmem:[%s1 + $0x1bf8] sm:$0xff]
    %v938 = vld [vmem:[%s1 + $0x1c00] sm:$0xff]
    %v939 = vld [vmem:[%s1 + $0x1c08] sm:$0xff]
    %v940 = vld [vmem:[%s1 + $0x1c10] sm:$0xff]
    %v941 = vld [vmem:[%s1 + $0x1c18] sm:$0xff]
    %v942 = vld [vmem:[%s1 + $0x1c20] sm:$0xff]
    %v943 = vld [vmem:[%s1 + $0x1c28] sm:$0xff]
    %v944 = vld [vmem:[%s1 + $0x1c30] sm:$0xff]
    %v945 = vld [vmem:[%s1 + $0x1c38] sm:$0xff]
    %v946 = vld [vmem:[%s1 + $0x1c40] sm:$0xff]
    %v947 = vld [vmem:[%s1 + $0x1c48] sm:$0xff]
    %v948 = vld [vmem:[%s1 + $0x1c50] sm:$0xff]
    %v949 = vld [vmem:[%s1 + $0x1c58] sm:$0xff]
    %v950 = vld [vmem:[%s1 + $0x1c60] sm:$0xff]
    %v951 = vld [vmem:[%s1 + $0x1c68] sm:$0xff]
    %v952 = vld [vmem:[%s1 + $0x1c70] sm:$0xff]
    %v953 = vld [vmem:[%s1 + $0x1c78] sm:$0xff]
    %v954 = vld [vmem:[%s1 + $0x1c80] sm:$0xff]
    %v955 = vld [vmem:[%s1 + $0x1c88] sm:$0xff]
    %v956 = vld [vmem:[%s1 + $0x1c90] sm:$0xff]
    %v957 = vld [vmem:[%s1 + $0x1c98] sm:$0xff]
    %v958 = vld [vmem:[%s1 + $0x1ca0] sm:$0xff]
    %v959 = vld [vmem:[%s1 + $0x1ca8] sm:$0xff]
    %v960 = vld [vmem:[%s1 + $0x1cb0] sm:$0xff]
    %v961 = vld [vmem:[%s1 + $0x1cb8] sm:$0xff]
    %v962 = vld [vmem:[%s1 + $0x1cc0] sm:$0xff]
    %v963 = vld [vmem:[%s1 + $0x1cc8] sm:$0xff]
    %v964 = vld [vmem:[%s1 + $0x1cd0] sm:$0xff]
    %v965 = vld [vmem:[%s1 + $0x1cd8] sm:$0xff]
    %v966 = vld [vmem:[%s1 + $0x1ce0] sm:$0xff]
    %v967 = vld [vmem:[%s1 + $0x1ce8] sm:$0xff]
    %v968 = vld [vmem:[%s1 + $0x1cf0] sm:$0xff]
    %v969 = vld [vmem:[%s1 + $0x1cf8] sm:$0xff]
    %v970 = vld [vmem:[%s1 + $0x1d00] sm:$0xff]
    %v971 = vld [vmem:[%s1 + $0x1d08] sm:$0xff]
    %v972 = vld [vmem:[%s1 + $0x1d10] sm:$0xff]
    %v973 = vld [vmem:[%s1 + $0x1d18] sm:$0xff]
    %v974 = vld [vmem:[%s1 + $0x1d20] sm:$0xff]
    %v975 = vld [vmem:[%s1 + $0x1d28] sm:$0xff]
    %v976 = vld [vmem:[%s1 + $0x1d30] sm:$0xff]
    %v977 = vld [vmem:[%s1 + $0x1d38] sm:$0xff]
    %v978 = vld [vmem:[%s1 + $0x1d40] sm:$0xff]
    %v979 = vld [vmem:[%s1 + $0x1d48] sm:$0xff]
    %v980 = vld [vmem:[%s1 + $0x1d50] sm:$0xff]
    %v981 = vld [vmem:[%s1 + $0x1d58] sm:$0xff]
    %v982 = vld [vmem:[%s1 + $0x1d60] sm:$0xff]
    %v983 = vld [vmem:[%s1 + $0x1d68] sm:$0xff]
    %v984 = vld [vmem:[%s1 + $0x1d70] sm:$0xff]
    %v985 = vld [vmem:[%s1 + $0x1d78] sm:$0xff]
    %v986 = vld [vmem:[%s2] sm:$0x1]
    %v988 = vperm.slane %v986, 0
    %1005 = vst [vmem:[#allocation1] ss:$4 sm:$0xff] %v27
    %s1006 = scalar_lea.vmem [#allocation1], 32
    %1007 = vst [vmem:[%s1006] ss:$4 sm:$0xff] %v28
    %v1008 = vld.sshfl [vmem:[#allocation1] sm:$0xff pattern:$0x73625140]
    %v1009 = vld.sshfl [vmem:[#allocation1 + $0x8] sm:$0xff pattern:$0x73625140]
    %v1010 = vld.sshfl [vmem:[#allocation1 + $0x10] sm:$0xff pattern:$0x73625140]
    %v1011 = vld.sshfl [vmem:[#allocation1 + $0x18] sm:$0xff pattern:$0x73625140]
    %v1012 = vld.sshfl [vmem:[#allocation1 + $0x20] sm:$0xff pattern:$0x73625140]
    %v1013 = vld.sshfl [vmem:[#allocation1 + $0x28] sm:$0xff pattern:$0x73625140]
    %v1014 = vld.sshfl [vmem:[#allocation1 + $0x30] sm:$0xff pattern:$0x73625140]
    %v1015 = vld.sshfl [vmem:[#allocation1 + $0x38] sm:$0xff pattern:$0x73625140]
    %1016 = vst [vmem:[#allocation1] ss:$4 sm:$0xff] %v29
    %1017 = vst [vmem:[%s1006] ss:$4 sm:$0xff] %v30
    %v1018 = vld.sshfl [vmem:[#allocation1] sm:$0xff pattern:$0x73625140]
    %v1019 = vld.sshfl [vmem:[#allocation1 + $0x8] sm:$0xff pattern:$0x73625140]
    %v1020 = vld.sshfl [vmem:[#allocation1 + $0x10] sm:$0xff pattern:$0x73625140]
    %v1021 = vld.sshfl [vmem:[#allocation1 + $0x18] sm:$0xff pattern:$0x73625140]
    %v1022 = vld.sshfl [vmem:[#allocation1 + $0x20] sm:$0xff pattern:$0x73625140]
    %v1023 = vld.sshfl [vmem:[#allocation1 + $0x28] sm:$0xff pattern:$0x73625140]
    %v1024 = vld.sshfl [vmem:[#allocation1 + $0x30] sm:$0xff pattern:$0x73625140]
    %v1025 = vld.sshfl [vmem:[#allocation1 + $0x38] sm:$0xff pattern:$0x73625140]
    %1026 = vst [vmem:[#allocation1] ss:$4 sm:$0xff] %v31
    %1027 = vst [vmem:[%s1006] ss:$4 sm:$0xff] %v32
    %v1028 = vld.sshfl [vmem:[#allocation1] sm:$0xff pattern:$0x73625140]
    %v1029 = vld.sshfl [vmem:[#allocation1 + $0x8] sm:$0xff pattern:$0x73625140]
    %v1030 = vld.sshfl [vmem:[#allocation1 + $0x10] sm:$0xff pattern:$0x73625140]
    %v1031 = vld.sshfl [vmem:[#allocation1 + $0x18] sm:$0xff pattern:$0x73625140]
    %v1032 = vld.sshfl [vmem:[#allocation1 + $0x20] sm:$0xff pattern:$0x73625140]
    %v1033 = vld.sshfl [vmem:[#allocation1 + $0x28] sm:$0xff pattern:$0x73625140]
    %v1034 = vld.sshfl [vmem:[#allocation1 + $0x30] sm:$0xff pattern:$0x73625140]
    %v1035 = vld.sshfl [vmem:[#allocation1 + $0x38] sm:$0xff pattern:$0x73625140]
    %1036 = vst [vmem:[#allocation1] ss:$4 sm:$0xff] %v33
    %1037 = vst [vmem:[%s1006] ss:$4 sm:$0xff] %v34
    %v1038 = vld.sshfl [vmem:[#allocation1] sm:$0xff pattern:$0x73625140]
    %v1039 = vld.sshfl [vmem:[#allocation1 + $0x8] sm:$0xff pattern:$0x73625140]
    %v1040 = vld.sshfl [vmem:[#allocation1 + $0x10] sm:$0xff pattern:$0x73625140]
    %v1041 = vld.sshfl [vmem:[#allocation1 + $0x18] sm:$0xff pattern:$0x73625140]
    %v1042 = vld.sshfl [vmem:[#allocation1 + $0x20] sm:$0xff pattern:$0x73625140]
    %v1043 = vld.sshfl [vmem:[#allocation1 + $0x28] sm:$0xff pattern:$0x73625140]
    %v1044 = vld.sshfl [vmem:[#allocation1 + $0x30] sm:$0xff pattern:$0x73625140]
    %v1045 = vld.sshfl [vmem:[#allocation1 + $0x38] sm:$0xff pattern:$0x73625140]
    %1046 = vst [vmem:[#allocation1] ss:$4 sm:$0xff] %v35
    %1047 = vst [vmem:[%s1006] ss:$4 sm:$0xff] %v36
    %v1048 = vld.sshfl [vmem:[#allocation1] sm:$0xff pattern:$0x73625140]
    %v1049 = vld.sshfl [vmem:[#allocation1 + $0x8] sm:$0xff pattern:$0x73625140]
    %v1050 = vld.sshfl [vmem:[#allocation1 + $0x10] sm:$0xff pattern:$0x73625140]
    %v1051 = vld.sshfl [vmem:[#allocation1 + $0x18] sm:$0xff pattern:$0x73625140]
    %v1052 = vld.sshfl [vmem:[#allocation1 + $0x20] sm:$0xff pattern:$0x73625140]
    %v1053 = vld.sshfl [vmem:[#allocation1 + $0x28] sm:$0xff pattern:$0x73625140]
    %v1054 = vld.sshfl [vmem:[#allocation1 + $0x30] sm:$0xff pattern:$0x73625140]
    %v1055 = vld.sshfl [vmem:[#allocation1 + $0x38] sm:$0xff pattern:$0x73625140]
    %1056 = vst [vmem:[#allocation1] ss:$4 sm:$0xff] %v37
    %1057 = vst [vmem:[%s1006] ss:$4 sm:$0xff] %v38
    %v1058 = vld.sshfl [vmem:[#allocation1] sm:$0xff pattern:$0x73625140]
    %v1059 = vld.sshfl [vmem:[#allocation1 + $0x8] sm:$0xff pattern:$0x73625140]
    %v1060 = vld.sshfl [vmem:[#allocation1 + $0x10] sm:$0xff pattern:$0x73625140]
    %v1061 = vld.sshfl [vmem:[#allocation1 + $0x18] sm:$0xff pattern:$0x73625140]
    %v1062 = vld.sshfl [vmem:[#allocation1 + $0x20] sm:$0xff pattern:$0x73625140]
    %v1063 = vld.sshfl [vmem:[#allocation1 + $0x28] sm:$0xff pattern:$0x73625140]
    %v1064 = vld.sshfl [vmem:[#allocation1 + $0x30] sm:$0xff pattern:$0x73625140]
    %v1065 = vld.sshfl [vmem:[#allocation1 + $0x38] sm:$0xff pattern:$0x73625140]
    %1066 = vst [vmem:[#allocation1] ss:$4 sm:$0xff] %v39
    %1067 = vst [vmem:[%s1006] ss:$4 sm:$0xff] %v40
    %v1068 = vld.sshfl [vmem:[#allocation1] sm:$0xff pattern:$0x73625140]
    %v1069 = vld.sshfl [vmem:[#allocation1 + $0x8] sm:$0xff pattern:$0x73625140]
    %v1070 = vld.sshfl [vmem:[#allocation1 + $0x10] sm:$0xff pattern:$0x73625140]
    %v1071 = vld.sshfl [vmem:[#allocation1 + $0x18] sm:$0xff pattern:$0x73625140]
    %v1072 = vld.sshfl [vmem:[#allocation1 + $0x20] sm:$0xff pattern:$0x73625140]
    %v1073 = vld.sshfl [vmem:[#allocation1 + $0x28] sm:$0xff pattern:$0x73625140]
    %v1074 = vld.sshfl [vmem:[#allocation1 + $0x30] sm:$0xff pattern:$0x73625140]
    %v1075 = vld.sshfl [vmem:[#allocation1 + $0x38] sm:$0xff pattern:$0x73625140]
    %1076 = vst [vmem:[#allocation1] ss:$4 sm:$0xff] %v41
    %v1077 = vld.sshfl [vmem:[#allocation1] sm:$0xff pattern:$0x73625140]
    %v1078 = vld.sshfl [vmem:[#allocation1 + $0x8] sm:$0xff pattern:$0x73625140]
    %v1079 = vld.sshfl [vmem:[#allocation1 + $0x10] sm:$0xff pattern:$0x73625140]
    %1139 = vmatpush.msra.mxu0 %v57
    %1140 = vmatpush.msra.mxu0 %v56
    %1141 = vmatpush.msra.mxu0 %v55
    %1142 = vmatpush.msra.mxu0 %v54
    %1143 = vmatpush.msra.mxu0 %v53
    %1144 = vmatpush.msra.mxu0 %v52
    %1145 = vmatpush.msra.mxu0 %v51
    %1146 = vmatpush.msra.mxu0 %v50
    %1147 = vmatpush.msra.mxu0 %v49
    %1148 = vmatpush.msra.mxu0 %v48
    %1149 = vmatpush.msra.mxu0 %v47
    %1150 = vmatpush.msra.mxu0 %v46
    %1151 = vmatpush.msra.mxu0 %v45
    %1152 = vmatpush.msra.mxu0 %v44
    %1153 = vmatpush.msra.mxu0 %v43
    %1154 = vmatpush.msra.mxu0 %v42
    %1155 = vmatmul.f32.gmra.mxu0 %v1008
    %v1156 = vpop.f32.mrf.mxu0
    %v1157 = vadd.f32 %v988, %v1156
    %1158 = vdwg.mxu0
    %1159 = vmatpush.msra.mxu0 %v73
    %1160 = vmatpush.msra.mxu0 %v72
    %1161 = vmatpush.msra.mxu0 %v71
    %1162 = vmatpush.msra.mxu0 %v70
    %1163 = vmatpush.msra.mxu0 %v69
    %1164 = vmatpush.msra.mxu0 %v68
    %1165 = vmatpush.msra.mxu0 %v67
    %1166 = vmatpush.msra.mxu0 %v66
    %1167 = vmatpush.msra.mxu0 %v65
    %1168 = vmatpush.msra.mxu0 %v64
    %1169 = vmatpush.msra.mxu0 %v63
    %1170 = vmatpush.msra.mxu0 %v62
    %1171 = vmatpush.msra.mxu0 %v61
    %1172 = vmatpush.msra.mxu0 %v60
    %1173 = vmatpush.msra.mxu0 %v59
    %1174 = vmatpush.msra.mxu0 %v58
    %1175 = vmatmul.f32.gmra.mxu0 %v1009
    %v1176 = vpop.f32.mrf.mxu0
    %v1177 = vadd.f32 %v1157, %v1176
    %1178 = vdwg.mxu0
    %1179 = vmatpush.msra.mxu0 %v89
    %1180 = vmatpush.msra.mxu0 %v88
    %1181 = vmatpush.msra.mxu0 %v87
    %1182 = vmatpush.msra.mxu0 %v86
    %1183 = vmatpush.msra.mxu0 %v85
    %1184 = vmatpush.msra.mxu0 %v84
    %1185 = vmatpush.msra.mxu0 %v83
    %1186 = vmatpush.msra.mxu0 %v82
    %1187 = vmatpush.msra.mxu0 %v81
    %1188 = vmatpush.msra.mxu0 %v80
    %1189 = vmatpush.msra.mxu0 %v79
    %1190 = vmatpush.msra.mxu0 %v78
    %1191 = vmatpush.msra.mxu0 %v77
    %1192 = vmatpush.msra.mxu0 %v76
    %1193 = vmatpush.msra.mxu0 %v75
    %1194 = vmatpush.msra.mxu0 %v74
    %1195 = vmatmul.f32.gmra.mxu0 %v1010
    %v1196 = vpop.f32.mrf.mxu0
    %v1197 = vadd.f32 %v1177, %v1196
    %1198 = vdwg.mxu0
    %1199 = vmatpush.msra.mxu0 %v105
    %1200 = vmatpush.msra.mxu0 %v104
    %1201 = vmatpush.msra.mxu0 %v103
    %1202 = vmatpush.msra.mxu0 %v102
    %1203 = vmatpush.msra.mxu0 %v101
    %1204 = vmatpush.msra.mxu0 %v100
    %1205 = vmatpush.msra.mxu0 %v99
    %1206 = vmatpush.msra.mxu0 %v98
    %1207 = vmatpush.msra.mxu0 %v97
    %1208 = vmatpush.msra.mxu0 %v96
    %1209 = vmatpush.msra.mxu0 %v95
    %1210 = vmatpush.msra.mxu0 %v94
    %1211 = vmatpush.msra.mxu0 %v93
    %1212 = vmatpush.msra.mxu0 %v92
    %1213 = vmatpush.msra.mxu0 %v91
    %1214 = vmatpush.msra.mxu0 %v90
    %1215 = vmatmul.f32.gmra.mxu0 %v1011
    %v1216 = vpop.f32.mrf.mxu0
    %v1217 = vadd.f32 %v1197, %v1216
    %1218 = vdwg.mxu0
    %1219 = vmatpush.msra.mxu0 %v121
    %1220 = vmatpush.msra.mxu0 %v120
    %1221 = vmatpush.msra.mxu0 %v119
    %1222 = vmatpush.msra.mxu0 %v118
    %1223 = vmatpush.msra.mxu0 %v117
    %1224 = vmatpush.msra.mxu0 %v116
    %1225 = vmatpush.msra.mxu0 %v115
    %1226 = vmatpush.msra.mxu0 %v114
    %1227 = vmatpush.msra.mxu0 %v113
    %1228 = vmatpush.msra.mxu0 %v112
    %1229 = vmatpush.msra.mxu0 %v111
    %1230 = vmatpush.msra.mxu0 %v110
    %1231 = vmatpush.msra.mxu0 %v109
    %1232 = vmatpush.msra.mxu0 %v108
    %1233 = vmatpush.msra.mxu0 %v107
    %1234 = vmatpush.msra.mxu0 %v106
    %1235 = vmatmul.f32.gmra.mxu0 %v1012
    %v1236 = vpop.f32.mrf.mxu0
    %v1237 = vadd.f32 %v1217, %v1236
    %1238 = vdwg.mxu0
    %1239 = vmatpush.msra.mxu0 %v137
    %1240 = vmatpush.msra.mxu0 %v136
    %1241 = vmatpush.msra.mxu0 %v135
    %1242 = vmatpush.msra.mxu0 %v134
    %1243 = vmatpush.msra.mxu0 %v133
    %1244 = vmatpush.msra.mxu0 %v132
    %1245 = vmatpush.msra.mxu0 %v131
    %1246 = vmatpush.msra.mxu0 %v130
    %1247 = vmatpush.msra.mxu0 %v129
    %1248 = vmatpush.msra.mxu0 %v128
    %1249 = vmatpush.msra.mxu0 %v127
    %1250 = vmatpush.msra.mxu0 %v126
    %1251 = vmatpush.msra.mxu0 %v125
    %1252 = vmatpush.msra.mxu0 %v124
    %1253 = vmatpush.msra.mxu0 %v123
    %1254 = vmatpush.msra.mxu0 %v122
    %1255 = vmatmul.f32.gmra.mxu0 %v1013
    %v1256 = vpop.f32.mrf.mxu0
    %v1257 = vadd.f32 %v1237, %v1256
    %1258 = vdwg.mxu0
    %1259 = vmatpush.msra.mxu0 %v153
    %1260 = vmatpush.msra.mxu0 %v152
    %1261 = vmatpush.msra.mxu0 %v151
    %1262 = vmatpush.msra.mxu0 %v150
    %1263 = vmatpush.msra.mxu0 %v149
    %1264 = vmatpush.msra.mxu0 %v148
    %1265 = vmatpush.msra.mxu0 %v147
    %1266 = vmatpush.msra.mxu0 %v146
    %1267 = vmatpush.msra.mxu0 %v145
    %1268 = vmatpush.msra.mxu0 %v144
    %1269 = vmatpush.msra.mxu0 %v143
    %1270 = vmatpush.msra.mxu0 %v142
    %1271 = vmatpush.msra.mxu0 %v141
    %1272 = vmatpush.msra.mxu0 %v140
    %1273 = vmatpush.msra.mxu0 %v139
    %1274 = vmatpush.msra.mxu0 %v138
    %1275 = vmatmul.f32.gmra.mxu0 %v1014
    %v1276 = vpop.f32.mrf.mxu0
    %v1277 = vadd.f32 %v1257, %v1276
    %1278 = vdwg.mxu0
    %1279 = vmatpush.msra.mxu0 %v169
    %1280 = vmatpush.msra.mxu0 %v168
    %1281 = vmatpush.msra.mxu0 %v167
    %1282 = vmatpush.msra.mxu0 %v166
    %1283 = vmatpush.msra.mxu0 %v165
    %1284 = vmatpush.msra.mxu0 %v164
    %1285 = vmatpush.msra.mxu0 %v163
    %1286 = vmatpush.msra.mxu0 %v162
    %1287 = vmatpush.msra.mxu0 %v161
    %1288 = vmatpush.msra.mxu0 %v160
    %1289 = vmatpush.msra.mxu0 %v159
    %1290 = vmatpush.msra.mxu0 %v158
    %1291 = vmatpush.msra.mxu0 %v157
    %1292 = vmatpush.msra.mxu0 %v156
    %1293 = vmatpush.msra.mxu0 %v155
    %1294 = vmatpush.msra.mxu0 %v154
    %1295 = vmatmul.f32.gmra.mxu0 %v1015
    %v1296 = vpop.f32.mrf.mxu0
    %v1297 = vadd.f32 %v1277, %v1296
    %1298 = vdwg.mxu0
    %1299 = vmatpush.msra.mxu0 %v185
    %1300 = vmatpush.msra.mxu0 %v184
    %1301 = vmatpush.msra.mxu0 %v183
    %1302 = vmatpush.msra.mxu0 %v182
    %1303 = vmatpush.msra.mxu0 %v181
    %1304 = vmatpush.msra.mxu0 %v180
    %1305 = vmatpush.msra.mxu0 %v179
    %1306 = vmatpush.msra.mxu0 %v178
    %1307 = vmatpush.msra.mxu0 %v177
    %1308 = vmatpush.msra.mxu0 %v176
    %1309 = vmatpush.msra.mxu0 %v175
    %1310 = vmatpush.msra.mxu0 %v174
    %1311 = vmatpush.msra.mxu0 %v173
    %1312 = vmatpush.msra.mxu0 %v172
    %1313 = vmatpush.msra.mxu0 %v171
    %1314 = vmatpush.msra.mxu0 %v170
    %1315 = vmatmul.f32.gmra.mxu0 %v1018
    %v1316 = vpop.f32.mrf.mxu0
    %v1317 = vadd.f32 %v1297, %v1316
    %1318 = vdwg.mxu0
    %1319 = vmatpush.msra.mxu0 %v201
    %1320 = vmatpush.msra.mxu0 %v200
    %1321 = vmatpush.msra.mxu0 %v199
    %1322 = vmatpush.msra.mxu0 %v198
    %1323 = vmatpush.msra.mxu0 %v197
    %1324 = vmatpush.msra.mxu0 %v196
    %1325 = vmatpush.msra.mxu0 %v195
    %1326 = vmatpush.msra.mxu0 %v194
    %1327 = vmatpush.msra.mxu0 %v193
    %1328 = vmatpush.msra.mxu0 %v192
    %1329 = vmatpush.msra.mxu0 %v191
    %1330 = vmatpush.msra.mxu0 %v190
    %1331 = vmatpush.msra.mxu0 %v189
    %1332 = vmatpush.msra.mxu0 %v188
    %1333 = vmatpush.msra.mxu0 %v187
    %1334 = vmatpush.msra.mxu0 %v186
    %1335 = vmatmul.f32.gmra.mxu0 %v1019
    %v1336 = vpop.f32.mrf.mxu0
    %v1337 = vadd.f32 %v1317, %v1336
    %1338 = vdwg.mxu0
    %1339 = vmatpush.msra.mxu0 %v217
    %1340 = vmatpush.msra.mxu0 %v216
    %1341 = vmatpush.msra.mxu0 %v215
    %1342 = vmatpush.msra.mxu0 %v214
    %1343 = vmatpush.msra.mxu0 %v213
    %1344 = vmatpush.msra.mxu0 %v212
    %1345 = vmatpush.msra.mxu0 %v211
    %1346 = vmatpush.msra.mxu0 %v210
    %1347 = vmatpush.msra.mxu0 %v209
    %1348 = vmatpush.msra.mxu0 %v208
    %1349 = vmatpush.msra.mxu0 %v207
    %1350 = vmatpush.msra.mxu0 %v206
    %1351 = vmatpush.msra.mxu0 %v205
    %1352 = vmatpush.msra.mxu0 %v204
    %1353 = vmatpush.msra.mxu0 %v203
    %1354 = vmatpush.msra.mxu0 %v202
    %1355 = vmatmul.f32.gmra.mxu0 %v1020
    %v1356 = vpop.f32.mrf.mxu0
    %v1357 = vadd.f32 %v1337, %v1356
    %1358 = vdwg.mxu0
    %1359 = vmatpush.msra.mxu0 %v233
    %1360 = vmatpush.msra.mxu0 %v232
    %1361 = vmatpush.msra.mxu0 %v231
    %1362 = vmatpush.msra.mxu0 %v230
    %1363 = vmatpush.msra.mxu0 %v229
    %1364 = vmatpush.msra.mxu0 %v228
    %1365 = vmatpush.msra.mxu0 %v227
    %1366 = vmatpush.msra.mxu0 %v226
    %1367 = vmatpush.msra.mxu0 %v225
    %1368 = vmatpush.msra.mxu0 %v224
    %1369 = vmatpush.msra.mxu0 %v223
    %1370 = vmatpush.msra.mxu0 %v222
    %1371 = vmatpush.msra.mxu0 %v221
    %1372 = vmatpush.msra.mxu0 %v220
    %1373 = vmatpush.msra.mxu0 %v219
    %1374 = vmatpush.msra.mxu0 %v218
    %1375 = vmatmul.f32.gmra.mxu0 %v1021
    %v1376 = vpop.f32.mrf.mxu0
    %v1377 = vadd.f32 %v1357, %v1376
    %1378 = vdwg.mxu0
    %1379 = vmatpush.msra.mxu0 %v249
    %1380 = vmatpush.msra.mxu0 %v248
    %1381 = vmatpush.msra.mxu0 %v247
    %1382 = vmatpush.msra.mxu0 %v246
    %1383 = vmatpush.msra.mxu0 %v245
    %1384 = vmatpush.msra.mxu0 %v244
    %1385 = vmatpush.msra.mxu0 %v243
    %1386 = vmatpush.msra.mxu0 %v242
    %1387 = vmatpush.msra.mxu0 %v241
    %1388 = vmatpush.msra.mxu0 %v240
    %1389 = vmatpush.msra.mxu0 %v239
    %1390 = vmatpush.msra.mxu0 %v238
    %1391 = vmatpush.msra.mxu0 %v237
    %1392 = vmatpush.msra.mxu0 %v236
    %1393 = vmatpush.msra.mxu0 %v235
    %1394 = vmatpush.msra.mxu0 %v234
    %1395 = vmatmul.f32.gmra.mxu0 %v1022
    %v1396 = vpop.f32.mrf.mxu0
    %v1397 = vadd.f32 %v1377, %v1396
    %1398 = vdwg.mxu0
    %1399 = vmatpush.msra.mxu0 %v265
    %1400 = vmatpush.msra.mxu0 %v264
    %1401 = vmatpush.msra.mxu0 %v263
    %1402 = vmatpush.msra.mxu0 %v262
    %1403 = vmatpush.msra.mxu0 %v261
    %1404 = vmatpush.msra.mxu0 %v260
    %1405 = vmatpush.msra.mxu0 %v259
    %1406 = vmatpush.msra.mxu0 %v258
    %1407 = vmatpush.msra.mxu0 %v257
    %1408 = vmatpush.msra.mxu0 %v256
    %1409 = vmatpush.msra.mxu0 %v255
    %1410 = vmatpush.msra.mxu0 %v254
    %1411 = vmatpush.msra.mxu0 %v253
    %1412 = vmatpush.msra.mxu0 %v252
    %1413 = vmatpush.msra.mxu0 %v251
    %1414 = vmatpush.msra.mxu0 %v250
    %1415 = vmatmul.f32.gmra.mxu0 %v1023
    %v1416 = vpop.f32.mrf.mxu0
    %v1417 = vadd.f32 %v1397, %v1416
    %1418 = vdwg.mxu0
    %1419 = vmatpush.msra.mxu0 %v281
    %1420 = vmatpush.msra.mxu0 %v280
    %1421 = vmatpush.msra.mxu0 %v279
    %1422 = vmatpush.msra.mxu0 %v278
    %1423 = vmatpush.msra.mxu0 %v277
    %1424 = vmatpush.msra.mxu0 %v276
    %1425 = vmatpush.msra.mxu0 %v275
    %1426 = vmatpush.msra.mxu0 %v274
    %1427 = vmatpush.msra.mxu0 %v273
    %1428 = vmatpush.msra.mxu0 %v272
    %1429 = vmatpush.msra.mxu0 %v271
    %1430 = vmatpush.msra.mxu0 %v270
    %1431 = vmatpush.msra.mxu0 %v269
    %1432 = vmatpush.msra.mxu0 %v268
    %1433 = vmatpush.msra.mxu0 %v267
    %1434 = vmatpush.msra.mxu0 %v266
    %1435 = vmatmul.f32.gmra.mxu0 %v1024
    %v1436 = vpop.f32.mrf.mxu0
    %v1437 = vadd.f32 %v1417, %v1436
    %1438 = vdwg.mxu0
    %1439 = vmatpush.msra.mxu0 %v297
    %1440 = vmatpush.msra.mxu0 %v296
    %1441 = vmatpush.msra.mxu0 %v295
    %1442 = vmatpush.msra.mxu0 %v294
    %1443 = vmatpush.msra.mxu0 %v293
    %1444 = vmatpush.msra.mxu0 %v292
    %1445 = vmatpush.msra.mxu0 %v291
    %1446 = vmatpush.msra.mxu0 %v290
    %1447 = vmatpush.msra.mxu0 %v289
    %1448 = vmatpush.msra.mxu0 %v288
    %1449 = vmatpush.msra.mxu0 %v287
    %1450 = vmatpush.msra.mxu0 %v286
    %1451 = vmatpush.msra.mxu0 %v285
    %1452 = vmatpush.msra.mxu0 %v284
    %1453 = vmatpush.msra.mxu0 %v283
    %1454 = vmatpush.msra.mxu0 %v282
    %1455 = vmatmul.f32.gmra.mxu0 %v1025
    %v1456 = vpop.f32.mrf.mxu0
    %v1457 = vadd.f32 %v1437, %v1456
    %1458 = vdwg.mxu0
    %1459 = vmatpush.msra.mxu0 %v313
    %1460 = vmatpush.msra.mxu0 %v312
    %1461 = vmatpush.msra.mxu0 %v311
    %1462 = vmatpush.msra.mxu0 %v310
    %1463 = vmatpush.msra.mxu0 %v309
    %1464 = vmatpush.msra.mxu0 %v308
    %1465 = vmatpush.msra.mxu0 %v307
    %1466 = vmatpush.msra.mxu0 %v306
    %1467 = vmatpush.msra.mxu0 %v305
    %1468 = vmatpush.msra.mxu0 %v304
    %1469 = vmatpush.msra.mxu0 %v303
    %1470 = vmatpush.msra.mxu0 %v302
    %1471 = vmatpush.msra.mxu0 %v301
    %1472 = vmatpush.msra.mxu0 %v300
    %1473 = vmatpush.msra.mxu0 %v299
    %1474 = vmatpush.msra.mxu0 %v298
    %1475 = vmatmul.f32.gmra.mxu0 %v1028
    %v1476 = vpop.f32.mrf.mxu0
    %v1477 = vadd.f32 %v1457, %v1476
    %1478 = vdwg.mxu0
    %1479 = vmatpush.msra.mxu0 %v329
    %1480 = vmatpush.msra.mxu0 %v328
    %1481 = vmatpush.msra.mxu0 %v327
    %1482 = vmatpush.msra.mxu0 %v326
    %1483 = vmatpush.msra.mxu0 %v325
    %1484 = vmatpush.msra.mxu0 %v324
    %1485 = vmatpush.msra.mxu0 %v323
    %1486 = vmatpush.msra.mxu0 %v322
    %1487 = vmatpush.msra.mxu0 %v321
    %1488 = vmatpush.msra.mxu0 %v320
    %1489 = vmatpush.msra.mxu0 %v319
    %1490 = vmatpush.msra.mxu0 %v318
    %1491 = vmatpush.msra.mxu0 %v317
    %1492 = vmatpush.msra.mxu0 %v316
    %1493 = vmatpush.msra.mxu0 %v315
    %1494 = vmatpush.msra.mxu0 %v314
    %1495 = vmatmul.f32.gmra.mxu0 %v1029
    %v1496 = vpop.f32.mrf.mxu0
    %v1497 = vadd.f32 %v1477, %v1496
    %1498 = vdwg.mxu0
    %1499 = vmatpush.msra.mxu0 %v345
    %1500 = vmatpush.msra.mxu0 %v344
    %1501 = vmatpush.msra.mxu0 %v343
    %1502 = vmatpush.msra.mxu0 %v342
    %1503 = vmatpush.msra.mxu0 %v341
    %1504 = vmatpush.msra.mxu0 %v340
    %1505 = vmatpush.msra.mxu0 %v339
    %1506 = vmatpush.msra.mxu0 %v338
    %1507 = vmatpush.msra.mxu0 %v337
    %1508 = vmatpush.msra.mxu0 %v336
    %1509 = vmatpush.msra.mxu0 %v335
    %1510 = vmatpush.msra.mxu0 %v334
    %1511 = vmatpush.msra.mxu0 %v333
    %1512 = vmatpush.msra.mxu0 %v332
    %1513 = vmatpush.msra.mxu0 %v331
    %1514 = vmatpush.msra.mxu0 %v330
    %1515 = vmatmul.f32.gmra.mxu0 %v1030
    %v1516 = vpop.f32.mrf.mxu0
    %v1517 = vadd.f32 %v1497, %v1516
    %1518 = vdwg.mxu0
    %1519 = vmatpush.msra.mxu0 %v361
    %1520 = vmatpush.msra.mxu0 %v360
    %1521 = vmatpush.msra.mxu0 %v359
    %1522 = vmatpush.msra.mxu0 %v358
    %1523 = vmatpush.msra.mxu0 %v357
    %1524 = vmatpush.msra.mxu0 %v356
    %1525 = vmatpush.msra.mxu0 %v355
    %1526 = vmatpush.msra.mxu0 %v354
    %1527 = vmatpush.msra.mxu0 %v353
    %1528 = vmatpush.msra.mxu0 %v352
    %1529 = vmatpush.msra.mxu0 %v351
    %1530 = vmatpush.msra.mxu0 %v350
    %1531 = vmatpush.msra.mxu0 %v349
    %1532 = vmatpush.msra.mxu0 %v348
    %1533 = vmatpush.msra.mxu0 %v347
    %1534 = vmatpush.msra.mxu0 %v346
    %1535 = vmatmul.f32.gmra.mxu0 %v1031
    %v1536 = vpop.f32.mrf.mxu0
    %v1537 = vadd.f32 %v1517, %v1536
    %1538 = vdwg.mxu0
    %1539 = vmatpush.msra.mxu0 %v377
    %1540 = vmatpush.msra.mxu0 %v376
    %1541 = vmatpush.msra.mxu0 %v375
    %1542 = vmatpush.msra.mxu0 %v374
    %1543 = vmatpush.msra.mxu0 %v373
    %1544 = vmatpush.msra.mxu0 %v372
    %1545 = vmatpush.msra.mxu0 %v371
    %1546 = vmatpush.msra.mxu0 %v370
    %1547 = vmatpush.msra.mxu0 %v369
    %1548 = vmatpush.msra.mxu0 %v368
    %1549 = vmatpush.msra.mxu0 %v367
    %1550 = vmatpush.msra.mxu0 %v366
    %1551 = vmatpush.msra.mxu0 %v365
    %1552 = vmatpush.msra.mxu0 %v364
    %1553 = vmatpush.msra.mxu0 %v363
    %1554 = vmatpush.msra.mxu0 %v362
    %1555 = vmatmul.f32.gmra.mxu0 %v1032
    %v1556 = vpop.f32.mrf.mxu0
    %v1557 = vadd.f32 %v1537, %v1556
    %1558 = vdwg.mxu0
    %1559 = vmatpush.msra.mxu0 %v393
    %1560 = vmatpush.msra.mxu0 %v392
    %1561 = vmatpush.msra.mxu0 %v391
    %1562 = vmatpush.msra.mxu0 %v390
    %1563 = vmatpush.msra.mxu0 %v389
    %1564 = vmatpush.msra.mxu0 %v388
    %1565 = vmatpush.msra.mxu0 %v387
    %1566 = vmatpush.msra.mxu0 %v386
    %1567 = vmatpush.msra.mxu0 %v385
    %1568 = vmatpush.msra.mxu0 %v384
    %1569 = vmatpush.msra.mxu0 %v383
    %1570 = vmatpush.msra.mxu0 %v382
    %1571 = vmatpush.msra.mxu0 %v381
    %1572 = vmatpush.msra.mxu0 %v380
    %1573 = vmatpush.msra.mxu0 %v379
    %1574 = vmatpush.msra.mxu0 %v378
    %1575 = vmatmul.f32.gmra.mxu0 %v1033
    %v1576 = vpop.f32.mrf.mxu0
    %v1577 = vadd.f32 %v1557, %v1576
    %1578 = vdwg.mxu0
    %1579 = vmatpush.msra.mxu0 %v409
    %1580 = vmatpush.msra.mxu0 %v408
    %1581 = vmatpush.msra.mxu0 %v407
    %1582 = vmatpush.msra.mxu0 %v406
    %1583 = vmatpush.msra.mxu0 %v405
    %1584 = vmatpush.msra.mxu0 %v404
    %1585 = vmatpush.msra.mxu0 %v403
    %1586 = vmatpush.msra.mxu0 %v402
    %1587 = vmatpush.msra.mxu0 %v401
    %1588 = vmatpush.msra.mxu0 %v400
    %1589 = vmatpush.msra.mxu0 %v399
    %1590 = vmatpush.msra.mxu0 %v398
    %1591 = vmatpush.msra.mxu0 %v397
    %1592 = vmatpush.msra.mxu0 %v396
    %1593 = vmatpush.msra.mxu0 %v395
    %1594 = vmatpush.msra.mxu0 %v394
    %1595 = vmatmul.f32.gmra.mxu0 %v1034
    %v1596 = vpop.f32.mrf.mxu0
    %v1597 = vadd.f32 %v1577, %v1596
    %1598 = vdwg.mxu0
    %1599 = vmatpush.msra.mxu0 %v425
    %1600 = vmatpush.msra.mxu0 %v424
    %1601 = vmatpush.msra.mxu0 %v423
    %1602 = vmatpush.msra.mxu0 %v422
    %1603 = vmatpush.msra.mxu0 %v421
    %1604 = vmatpush.msra.mxu0 %v420
    %1605 = vmatpush.msra.mxu0 %v419
    %1606 = vmatpush.msra.mxu0 %v418
    %1607 = vmatpush.msra.mxu0 %v417
    %1608 = vmatpush.msra.mxu0 %v416
    %1609 = vmatpush.msra.mxu0 %v415
    %1610 = vmatpush.msra.mxu0 %v414
    %1611 = vmatpush.msra.mxu0 %v413
    %1612 = vmatpush.msra.mxu0 %v412
    %1613 = vmatpush.msra.mxu0 %v411
    %1614 = vmatpush.msra.mxu0 %v410
    %1615 = vmatmul.f32.gmra.mxu0 %v1035
    %v1616 = vpop.f32.mrf.mxu0
    %v1617 = vadd.f32 %v1597, %v1616
    %1618 = vdwg.mxu0
    %1619 = vmatpush.msra.mxu0 %v441
    %1620 = vmatpush.msra.mxu0 %v440
    %1621 = vmatpush.msra.mxu0 %v439
    %1622 = vmatpush.msra.mxu0 %v438
    %1623 = vmatpush.msra.mxu0 %v437
    %1624 = vmatpush.msra.mxu0 %v436
    %1625 = vmatpush.msra.mxu0 %v435
    %1626 = vmatpush.msra.mxu0 %v434
    %1627 = vmatpush.msra.mxu0 %v433
    %1628 = vmatpush.msra.mxu0 %v432
    %1629 = vmatpush.msra.mxu0 %v431
    %1630 = vmatpush.msra.mxu0 %v430
    %1631 = vmatpush.msra.mxu0 %v429
    %1632 = vmatpush.msra.mxu0 %v428
    %1633 = vmatpush.msra.mxu0 %v427
    %1634 = vmatpush.msra.mxu0 %v426
    %1635 = vmatmul.f32.gmra.mxu0 %v1038
    %v1636 = vpop.f32.mrf.mxu0
    %v1637 = vadd.f32 %v1617, %v1636
    %1638 = vdwg.mxu0
    %1639 = vmatpush.msra.mxu0 %v457
    %1640 = vmatpush.msra.mxu0 %v456
    %1641 = vmatpush.msra.mxu0 %v455
    %1642 = vmatpush.msra.mxu0 %v454
    %1643 = vmatpush.msra.mxu0 %v453
    %1644 = vmatpush.msra.mxu0 %v452
    %1645 = vmatpush.msra.mxu0 %v451
    %1646 = vmatpush.msra.mxu0 %v450
    %1647 = vmatpush.msra.mxu0 %v449
    %1648 = vmatpush.msra.mxu0 %v448
    %1649 = vmatpush.msra.mxu0 %v447
    %1650 = vmatpush.msra.mxu0 %v446
    %1651 = vmatpush.msra.mxu0 %v445
    %1652 = vmatpush.msra.mxu0 %v444
    %1653 = vmatpush.msra.mxu0 %v443
    %1654 = vmatpush.msra.mxu0 %v442
    %1655 = vmatmul.f32.gmra.mxu0 %v1039
    %v1656 = vpop.f32.mrf.mxu0
    %v1657 = vadd.f32 %v1637, %v1656
    %1658 = vdwg.mxu0
    %1659 = vmatpush.msra.mxu0 %v473
    %1660 = vmatpush.msra.mxu0 %v472
    %1661 = vmatpush.msra.mxu0 %v471
    %1662 = vmatpush.msra.mxu0 %v470
    %1663 = vmatpush.msra.mxu0 %v469
    %1664 = vmatpush.msra.mxu0 %v468
    %1665 = vmatpush.msra.mxu0 %v467
    %1666 = vmatpush.msra.mxu0 %v466
    %1667 = vmatpush.msra.mxu0 %v465
    %1668 = vmatpush.msra.mxu0 %v464
    %1669 = vmatpush.msra.mxu0 %v463
    %1670 = vmatpush.msra.mxu0 %v462
    %1671 = vmatpush.msra.mxu0 %v461
    %1672 = vmatpush.msra.mxu0 %v460
    %1673 = vmatpush.msra.mxu0 %v459
    %1674 = vmatpush.msra.mxu0 %v458
    %1675 = vmatmul.f32.gmra.mxu0 %v1040
    %v1676 = vpop.f32.mrf.mxu0
    %v1677 = vadd.f32 %v1657, %v1676
    %1678 = vdwg.mxu0
    %1679 = vmatpush.msra.mxu0 %v489
    %1680 = vmatpush.msra.mxu0 %v488
    %1681 = vmatpush.msra.mxu0 %v487
    %1682 = vmatpush.msra.mxu0 %v486
    %1683 = vmatpush.msra.mxu0 %v485
    %1684 = vmatpush.msra.mxu0 %v484
    %1685 = vmatpush.msra.mxu0 %v483
    %1686 = vmatpush.msra.mxu0 %v482
    %1687 = vmatpush.msra.mxu0 %v481
    %1688 = vmatpush.msra.mxu0 %v480
    %1689 = vmatpush.msra.mxu0 %v479
    %1690 = vmatpush.msra.mxu0 %v478
    %1691 = vmatpush.msra.mxu0 %v477
    %1692 = vmatpush.msra.mxu0 %v476
    %1693 = vmatpush.msra.mxu0 %v475
    %1694 = vmatpush.msra.mxu0 %v474
    %1695 = vmatmul.f32.gmra.mxu0 %v1041
    %v1696 = vpop.f32.mrf.mxu0
    %v1697 = vadd.f32 %v1677, %v1696
    %1698 = vdwg.mxu0
    %1699 = vmatpush.msra.mxu0 %v505
    %1700 = vmatpush.msra.mxu0 %v504
    %1701 = vmatpush.msra.mxu0 %v503
    %1702 = vmatpush.msra.mxu0 %v502
    %1703 = vmatpush.msra.mxu0 %v501
    %1704 = vmatpush.msra.mxu0 %v500
    %1705 = vmatpush.msra.mxu0 %v499
    %1706 = vmatpush.msra.mxu0 %v498
    %1707 = vmatpush.msra.mxu0 %v497
    %1708 = vmatpush.msra.mxu0 %v496
    %1709 = vmatpush.msra.mxu0 %v495
    %1710 = vmatpush.msra.mxu0 %v494
    %1711 = vmatpush.msra.mxu0 %v493
    %1712 = vmatpush.msra.mxu0 %v492
    %1713 = vmatpush.msra.mxu0 %v491
    %1714 = vmatpush.msra.mxu0 %v490
    %1715 = vmatmul.f32.gmra.mxu0 %v1042
    %v1716 = vpop.f32.mrf.mxu0
    %v1717 = vadd.f32 %v1697, %v1716
    %1718 = vdwg.mxu0
    %1719 = vmatpush.msra.mxu0 %v521
    %1720 = vmatpush.msra.mxu0 %v520
    %1721 = vmatpush.msra.mxu0 %v519
    %1722 = vmatpush.msra.mxu0 %v518
    %1723 = vmatpush.msra.mxu0 %v517
    %1724 = vmatpush.msra.mxu0 %v516
    %1725 = vmatpush.msra.mxu0 %v515
    %1726 = vmatpush.msra.mxu0 %v514
    %1727 = vmatpush.msra.mxu0 %v513
    %1728 = vmatpush.msra.mxu0 %v512
    %1729 = vmatpush.msra.mxu0 %v511
    %1730 = vmatpush.msra.mxu0 %v510
    %1731 = vmatpush.msra.mxu0 %v509
    %1732 = vmatpush.msra.mxu0 %v508
    %1733 = vmatpush.msra.mxu0 %v507
    %1734 = vmatpush.msra.mxu0 %v506
    %1735 = vmatmul.f32.gmra.mxu0 %v1043
    %v1736 = vpop.f32.mrf.mxu0
    %v1737 = vadd.f32 %v1717, %v1736
    %1738 = vdwg.mxu0
    %1739 = vmatpush.msra.mxu0 %v537
    %1740 = vmatpush.msra.mxu0 %v536
    %1741 = vmatpush.msra.mxu0 %v535
    %1742 = vmatpush.msra.mxu0 %v534
    %1743 = vmatpush.msra.mxu0 %v533
    %1744 = vmatpush.msra.mxu0 %v532
    %1745 = vmatpush.msra.mxu0 %v531
    %1746 = vmatpush.msra.mxu0 %v530
    %1747 = vmatpush.msra.mxu0 %v529
    %1748 = vmatpush.msra.mxu0 %v528
    %1749 = vmatpush.msra.mxu0 %v527
    %1750 = vmatpush.msra.mxu0 %v526
    %1751 = vmatpush.msra.mxu0 %v525
    %1752 = vmatpush.msra.mxu0 %v524
    %1753 = vmatpush.msra.mxu0 %v523
    %1754 = vmatpush.msra.mxu0 %v522
    %1755 = vmatmul.f32.gmra.mxu0 %v1044
    %v1756 = vpop.f32.mrf.mxu0
    %v1757 = vadd.f32 %v1737, %v1756
    %1758 = vdwg.mxu0
    %1759 = vmatpush.msra.mxu0 %v553
    %1760 = vmatpush.msra.mxu0 %v552
    %1761 = vmatpush.msra.mxu0 %v551
    %1762 = vmatpush.msra.mxu0 %v550
    %1763 = vmatpush.msra.mxu0 %v549
    %1764 = vmatpush.msra.mxu0 %v548
    %1765 = vmatpush.msra.mxu0 %v547
    %1766 = vmatpush.msra.mxu0 %v546
    %1767 = vmatpush.msra.mxu0 %v545
    %1768 = vmatpush.msra.mxu0 %v544
    %1769 = vmatpush.msra.mxu0 %v543
    %1770 = vmatpush.msra.mxu0 %v542
    %1771 = vmatpush.msra.mxu0 %v541
    %1772 = vmatpush.msra.mxu0 %v540
    %1773 = vmatpush.msra.mxu0 %v539
    %1774 = vmatpush.msra.mxu0 %v538
    %1775 = vmatmul.f32.gmra.mxu0 %v1045
    %v1776 = vpop.f32.mrf.mxu0
    %v1777 = vadd.f32 %v1757, %v1776
    %1778 = vdwg.mxu0
    %1779 = vmatpush.msra.mxu0 %v569
    %1780 = vmatpush.msra.mxu0 %v568
    %1781 = vmatpush.msra.mxu0 %v567
    %1782 = vmatpush.msra.mxu0 %v566
    %1783 = vmatpush.msra.mxu0 %v565
    %1784 = vmatpush.msra.mxu0 %v564
    %1785 = vmatpush.msra.mxu0 %v563
    %1786 = vmatpush.msra.mxu0 %v562
    %1787 = vmatpush.msra.mxu0 %v561
    %1788 = vmatpush.msra.mxu0 %v560
    %1789 = vmatpush.msra.mxu0 %v559
    %1790 = vmatpush.msra.mxu0 %v558
    %1791 = vmatpush.msra.mxu0 %v557
    %1792 = vmatpush.msra.mxu0 %v556
    %1793 = vmatpush.msra.mxu0 %v555
    %1794 = vmatpush.msra.mxu0 %v554
    %1795 = vmatmul.f32.gmra.mxu0 %v1048
    %v1796 = vpop.f32.mrf.mxu0
    %v1797 = vadd.f32 %v1777, %v1796
    %1798 = vdwg.mxu0
    %1799 = vmatpush.msra.mxu0 %v585
    %1800 = vmatpush.msra.mxu0 %v584
    %1801 = vmatpush.msra.mxu0 %v583
    %1802 = vmatpush.msra.mxu0 %v582
    %1803 = vmatpush.msra.mxu0 %v581
    %1804 = vmatpush.msra.mxu0 %v580
    %1805 = vmatpush.msra.mxu0 %v579
    %1806 = vmatpush.msra.mxu0 %v578
    %1807 = vmatpush.msra.mxu0 %v577
    %1808 = vmatpush.msra.mxu0 %v576
    %1809 = vmatpush.msra.mxu0 %v575
    %1810 = vmatpush.msra.mxu0 %v574
    %1811 = vmatpush.msra.mxu0 %v573
    %1812 = vmatpush.msra.mxu0 %v572
    %1813 = vmatpush.msra.mxu0 %v571
    %1814 = vmatpush.msra.mxu0 %v570
    %1815 = vmatmul.f32.gmra.mxu0 %v1049
    %v1816 = vpop.f32.mrf.mxu0
    %v1817 = vadd.f32 %v1797, %v1816
    %1818 = vdwg.mxu0
    %1819 = vmatpush.msra.mxu0 %v601
    %1820 = vmatpush.msra.mxu0 %v600
    %1821 = vmatpush.msra.mxu0 %v599
    %1822 = vmatpush.msra.mxu0 %v598
    %1823 = vmatpush.msra.mxu0 %v597
    %1824 = vmatpush.msra.mxu0 %v596
    %1825 = vmatpush.msra.mxu0 %v595
    %1826 = vmatpush.msra.mxu0 %v594
    %1827 = vmatpush.msra.mxu0 %v593
    %1828 = vmatpush.msra.mxu0 %v592
    %1829 = vmatpush.msra.mxu0 %v591
    %1830 = vmatpush.msra.mxu0 %v590
    %1831 = vmatpush.msra.mxu0 %v589
    %1832 = vmatpush.msra.mxu0 %v588
    %1833 = vmatpush.msra.mxu0 %v587
    %1834 = vmatpush.msra.mxu0 %v586
    %1835 = vmatmul.f32.gmra.mxu0 %v1050
    %v1836 = vpop.f32.mrf.mxu0
    %v1837 = vadd.f32 %v1817, %v1836
    %1838 = vdwg.mxu0
    %1839 = vmatpush.msra.mxu0 %v617
    %1840 = vmatpush.msra.mxu0 %v616
    %1841 = vmatpush.msra.mxu0 %v615
    %1842 = vmatpush.msra.mxu0 %v614
    %1843 = vmatpush.msra.mxu0 %v613
    %1844 = vmatpush.msra.mxu0 %v612
    %1845 = vmatpush.msra.mxu0 %v611
    %1846 = vmatpush.msra.mxu0 %v610
    %1847 = vmatpush.msra.mxu0 %v609
    %1848 = vmatpush.msra.mxu0 %v608
    %1849 = vmatpush.msra.mxu0 %v607
    %1850 = vmatpush.msra.mxu0 %v606
    %1851 = vmatpush.msra.mxu0 %v605
    %1852 = vmatpush.msra.mxu0 %v604
    %1853 = vmatpush.msra.mxu0 %v603
    %1854 = vmatpush.msra.mxu0 %v602
    %1855 = vmatmul.f32.gmra.mxu0 %v1051
    %v1856 = vpop.f32.mrf.mxu0
    %v1857 = vadd.f32 %v1837, %v1856
    %1858 = vdwg.mxu0
    %1859 = vmatpush.msra.mxu0 %v633
    %1860 = vmatpush.msra.mxu0 %v632
    %1861 = vmatpush.msra.mxu0 %v631
    %1862 = vmatpush.msra.mxu0 %v630
    %1863 = vmatpush.msra.mxu0 %v629
    %1864 = vmatpush.msra.mxu0 %v628
    %1865 = vmatpush.msra.mxu0 %v627
    %1866 = vmatpush.msra.mxu0 %v626
    %1867 = vmatpush.msra.mxu0 %v625
    %1868 = vmatpush.msra.mxu0 %v624
    %1869 = vmatpush.msra.mxu0 %v623
    %1870 = vmatpush.msra.mxu0 %v622
    %1871 = vmatpush.msra.mxu0 %v621
    %1872 = vmatpush.msra.mxu0 %v620
    %1873 = vmatpush.msra.mxu0 %v619
    %1874 = vmatpush.msra.mxu0 %v618
    %1875 = vmatmul.f32.gmra.mxu0 %v1052
    %v1876 = vpop.f32.mrf.mxu0
    %v1877 = vadd.f32 %v1857, %v1876
    %1878 = vdwg.mxu0
    %1879 = vmatpush.msra.mxu0 %v649
    %1880 = vmatpush.msra.mxu0 %v648
    %1881 = vmatpush.msra.mxu0 %v647
    %1882 = vmatpush.msra.mxu0 %v646
    %1883 = vmatpush.msra.mxu0 %v645
    %1884 = vmatpush.msra.mxu0 %v644
    %1885 = vmatpush.msra.mxu0 %v643
    %1886 = vmatpush.msra.mxu0 %v642
    %1887 = vmatpush.msra.mxu0 %v641
    %1888 = vmatpush.msra.mxu0 %v640
    %1889 = vmatpush.msra.mxu0 %v639
    %1890 = vmatpush.msra.mxu0 %v638
    %1891 = vmatpush.msra.mxu0 %v637
    %1892 = vmatpush.msra.mxu0 %v636
    %1893 = vmatpush.msra.mxu0 %v635
    %1894 = vmatpush.msra.mxu0 %v634
    %1895 = vmatmul.f32.gmra.mxu0 %v1053
    %v1896 = vpop.f32.mrf.mxu0
    %v1897 = vadd.f32 %v1877, %v1896
    %1898 = vdwg.mxu0
    %1899 = vmatpush.msra.mxu0 %v665
    %1900 = vmatpush.msra.mxu0 %v664
    %1901 = vmatpush.msra.mxu0 %v663
    %1902 = vmatpush.msra.mxu0 %v662
    %1903 = vmatpush.msra.mxu0 %v661
    %1904 = vmatpush.msra.mxu0 %v660
    %1905 = vmatpush.msra.mxu0 %v659
    %1906 = vmatpush.msra.mxu0 %v658
    %1907 = vmatpush.msra.mxu0 %v657
    %1908 = vmatpush.msra.mxu0 %v656
    %1909 = vmatpush.msra.mxu0 %v655
    %1910 = vmatpush.msra.mxu0 %v654
    %1911 = vmatpush.msra.mxu0 %v653
    %1912 = vmatpush.msra.mxu0 %v652
    %1913 = vmatpush.msra.mxu0 %v651
    %1914 = vmatpush.msra.mxu0 %v650
    %1915 = vmatmul.f32.gmra.mxu0 %v1054
    %v1916 = vpop.f32.mrf.mxu0
    %v1917 = vadd.f32 %v1897, %v1916
    %1918 = vdwg.mxu0
    %1919 = vmatpush.msra.mxu0 %v681
    %1920 = vmatpush.msra.mxu0 %v680
    %1921 = vmatpush.msra.mxu0 %v679
    %1922 = vmatpush.msra.mxu0 %v678
    %1923 = vmatpush.msra.mxu0 %v677
    %1924 = vmatpush.msra.mxu0 %v676
    %1925 = vmatpush.msra.mxu0 %v675
    %1926 = vmatpush.msra.mxu0 %v674
    %1927 = vmatpush.msra.mxu0 %v673
    %1928 = vmatpush.msra.mxu0 %v672
    %1929 = vmatpush.msra.mxu0 %v671
    %1930 = vmatpush.msra.mxu0 %v670
    %1931 = vmatpush.msra.mxu0 %v669
    %1932 = vmatpush.msra.mxu0 %v668
    %1933 = vmatpush.msra.mxu0 %v667
    %1934 = vmatpush.msra.mxu0 %v666
    %1935 = vmatmul.f32.gmra.mxu0 %v1055
    %v1936 = vpop.f32.mrf.mxu0
    %v1937 = vadd.f32 %v1917, %v1936
    %1938 = vdwg.mxu0
    %1939 = vmatpush.msra.mxu0 %v697
    %1940 = vmatpush.msra.mxu0 %v696
    %1941 = vmatpush.msra.mxu0 %v695
    %1942 = vmatpush.msra.mxu0 %v694
    %1943 = vmatpush.msra.mxu0 %v693
    %1944 = vmatpush.msra.mxu0 %v692
    %1945 = vmatpush.msra.mxu0 %v691
    %1946 = vmatpush.msra.mxu0 %v690
    %1947 = vmatpush.msra.mxu0 %v689
    %1948 = vmatpush.msra.mxu0 %v688
    %1949 = vmatpush.msra.mxu0 %v687
    %1950 = vmatpush.msra.mxu0 %v686
    %1951 = vmatpush.msra.mxu0 %v685
    %1952 = vmatpush.msra.mxu0 %v684
    %1953 = vmatpush.msra.mxu0 %v683
    %1954 = vmatpush.msra.mxu0 %v682
    %1955 = vmatmul.f32.gmra.mxu0 %v1058
    %v1956 = vpop.f32.mrf.mxu0
    %v1957 = vadd.f32 %v1937, %v1956
    %1958 = vdwg.mxu0
    %1959 = vmatpush.msra.mxu0 %v713
    %1960 = vmatpush.msra.mxu0 %v712
    %1961 = vmatpush.msra.mxu0 %v711
    %1962 = vmatpush.msra.mxu0 %v710
    %1963 = vmatpush.msra.mxu0 %v709
    %1964 = vmatpush.msra.mxu0 %v708
    %1965 = vmatpush.msra.mxu0 %v707
    %1966 = vmatpush.msra.mxu0 %v706
    %1967 = vmatpush.msra.mxu0 %v705
    %1968 = vmatpush.msra.mxu0 %v704
    %1969 = vmatpush.msra.mxu0 %v703
    %1970 = vmatpush.msra.mxu0 %v702
    %1971 = vmatpush.msra.mxu0 %v701
    %1972 = vmatpush.msra.mxu0 %v700
    %1973 = vmatpush.msra.mxu0 %v699
    %1974 = vmatpush.msra.mxu0 %v698
    %1975 = vmatmul.f32.gmra.mxu0 %v1059
    %v1976 = vpop.f32.mrf.mxu0
    %v1977 = vadd.f32 %v1957, %v1976
    %1978 = vdwg.mxu0
    %1979 = vmatpush.msra.mxu0 %v729
    %1980 = vmatpush.msra.mxu0 %v728
    %1981 = vmatpush.msra.mxu0 %v727
    %1982 = vmatpush.msra.mxu0 %v726
    %1983 = vmatpush.msra.mxu0 %v725
    %1984 = vmatpush.msra.mxu0 %v724
    %1985 = vmatpush.msra.mxu0 %v723
    %1986 = vmatpush.msra.mxu0 %v722
    %1987 = vmatpush.msra.mxu0 %v721
    %1988 = vmatpush.msra.mxu0 %v720
    %1989 = vmatpush.msra.mxu0 %v719
    %1990 = vmatpush.msra.mxu0 %v718
    %1991 = vmatpush.msra.mxu0 %v717
    %1992 = vmatpush.msra.mxu0 %v716
    %1993 = vmatpush.msra.mxu0 %v715
    %1994 = vmatpush.msra.mxu0 %v714
    %1995 = vmatmul.f32.gmra.mxu0 %v1060
    %v1996 = vpop.f32.mrf.mxu0
    %v1997 = vadd.f32 %v1977, %v1996
    %1998 = vdwg.mxu0
    %1999 = vmatpush.msra.mxu0 %v745
    %2000 = vmatpush.msra.mxu0 %v744
    %2001 = vmatpush.msra.mxu0 %v743
    %2002 = vmatpush.msra.mxu0 %v742
    %2003 = vmatpush.msra.mxu0 %v741
    %2004 = vmatpush.msra.mxu0 %v740
    %2005 = vmatpush.msra.mxu0 %v739
    %2006 = vmatpush.msra.mxu0 %v738
    %2007 = vmatpush.msra.mxu0 %v737
    %2008 = vmatpush.msra.mxu0 %v736
    %2009 = vmatpush.msra.mxu0 %v735
    %2010 = vmatpush.msra.mxu0 %v734
    %2011 = vmatpush.msra.mxu0 %v733
    %2012 = vmatpush.msra.mxu0 %v732
    %2013 = vmatpush.msra.mxu0 %v731
    %2014 = vmatpush.msra.mxu0 %v730
    %2015 = vmatmul.f32.gmra.mxu0 %v1061
    %v2016 = vpop.f32.mrf.mxu0
    %v2017 = vadd.f32 %v1997, %v2016
    %2018 = vdwg.mxu0
    %2019 = vmatpush.msra.mxu0 %v761
    %2020 = vmatpush.msra.mxu0 %v760
    %2021 = vmatpush.msra.mxu0 %v759
    %2022 = vmatpush.msra.mxu0 %v758
    %2023 = vmatpush.msra.mxu0 %v757
    %2024 = vmatpush.msra.mxu0 %v756
    %2025 = vmatpush.msra.mxu0 %v755
    %2026 = vmatpush.msra.mxu0 %v754
    %2027 = vmatpush.msra.mxu0 %v753
    %2028 = vmatpush.msra.mxu0 %v752
    %2029 = vmatpush.msra.mxu0 %v751
    %2030 = vmatpush.msra.mxu0 %v750
    %2031 = vmatpush.msra.mxu0 %v749
    %2032 = vmatpush.msra.mxu0 %v748
    %2033 = vmatpush.msra.mxu0 %v747
    %2034 = vmatpush.msra.mxu0 %v746
    %2035 = vmatmul.f32.gmra.mxu0 %v1062
    %v2036 = vpop.f32.mrf.mxu0
    %v2037 = vadd.f32 %v2017, %v2036
    %2038 = vdwg.mxu0
    %2039 = vmatpush.msra.mxu0 %v777
    %2040 = vmatpush.msra.mxu0 %v776
    %2041 = vmatpush.msra.mxu0 %v775
    %2042 = vmatpush.msra.mxu0 %v774
    %2043 = vmatpush.msra.mxu0 %v773
    %2044 = vmatpush.msra.mxu0 %v772
    %2045 = vmatpush.msra.mxu0 %v771
    %2046 = vmatpush.msra.mxu0 %v770
    %2047 = vmatpush.msra.mxu0 %v769
    %2048 = vmatpush.msra.mxu0 %v768
    %2049 = vmatpush.msra.mxu0 %v767
    %2050 = vmatpush.msra.mxu0 %v766
    %2051 = vmatpush.msra.mxu0 %v765
    %2052 = vmatpush.msra.mxu0 %v764
    %2053 = vmatpush.msra.mxu0 %v763
    %2054 = vmatpush.msra.mxu0 %v762
    %2055 = vmatmul.f32.gmra.mxu0 %v1063
    %v2056 = vpop.f32.mrf.mxu0
    %v2057 = vadd.f32 %v2037, %v2056
    %2058 = vdwg.mxu0
    %2059 = vmatpush.msra.mxu0 %v793
    %2060 = vmatpush.msra.mxu0 %v792
    %2061 = vmatpush.msra.mxu0 %v791
    %2062 = vmatpush.msra.mxu0 %v790
    %2063 = vmatpush.msra.mxu0 %v789
    %2064 = vmatpush.msra.mxu0 %v788
    %2065 = vmatpush.msra.mxu0 %v787
    %2066 = vmatpush.msra.mxu0 %v786
    %2067 = vmatpush.msra.mxu0 %v785
    %2068 = vmatpush.msra.mxu0 %v784
    %2069 = vmatpush.msra.mxu0 %v783
    %2070 = vmatpush.msra.mxu0 %v782
    %2071 = vmatpush.msra.mxu0 %v781
    %2072 = vmatpush.msra.mxu0 %v780
    %2073 = vmatpush.msra.mxu0 %v779
    %2074 = vmatpush.msra.mxu0 %v778
    %2075 = vmatmul.f32.gmra.mxu0 %v1064
    %v2076 = vpop.f32.mrf.mxu0
    %v2077 = vadd.f32 %v2057, %v2076
    %2078 = vdwg.mxu0
    %2079 = vmatpush.msra.mxu0 %v809
    %2080 = vmatpush.msra.mxu0 %v808
    %2081 = vmatpush.msra.mxu0 %v807
    %2082 = vmatpush.msra.mxu0 %v806
    %2083 = vmatpush.msra.mxu0 %v805
    %2084 = vmatpush.msra.mxu0 %v804
    %2085 = vmatpush.msra.mxu0 %v803
    %2086 = vmatpush.msra.mxu0 %v802
    %2087 = vmatpush.msra.mxu0 %v801
    %2088 = vmatpush.msra.mxu0 %v800
    %2089 = vmatpush.msra.mxu0 %v799
    %2090 = vmatpush.msra.mxu0 %v798
    %2091 = vmatpush.msra.mxu0 %v797
    %2092 = vmatpush.msra.mxu0 %v796
    %2093 = vmatpush.msra.mxu0 %v795
    %2094 = vmatpush.msra.mxu0 %v794
    %2095 = vmatmul.f32.gmra.mxu0 %v1065
    %v2096 = vpop.f32.mrf.mxu0
    %v2097 = vadd.f32 %v2077, %v2096
    %2098 = vdwg.mxu0
    %2099 = vmatpush.msra.mxu0 %v825
    %2100 = vmatpush.msra.mxu0 %v824
    %2101 = vmatpush.msra.mxu0 %v823
    %2102 = vmatpush.msra.mxu0 %v822
    %2103 = vmatpush.msra.mxu0 %v821
    %2104 = vmatpush.msra.mxu0 %v820
    %2105 = vmatpush.msra.mxu0 %v819
    %2106 = vmatpush.msra.mxu0 %v818
    %2107 = vmatpush.msra.mxu0 %v817
    %2108 = vmatpush.msra.mxu0 %v816
    %2109 = vmatpush.msra.mxu0 %v815
    %2110 = vmatpush.msra.mxu0 %v814
    %2111 = vmatpush.msra.mxu0 %v813
    %2112 = vmatpush.msra.mxu0 %v812
    %2113 = vmatpush.msra.mxu0 %v811
    %2114 = vmatpush.msra.mxu0 %v810
    %2115 = vmatmul.f32.gmra.mxu0 %v1068
    %v2116 = vpop.f32.mrf.mxu0
    %v2117 = vadd.f32 %v2097, %v2116
    %2118 = vdwg.mxu0
    %2119 = vmatpush.msra.mxu0 %v841
    %2120 = vmatpush.msra.mxu0 %v840
    %2121 = vmatpush.msra.mxu0 %v839
    %2122 = vmatpush.msra.mxu0 %v838
    %2123 = vmatpush.msra.mxu0 %v837
    %2124 = vmatpush.msra.mxu0 %v836
    %2125 = vmatpush.msra.mxu0 %v835
    %2126 = vmatpush.msra.mxu0 %v834
    %2127 = vmatpush.msra.mxu0 %v833
    %2128 = vmatpush.msra.mxu0 %v832
    %2129 = vmatpush.msra.mxu0 %v831
    %2130 = vmatpush.msra.mxu0 %v830
    %2131 = vmatpush.msra.mxu0 %v829
    %2132 = vmatpush.msra.mxu0 %v828
    %2133 = vmatpush.msra.mxu0 %v827
    %2134 = vmatpush.msra.mxu0 %v826
    %2135 = vmatmul.f32.gmra.mxu0 %v1069
    %v2136 = vpop.f32.mrf.mxu0
    %v2137 = vadd.f32 %v2117, %v2136
    %2138 = vdwg.mxu0
    %2139 = vmatpush.msra.mxu0 %v857
    %2140 = vmatpush.msra.mxu0 %v856
    %2141 = vmatpush.msra.mxu0 %v855
    %2142 = vmatpush.msra.mxu0 %v854
    %2143 = vmatpush.msra.mxu0 %v853
    %2144 = vmatpush.msra.mxu0 %v852
    %2145 = vmatpush.msra.mxu0 %v851
    %2146 = vmatpush.msra.mxu0 %v850
    %2147 = vmatpush.msra.mxu0 %v849
    %2148 = vmatpush.msra.mxu0 %v848
    %2149 = vmatpush.msra.mxu0 %v847
    %2150 = vmatpush.msra.mxu0 %v846
    %2151 = vmatpush.msra.mxu0 %v845
    %2152 = vmatpush.msra.mxu0 %v844
    %2153 = vmatpush.msra.mxu0 %v843
    %2154 = vmatpush.msra.mxu0 %v842
    %2155 = vmatmul.f32.gmra.mxu0 %v1070
    %v2156 = vpop.f32.mrf.mxu0
    %v2157 = vadd.f32 %v2137, %v2156
    %2158 = vdwg.mxu0
    %2159 = vmatpush.msra.mxu0 %v873
    %2160 = vmatpush.msra.mxu0 %v872
    %2161 = vmatpush.msra.mxu0 %v871
    %2162 = vmatpush.msra.mxu0 %v870
    %2163 = vmatpush.msra.mxu0 %v869
    %2164 = vmatpush.msra.mxu0 %v868
    %2165 = vmatpush.msra.mxu0 %v867
    %2166 = vmatpush.msra.mxu0 %v866
    %2167 = vmatpush.msra.mxu0 %v865
    %2168 = vmatpush.msra.mxu0 %v864
    %2169 = vmatpush.msra.mxu0 %v863
    %2170 = vmatpush.msra.mxu0 %v862
    %2171 = vmatpush.msra.mxu0 %v861
    %2172 = vmatpush.msra.mxu0 %v860
    %2173 = vmatpush.msra.mxu0 %v859
    %2174 = vmatpush.msra.mxu0 %v858
    %2175 = vmatmul.f32.gmra.mxu0 %v1071
    %v2176 = vpop.f32.mrf.mxu0
    %v2177 = vadd.f32 %v2157, %v2176
    %2178 = vdwg.mxu0
    %2179 = vmatpush.msra.mxu0 %v889
    %2180 = vmatpush.msra.mxu0 %v888
    %2181 = vmatpush.msra.mxu0 %v887
    %2182 = vmatpush.msra.mxu0 %v886
    %2183 = vmatpush.msra.mxu0 %v885
    %2184 = vmatpush.msra.mxu0 %v884
    %2185 = vmatpush.msra.mxu0 %v883
    %2186 = vmatpush.msra.mxu0 %v882
    %2187 = vmatpush.msra.mxu0 %v881
    %2188 = vmatpush.msra.mxu0 %v880
    %2189 = vmatpush.msra.mxu0 %v879
    %2190 = vmatpush.msra.mxu0 %v878
    %2191 = vmatpush.msra.mxu0 %v877
    %2192 = vmatpush.msra.mxu0 %v876
    %2193 = vmatpush.msra.mxu0 %v875
    %2194 = vmatpush.msra.mxu0 %v874
    %2195 = vmatmul.f32.gmra.mxu0 %v1072
    %v2196 = vpop.f32.mrf.mxu0
    %v2197 = vadd.f32 %v2177, %v2196
    %2198 = vdwg.mxu0
    %2199 = vmatpush.msra.mxu0 %v905
    %2200 = vmatpush.msra.mxu0 %v904
    %2201 = vmatpush.msra.mxu0 %v903
    %2202 = vmatpush.msra.mxu0 %v902
    %2203 = vmatpush.msra.mxu0 %v901
    %2204 = vmatpush.msra.mxu0 %v900
    %2205 = vmatpush.msra.mxu0 %v899
    %2206 = vmatpush.msra.mxu0 %v898
    %2207 = vmatpush.msra.mxu0 %v897
    %2208 = vmatpush.msra.mxu0 %v896
    %2209 = vmatpush.msra.mxu0 %v895
    %2210 = vmatpush.msra.mxu0 %v894
    %2211 = vmatpush.msra.mxu0 %v893
    %2212 = vmatpush.msra.mxu0 %v892
    %2213 = vmatpush.msra.mxu0 %v891
    %2214 = vmatpush.msra.mxu0 %v890
    %2215 = vmatmul.f32.gmra.mxu0 %v1073
    %v2216 = vpop.f32.mrf.mxu0
    %v2217 = vadd.f32 %v2197, %v2216
    %2218 = vdwg.mxu0
    %2219 = vmatpush.msra.mxu0 %v921
    %2220 = vmatpush.msra.mxu0 %v920
    %2221 = vmatpush.msra.mxu0 %v919
    %2222 = vmatpush.msra.mxu0 %v918
    %2223 = vmatpush.msra.mxu0 %v917
    %2224 = vmatpush.msra.mxu0 %v916
    %2225 = vmatpush.msra.mxu0 %v915
    %2226 = vmatpush.msra.mxu0 %v914
    %2227 = vmatpush.msra.mxu0 %v913
    %2228 = vmatpush.msra.mxu0 %v912
    %2229 = vmatpush.msra.mxu0 %v911
    %2230 = vmatpush.msra.mxu0 %v910
    %2231 = vmatpush.msra.mxu0 %v909
    %2232 = vmatpush.msra.mxu0 %v908
    %2233 = vmatpush.msra.mxu0 %v907
    %2234 = vmatpush.msra.mxu0 %v906
    %2235 = vmatmul.f32.gmra.mxu0 %v1074
    %v2236 = vpop.f32.mrf.mxu0
    %v2237 = vadd.f32 %v2217, %v2236
    %2238 = vdwg.mxu0
    %2239 = vmatpush.msra.mxu0 %v937
    %2240 = vmatpush.msra.mxu0 %v936
    %2241 = vmatpush.msra.mxu0 %v935
    %2242 = vmatpush.msra.mxu0 %v934
    %2243 = vmatpush.msra.mxu0 %v933
    %2244 = vmatpush.msra.mxu0 %v932
    %2245 = vmatpush.msra.mxu0 %v931
    %2246 = vmatpush.msra.mxu0 %v930
    %2247 = vmatpush.msra.mxu0 %v929
    %2248 = vmatpush.msra.mxu0 %v928
    %2249 = vmatpush.msra.mxu0 %v927
    %2250 = vmatpush.msra.mxu0 %v926
    %2251 = vmatpush.msra.mxu0 %v925
    %2252 = vmatpush.msra.mxu0 %v924
    %2253 = vmatpush.msra.mxu0 %v923
    %2254 = vmatpush.msra.mxu0 %v922
    %2255 = vmatmul.f32.gmra.mxu0 %v1075
    %v2256 = vpop.f32.mrf.mxu0
    %v2257 = vadd.f32 %v2237, %v2256
    %2258 = vdwg.mxu0
    %2259 = vmatpush.msra.mxu0 %v953
    %2260 = vmatpush.msra.mxu0 %v952
    %2261 = vmatpush.msra.mxu0 %v951
    %2262 = vmatpush.msra.mxu0 %v950
    %2263 = vmatpush.msra.mxu0 %v949
    %2264 = vmatpush.msra.mxu0 %v948
    %2265 = vmatpush.msra.mxu0 %v947
    %2266 = vmatpush.msra.mxu0 %v946
    %2267 = vmatpush.msra.mxu0 %v945
    %2268 = vmatpush.msra.mxu0 %v944
    %2269 = vmatpush.msra.mxu0 %v943
    %2270 = vmatpush.msra.mxu0 %v942
    %2271 = vmatpush.msra.mxu0 %v941
    %2272 = vmatpush.msra.mxu0 %v940
    %2273 = vmatpush.msra.mxu0 %v939
    %2274 = vmatpush.msra.mxu0 %v938
    %2275 = vmatmul.f32.gmra.mxu0 %v1077
    %v2276 = vpop.f32.mrf.mxu0
    %v2277 = vadd.f32 %v2257, %v2276
    %2278 = vdwg.mxu0
    %2279 = vmatpush.msra.mxu0 %v969
    %2280 = vmatpush.msra.mxu0 %v968
    %2281 = vmatpush.msra.mxu0 %v967
    %2282 = vmatpush.msra.mxu0 %v966
    %2283 = vmatpush.msra.mxu0 %v965
    %2284 = vmatpush.msra.mxu0 %v964
    %2285 = vmatpush.msra.mxu0 %v963
    %2286 = vmatpush.msra.mxu0 %v962
    %2287 = vmatpush.msra.mxu0 %v961
    %2288 = vmatpush.msra.mxu0 %v960
    %2289 = vmatpush.msra.mxu0 %v959
    %2290 = vmatpush.msra.mxu0 %v958
    %2291 = vmatpush.msra.mxu0 %v957
    %2292 = vmatpush.msra.mxu0 %v956
    %2293 = vmatpush.msra.mxu0 %v955
    %2294 = vmatpush.msra.mxu0 %v954
    %2295 = vmatmul.f32.gmra.mxu0 %v1078
    %v2296 = vpop.f32.mrf.mxu0
    %v2297 = vadd.f32 %v2277, %v2296
    %2298 = vdwg.mxu0
    %2299 = vmatpush.msra.mxu0 %v985
    %2300 = vmatpush.msra.mxu0 %v984
    %2301 = vmatpush.msra.mxu0 %v983
    %2302 = vmatpush.msra.mxu0 %v982
    %2303 = vmatpush.msra.mxu0 %v981
    %2304 = vmatpush.msra.mxu0 %v980
    %2305 = vmatpush.msra.mxu0 %v979
    %2306 = vmatpush.msra.mxu0 %v978
    %2307 = vmatpush.msra.mxu0 %v977
    %2308 = vmatpush.msra.mxu0 %v976
    %2309 = vmatpush.msra.mxu0 %v975
    %2310 = vmatpush.msra.mxu0 %v974
    %2311 = vmatpush.msra.mxu0 %v973
    %2312 = vmatpush.msra.mxu0 %v972
    %2313 = vmatpush.msra.mxu0 %v971
    %2314 = vmatpush.msra.mxu0 %v970
    %2315 = vmatmul.f32.gmra.mxu0 %v1079
    %v2316 = vpop.f32.mrf.mxu0
    %v2317 = vadd.f32 %v2297, %v2316
    %2318 = vdwg.mxu0
    %v2319 = vmax.f32 %v2317, 0.0
    %v2320 = vld [vmem:[%s3] sm:$0xff]
    %v2321 = vld [vmem:[%s3 + $0x8] sm:$0xff]
    %v2322 = vld [vmem:[%s3 + $0x10] sm:$0xff]
    %v2323 = vld [vmem:[%s3 + $0x18] sm:$0xff]
    %v2324 = vld [vmem:[%s3 + $0x20] sm:$0xff]
    %v2325 = vld [vmem:[%s3 + $0x28] sm:$0xff]
    %v2326 = vld [vmem:[%s3 + $0x30] sm:$0xff]
    %v2327 = vld [vmem:[%s3 + $0x38] sm:$0xff]
    %v2328 = vld [vmem:[%s3 + $0x40] sm:$0xff]
    %v2329 = vld [vmem:[%s3 + $0x48] sm:$0xff]
    %v2330 = vld [vmem:[%s3 + $0x50] sm:$0xff]
    %v2331 = vld [vmem:[%s3 + $0x58] sm:$0xff]
    %v2332 = vld [vmem:[%s3 + $0x60] sm:$0xff]
    %v2333 = vld [vmem:[%s3 + $0x68] sm:$0xff]
    %v2334 = vld [vmem:[%s3 + $0x70] sm:$0xff]
    %v2335 = vld [vmem:[%s3 + $0x78] sm:$0xff]
    %v2336 = vld [vmem:[%s4] sm:$0x1]
    %v2338 = vperm.slane %v2336, 0
    %2340 = vmatpush.msra.mxu0 %v2335
    %2341 = vmatpush.msra.mxu0 %v2334
    %2342 = vmatpush.msra.mxu0 %v2333
    %2343 = vmatpush.msra.mxu0 %v2332
    %2344 = vmatpush.msra.mxu0 %v2331
    %2345 = vmatpush.msra.mxu0 %v2330
    %2346 = vmatpush.msra.mxu0 %v2329
    %2347 = vmatpush.msra.mxu0 %v2328
    %2348 = vmatpush.msra.mxu0 %v2327
    %2349 = vmatpush.msra.mxu0 %v2326
    %2350 = vmatpush.msra.mxu0 %v2325
    %2351 = vmatpush.msra.mxu0 %v2324
    %2352 = vmatpush.msra.mxu0 %v2323
    %2353 = vmatpush.msra.mxu0 %v2322
    %2354 = vmatpush.msra.mxu0 %v2321
    %2355 = vmatpush.msra.mxu0 %v2320
    %2356 = vmatmul.f32.gmra.mxu0 %v2319
    %v2357 = vpop.f32.mrf.mxu0
    %v2358 = vadd.f32 %v2338, %v2357
    %2359 = vdwg.mxu0
    %v2360 = vld [vmem:[%s5] sm:$0xff]
    %v2361 = vld [vmem:[%s5 + $0x8] sm:$0xff]
    %v2362 = vld [vmem:[%s5 + $0x10] sm:$0xff]
    %v2363 = vld [vmem:[%s5 + $0x18] sm:$0xff]
    %v2364 = vld [vmem:[%s6] sm:$0x1]
    %v2366 = vperm.slane %v2364, 0
    %vm2368 = vcmask 261120
    %v2370 = vsel %vm2368, %v2358, 0
    %2372 = vmatpush.msra.mxu0 0.0
    %2373 = vmatpush.msra.mxu0 0.0
    %2374 = vmatpush.msra.mxu0 0.0
    %2375 = vmatpush.msra.mxu0 0.0
    %2376 = vmatpush.msra.mxu0 0.0
    %2377 = vmatpush.msra.mxu0 0.0
    %2378 = vmatpush.msra.mxu0 0.0
    %2379 = vmatpush.msra.mxu0 0.0
    %2380 = vmatpush.msra.mxu0 0.0
    %2381 = vmatpush.msra.mxu0 0.0
    %2382 = vmatpush.msra.mxu0 0.0
    %2383 = vmatpush.msra.mxu0 0.0
    %2384 = vmatpush.msra.mxu0 %v2363
    %2385 = vmatpush.msra.mxu0 %v2362
    %2386 = vmatpush.msra.mxu0 %v2361
    %2387 = vmatpush.msra.mxu0 %v2360
    %2388 = vmatmul.f32.gmra.mxu0 %v2370
    %v2389 = vpop.f32.mrf.mxu0
    %v2390 = vadd.f32 %v2366, %v2389
    %2391 = vdwg.mxu0
    %v2392 = vmul.f32 %v2390, %v2390
    %vm2393 = vcmask 58368
    %v2394 = vsel %vm2393, %v2392, 0.0
    %2395 = vadd.xlane.f32.xlu0 %v2394
    %v2396 = vpop.xlane.xlu0 %2395
    %v2397 = vmax.f32 %v2396, 1e-24
    %v2398 = vrsqrt.pop %v2397
    %v2399 = vmul.f32 %v2398, %v2397
    %v2400 = vmul.f32 %v2399, %v2398
    %v2401 = vmul.f32 0.5, %v2400
    %v2402 = vsub.f32 1.5, %v2401
    %v2403 = vmul.f32 %v2398, %v2402
    %vm2404 = vweird.f32 %v2397
    %vm2405 = vweird.f32 %v2398
    %vm2406 = vmor %vm2404, %vm2405
    %v2407 = vsel %vm2406, %v2398, %v2403
    %v2408 = vmul.f32 %v2390, %v2407
    %2409 = vst.msk [vmem:[#allocation2] sm:$0x3] %vm2393, %v2408
    // Predicated region
    $region30: #{pixelnet_forward.3} parent=1 // pred_check
      _
    $region31: #{pixelnet_forward.3} parent=1 // pred_check_branch
      %2411 = sbr.rel (0) target = $region33
    $region32: #{pixelnet_forward.3} parent=1 // pred_region
      %2413 = vsyncadd [#allocation3], 0
      %s2415 = sshll.u32 [#allocation2], 4
      %s2416 = int_to_ptr.vmem [resolvable:$true] %s2415
      %s2417 = sshll.u32 %s7, 4
      %s2418 = int_to_ptr.hbm [resolvable:$true] %s2417
      %2420 = dma.vmem_to_hbm [thread:$0]  %s2416, 32, %s2418, [#allocation3]
    $region33: #{pixelnet_forward.3} parent=1 // pred_fallthru
      _
    // Predicated region
    $region34: #{pixelnet_forward.3} parent=1 // pred_check
      _
    $region35: #{pixelnet_forward.3} parent=1 // pred_check_branch
      %2422 = sbr.rel (0) target = $region37
    $region36: #{pixelnet_forward.3} parent=1 // pred_region
      %2424 = dma.done [#allocation3], 32
    $region37: #{pixelnet_forward.3} parent=1 // pred_fallthru
      _
    %2425 = vsyncpa [#allocation3], 1

// kernel: pixelnet_forward.2
$region0: #{pixelnet_forward.2}
  #allocation0 [shape = 'u32[]', space=smem, size = 0x4, offset = 0x4, fixed_abs, tag = 'smem constant byte address 0x4 - core index']
  #allocation1 [shape = 'u32[72,128]{1,0:T(1,128)}', space=vmem, size = 0x9000, scoped, tag = 'internal scratch']
  #allocation2 [shape = 'f32[496,32]{1,0:T(8,128)}', space=vmem, size = 0x3e000, scoped, tag = 'scratch operand']
  #allocation3 [shape = 'f32[495,32]{1,0:T(8,128)}', space=vmem, size = 0x3e000, scoped, tag = 'scratch operand']
  #allocation4 [shape = 'f32[248,32]{1,0:T(8,128)}', space=vmem, size = 0x1f000, scoped, tag = 'scratch operand']
  #allocation5 [shape = 'f32[244,64]{1,0:T(8,128)}', space=vmem, size = 0x1f000, scoped, tag = 'scratch operand']
  #allocation6 [shape = 'f32[243,64]{1,0:T(8,128)}', space=vmem, size = 0x1f000, scoped, tag = 'scratch operand']
  #allocation7 [shape = 'f32[122,64]{1,0:T(8,128)}', space=vmem, size = 0x10000, scoped, tag = 'scratch operand']
  #allocation8 [shape = 'f32[118,128]{1,0:T(8,128)}', space=vmem, size = 0xf000, scoped, tag = 'scratch operand']
  #allocation9 [shape = 'f32[117,128]{1,0:T(8,128)}', space=vmem, size = 0xf000, scoped, tag = 'scratch operand']
  %s0 = inlined_call_operand.vmem [shape: f32[2,500,4], index: 0, kind: input, shape index: {}]
  %s1 = inlined_call_operand.vmem [shape: f32[5,4,32], index: 1, kind: input, shape index: {}]
  %s2 = inlined_call_operand.vmem [shape: f32[1,32], index: 2, kind: input, shape index: {}]
  %s3 = inlined_call_operand.vmem [shape: f32[5,32,64], index: 3, kind: input, shape index: {}]
  %s4 = inlined_call_operand.vmem [shape: f32[1,64], index: 4, kind: input, shape index: {}]
  %s5 = inlined_call_operand.vmem [shape: f32[5,64,128], index: 5, kind: input, shape index: {}]
  %s6 = inlined_call_operand.vmem [shape: f32[1,128], index: 6, kind: input, shape index: {}]
  %s7 = inlined_call_operand.vmem [shape: f32[2,59,128], index: 7, kind: output, shape index: {}]
  %s8 = sld [smem:[#allocation0]]
  $region61: #{pixelnet_forward.2} parent=0
    _
  %s10 = ssub.s32 1, %s8
  %s11 = scalar_select 0, %s10, %s8
  loop: start=0, step=1, limit=4
  $region2: #{pixelnet_forward.2} parent=0 // loop_pre_header
    _
  $region3: #{pixelnet_forward.2} parent=0 // loop_header
    %s13 = sphi 0, %s17
    %p14 = scmp.ge.s32.totalorder %s13, 4
    %s23 = sphi 0, %s25
    %s26 = sphi 0, %s23
    %s27 = sphi 0, %s26
    %s43 = sphi 0, %s27
    %s47 = sphi 0, %s47
    %s49 = sphi 0, %s47
    %s50 = sphi 0, %s49
    %s64 = sphi 0, %s50
    %s68 = sphi 0, %s68
    %s70 = sphi 0, %s68
    %s71 = sphi 0, %s70
    %s85 = sphi 0, %s71
    %s89 = sphi 0, %s89
    %s91 = sphi 0, %s89
    %s92 = sphi 0, %s91
    %s106 = sphi 0, %s92
    %s110 = sphi 0, %s110
    %s112 = sphi 0, %s110
    %s113 = sphi 0, %s112
    %s127 = sphi 0, %s113
    %s131 = sphi 0, %s131
    %s133 = sphi 0, %s131
    %s134 = sphi 0, %s133
    %s148 = sphi 0, %s134
    %s152 = sphi 0, %s152
    %s154 = sphi 0, %s152
    %s155 = sphi 0, %s154
    %s169 = sphi 0, %s155
    %s175 = sphi 0, %s177
    %s178 = sphi 0, %s175
    %s179 = sphi 0, %s178
    %s195 = sphi 0, %s179
  $region4: #{pixelnet_forward.2} parent=0 // loop_header_branch
    %16 = sbr.rel (%p14) target = $region8
  $region5: #{pixelnet_forward.2} parent=0 // loop_body
    %s18 = ssub.s32 %s13, 1
    %s19 = ssub.s32 %s13, 2
    %s20 = sadd.s32 %s13, 1
    %s21 = ssub.s32 %s13, %s20
    %p22 = scmp.eq.s32.totalorder %s21, 0
    %s24 = sadd.s32 %s23, 1
    %s25 = scalar_select %p22, %s23, %s24
    %p28 = pneg %p22
    %p29 = scmp.eq.s32.totalorder %s13, 1
    %p30 = por %p28, %p29
    %p31 = scmp.ne.s32.totalorder %s23, %s26
    %p32 = scmp.eq.s32.totalorder %s13, 0
    %p33 = por %p31, %p32
    %p34 = scmp.ne.s32.totalorder %s23, %s26
    %p35 = scmp.eq.s32.totalorder %s18, 1
    %p36 = por %p34, %p35
    %p37 = scmp.ne.s32.totalorder %s26, %s27
    %p38 = scmp.eq.s32.totalorder %s18, 0
    %p39 = por %p37, %p38
    %p40 = scmp.ne.s32.totalorder %s26, %s27
    %p41 = scmp.eq.s32.totalorder %s19, 1
    %p42 = por %p40, %p41
    %p44 = scmp.ne.s32.totalorder %s27, %s43
    %p45 = scmp.eq.s32.totalorder %s19, 0
    %p46 = por %p44, %p45
    %s48 = sadd.s32 %s47, 1
    %p51 = scmp.eq.s32.totalorder %s13, 1
    %p52 = scmp.ne.s32.totalorder %s47, %s49
    %p53 = scmp.eq.s32.totalorder %s13, 0
    %p54 = por %p52, %p53
    %p55 = scmp.ne.s32.totalorder %s47, %s49
    %p56 = scmp.eq.s32.totalorder %s18, 1
    %p57 = por %p55, %p56
    %p58 = scmp.ne.s32.totalorder %s49, %s50
    %p59 = scmp.eq.s32.totalorder %s18, 0
    %p60 = por %p58, %p59
    %p61 = scmp.ne.s32.totalorder %s49, %s50
    %p62 = scmp.eq.s32.totalorder %s19, 1
    %p63 = por %p61, %p62
    %p65 = scmp.ne.s32.totalorder %s50, %s64
    %p66 = scmp.eq.s32.totalorder %s19, 0
    %p67 = por %p65, %p66
    %s69 = sadd.s32 %s68, 1
    %p72 = scmp.eq.s32.totalorder %s13, 1
    %p73 = scmp.ne.s32.totalorder %s68, %s70
    %p74 = scmp.eq.s32.totalorder %s13, 0
    %p75 = por %p73, %p74
    %p76 = scmp.ne.s32.totalorder %s68, %s70
    %p77 = scmp.eq.s32.totalorder %s18, 1
    %p78 = por %p76, %p77
    %p79 = scmp.ne.s32.totalorder %s70, %s71
    %p80 = scmp.eq.s32.totalorder %s18, 0
    %p81 = por %p79, %p80
    %p82 = scmp.ne.s32.totalorder %s70, %s71
    %p83 = scmp.eq.s32.totalorder %s19, 1
    %p84 = por %p82, %p83
    %p86 = scmp.ne.s32.totalorder %s71, %s85
    %p87 = scmp.eq.s32.totalorder %s19, 0
    %p88 = por %p86, %p87
    %s90 = sadd.s32 %s89, 1
    %p93 = scmp.eq.s32.totalorder %s13, 1
    %p94 = scmp.ne.s32.totalorder %s89, %s91
    %p95 = scmp.eq.s32.totalorder %s13, 0
    %p96 = por %p94, %p95
    %p97 = scmp.ne.s32.totalorder %s89, %s91
    %p98 = scmp.eq.s32.totalorder %s18, 1
    %p99 = por %p97, %p98
    %p100 = scmp.ne.s32.totalorder %s91, %s92
    %p101 = scmp.eq.s32.totalorder %s18, 0
    %p102 = por %p100, %p101
    %p103 = scmp.ne.s32.totalorder %s91, %s92
    %p104 = scmp.eq.s32.totalorder %s19, 1
    %p105 = por %p103, %p104
    %p107 = scmp.ne.s32.totalorder %s92, %s106
    %p108 = scmp.eq.s32.totalorder %s19, 0
    %p109 = por %p107, %p108
    %s111 = sadd.s32 %s110, 1
    %p114 = scmp.eq.s32.totalorder %s13, 1
    %p115 = scmp.ne.s32.totalorder %s110, %s112
    %p116 = scmp.eq.s32.totalorder %s13, 0
    %p117 = por %p115, %p116
    %p118 = scmp.ne.s32.totalorder %s110, %s112
    %p119 = scmp.eq.s32.totalorder %s18, 1
    %p120 = por %p118, %p119
    %p121 = scmp.ne.s32.totalorder %s112, %s113
    %p122 = scmp.eq.s32.totalorder %s18, 0
    %p123 = por %p121, %p122
    %p124 = scmp.ne.s32.totalorder %s112, %s113
    %p125 = scmp.eq.s32.totalorder %s19, 1
    %p126 = por %p124, %p125
    %p128 = scmp.ne.s32.totalorder %s113, %s127
    %p129 = scmp.eq.s32.totalorder %s19, 0
    %p130 = por %p128, %p129
    %s132 = sadd.s32 %s131, 1
    %p135 = scmp.eq.s32.totalorder %s13, 1
    %p136 = scmp.ne.s32.totalorder %s131, %s133
    %p137 = scmp.eq.s32.totalorder %s13, 0
    %p138 = por %p136, %p137
    %p139 = scmp.ne.s32.totalorder %s131, %s133
    %p140 = scmp.eq.s32.totalorder %s18, 1
    %p141 = por %p139, %p140
    %p142 = scmp.ne.s32.totalorder %s133, %s134
    %p143 = scmp.eq.s32.totalorder %s18, 0
    %p144 = por %p142, %p143
    %p145 = scmp.ne.s32.totalorder %s133, %s134
    %p146 = scmp.eq.s32.totalorder %s19, 1
    %p147 = por %p145, %p146
    %p149 = scmp.ne.s32.totalorder %s134, %s148
    %p150 = scmp.eq.s32.totalorder %s19, 0
    %p151 = por %p149, %p150
    %s153 = sadd.s32 %s152, 1
    %p156 = scmp.eq.s32.totalorder %s13, 1
    %p157 = scmp.ne.s32.totalorder %s152, %s154
    %p158 = scmp.eq.s32.totalorder %s13, 0
    %p159 = por %p157, %p158
    %p160 = scmp.ne.s32.totalorder %s152, %s154
    %p161 = scmp.eq.s32.totalorder %s18, 1
    %p162 = por %p160, %p161
    %p163 = scmp.ne.s32.totalorder %s154, %s155
    %p164 = scmp.eq.s32.totalorder %s18, 0
    %p165 = por %p163, %p164
    %p166 = scmp.ne.s32.totalorder %s154, %s155
    %p167 = scmp.eq.s32.totalorder %s19, 1
    %p168 = por %p166, %p167
    %p170 = scmp.ne.s32.totalorder %s155, %s169
    %p171 = scmp.eq.s32.totalorder %s19, 0
    %p172 = por %p170, %p171
    %s173 = ssub.s32 %s13, %s20
    %p174 = scmp.eq.s32.totalorder %s173, 0
    %s176 = sadd.s32 %s175, 1
    %s177 = scalar_select %p174, %s175, %s176
    %p180 = pneg %p174
    %p181 = scmp.eq.s32.totalorder %s13, 1
    %p182 = por %p180, %p181
    %p183 = scmp.ne.s32.totalorder %s175, %s178
    %p184 = scmp.eq.s32.totalorder %s13, 0
    %p185 = por %p183, %p184
    %p186 = scmp.ne.s32.totalorder %s175, %s178
    %p187 = scmp.eq.s32.totalorder %s18, 1
    %p188 = por %p186, %p187
    %p189 = scmp.ne.s32.totalorder %s178, %s179
    %p190 = scmp.eq.s32.totalorder %s18, 0
    %p191 = por %p189, %p190
    %p192 = scmp.ne.s32.totalorder %s178, %s179
    %p193 = scmp.eq.s32.totalorder %s19, 1
    %p194 = por %p192, %p193
    %p196 = scmp.ne.s32.totalorder %s179, %s195
    %p197 = scmp.eq.s32.totalorder %s19, 0
    %p198 = por %p196, %p197
    %p199 = scmp.le.s32.totalorder 1, %s13
    %p200 = scmp.lt.s32.totalorder %s13, 3
    %p201 = pnand %p199, %p200
    %p202 = pneg %p201
    // Predicated region
    $region9: #{pixelnet_forward.2} parent=5 // pred_check
      _
    $region10: #{pixelnet_forward.2} parent=5 // pred_check_branch
      %204 = sbr.rel (%p201) target = $region12
    $region11: #{pixelnet_forward.2} parent=5 // pred_region
      %s205 = ssub.s32 %s13, 1
      // Predicated region
      $region13: #{pixelnet_forward.2} parent=11 // pred_check
        %p206 = pneg %p60
      $region14: #{pixelnet_forward.2} parent=11 // pred_check_branch
        %208 = sbr.rel (%p206) target = $region16
      $region15: #{pixelnet_forward.2} parent=11 // pred_region
        _
      $region16: #{pixelnet_forward.2} parent=11 // pred_fallthru
        _
      // Predicated region
      $region17: #{pixelnet_forward.2} parent=11 // pred_check
        %p209 = pneg %p81
      $region18: #{pixelnet_forward.2} parent=11 // pred_check_branch
        %211 = sbr.rel (%p209) target = $region20
      $region19: #{pixelnet_forward.2} parent=11 // pred_region
        _
      $region20: #{pixelnet_forward.2} parent=11 // pred_fallthru
        _
      // Predicated region
      $region21: #{pixelnet_forward.2} parent=11 // pred_check
        %p212 = pneg %p102
      $region22: #{pixelnet_forward.2} parent=11 // pred_check_branch
        %214 = sbr.rel (%p212) target = $region24
      $region23: #{pixelnet_forward.2} parent=11 // pred_region
        _
      $region24: #{pixelnet_forward.2} parent=11 // pred_fallthru
        _
      // Predicated region
      $region25: #{pixelnet_forward.2} parent=11 // pred_check
        %p215 = pneg %p123
      $region26: #{pixelnet_forward.2} parent=11 // pred_check_branch
        %217 = sbr.rel (%p215) target = $region28
      $region27: #{pixelnet_forward.2} parent=11 // pred_region
        _
      $region28: #{pixelnet_forward.2} parent=11 // pred_fallthru
        _
      // Predicated region
      $region29: #{pixelnet_forward.2} parent=11 // pred_check
        %p218 = pneg %p144
      $region30: #{pixelnet_forward.2} parent=11 // pred_check_branch
        %220 = sbr.rel (%p218) target = $region32
      $region31: #{pixelnet_forward.2} parent=11 // pred_region
        _
      $region32: #{pixelnet_forward.2} parent=11 // pred_fallthru
        _
      // Predicated region
      $region33: #{pixelnet_forward.2} parent=11 // pred_check
        %p221 = pneg %p165
      $region34: #{pixelnet_forward.2} parent=11 // pred_check_branch
        %223 = sbr.rel (%p221) target = $region36
      $region35: #{pixelnet_forward.2} parent=11 // pred_region
        _
      $region36: #{pixelnet_forward.2} parent=11 // pred_fallthru
        _
    $region12: #{pixelnet_forward.2} parent=5 // pred_fallthru
      _
    %p224 = scmp.lt.s32.totalorder %s13, 2
    // Predicated region
    $region37: #{pixelnet_forward.2} parent=5 // pred_check
      %p225 = pneg %p224
    $region38: #{pixelnet_forward.2} parent=5 // pred_check_branch
      %227 = sbr.rel (%p225) target = $region40
    $region39: #{pixelnet_forward.2} parent=5 // pred_region
      // Predicated region
      $region41: #{pixelnet_forward.2} parent=39 // pred_check
        %p228 = pneg %p33
      $region42: #{pixelnet_forward.2} parent=39 // pred_check_branch
        %230 = sbr.rel (%p228) target = $region44
      $region43: #{pixelnet_forward.2} parent=39 // pred_region
        %p231 = scmp.lt.s32.totalorder %s13, 1
        %s232 = scalar_select %p231, %s13, 1
        %s233 = smul.addr %s232, 63
        %s234 = smul.addr %s233, 8
        %s235 = scalar_lea.vmem %s0, %s234
      $region44: #{pixelnet_forward.2} parent=39 // pred_fallthru
        _
    $region40: #{pixelnet_forward.2} parent=5 // pred_fallthru
      _
    %p236 = scmp.le.s32.totalorder 1, %s13
    %p237 = scmp.lt.s32.totalorder %s13, 3
    %p238 = pnand %p236, %p237
    %p239 = pneg %p238
    // Predicated region
    $region45: #{pixelnet_forward.2} parent=5 // pred_check
      _
    $region46: #{pixelnet_forward.2} parent=5 // pred_check_branch
      %241 = sbr.rel (%p238) target = $region48
    $region47: #{pixelnet_forward.2} parent=5 // pred_region
      %s242 = ssub.s32 %s13, 1
      %p243 = scmp.lt.s32.totalorder %s18, 1
      %s244 = scalar_select %p243, %s18, 1
      %s245 = smul.addr %s244, 63
      %s246 = smul.addr %s245, 8
      %s247 = scalar_lea.vmem %s0, %s246
      %p248 = pneg %p39
      %p249 = pneg %p36
      %p250 = pneg %p60
      %p251 = pneg %p57
      %p252 = pneg %p81
      %p253 = pneg %p78
      %p254 = pneg %p102
      %p255 = pneg %p99
      %p256 = pneg %p123
      %p257 = pneg %p120
      %p258 = pneg %p144
      %p259 = pneg %p141
      %p260 = pneg %p165
      %p261 = pneg %p162
      %p262 = pneg %p191
      %p263 = pneg %p188
      %p264 = scmp.lt.s32.totalorder %s18, 1
      %s265 = scalar_select %p264, %s18, 1
      %s266 = smul.addr %s265, 8
      %s267 = smul.addr %s266, 8
      %s268 = scalar_lea.vmem %s7, %s267
      %p269 = scmp.lt.s32.totalorder %s18, 1
      %s270 = scalar_select %p269, %s18, 1
      %s271 = smul.addr %s270, 63
      %s272 = smul.addr %s271, 8
      %s273 = scalar_lea.vmem %s0, %s272
      %p274 = scmp.lt.s32.totalorder %s18, 1
      %s275 = scalar_select %p274, %s18, 1
      %s276 = smul.addr %s275, 8
      %s277 = smul.addr %s276, 8
      %s278 = scalar_lea.vmem %s7, %s277
      %v279 = vld [vmem:[%s273] sm:$0xff]
      %v280 = vld [vmem:[%s273 + $0x8] sm:$0xff]
      %v281 = vld [vmem:[%s273 + $0x10] sm:$0xff]
      %v282 = vld [vmem:[%s273 + $0x18] sm:$0xff]
      %v283 = vld [vmem:[%s273 + $0x20] sm:$0xff]
      %v284 = vld [vmem:[%s273 + $0x28] sm:$0xff]
      %v285 = vld [vmem:[%s273 + $0x30] sm:$0xff]
      %v286 = vld [vmem:[%s273 + $0x38] sm:$0xff]
      %v287 = vld [vmem:[%s273 + $0x40] sm:$0xff]
      %v288 = vld [vmem:[%s273 + $0x48] sm:$0xff]
      %v289 = vld [vmem:[%s273 + $0x50] sm:$0xff]
      %v290 = vld [vmem:[%s273 + $0x58] sm:$0xff]
      %v291 = vld [vmem:[%s273 + $0x60] sm:$0xff]
      %v292 = vld [vmem:[%s273 + $0x68] sm:$0xff]
      %v293 = vld [vmem:[%s273 + $0x70] sm:$0xff]
      %v294 = vld [vmem:[%s273 + $0x78] sm:$0xff]
      %v295 = vld [vmem:[%s273 + $0x80] sm:$0xff]
      %v296 = vld [vmem:[%s273 + $0x88] sm:$0xff]
      %v297 = vld [vmem:[%s273 + $0x90] sm:$0xff]
      %v298 = vld [vmem:[%s273 + $0x98] sm:$0xff]
      %v299 = vld [vmem:[%s273 + $0xa0] sm:$0xff]
      %v300 = vld [vmem:[%s273 + $0xa8] sm:$0xff]
      %v301 = vld [vmem:[%s273 + $0xb0] sm:$0xff]
      %v302 = vld [vmem:[%s273 + $0xb8] sm:$0xff]
      %v303 = vld [vmem:[%s273 + $0xc0] sm:$0xff]
      %v304 = vld [vmem:[%s273 + $0xc8] sm:$0xff]
      %v305 = vld [vmem:[%s273 + $0xd0] sm:$0xff]
      %v306 = vld [vmem:[%s273 + $0xd8] sm:$0xff]
      %v307 = vld [vmem:[%s273 + $0xe0] sm:$0xff]
      %v308 = vld [vmem:[%s273 + $0xe8] sm:$0xff]
      %v309 = vld [vmem:[%s273 + $0xf0] sm:$0xff]
      %v310 = vld [vmem:[%s273 + $0xf8] sm:$0xff]
      %v311 = vld [vmem:[%s273 + $0x100] sm:$0xff]
      %v312 = vld [vmem:[%s273 + $0x108] sm:$0xff]
      %v313 = vld [vmem:[%s273 + $0x110] sm:$0xff]
      %v314 = vld [vmem:[%s273 + $0x118] sm:$0xff]
      %v315 = vld [vmem:[%s273 + $0x120] sm:$0xff]
      %v316 = vld [vmem:[%s273 + $0x128] sm:$0xff]
      %v317 = vld [vmem:[%s273 + $0x130] sm:$0xff]
      %v318 = vld [vmem:[%s273 + $0x138] sm:$0xff]
      %v319 = vld [vmem:[%s273 + $0x140] sm:$0xff]
      %v320 = vld [vmem:[%s273 + $0x148] sm:$0xff]
      %v321 = vld [vmem:[%s273 + $0x150] sm:$0xff]
      %v322 = vld [vmem:[%s273 + $0x158] sm:$0xff]
      %v323 = vld [vmem:[%s273 + $0x160] sm:$0xff]
      %v324 = vld [vmem:[%s273 + $0x168] sm:$0xff]
      %v325 = vld [vmem:[%s273 + $0x170] sm:$0xff]
      %v326 = vld [vmem:[%s273 + $0x178] sm:$0xff]
      %v327 = vld [vmem:[%s273 + $0x180] sm:$0xff]
      %v328 = vld [vmem:[%s273 + $0x188] sm:$0xff]
      %v329 = vld [vmem:[%s273 + $0x190] sm:$0xff]
      %v330 = vld [vmem:[%s273 + $0x198] sm:$0xff]
      %v331 = vld [vmem:[%s273 + $0x1a0] sm:$0xff]
      %v332 = vld [vmem:[%s273 + $0x1a8] sm:$0xff]
      %v333 = vld [vmem:[%s273 + $0x1b0] sm:$0xff]
      %v334 = vld [vmem:[%s273 + $0x1b8] sm:$0xff]
      %v335 = vld [vmem:[%s273 + $0x1c0] sm:$0xff]
      %v336 = vld [vmem:[%s273 + $0x1c8] sm:$0xff]
      %v337 = vld [vmem:[%s273 + $0x1d0] sm:$0xff]
      %v338 = vld [vmem:[%s273 + $0x1d8] sm:$0xff]
      %v339 = vld [vmem:[%s273 + $0x1e0] sm:$0xff]
      %v340 = vld [vmem:[%s273 + $0x1e8] sm:$0xff]
      %v341 = vld [vmem:[%s1] sm:$0xf]
      %v342 = vld [vmem:[%s273 + $0x1] sm:$0xff]
      %v343 = vld [vmem:[%s273 + $0x9] sm:$0xff]
      %v344 = vld [vmem:[%s273 + $0x11] sm:$0xff]
      %v345 = vld [vmem:[%s273 + $0x19] sm:$0xff]
      %v346 = vld [vmem:[%s273 + $0x21] sm:$0xff]
      %v347 = vld [vmem:[%s273 + $0x29] sm:$0xff]
      %v348 = vld [vmem:[%s273 + $0x31] sm:$0xff]
      %v349 = vld [vmem:[%s273 + $0x39] sm:$0xff]
      %v350 = vld [vmem:[%s273 + $0x41] sm:$0xff]
      %v351 = vld [vmem:[%s273 + $0x49] sm:$0xff]
      %v352 = vld [vmem:[%s273 + $0x51] sm:$0xff]
      %v353 = vld [vmem:[%s273 + $0x59] sm:$0xff]
      %v354 = vld [vmem:[%s273 + $0x61] sm:$0xff]
      %v355 = vld [vmem:[%s273 + $0x69] sm:$0xff]
      %v356 = vld [vmem:[%s273 + $0x71] sm:$0xff]
      %v357 = vld [vmem:[%s273 + $0x79] sm:$0xff]
      %v358 = vld [vmem:[%s273 + $0x81] sm:$0xff]
      %v359 = vld [vmem:[%s273 + $0x89] sm:$0xff]
      %v360 = vld [vmem:[%s273 + $0x91] sm:$0xff]
      %v361 = vld [vmem:[%s273 + $0x99] sm:$0xff]
      %v362 = vld [vmem:[%s273 + $0xa1] sm:$0xff]
      %v363 = vld [vmem:[%s273 + $0xa9] sm:$0xff]
      %v364 = vld [vmem:[%s273 + $0xb1] sm:$0xff]
      %v365 = vld [vmem:[%s273 + $0xb9] sm:$0xff]
      %v366 = vld [vmem:[%s273 + $0xc1] sm:$0xff]
      %v367 = vld [vmem:[%s273 + $0xc9] sm:$0xff]
      %v368 = vld [vmem:[%s273 + $0xd1] sm:$0xff]
      %v369 = vld [vmem:[%s273 + $0xd9] sm:$0xff]
      %v370 = vld [vmem:[%s273 + $0xe1] sm:$0xff]
      %v371 = vld [vmem:[%s273 + $0xe9] sm:$0xff]
      %v372 = vld [vmem:[%s273 + $0xf1] sm:$0xff]
      %v373 = vld [vmem:[%s273 + $0xf9] sm:$0xff]
      %v374 = vld [vmem:[%s273 + $0x101] sm:$0xff]
      %v375 = vld [vmem:[%s273 + $0x109] sm:$0xff]
      %v376 = vld [vmem:[%s273 + $0x111] sm:$0xff]
      %v377 = vld [vmem:[%s273 + $0x119] sm:$0xff]
      %v378 = vld [vmem:[%s273 + $0x121] sm:$0xff]
      %v379 = vld [vmem:[%s273 + $0x129] sm:$0xff]
      %v380 = vld [vmem:[%s273 + $0x131] sm:$0xff]
      %v381 = vld [vmem:[%s273 + $0x139] sm:$0xff]
      %v382 = vld [vmem:[%s273 + $0x141] sm:$0xff]
      %v383 = vld [vmem:[%s273 + $0x149] sm:$0xff]
      %v384 = vld [vmem:[%s273 + $0x151] sm:$0xff]
      %v385 = vld [vmem:[%s273 + $0x159] sm:$0xff]
      %v386 = vld [vmem:[%s273 + $0x161] sm:$0xff]
      %v387 = vld [vmem:[%s273 + $0x169] sm:$0xff]
      %v388 = vld [vmem:[%s273 + $0x171] sm:$0xff]
      %v389 = vld [vmem:[%s273 + $0x179] sm:$0xff]
      %v390 = vld [vmem:[%s273 + $0x181] sm:$0xff]
      %v391 = vld [vmem:[%s273 + $0x189] sm:$0xff]
      %v392 = vld [vmem:[%s273 + $0x191] sm:$0xff]
      %v393 = vld [vmem:[%s273 + $0x199] sm:$0xff]
      %v394 = vld [vmem:[%s273 + $0x1a1] sm:$0xff]
      %v395 = vld [vmem:[%s273 + $0x1a9] sm:$0xff]
      %v396 = vld [vmem:[%s273 + $0x1b1] sm:$0xff]
      %v397 = vld [vmem:[%s273 + $0x1b9] sm:$0xff]
      %v398 = vld [vmem:[%s273 + $0x1c1] sm:$0xff]
      %v399 = vld [vmem:[%s273 + $0x1c9] sm:$0xff]
      %v400 = vld [vmem:[%s273 + $0x1d1] sm:$0xff]
      %v401 = vld [vmem:[%s273 + $0x1d9] sm:$0xff]
      %v402 = vld [vmem:[%s273 + $0x1e1] sm:$0xff]
      %v403 = vld [vmem:[%s273 + $0x1e9] sm:$0xff]
      %s404 = scalar_lea.vmem %s1, 4
      %v405 = vld [vmem:[%s404] sm:$0xf]
      %vm406 = vcmask 31744
      %v408 = vsel %vm406, %v342, 0
      %v411 = vsel %vm406, %v343, 0
      %v414 = vsel %vm406, %v344, 0
      %v417 = vsel %vm406, %v345, 0
      %v420 = vsel %vm406, %v346, 0
      %v423 = vsel %vm406, %v347, 0
      %v426 = vsel %vm406, %v348, 0
      %v429 = vsel %vm406, %v349, 0
      %v432 = vsel %vm406, %v350, 0
      %v435 = vsel %vm406, %v351, 0
      %v438 = vsel %vm406, %v352, 0
      %v441 = vsel %vm406, %v353, 0
      %v444 = vsel %vm406, %v354, 0
      %v447 = vsel %vm406, %v355, 0
      %v450 = vsel %vm406, %v356, 0
      %v453 = vsel %vm406, %v357, 0
      %v456 = vsel %vm406, %v358, 0
      %v459 = vsel %vm406, %v359, 0
      %v462 = vsel %vm406, %v360, 0
      %v465 = vsel %vm406, %v361, 0
      %v468 = vsel %vm406, %v362, 0
      %v471 = vsel %vm406, %v363, 0
      %v474 = vsel %vm406, %v364, 0
      %v477 = vsel %vm406, %v365, 0
      %v480 = vsel %vm406, %v366, 0
      %v483 = vsel %vm406, %v367, 0
      %v486 = vsel %vm406, %v368, 0
      %v489 = vsel %vm406, %v369, 0
      %v492 = vsel %vm406, %v370, 0
      %v495 = vsel %vm406, %v371, 0
      %v498 = vsel %vm406, %v372, 0
      %v501 = vsel %vm406, %v373, 0
      %v504 = vsel %vm406, %v374, 0
      %v507 = vsel %vm406, %v375, 0
      %v510 = vsel %vm406, %v376, 0
      %v513 = vsel %vm406, %v377, 0
      %v516 = vsel %vm406, %v378, 0
      %v519 = vsel %vm406, %v379, 0
      %v522 = vsel %vm406, %v380, 0
      %v525 = vsel %vm406, %v381, 0
      %v528 = vsel %vm406, %v382, 0
      %v531 = vsel %vm406, %v383, 0
      %v534 = vsel %vm406, %v384, 0
      %v537 = vsel %vm406, %v385, 0
      %v540 = vsel %vm406, %v386, 0
      %v543 = vsel %vm406, %v387, 0
      %v546 = vsel %vm406, %v388, 0
      %v549 = vsel %vm406, %v389, 0
      %v552 = vsel %vm406, %v390, 0
      %v555 = vsel %vm406, %v391, 0
      %v558 = vsel %vm406, %v392, 0
      %v561 = vsel %vm406, %v393, 0
      %v564 = vsel %vm406, %v394, 0
      %v567 = vsel %vm406, %v395, 0
      %v570 = vsel %vm406, %v396, 0
      %v573 = vsel %vm406, %v397, 0
      %v576 = vsel %vm406, %v398, 0
      %v579 = vsel %vm406, %v399, 0
      %v582 = vsel %vm406, %v400, 0
      %v585 = vsel %vm406, %v401, 0
      %v588 = vsel %vm406, %v402, 0
      %v591 = vsel %vm406, %v403, 0
      %vm593 = vcmask 1043456
      %v595 = vsel %vm593, %v405, 0
      %597 = vmatpush.msra.mxu0 0.0
      %598 = vmatpush.msra.mxu0 0.0
      %599 = vmatpush.msra.mxu0 0.0
      %600 = vmatpush.msra.mxu0 0.0
      %601 = vmatpush.msra.mxu0 0.0
      %602 = vmatpush.msra.mxu0 0.0
      %603 = vmatpush.msra.mxu0 0.0
      %604 = vmatpush.msra.mxu0 0.0
      %605 = vmatpush.msra.mxu0 0.0
      %606 = vmatpush.msra.mxu0 0.0
      %607 = vmatpush.msra.mxu0 0.0
      %608 = vmatpush.msra.mxu0 0.0
      %609 = vmatpush.msra.mxu0 0.0
      %610 = vmatpush.msra.mxu0 0.0
      %611 = vmatpush.msra.mxu0 0.0
      %612 = vmatpush.msra.mxu0 %v595
      %613 = vmatmul.f32.gmra.mxu0 %v408
      %v614 = vpop.f32.mrf.mxu0
      %v615 = vadd.f32 0.0, %v614
      %616 = vmatmul.f32.gmra.mxu0 %v411
      %v617 = vpop.f32.mrf.mxu0
      %v618 = vadd.f32 0.0, %v617
      %619 = vmatmul.f32.gmra.mxu0 %v414
      %v620 = vpop.f32.mrf.mxu0
      %v621 = vadd.f32 0.0, %v620
      %622 = vmatmul.f32.gmra.mxu0 %v417
      %v623 = vpop.f32.mrf.mxu0
      %v624 = vadd.f32 0.0, %v623
      %625 = vmatmul.f32.gmra.mxu0 %v420
      %v626 = vpop.f32.mrf.mxu0
      %v627 = vadd.f32 0.0, %v626
      %628 = vmatmul.f32.gmra.mxu0 %v423
      %v629 = vpop.f32.mrf.mxu0
      %v630 = vadd.f32 0.0, %v629
      %631 = vmatmul.f32.gmra.mxu0 %v426
      %v632 = vpop.f32.mrf.mxu0
      %v633 = vadd.f32 0.0, %v632
      %634 = vmatmul.f32.gmra.mxu0 %v429
      %v635 = vpop.f32.mrf.mxu0
      %v636 = vadd.f32 0.0, %v635
      %637 = vmatmul.f32.gmra.mxu0 %v432
      %v638 = vpop.f32.mrf.mxu0
      %v639 = vadd.f32 0.0, %v638
      %640 = vmatmul.f32.gmra.mxu0 %v435
      %v641 = vpop.f32.mrf.mxu0
      %v642 = vadd.f32 0.0, %v641
      %643 = vmatmul.f32.gmra.mxu0 %v438
      %v644 = vpop.f32.mrf.mxu0
      %v645 = vadd.f32 0.0, %v644
      %646 = vmatmul.f32.gmra.mxu0 %v441
      %v647 = vpop.f32.mrf.mxu0
      %v648 = vadd.f32 0.0, %v647
      %649 = vmatmul.f32.gmra.mxu0 %v444
      %v650 = vpop.f32.mrf.mxu0
      %v651 = vadd.f32 0.0, %v650
      %652 = vmatmul.f32.gmra.mxu0 %v447
      %v653 = vpop.f32.mrf.mxu0
      %v654 = vadd.f32 0.0, %v653
      %655 = vmatmul.f32.gmra.mxu0 %v450
      %v656 = vpop.f32.mrf.mxu0
      %v657 = vadd.f32 0.0, %v656
      %658 = vmatmul.f32.gmra.mxu0 %v453
      %v659 = vpop.f32.mrf.mxu0
      %v660 = vadd.f32 0.0, %v659
      %661 = vmatmul.f32.gmra.mxu0 %v456
      %v662 = vpop.f32.mrf.mxu0
      %v663 = vadd.f32 0.0, %v662
      %664 = vmatmul.f32.gmra.mxu0 %v459
      %v665 = vpop.f32.mrf.mxu0
      %v666 = vadd.f32 0.0, %v665
      %667 = vmatmul.f32.gmra.mxu0 %v462
      %v668 = vpop.f32.mrf.mxu0
      %v669 = vadd.f32 0.0, %v668
      %670 = vmatmul.f32.gmra.mxu0 %v465
      %v671 = vpop.f32.mrf.mxu0
      %v672 = vadd.f32 0.0, %v671
      %673 = vmatmul.f32.gmra.mxu0 %v468
      %v674 = vpop.f32.mrf.mxu0
      %v675 = vadd.f32 0.0, %v674
      %676 = vmatmul.f32.gmra.mxu0 %v471
      %v677 = vpop.f32.mrf.mxu0
      %v678 = vadd.f32 0.0, %v677
      %679 = vmatmul.f32.gmra.mxu0 %v474
      %v680 = vpop.f32.mrf.mxu0
      %v681 = vadd.f32 0.0, %v680
      %682 = vmatmul.f32.gmra.mxu0 %v477
      %v683 = vpop.f32.mrf.mxu0
      %v684 = vadd.f32 0.0, %v683
      %685 = vmatmul.f32.gmra.mxu0 %v480
      %v686 = vpop.f32.mrf.mxu0
      %v687 = vadd.f32 0.0, %v686
      %688 = vmatmul.f32.gmra.mxu0 %v483
      %v689 = vpop.f32.mrf.mxu0
      %v690 = vadd.f32 0.0, %v689
      %691 = vmatmul.f32.gmra.mxu0 %v486
      %v692 = vpop.f32.mrf.mxu0
      %v693 = vadd.f32 0.0, %v692
      %694 = vmatmul.f32.gmra.mxu0 %v489
      %v695 = vpop.f32.mrf.mxu0
      %v696 = vadd.f32 0.0, %v695
      %697 = vmatmul.f32.gmra.mxu0 %v492
      %v698 = vpop.f32.mrf.mxu0
      %v699 = vadd.f32 0.0, %v698
      %700 = vmatmul.f32.gmra.mxu0 %v495
      %v701 = vpop.f32.mrf.mxu0
      %v702 = vadd.f32 0.0, %v701
      %703 = vmatmul.f32.gmra.mxu0 %v498
      %v704 = vpop.f32.mrf.mxu0
      %v705 = vadd.f32 0.0, %v704
      %706 = vmatmul.f32.gmra.mxu0 %v501
      %v707 = vpop.f32.mrf.mxu0
      %v708 = vadd.f32 0.0, %v707
      %709 = vmatmul.f32.gmra.mxu0 %v504
      %v710 = vpop.f32.mrf.mxu0
      %v711 = vadd.f32 0.0, %v710
      %712 = vmatmul.f32.gmra.mxu0 %v507
      %v713 = vpop.f32.mrf.mxu0
      %v714 = vadd.f32 0.0, %v713
      %715 = vmatmul.f32.gmra.mxu0 %v510
      %v716 = vpop.f32.mrf.mxu0
      %v717 = vadd.f32 0.0, %v716
      %718 = vmatmul.f32.gmra.mxu0 %v513
      %v719 = vpop.f32.mrf.mxu0
      %v720 = vadd.f32 0.0, %v719
      %721 = vmatmul.f32.gmra.mxu0 %v516
      %v722 = vpop.f32.mrf.mxu0
      %v723 = vadd.f32 0.0, %v722
      %724 = vmatmul.f32.gmra.mxu0 %v519
      %v725 = vpop.f32.mrf.mxu0
      %v726 = vadd.f32 0.0, %v725
      %727 = vmatmul.f32.gmra.mxu0 %v522
      %v728 = vpop.f32.mrf.mxu0
      %v729 = vadd.f32 0.0, %v728
      %730 = vmatmul.f32.gmra.mxu0 %v525
      %v731 = vpop.f32.mrf.mxu0
      %v732 = vadd.f32 0.0, %v731
      %733 = vmatmul.f32.gmra.mxu0 %v528
      %v734 = vpop.f32.mrf.mxu0
      %v735 = vadd.f32 0.0, %v734
      %736 = vmatmul.f32.gmra.mxu0 %v531
      %v737 = vpop.f32.mrf.mxu0
      %v738 = vadd.f32 0.0, %v737
      %739 = vmatmul.f32.gmra.mxu0 %v534
      %v740 = vpop.f32.mrf.mxu0
      %v741 = vadd.f32 0.0, %v740
      %742 = vmatmul.f32.gmra.mxu0 %v537
      %v743 = vpop.f32.mrf.mxu0
      %v744 = vadd.f32 0.0, %v743
      %745 = vmatmul.f32.gmra.mxu0 %v540
      %v746 = vpop.f32.mrf.mxu0
      %v747 = vadd.f32 0.0, %v746
      %748 = vmatmul.f32.gmra.mxu0 %v543
      %v749 = vpop.f32.mrf.mxu0
      %v750 = vadd.f32 0.0, %v749
      %751 = vmatmul.f32.gmra.mxu0 %v546
      %v752 = vpop.f32.mrf.mxu0
      %v753 = vadd.f32 0.0, %v752
      %754 = vmatmul.f32.gmra.mxu0 %v549
      %v755 = vpop.f32.mrf.mxu0
      %v756 = vadd.f32 0.0, %v755
      %757 = vmatmul.f32.gmra.mxu0 %v552
      %v758 = vpop.f32.mrf.mxu0
      %v759 = vadd.f32 0.0, %v758
      %760 = vmatmul.f32.gmra.mxu0 %v555
      %v761 = vpop.f32.mrf.mxu0
      %v762 = vadd.f32 0.0, %v761
      %763 = vmatmul.f32.gmra.mxu0 %v558
      %v764 = vpop.f32.mrf.mxu0
      %v765 = vadd.f32 0.0, %v764
      %766 = vmatmul.f32.gmra.mxu0 %v561
      %v767 = vpop.f32.mrf.mxu0
      %v768 = vadd.f32 0.0, %v767
      %769 = vmatmul.f32.gmra.mxu0 %v564
      %v770 = vpop.f32.mrf.mxu0
      %v771 = vadd.f32 0.0, %v770
      %772 = vmatmul.f32.gmra.mxu0 %v567
      %v773 = vpop.f32.mrf.mxu0
      %v774 = vadd.f32 0.0, %v773
      %775 = vmatmul.f32.gmra.mxu0 %v570
      %v776 = vpop.f32.mrf.mxu0
      %v777 = vadd.f32 0.0, %v776
      %778 = vmatmul.f32.gmra.mxu0 %v573
      %v779 = vpop.f32.mrf.mxu0
      %v780 = vadd.f32 0.0, %v779
      %781 = vmatmul.f32.gmra.mxu0 %v576
      %v782 = vpop.f32.mrf.mxu0
      %v783 = vadd.f32 0.0, %v782
      %784 = vmatmul.f32.gmra.mxu0 %v579
      %v785 = vpop.f32.mrf.mxu0
      %v786 = vadd.f32 0.0, %v785
      %787 = vmatmul.f32.gmra.mxu0 %v582
      %v788 = vpop.f32.mrf.mxu0
      %v789 = vadd.f32 0.0, %v788
      %790 = vmatmul.f32.gmra.mxu0 %v585
      %v791 = vpop.f32.mrf.mxu0
      %v792 = vadd.f32 0.0, %v791
      %793 = vmatmul.f32.gmra.mxu0 %v588
      %v794 = vpop.f32.mrf.mxu0
      %v795 = vadd.f32 0.0, %v794
      %796 = vmatmul.f32.gmra.mxu0 %v591
      %v797 = vpop.f32.mrf.mxu0
      %v798 = vadd.f32 0.0, %v797
      %799 = vdwg.mxu0
      %v801 = vsel %vm406, %v279, 0
      %v804 = vsel %vm406, %v280, 0
      %v807 = vsel %vm406, %v281, 0
      %v810 = vsel %vm406, %v282, 0
      %v813 = vsel %vm406, %v283, 0
      %v816 = vsel %vm406, %v284, 0
      %v819 = vsel %vm406, %v285, 0
      %v822 = vsel %vm406, %v286, 0
      %v825 = vsel %vm406, %v287, 0
      %v828 = vsel %vm406, %v288, 0
      %v831 = vsel %vm406, %v289, 0
      %v834 = vsel %vm406, %v290, 0
      %v837 = vsel %vm406, %v291, 0
      %v840 = vsel %vm406, %v292, 0
      %v843 = vsel %vm406, %v293, 0
      %v846 = vsel %vm406, %v294, 0
      %v849 = vsel %vm406, %v295, 0
      %v852 = vsel %vm406, %v296, 0
      %v855 = vsel %vm406, %v297, 0
      %v858 = vsel %vm406, %v298, 0
      %v861 = vsel %vm406, %v299, 0
      %v864 = vsel %vm406, %v300, 0
      %v867 = vsel %vm406, %v301, 0
      %v870 = vsel %vm406, %v302, 0
      %v873 = vsel %vm406, %v303, 0
      %v876 = vsel %vm406, %v304, 0
      %v879 = vsel %vm406, %v305, 0
      %v882 = vsel %vm406, %v306, 0
      %v885 = vsel %vm406, %v307, 0
      %v888 = vsel %vm406, %v308, 0
      %v891 = vsel %vm406, %v309, 0
      %v894 = vsel %vm406, %v310, 0
      %v897 = vsel %vm406, %v311, 0
      %v900 = vsel %vm406, %v312, 0
      %v903 = vsel %vm406, %v313, 0
      %v906 = vsel %vm406, %v314, 0
      %v909 = vsel %vm406, %v315, 0
      %v912 = vsel %vm406, %v316, 0
      %v915 = vsel %vm406, %v317, 0
      %v918 = vsel %vm406, %v318, 0
      %v921 = vsel %vm406, %v319, 0
      %v924 = vsel %vm406, %v320, 0
      %v927 = vsel %vm406, %v321, 0
      %v930 = vsel %vm406, %v322, 0
      %v933 = vsel %vm406, %v323, 0
      %v936 = vsel %vm406, %v324, 0
      %v939 = vsel %vm406, %v325, 0
      %v942 = vsel %vm406, %v326, 0
      %v945 = vsel %vm406, %v327, 0
      %v948 = vsel %vm406, %v328, 0
      %v951 = vsel %vm406, %v329, 0
      %v954 = vsel %vm406, %v330, 0
      %v957 = vsel %vm406, %v331, 0
      %v960 = vsel %vm406, %v332, 0
      %v963 = vsel %vm406, %v333, 0
      %v966 = vsel %vm406, %v334, 0
      %v969 = vsel %vm406, %v335, 0
      %v972 = vsel %vm406, %v336, 0
      %v975 = vsel %vm406, %v337, 0
      %v978 = vsel %vm406, %v338, 0
      %v981 = vsel %vm406, %v339, 0
      %v984 = vsel %vm406, %v340, 0
      %v987 = vsel %vm593, %v341, 0
      %989 = vmatpush.msra.mxu0 0.0
      %990 = vmatpush.msra.mxu0 0.0
      %991 = vmatpush.msra.mxu0 0.0
      %992 = vmatpush.msra.mxu0 0.0
      %993 = vmatpush.msra.mxu0 0.0
      %994 = vmatpush.msra.mxu0 0.0
      %995 = vmatpush.msra.mxu0 0.0
      %996 = vmatpush.msra.mxu0 0.0
      %997 = vmatpush.msra.mxu0 0.0
      %998 = vmatpush.msra.mxu0 0.0
      %999 = vmatpush.msra.mxu0 0.0
      %1000 = vmatpush.msra.mxu0 0.0
      %1001 = vmatpush.msra.mxu0 0.0
      %1002 = vmatpush.msra.mxu0 0.0
      %1003 = vmatpush.msra.mxu0 0.0
      %1004 = vmatpush.msra.mxu0 %v987
      %1005 = vmatmul.f32.gmra.mxu0 %v801
      %v1006 = vpop.f32.mrf.mxu0
      %v1007 = vadd.f32 %v615, %v1006
      %1008 = vmatmul.f32.gmra.mxu0 %v804
      %v1009 = vpop.f32.mrf.mxu0
      %v1010 = vadd.f32 %v618, %v1009
      %1011 = vmatmul.f32.gmra.mxu0 %v807
      %v1012 = vpop.f32.mrf.mxu0
      %v1013 = vadd.f32 %v621, %v1012
      %1014 = vmatmul.f32.gmra.mxu0 %v810
      %v1015 = vpop.f32.mrf.mxu0
      %v1016 = vadd.f32 %v624, %v1015
      %1017 = vmatmul.f32.gmra.mxu0 %v813
      %v1018 = vpop.f32.mrf.mxu0
      %v1019 = vadd.f32 %v627, %v1018
      %1020 = vmatmul.f32.gmra.mxu0 %v816
      %v1021 = vpop.f32.mrf.mxu0
      %v1022 = vadd.f32 %v630, %v1021
      %1023 = vmatmul.f32.gmra.mxu0 %v819
      %v1024 = vpop.f32.mrf.mxu0
      %v1025 = vadd.f32 %v633, %v1024
      %1026 = vmatmul.f32.gmra.mxu0 %v822
      %v1027 = vpop.f32.mrf.mxu0
      %v1028 = vadd.f32 %v636, %v1027
      %1029 = vmatmul.f32.gmra.mxu0 %v825
      %v1030 = vpop.f32.mrf.mxu0
      %v1031 = vadd.f32 %v639, %v1030
      %1032 = vmatmul.f32.gmra.mxu0 %v828
      %v1033 = vpop.f32.mrf.mxu0
      %v1034 = vadd.f32 %v642, %v1033
      %1035 = vmatmul.f32.gmra.mxu0 %v831
      %v1036 = vpop.f32.mrf.mxu0
      %v1037 = vadd.f32 %v645, %v1036
      %1038 = vmatmul.f32.gmra.mxu0 %v834
      %v1039 = vpop.f32.mrf.mxu0
      %v1040 = vadd.f32 %v648, %v1039
      %1041 = vmatmul.f32.gmra.mxu0 %v837
      %v1042 = vpop.f32.mrf.mxu0
      %v1043 = vadd.f32 %v651, %v1042
      %1044 = vmatmul.f32.gmra.mxu0 %v840
      %v1045 = vpop.f32.mrf.mxu0
      %v1046 = vadd.f32 %v654, %v1045
      %1047 = vmatmul.f32.gmra.mxu0 %v843
      %v1048 = vpop.f32.mrf.mxu0
      %v1049 = vadd.f32 %v657, %v1048
      %1050 = vmatmul.f32.gmra.mxu0 %v846
      %v1051 = vpop.f32.mrf.mxu0
      %v1052 = vadd.f32 %v660, %v1051
      %1053 = vmatmul.f32.gmra.mxu0 %v849
      %v1054 = vpop.f32.mrf.mxu0
      %v1055 = vadd.f32 %v663, %v1054
      %1056 = vmatmul.f32.gmra.mxu0 %v852
      %v1057 = vpop.f32.mrf.mxu0
      %v1058 = vadd.f32 %v666, %v1057
      %1059 = vmatmul.f32.gmra.mxu0 %v855
      %v1060 = vpop.f32.mrf.mxu0
      %v1061 = vadd.f32 %v669, %v1060
      %1062 = vmatmul.f32.gmra.mxu0 %v858
      %v1063 = vpop.f32.mrf.mxu0
      %v1064 = vadd.f32 %v672, %v1063
      %1065 = vmatmul.f32.gmra.mxu0 %v861
      %v1066 = vpop.f32.mrf.mxu0
      %v1067 = vadd.f32 %v675, %v1066
      %1068 = vmatmul.f32.gmra.mxu0 %v864
      %v1069 = vpop.f32.mrf.mxu0
      %v1070 = vadd.f32 %v678, %v1069
      %1071 = vmatmul.f32.gmra.mxu0 %v867
      %v1072 = vpop.f32.mrf.mxu0
      %v1073 = vadd.f32 %v681, %v1072
      %1074 = vmatmul.f32.gmra.mxu0 %v870
      %v1075 = vpop.f32.mrf.mxu0
      %v1076 = vadd.f32 %v684, %v1075
      %1077 = vmatmul.f32.gmra.mxu0 %v873
      %v1078 = vpop.f32.mrf.mxu0
      %v1079 = vadd.f32 %v687, %v1078
      %1080 = vmatmul.f32.gmra.mxu0 %v876
      %v1081 = vpop.f32.mrf.mxu0
      %v1082 = vadd.f32 %v690, %v1081
      %1083 = vmatmul.f32.gmra.mxu0 %v879
      %v1084 = vpop.f32.mrf.mxu0
      %v1085 = vadd.f32 %v693, %v1084
      %1086 = vmatmul.f32.gmra.mxu0 %v882
      %v1087 = vpop.f32.mrf.mxu0
      %v1088 = vadd.f32 %v696, %v1087
      %1089 = vmatmul.f32.gmra.mxu0 %v885
      %v1090 = vpop.f32.mrf.mxu0
      %v1091 = vadd.f32 %v699, %v1090
      %1092 = vmatmul.f32.gmra.mxu0 %v888
      %v1093 = vpop.f32.mrf.mxu0
      %v1094 = vadd.f32 %v702, %v1093
      %1095 = vmatmul.f32.gmra.mxu0 %v891
      %v1096 = vpop.f32.mrf.mxu0
      %v1097 = vadd.f32 %v705, %v1096
      %1098 = vmatmul.f32.gmra.mxu0 %v894
      %v1099 = vpop.f32.mrf.mxu0
      %v1100 = vadd.f32 %v708, %v1099
      %1101 = vmatmul.f32.gmra.mxu0 %v897
      %v1102 = vpop.f32.mrf.mxu0
      %v1103 = vadd.f32 %v711, %v1102
      %1104 = vmatmul.f32.gmra.mxu0 %v900
      %v1105 = vpop.f32.mrf.mxu0
      %v1106 = vadd.f32 %v714, %v1105
      %1107 = vmatmul.f32.gmra.mxu0 %v903
      %v1108 = vpop.f32.mrf.mxu0
      %v1109 = vadd.f32 %v717, %v1108
      %1110 = vmatmul.f32.gmra.mxu0 %v906
      %v1111 = vpop.f32.mrf.mxu0
      %v1112 = vadd.f32 %v720, %v1111
      %1113 = vmatmul.f32.gmra.mxu0 %v909
      %v1114 = vpop.f32.mrf.mxu0
      %v1115 = vadd.f32 %v723, %v1114
      %1116 = vmatmul.f32.gmra.mxu0 %v912
      %v1117 = vpop.f32.mrf.mxu0
      %v1118 = vadd.f32 %v726, %v1117
      %1119 = vmatmul.f32.gmra.mxu0 %v915
      %v1120 = vpop.f32.mrf.mxu0
      %v1121 = vadd.f32 %v729, %v1120
      %1122 = vmatmul.f32.gmra.mxu0 %v918
      %v1123 = vpop.f32.mrf.mxu0
      %v1124 = vadd.f32 %v732, %v1123
      %1125 = vmatmul.f32.gmra.mxu0 %v921
      %v1126 = vpop.f32.mrf.mxu0
      %v1127 = vadd.f32 %v735, %v1126
      %1128 = vmatmul.f32.gmra.mxu0 %v924
      %v1129 = vpop.f32.mrf.mxu0
      %v1130 = vadd.f32 %v738, %v1129
      %1131 = vmatmul.f32.gmra.mxu0 %v927
      %v1132 = vpop.f32.mrf.mxu0
      %v1133 = vadd.f32 %v741, %v1132
      %1134 = vmatmul.f32.gmra.mxu0 %v930
      %v1135 = vpop.f32.mrf.mxu0
      %v1136 = vadd.f32 %v744, %v1135
      %1137 = vmatmul.f32.gmra.mxu0 %v933
      %v1138 = vpop.f32.mrf.mxu0
      %v1139 = vadd.f32 %v747, %v1138
      %1140 = vmatmul.f32.gmra.mxu0 %v936
      %v1141 = vpop.f32.mrf.mxu0
      %v1142 = vadd.f32 %v750, %v1141
      %1143 = vmatmul.f32.gmra.mxu0 %v939
      %v1144 = vpop.f32.mrf.mxu0
      %v1145 = vadd.f32 %v753, %v1144
      %1146 = vmatmul.f32.gmra.mxu0 %v942
      %v1147 = vpop.f32.mrf.mxu0
      %v1148 = vadd.f32 %v756, %v1147
      %1149 = vmatmul.f32.gmra.mxu0 %v945
      %v1150 = vpop.f32.mrf.mxu0
      %v1151 = vadd.f32 %v759, %v1150
      %1152 = vmatmul.f32.gmra.mxu0 %v948
      %v1153 = vpop.f32.mrf.mxu0
      %v1154 = vadd.f32 %v762, %v1153
      %1155 = vmatmul.f32.gmra.mxu0 %v951
      %v1156 = vpop.f32.mrf.mxu0
      %v1157 = vadd.f32 %v765, %v1156
      %1158 = vmatmul.f32.gmra.mxu0 %v954
      %v1159 = vpop.f32.mrf.mxu0
      %v1160 = vadd.f32 %v768, %v1159
      %1161 = vmatmul.f32.gmra.mxu0 %v957
      %v1162 = vpop.f32.mrf.mxu0
      %v1163 = vadd.f32 %v771, %v1162
      %1164 = vmatmul.f32.gmra.mxu0 %v960
      %v1165 = vpop.f32.mrf.mxu0
      %v1166 = vadd.f32 %v774, %v1165
      %1167 = vmatmul.f32.gmra.mxu0 %v963
      %v1168 = vpop.f32.mrf.mxu0
      %v1169 = vadd.f32 %v777, %v1168
      %1170 = vmatmul.f32.gmra.mxu0 %v966
      %v1171 = vpop.f32.mrf.mxu0
      %v1172 = vadd.f32 %v780, %v1171
      %1173 = vmatmul.f32.gmra.mxu0 %v969
      %v1174 = vpop.f32.mrf.mxu0
      %v1175 = vadd.f32 %v783, %v1174
      %1176 = vmatmul.f32.gmra.mxu0 %v972
      %v1177 = vpop.f32.mrf.mxu0
      %v1178 = vadd.f32 %v786, %v1177
      %1179 = vmatmul.f32.gmra.mxu0 %v975
      %v1180 = vpop.f32.mrf.mxu0
      %v1181 = vadd.f32 %v789, %v1180
      %1182 = vmatmul.f32.gmra.mxu0 %v978
      %v1183 = vpop.f32.mrf.mxu0
      %v1184 = vadd.f32 %v792, %v1183
      %1185 = vmatmul.f32.gmra.mxu0 %v981
      %v1186 = vpop.f32.mrf.mxu0
      %v1187 = vadd.f32 %v795, %v1186
      %1188 = vmatmul.f32.gmra.mxu0 %v984
      %v1189 = vpop.f32.mrf.mxu0
      %v1190 = vadd.f32 %v798, %v1189
      %1191 = vdwg.mxu0
      %v1192 = vld [vmem:[%s273 + $0x2] sm:$0xff]
      %v1193 = vld [vmem:[%s273 + $0xa] sm:$0xff]
      %v1194 = vld [vmem:[%s273 + $0x12] sm:$0xff]
      %v1195 = vld [vmem:[%s273 + $0x1a] sm:$0xff]
      %v1196 = vld [vmem:[%s273 + $0x22] sm:$0xff]
      %v1197 = vld [vmem:[%s273 + $0x2a] sm:$0xff]
      %v1198 = vld [vmem:[%s273 + $0x32] sm:$0xff]
      %v1199 = vld [vmem:[%s273 + $0x3a] sm:$0xff]
      %v1200 = vld [vmem:[%s273 + $0x42] sm:$0xff]
      %v1201 = vld [vmem:[%s273 + $0x4a] sm:$0xff]
      %v1202 = vld [vmem:[%s273 + $0x52] sm:$0xff]
      %v1203 = vld [vmem:[%s273 + $0x5a] sm:$0xff]
      %v1204 = vld [vmem:[%s273 + $0x62] sm:$0xff]
      %v1205 = vld [vmem:[%s273 + $0x6a] sm:$0xff]
      %v1206 = vld [vmem:[%s273 + $0x72] sm:$0xff]
      %v1207 = vld [vmem:[%s273 + $0x7a] sm:$0xff]
      %v1208 = vld [vmem:[%s273 + $0x82] sm:$0xff]
      %v1209 = vld [vmem:[%s273 + $0x8a] sm:$0xff]
      %v1210 = vld [vmem:[%s273 + $0x92] sm:$0xff]
      %v1211 = vld [vmem:[%s273 + $0x9a] sm:$0xff]
      %v1212 = vld [vmem:[%s273 + $0xa2] sm:$0xff]
      %v1213 = vld [vmem:[%s273 + $0xaa] sm:$0xff]
      %v1214 = vld [vmem:[%s273 + $0xb2] sm:$0xff]
      %v1215 = vld [vmem:[%s273 + $0xba] sm:$0xff]
      %v1216 = vld [vmem:[%s273 + $0xc2] sm:$0xff]
      %v1217 = vld [vmem:[%s273 + $0xca] sm:$0xff]
      %v1218 = vld [vmem:[%s273 + $0xd2] sm:$0xff]
      %v1219 = vld [vmem:[%s273 + $0xda] sm:$0xff]
      %v1220 = vld [vmem:[%s273 + $0xe2] sm:$0xff]
      %v1221 = vld [vmem:[%s273 + $0xea] sm:$0xff]
      %v1222 = vld [vmem:[%s273 + $0xf2] sm:$0xff]
      %v1223 = vld [vmem:[%s273 + $0xfa] sm:$0xff]
      %v1224 = vld [vmem:[%s273 + $0x102] sm:$0xff]
      %v1225 = vld [vmem:[%s273 + $0x10a] sm:$0xff]
      %v1226 = vld [vmem:[%s273 + $0x112] sm:$0xff]
      %v1227 = vld [vmem:[%s273 + $0x11a] sm:$0xff]
      %v1228 = vld [vmem:[%s273 + $0x122] sm:$0xff]
      %v1229 = vld [vmem:[%s273 + $0x12a] sm:$0xff]
      %v1230 = vld [vmem:[%s273 + $0x132] sm:$0xff]
      %v1231 = vld [vmem:[%s273 + $0x13a] sm:$0xff]
      %v1232 = vld [vmem:[%s273 + $0x142] sm:$0xff]
      %v1233 = vld [vmem:[%s273 + $0x14a] sm:$0xff]
      %v1234 = vld [vmem:[%s273 + $0x152] sm:$0xff]
      %v1235 = vld [vmem:[%s273 + $0x15a] sm:$0xff]
      %v1236 = vld [vmem:[%s273 + $0x162] sm:$0xff]
      %v1237 = vld [vmem:[%s273 + $0x16a] sm:$0xff]
      %v1238 = vld [vmem:[%s273 + $0x172] sm:$0xff]
      %v1239 = vld [vmem:[%s273 + $0x17a] sm:$0xff]
      %v1240 = vld [vmem:[%s273 + $0x182] sm:$0xff]
      %v1241 = vld [vmem:[%s273 + $0x18a] sm:$0xff]
      %v1242 = vld [vmem:[%s273 + $0x192] sm:$0xff]
      %v1243 = vld [vmem:[%s273 + $0x19a] sm:$0xff]
      %v1244 = vld [vmem:[%s273 + $0x1a2] sm:$0xff]
      %v1245 = vld [vmem:[%s273 + $0x1aa] sm:$0xff]
      %v1246 = vld [vmem:[%s273 + $0x1b2] sm:$0xff]
      %v1247 = vld [vmem:[%s273 + $0x1ba] sm:$0xff]
      %v1248 = vld [vmem:[%s273 + $0x1c2] sm:$0xff]
      %v1249 = vld [vmem:[%s273 + $0x1ca] sm:$0xff]
      %v1250 = vld [vmem:[%s273 + $0x1d2] sm:$0xff]
      %v1251 = vld [vmem:[%s273 + $0x1da] sm:$0xff]
      %v1252 = vld [vmem:[%s273 + $0x1e2] sm:$0xff]
      %v1253 = vld [vmem:[%s273 + $0x1ea] sm:$0xff]
      %s1254 = scalar_lea.vmem %s1, 8
      %v1255 = vld [vmem:[%s1254] sm:$0xf]
      %v1257 = vsel %vm406, %v1192, 0
      %v1260 = vsel %vm406, %v1193, 0
      %v1263 = vsel %vm406, %v1194, 0
      %v1266 = vsel %vm406, %v1195, 0
      %v1269 = vsel %vm406, %v1196, 0
      %v1272 = vsel %vm406, %v1197, 0
      %v1275 = vsel %vm406, %v1198, 0
      %v1278 = vsel %vm406, %v1199, 0
      %v1281 = vsel %vm406, %v1200, 0
      %v1284 = vsel %vm406, %v1201, 0
      %v1287 = vsel %vm406, %v1202, 0
      %v1290 = vsel %vm406, %v1203, 0
      %v1293 = vsel %vm406, %v1204, 0
      %v1296 = vsel %vm406, %v1205, 0
      %v1299 = vsel %vm406, %v1206, 0
      %v1302 = vsel %vm406, %v1207, 0
      %v1305 = vsel %vm406, %v1208, 0
      %v1308 = vsel %vm406, %v1209, 0
      %v1311 = vsel %vm406, %v1210, 0
      %v1314 = vsel %vm406, %v1211, 0
      %v1317 = vsel %vm406, %v1212, 0
      %v1320 = vsel %vm406, %v1213, 0
      %v1323 = vsel %vm406, %v1214, 0
      %v1326 = vsel %vm406, %v1215, 0
      %v1329 = vsel %vm406, %v1216, 0
      %v1332 = vsel %vm406, %v1217, 0
      %v1335 = vsel %vm406, %v1218, 0
      %v1338 = vsel %vm406, %v1219, 0
      %v1341 = vsel %vm406, %v1220, 0
      %v1344 = vsel %vm406, %v1221, 0
      %v1347 = vsel %vm406, %v1222, 0
      %v1350 = vsel %vm406, %v1223, 0
      %v1353 = vsel %vm406, %v1224, 0
      %v1356 = vsel %vm406, %v1225, 0
      %v1359 = vsel %vm406, %v1226, 0
      %v1362 = vsel %vm406, %v1227, 0
      %v1365 = vsel %vm406, %v1228, 0
      %v1368 = vsel %vm406, %v1229, 0
      %v1371 = vsel %vm406, %v1230, 0
      %v1374 = vsel %vm406, %v1231, 0
      %v1377 = vsel %vm406, %v1232, 0
      %v1380 = vsel %vm406, %v1233, 0
      %v1383 = vsel %vm406, %v1234, 0
      %v1386 = vsel %vm406, %v1235, 0
      %v1389 = vsel %vm406, %v1236, 0
      %v1392 = vsel %vm406, %v1237, 0
      %v1395 = vsel %vm406, %v1238, 0
      %v1398 = vsel %vm406, %v1239, 0
      %v1401 = vsel %vm406, %v1240, 0
      %v1404 = vsel %vm406, %v1241, 0
      %v1407 = vsel %vm406, %v1242, 0
      %v1410 = vsel %vm406, %v1243, 0
      %v1413 = vsel %vm406, %v1244, 0
      %v1416 = vsel %vm406, %v1245, 0
      %v1419 = vsel %vm406, %v1246, 0
      %v1422 = vsel %vm406, %v1247, 0
      %v1425 = vsel %vm406, %v1248, 0
      %v1428 = vsel %vm406, %v1249, 0
      %v1431 = vsel %vm406, %v1250, 0
      %v1434 = vsel %vm406, %v1251, 0
      %v1437 = vsel %vm406, %v1252, 0
      %v1440 = vsel %vm406, %v1253, 0
      %v1443 = vsel %vm593, %v1255, 0
      %1445 = vmatpush.msra.mxu0 0.0
      %1446 = vmatpush.msra.mxu0 0.0
      %1447 = vmatpush.msra.mxu0 0.0
      %1448 = vmatpush.msra.mxu0 0.0
      %1449 = vmatpush.msra.mxu0 0.0
      %1450 = vmatpush.msra.mxu0 0.0
      %1451 = vmatpush.msra.mxu0 0.0
      %1452 = vmatpush.msra.mxu0 0.0
      %1453 = vmatpush.msra.mxu0 0.0
      %1454 = vmatpush.msra.mxu0 0.0
      %1455 = vmatpush.msra.mxu0 0.0
      %1456 = vmatpush.msra.mxu0 0.0
      %1457 = vmatpush.msra.mxu0 0.0
      %1458 = vmatpush.msra.mxu0 0.0
      %1459 = vmatpush.msra.mxu0 0.0
      %1460 = vmatpush.msra.mxu0 %v1443
      %1461 = vmatmul.f32.gmra.mxu0 %v1257
      %v1462 = vpop.f32.mrf.mxu0
      %v1463 = vadd.f32 0.0, %v1462
      %1464 = vmatmul.f32.gmra.mxu0 %v1260
      %v1465 = vpop.f32.mrf.mxu0
      %v1466 = vadd.f32 0.0, %v1465
      %1467 = vmatmul.f32.gmra.mxu0 %v1263
      %v1468 = vpop.f32.mrf.mxu0
      %v1469 = vadd.f32 0.0, %v1468
      %1470 = vmatmul.f32.gmra.mxu0 %v1266
      %v1471 = vpop.f32.mrf.mxu0
      %v1472 = vadd.f32 0.0, %v1471
      %1473 = vmatmul.f32.gmra.mxu0 %v1269
      %v1474 = vpop.f32.mrf.mxu0
      %v1475 = vadd.f32 0.0, %v1474
      %1476 = vmatmul.f32.gmra.mxu0 %v1272
      %v1477 = vpop.f32.mrf.mxu0
      %v1478 = vadd.f32 0.0, %v1477
      %1479 = vmatmul.f32.gmra.mxu0 %v1275
      %v1480 = vpop.f32.mrf.mxu0
      %v1481 = vadd.f32 0.0, %v1480
      %1482 = vmatmul.f32.gmra.mxu0 %v1278
      %v1483 = vpop.f32.mrf.mxu0
      %v1484 = vadd.f32 0.0, %v1483
      %1485 = vmatmul.f32.gmra.mxu0 %v1281
      %v1486 = vpop.f32.mrf.mxu0
      %v1487 = vadd.f32 0.0, %v1486
      %1488 = vmatmul.f32.gmra.mxu0 %v1284
      %v1489 = vpop.f32.mrf.mxu0
      %v1490 = vadd.f32 0.0, %v1489
      %1491 = vmatmul.f32.gmra.mxu0 %v1287
      %v1492 = vpop.f32.mrf.mxu0
      %v1493 = vadd.f32 0.0, %v1492
      %1494 = vmatmul.f32.gmra.mxu0 %v1290
      %v1495 = vpop.f32.mrf.mxu0
      %v1496 = vadd.f32 0.0, %v1495
      %1497 = vmatmul.f32.gmra.mxu0 %v1293
      %v1498 = vpop.f32.mrf.mxu0
      %v1499 = vadd.f32 0.0, %v1498
      %1500 = vmatmul.f32.gmra.mxu0 %v1296
      %v1501 = vpop.f32.mrf.mxu0
      %v1502 = vadd.f32 0.0, %v1501
      %1503 = vmatmul.f32.gmra.mxu0 %v1299
      %v1504 = vpop.f32.mrf.mxu0
      %v1505 = vadd.f32 0.0, %v1504
      %1506 = vmatmul.f32.gmra.mxu0 %v1302
      %v1507 = vpop.f32.mrf.mxu0
      %v1508 = vadd.f32 0.0, %v1507
      %1509 = vmatmul.f32.gmra.mxu0 %v1305
      %v1510 = vpop.f32.mrf.mxu0
      %v1511 = vadd.f32 0.0, %v1510
      %1512 = vmatmul.f32.gmra.mxu0 %v1308
      %v1513 = vpop.f32.mrf.mxu0
      %v1514 = vadd.f32 0.0, %v1513
      %1515 = vmatmul.f32.gmra.mxu0 %v1311
      %v1516 = vpop.f32.mrf.mxu0
      %v1517 = vadd.f32 0.0, %v1516
      %1518 = vmatmul.f32.gmra.mxu0 %v1314
      %v1519 = vpop.f32.mrf.mxu0
      %v1520 = vadd.f32 0.0, %v1519
      %1521 = vmatmul.f32.gmra.mxu0 %v1317
      %v1522 = vpop.f32.mrf.mxu0
      %v1523 = vadd.f32 0.0, %v1522
      %1524 = vmatmul.f32.gmra.mxu0 %v1320
      %v1525 = vpop.f32.mrf.mxu0
      %v1526 = vadd.f32 0.0, %v1525
      %1527 = vmatmul.f32.gmra.mxu0 %v1323
      %v1528 = vpop.f32.mrf.mxu0
      %v1529 = vadd.f32 0.0, %v1528
      %1530 = vmatmul.f32.gmra.mxu0 %v1326
      %v1531 = vpop.f32.mrf.mxu0
      %v1532 = vadd.f32 0.0, %v1531
      %1533 = vmatmul.f32.gmra.mxu0 %v1329
      %v1534 = vpop.f32.mrf.mxu0
      %v1535 = vadd.f32 0.0, %v1534
      %1536 = vmatmul.f32.gmra.mxu0 %v1332
      %v1537 = vpop.f32.mrf.mxu0
      %v1538 = vadd.f32 0.0, %v1537
      %1539 = vmatmul.f32.gmra.mxu0 %v1335
      %v1540 = vpop.f32.mrf.mxu0
      %v1541 = vadd.f32 0.0, %v1540
      %1542 = vmatmul.f32.gmra.mxu0 %v1338
      %v1543 = vpop.f32.mrf.mxu0
      %v1544 = vadd.f32 0.0, %v1543
      %1545 = vmatmul.f32.gmra.mxu0 %v1341
      %v1546 = vpop.f32.mrf.mxu0
      %v1547 = vadd.f32 0.0, %v1546
      %1548 = vmatmul.f32.gmra.mxu0 %v1344
      %v1549 = vpop.f32.mrf.mxu0
      %v1550 = vadd.f32 0.0, %v1549
      %1551 = vmatmul.f32.gmra.mxu0 %v1347
      %v1552 = vpop.f32.mrf.mxu0
      %v1553 = vadd.f32 0.0, %v1552
      %1554 = vmatmul.f32.gmra.mxu0 %v1350
      %v1555 = vpop.f32.mrf.mxu0
      %v1556 = vadd.f32 0.0, %v1555
      %1557 = vmatmul.f32.gmra.mxu0 %v1353
      %v1558 = vpop.f32.mrf.mxu0
      %v1559 = vadd.f32 0.0, %v1558
      %1560 = vmatmul.f32.gmra.mxu0 %v1356
      %v1561 = vpop.f32.mrf.mxu0
      %v1562 = vadd.f32 0.0, %v1561
      %1563 = vmatmul.f32.gmra.mxu0 %v1359
      %v1564 = vpop.f32.mrf.mxu0
      %v1565 = vadd.f32 0.0, %v1564
      %1566 = vmatmul.f32.gmra.mxu0 %v1362
      %v1567 = vpop.f32.mrf.mxu0
      %v1568 = vadd.f32 0.0, %v1567
      %1569 = vmatmul.f32.gmra.mxu0 %v1365
      %v1570 = vpop.f32.mrf.mxu0
      %v1571 = vadd.f32 0.0, %v1570
      %1572 = vmatmul.f32.gmra.mxu0 %v1368
      %v1573 = vpop.f32.mrf.mxu0
      %v1574 = vadd.f32 0.0, %v1573
      %1575 = vmatmul.f32.gmra.mxu0 %v1371
      %v1576 = vpop.f32.mrf.mxu0
      %v1577 = vadd.f32 0.0, %v1576
      %1578 = vmatmul.f32.gmra.mxu0 %v1374
      %v1579 = vpop.f32.mrf.mxu0
      %v1580 = vadd.f32 0.0, %v1579
      %1581 = vmatmul.f32.gmra.mxu0 %v1377
      %v1582 = vpop.f32.mrf.mxu0
      %v1583 = vadd.f32 0.0, %v1582
      %1584 = vmatmul.f32.gmra.mxu0 %v1380
      %v1585 = vpop.f32.mrf.mxu0
      %v1586 = vadd.f32 0.0, %v1585
      %1587 = vmatmul.f32.gmra.mxu0 %v1383
      %v1588 = vpop.f32.mrf.mxu0
      %v1589 = vadd.f32 0.0, %v1588
      %1590 = vmatmul.f32.gmra.mxu0 %v1386
      %v1591 = vpop.f32.mrf.mxu0
      %v1592 = vadd.f32 0.0, %v1591
      %1593 = vmatmul.f32.gmra.mxu0 %v1389
      %v1594 = vpop.f32.mrf.mxu0
      %v1595 = vadd.f32 0.0, %v1594
      %1596 = vmatmul.f32.gmra.mxu0 %v1392
      %v1597 = vpop.f32.mrf.mxu0
      %v1598 = vadd.f32 0.0, %v1597
      %1599 = vmatmul.f32.gmra.mxu0 %v1395
      %v1600 = vpop.f32.mrf.mxu0
      %v1601 = vadd.f32 0.0, %v1600
      %1602 = vmatmul.f32.gmra.mxu0 %v1398
      %v1603 = vpop.f32.mrf.mxu0
      %v1604 = vadd.f32 0.0, %v1603
      %1605 = vmatmul.f32.gmra.mxu0 %v1401
      %v1606 = vpop.f32.mrf.mxu0
      %v1607 = vadd.f32 0.0, %v1606
      %1608 = vmatmul.f32.gmra.mxu0 %v1404
      %v1609 = vpop.f32.mrf.mxu0
      %v1610 = vadd.f32 0.0, %v1609
      %1611 = vmatmul.f32.gmra.mxu0 %v1407
      %v1612 = vpop.f32.mrf.mxu0
      %v1613 = vadd.f32 0.0, %v1612
      %1614 = vmatmul.f32.gmra.mxu0 %v1410
      %v1615 = vpop.f32.mrf.mxu0
      %v1616 = vadd.f32 0.0, %v1615
      %1617 = vmatmul.f32.gmra.mxu0 %v1413
      %v1618 = vpop.f32.mrf.mxu0
      %v1619 = vadd.f32 0.0, %v1618
      %1620 = vmatmul.f32.gmra.mxu0 %v1416
      %v1621 = vpop.f32.mrf.mxu0
      %v1622 = vadd.f32 0.0, %v1621
      %1623 = vmatmul.f32.gmra.mxu0 %v1419
      %v1624 = vpop.f32.mrf.mxu0
      %v1625 = vadd.f32 0.0, %v1624
      %1626 = vmatmul.f32.gmra.mxu0 %v1422
      %v1627 = vpop.f32.mrf.mxu0
      %v1628 = vadd.f32 0.0, %v1627
      %1629 = vmatmul.f32.gmra.mxu0 %v1425
      %v1630 = vpop.f32.mrf.mxu0
      %v1631 = vadd.f32 0.0, %v1630
      %1632 = vmatmul.f32.gmra.mxu0 %v1428
      %v1633 = vpop.f32.mrf.mxu0
      %v1634 = vadd.f32 0.0, %v1633
      %1635 = vmatmul.f32.gmra.mxu0 %v1431
      %v1636 = vpop.f32.mrf.mxu0
      %v1637 = vadd.f32 0.0, %v1636
      %1638 = vmatmul.f32.gmra.mxu0 %v1434
      %v1639 = vpop.f32.mrf.mxu0
      %v1640 = vadd.f32 0.0, %v1639
      %1641 = vmatmul.f32.gmra.mxu0 %v1437
      %v1642 = vpop.f32.mrf.mxu0
      %v1643 = vadd.f32 0.0, %v1642
      %1644 = vmatmul.f32.gmra.mxu0 %v1440
      %v1645 = vpop.f32.mrf.mxu0
      %v1646 = vadd.f32 0.0, %v1645
      %1647 = vdwg.mxu0
      %v1648 = vadd.f32 %v1007, %v1463
      %v1649 = vadd.f32 %v1010, %v1466
      %v1650 = vadd.f32 %v1013, %v1469
      %v1651 = vadd.f32 %v1016, %v1472
      %v1652 = vadd.f32 %v1019, %v1475
      %v1653 = vadd.f32 %v1022, %v1478
      %v1654 = vadd.f32 %v1025, %v1481
      %v1655 = vadd.f32 %v1028, %v1484
      %v1656 = vadd.f32 %v1031, %v1487
      %v1657 = vadd.f32 %v1034, %v1490
      %v1658 = vadd.f32 %v1037, %v1493
      %v1659 = vadd.f32 %v1040, %v1496
      %v1660 = vadd.f32 %v1043, %v1499
      %v1661 = vadd.f32 %v1046, %v1502
      %v1662 = vadd.f32 %v1049, %v1505
      %v1663 = vadd.f32 %v1052, %v1508
      %v1664 = vadd.f32 %v1055, %v1511
      %v1665 = vadd.f32 %v1058, %v1514
      %v1666 = vadd.f32 %v1061, %v1517
      %v1667 = vadd.f32 %v1064, %v1520
      %v1668 = vadd.f32 %v1067, %v1523
      %v1669 = vadd.f32 %v1070, %v1526
      %v1670 = vadd.f32 %v1073, %v1529
      %v1671 = vadd.f32 %v1076, %v1532
      %v1672 = vadd.f32 %v1079, %v1535
      %v1673 = vadd.f32 %v1082, %v1538
      %v1674 = vadd.f32 %v1085, %v1541
      %v1675 = vadd.f32 %v1088, %v1544
      %v1676 = vadd.f32 %v1091, %v1547
      %v1677 = vadd.f32 %v1094, %v1550
      %v1678 = vadd.f32 %v1097, %v1553
      %v1679 = vadd.f32 %v1100, %v1556
      %v1680 = vadd.f32 %v1103, %v1559
      %v1681 = vadd.f32 %v1106, %v1562
      %v1682 = vadd.f32 %v1109, %v1565
      %v1683 = vadd.f32 %v1112, %v1568
      %v1684 = vadd.f32 %v1115, %v1571
      %v1685 = vadd.f32 %v1118, %v1574
      %v1686 = vadd.f32 %v1121, %v1577
      %v1687 = vadd.f32 %v1124, %v1580
      %v1688 = vadd.f32 %v1127, %v1583
      %v1689 = vadd.f32 %v1130, %v1586
      %v1690 = vadd.f32 %v1133, %v1589
      %v1691 = vadd.f32 %v1136, %v1592
      %v1692 = vadd.f32 %v1139, %v1595
      %v1693 = vadd.f32 %v1142, %v1598
      %v1694 = vadd.f32 %v1145, %v1601
      %v1695 = vadd.f32 %v1148, %v1604
      %v1696 = vadd.f32 %v1151, %v1607
      %v1697 = vadd.f32 %v1154, %v1610
      %v1698 = vadd.f32 %v1157, %v1613
      %v1699 = vadd.f32 %v1160, %v1616
      %v1700 = vadd.f32 %v1163, %v1619
      %v1701 = vadd.f32 %v1166, %v1622
      %v1702 = vadd.f32 %v1169, %v1625
      %v1703 = vadd.f32 %v1172, %v1628
      %v1704 = vadd.f32 %v1175, %v1631
      %v1705 = vadd.f32 %v1178, %v1634
      %v1706 = vadd.f32 %v1181, %v1637
      %v1707 = vadd.f32 %v1184, %v1640
      %v1708 = vadd.f32 %v1187, %v1643
      %v1709 = vadd.f32 %v1190, %v1646
      %v1710 = vld [vmem:[%s273 + $0x3] sm:$0xff]
      %v1711 = vld [vmem:[%s273 + $0xb] sm:$0xff]
      %v1712 = vld [vmem:[%s273 + $0x13] sm:$0xff]
      %v1713 = vld [vmem:[%s273 + $0x1b] sm:$0xff]
      %v1714 = vld [vmem:[%s273 + $0x23] sm:$0xff]
      %v1715 = vld [vmem:[%s273 + $0x2b] sm:$0xff]
      %v1716 = vld [vmem:[%s273 + $0x33] sm:$0xff]
      %v1717 = vld [vmem:[%s273 + $0x3b] sm:$0xff]
      %v1718 = vld [vmem:[%s273 + $0x43] sm:$0xff]
      %v1719 = vld [vmem:[%s273 + $0x4b] sm:$0xff]
      %v1720 = vld [vmem:[%s273 + $0x53] sm:$0xff]
      %v1721 = vld [vmem:[%s273 + $0x5b] sm:$0xff]
      %v1722 = vld [vmem:[%s273 + $0x63] sm:$0xff]
      %v1723 = vld [vmem:[%s273 + $0x6b] sm:$0xff]
      %v1724 = vld [vmem:[%s273 + $0x73] sm:$0xff]
      %v1725 = vld [vmem:[%s273 + $0x7b] sm:$0xff]
      %v1726 = vld [vmem:[%s273 + $0x83] sm:$0xff]
      %v1727 = vld [vmem:[%s273 + $0x8b] sm:$0xff]
      %v1728 = vld [vmem:[%s273 + $0x93] sm:$0xff]
      %v1729 = vld [vmem:[%s273 + $0x9b] sm:$0xff]
      %v1730 = vld [vmem:[%s273 + $0xa3] sm:$0xff]
      %v1731 = vld [vmem:[%s273 + $0xab] sm:$0xff]
      %v1732 = vld [vmem:[%s273 + $0xb3] sm:$0xff]
      %v1733 = vld [vmem:[%s273 + $0xbb] sm:$0xff]
      %v1734 = vld [vmem:[%s273 + $0xc3] sm:$0xff]
      %v1735 = vld [vmem:[%s273 + $0xcb] sm:$0xff]
      %v1736 = vld [vmem:[%s273 + $0xd3] sm:$0xff]
      %v1737 = vld [vmem:[%s273 + $0xdb] sm:$0xff]
      %v1738 = vld [vmem:[%s273 + $0xe3] sm:$0xff]
      %v1739 = vld [vmem:[%s273 + $0xeb] sm:$0xff]
      %v1740 = vld [vmem:[%s273 + $0xf3] sm:$0xff]
      %v1741 = vld [vmem:[%s273 + $0xfb] sm:$0xff]
      %v1742 = vld [vmem:[%s273 + $0x103] sm:$0xff]
      %v1743 = vld [vmem:[%s273 + $0x10b] sm:$0xff]
      %v1744 = vld [vmem:[%s273 + $0x113] sm:$0xff]
      %v1745 = vld [vmem:[%s273 + $0x11b] sm:$0xff]
      %v1746 = vld [vmem:[%s273 + $0x123] sm:$0xff]
      %v1747 = vld [vmem:[%s273 + $0x12b] sm:$0xff]
      %v1748 = vld [vmem:[%s273 + $0x133] sm:$0xff]
      %v1749 = vld [vmem:[%s273 + $0x13b] sm:$0xff]
      %v1750 = vld [vmem:[%s273 + $0x143] sm:$0xff]
      %v1751 = vld [vmem:[%s273 + $0x14b] sm:$0xff]
      %v1752 = vld [vmem:[%s273 + $0x153] sm:$0xff]
      %v1753 = vld [vmem:[%s273 + $0x15b] sm:$0xff]
      %v1754 = vld [vmem:[%s273 + $0x163] sm:$0xff]
      %v1755 = vld [vmem:[%s273 + $0x16b] sm:$0xff]
      %v1756 = vld [vmem:[%s273 + $0x173] sm:$0xff]
      %v1757 = vld [vmem:[%s273 + $0x17b] sm:$0xff]
      %v1758 = vld [vmem:[%s273 + $0x183] sm:$0xff]
      %v1759 = vld [vmem:[%s273 + $0x18b] sm:$0xff]
      %v1760 = vld [vmem:[%s273 + $0x193] sm:$0xff]
      %v1761 = vld [vmem:[%s273 + $0x19b] sm:$0xff]
      %v1762 = vld [vmem:[%s273 + $0x1a3] sm:$0xff]
      %v1763 = vld [vmem:[%s273 + $0x1ab] sm:$0xff]
      %v1764 = vld [vmem:[%s273 + $0x1b3] sm:$0xff]
      %v1765 = vld [vmem:[%s273 + $0x1bb] sm:$0xff]
      %v1766 = vld [vmem:[%s273 + $0x1c3] sm:$0xff]
      %v1767 = vld [vmem:[%s273 + $0x1cb] sm:$0xff]
      %v1768 = vld [vmem:[%s273 + $0x1d3] sm:$0xff]
      %v1769 = vld [vmem:[%s273 + $0x1db] sm:$0xff]
      %v1770 = vld [vmem:[%s273 + $0x1e3] sm:$0xff]
      %v1771 = vld [vmem:[%s273 + $0x1eb] sm:$0xff]
      %s1772 = scalar_lea.vmem %s1, 12
      %v1773 = vld [vmem:[%s1772] sm:$0xf]
      %v1775 = vsel %vm406, %v1710, 0
      %v1778 = vsel %vm406, %v1711, 0
      %v1781 = vsel %vm406, %v1712, 0
      %v1784 = vsel %vm406, %v1713, 0
      %v1787 = vsel %vm406, %v1714, 0
      %v1790 = vsel %vm406, %v1715, 0
      %v1793 = vsel %vm406, %v1716, 0
      %v1796 = vsel %vm406, %v1717, 0
      %v1799 = vsel %vm406, %v1718, 0
      %v1802 = vsel %vm406, %v1719, 0
      %v1805 = vsel %vm406, %v1720, 0
      %v1808 = vsel %vm406, %v1721, 0
      %v1811 = vsel %vm406, %v1722, 0
      %v1814 = vsel %vm406, %v1723, 0
      %v1817 = vsel %vm406, %v1724, 0
      %v1820 = vsel %vm406, %v1725, 0
      %v1823 = vsel %vm406, %v1726, 0
      %v1826 = vsel %vm406, %v1727, 0
      %v1829 = vsel %vm406, %v1728, 0
      %v1832 = vsel %vm406, %v1729, 0
      %v1835 = vsel %vm406, %v1730, 0
      %v1838 = vsel %vm406, %v1731, 0
      %v1841 = vsel %vm406, %v1732, 0
      %v1844 = vsel %vm406, %v1733, 0
      %v1847 = vsel %vm406, %v1734, 0
      %v1850 = vsel %vm406, %v1735, 0
      %v1853 = vsel %vm406, %v1736, 0
      %v1856 = vsel %vm406, %v1737, 0
      %v1859 = vsel %vm406, %v1738, 0
      %v1862 = vsel %vm406, %v1739, 0
      %v1865 = vsel %vm406, %v1740, 0
      %v1868 = vsel %vm406, %v1741, 0
      %v1871 = vsel %vm406, %v1742, 0
      %v1874 = vsel %vm406, %v1743, 0
      %v1877 = vsel %vm406, %v1744, 0
      %v1880 = vsel %vm406, %v1745, 0
      %v1883 = vsel %vm406, %v1746, 0
      %v1886 = vsel %vm406, %v1747, 0
      %v1889 = vsel %vm406, %v1748, 0
      %v1892 = vsel %vm406, %v1749, 0
      %v1895 = vsel %vm406, %v1750, 0
      %v1898 = vsel %vm406, %v1751, 0
      %v1901 = vsel %vm406, %v1752, 0
      %v1904 = vsel %vm406, %v1753, 0
      %v1907 = vsel %vm406, %v1754, 0
      %v1910 = vsel %vm406, %v1755, 0
      %v1913 = vsel %vm406, %v1756, 0
      %v1916 = vsel %vm406, %v1757, 0
      %v1919 = vsel %vm406, %v1758, 0
      %v1922 = vsel %vm406, %v1759, 0
      %v1925 = vsel %vm406, %v1760, 0
      %v1928 = vsel %vm406, %v1761, 0
      %v1931 = vsel %vm406, %v1762, 0
      %v1934 = vsel %vm406, %v1763, 0
      %v1937 = vsel %vm406, %v1764, 0
      %v1940 = vsel %vm406, %v1765, 0
      %v1943 = vsel %vm406, %v1766, 0
      %v1946 = vsel %vm406, %v1767, 0
      %v1949 = vsel %vm406, %v1768, 0
      %v1952 = vsel %vm406, %v1769, 0
      %v1955 = vsel %vm406, %v1770, 0
      %v1958 = vsel %vm406, %v1771, 0
      %v1961 = vsel %vm593, %v1773, 0
      %1963 = vmatpush.msra.mxu0 0.0
      %1964 = vmatpush.msra.mxu0 0.0
      %1965 = vmatpush.msra.mxu0 0.0
      %1966 = vmatpush.msra.mxu0 0.0
      %1967 = vmatpush.msra.mxu0 0.0
      %1968 = vmatpush.msra.mxu0 0.0
      %1969 = vmatpush.msra.mxu0 0.0
      %1970 = vmatpush.msra.mxu0 0.0
      %1971 = vmatpush.msra.mxu0 0.0
      %1972 = vmatpush.msra.mxu0 0.0
      %1973 = vmatpush.msra.mxu0 0.0
      %1974 = vmatpush.msra.mxu0 0.0
      %1975 = vmatpush.msra.mxu0 0.0
      %1976 = vmatpush.msra.mxu0 0.0
      %1977 = vmatpush.msra.mxu0 0.0
      %1978 = vmatpush.msra.mxu0 %v1961
      %1979 = vmatmul.f32.gmra.mxu0 %v1775
      %v1980 = vpop.f32.mrf.mxu0
      %v1981 = vadd.f32 0.0, %v1980
      %1982 = vmatmul.f32.gmra.mxu0 %v1778
      %v1983 = vpop.f32.mrf.mxu0
      %v1984 = vadd.f32 0.0, %v1983
      %1985 = vmatmul.f32.gmra.mxu0 %v1781
      %v1986 = vpop.f32.mrf.mxu0
      %v1987 = vadd.f32 0.0, %v1986
      %1988 = vmatmul.f32.gmra.mxu0 %v1784
      %v1989 = vpop.f32.mrf.mxu0
      %v1990 = vadd.f32 0.0, %v1989
      %1991 = vmatmul.f32.gmra.mxu0 %v1787
      %v1992 = vpop.f32.mrf.mxu0
      %v1993 = vadd.f32 0.0, %v1992
      %1994 = vmatmul.f32.gmra.mxu0 %v1790
      %v1995 = vpop.f32.mrf.mxu0
      %v1996 = vadd.f32 0.0, %v1995
      %1997 = vmatmul.f32.gmra.mxu0 %v1793
      %v1998 = vpop.f32.mrf.mxu0
      %v1999 = vadd.f32 0.0, %v1998
      %2000 = vmatmul.f32.gmra.mxu0 %v1796
      %v2001 = vpop.f32.mrf.mxu0
      %v2002 = vadd.f32 0.0, %v2001
      %2003 = vmatmul.f32.gmra.mxu0 %v1799
      %v2004 = vpop.f32.mrf.mxu0
      %v2005 = vadd.f32 0.0, %v2004
      %2006 = vmatmul.f32.gmra.mxu0 %v1802
      %v2007 = vpop.f32.mrf.mxu0
      %v2008 = vadd.f32 0.0, %v2007
      %2009 = vmatmul.f32.gmra.mxu0 %v1805
      %v2010 = vpop.f32.mrf.mxu0
      %v2011 = vadd.f32 0.0, %v2010
      %2012 = vmatmul.f32.gmra.mxu0 %v1808
      %v2013 = vpop.f32.mrf.mxu0
      %v2014 = vadd.f32 0.0, %v2013
      %2015 = vmatmul.f32.gmra.mxu0 %v1811
      %v2016 = vpop.f32.mrf.mxu0
      %v2017 = vadd.f32 0.0, %v2016
      %2018 = vmatmul.f32.gmra.mxu0 %v1814
      %v2019 = vpop.f32.mrf.mxu0
      %v2020 = vadd.f32 0.0, %v2019
      %2021 = vmatmul.f32.gmra.mxu0 %v1817
      %v2022 = vpop.f32.mrf.mxu0
      %v2023 = vadd.f32 0.0, %v2022
      %2024 = vmatmul.f32.gmra.mxu0 %v1820
      %v2025 = vpop.f32.mrf.mxu0
      %v2026 = vadd.f32 0.0, %v2025
      %2027 = vmatmul.f32.gmra.mxu0 %v1823
      %v2028 = vpop.f32.mrf.mxu0
      %v2029 = vadd.f32 0.0, %v2028
      %2030 = vmatmul.f32.gmra.mxu0 %v1826
      %v2031 = vpop.f32.mrf.mxu0
      %v2032 = vadd.f32 0.0, %v2031
      %2033 = vmatmul.f32.gmra.mxu0 %v1829
      %v2034 = vpop.f32.mrf.mxu0
      %v2035 = vadd.f32 0.0, %v2034
      %2036 = vmatmul.f32.gmra.mxu0 %v1832
      %v2037 = vpop.f32.mrf.mxu0
      %v2038 = vadd.f32 0.0, %v2037
      %2039 = vmatmul.f32.gmra.mxu0 %v1835
      %v2040 = vpop.f32.mrf.mxu0
      %v2041 = vadd.f32 0.0, %v2040
      %2042 = vmatmul.f32.gmra.mxu0 %v1838
      %v2043 = vpop.f32.mrf.mxu0
      %v2044 = vadd.f32 0.0, %v2043
      %2045 = vmatmul.f32.gmra.mxu0 %v1841
      %v2046 = vpop.f32.mrf.mxu0
      %v2047 = vadd.f32 0.0, %v2046
      %2048 = vmatmul.f32.gmra.mxu0 %v1844
      %v2049 = vpop.f32.mrf.mxu0
      %v2050 = vadd.f32 0.0, %v2049
      %2051 = vmatmul.f32.gmra.mxu0 %v1847
      %v2052 = vpop.f32.mrf.mxu0
      %v2053 = vadd.f32 0.0, %v2052
      %2054 = vmatmul.f32.gmra.mxu0 %v1850
      %v2055 = vpop.f32.mrf.mxu0
      %v2056 = vadd.f32 0.0, %v2055
      %2057 = vmatmul.f32.gmra.mxu0 %v1853
      %v2058 = vpop.f32.mrf.mxu0
      %v2059 = vadd.f32 0.0, %v2058
      %2060 = vmatmul.f32.gmra.mxu0 %v1856
      %v2061 = vpop.f32.mrf.mxu0
      %v2062 = vadd.f32 0.0, %v2061
      %2063 = vmatmul.f32.gmra.mxu0 %v1859
      %v2064 = vpop.f32.mrf.mxu0
      %v2065 = vadd.f32 0.0, %v2064
      %2066 = vmatmul.f32.gmra.mxu0 %v1862
      %v2067 = vpop.f32.mrf.mxu0
      %v2068 = vadd.f32 0.0, %v2067
      %2069 = vmatmul.f32.gmra.mxu0 %v1865
      %v2070 = vpop.f32.mrf.mxu0
      %v2071 = vadd.f32 0.0, %v2070
      %2072 = vmatmul.f32.gmra.mxu0 %v1868
      %v2073 = vpop.f32.mrf.mxu0
      %v2074 = vadd.f32 0.0, %v2073
      %2075 = vmatmul.f32.gmra.mxu0 %v1871
      %v2076 = vpop.f32.mrf.mxu0
      %v2077 = vadd.f32 0.0, %v2076
      %2078 = vmatmul.f32.gmra.mxu0 %v1874
      %v2079 = vpop.f32.mrf.mxu0
      %v2080 = vadd.f32 0.0, %v2079
      %2081 = vmatmul.f32.gmra.mxu0 %v1877
      %v2082 = vpop.f32.mrf.mxu0
      %v2083 = vadd.f32 0.0, %v2082
      %2084 = vmatmul.f32.gmra.mxu0 %v1880
      %v2085 = vpop.f32.mrf.mxu0
      %v2086 = vadd.f32 0.0, %v2085
      %2087 = vmatmul.f32.gmra.mxu0 %v1883
      %v2088 = vpop.f32.mrf.mxu0
      %v2089 = vadd.f32 0.0, %v2088
      %2090 = vmatmul.f32.gmra.mxu0 %v1886
      %v2091 = vpop.f32.mrf.mxu0
      %v2092 = vadd.f32 0.0, %v2091
      %2093 = vmatmul.f32.gmra.mxu0 %v1889
      %v2094 = vpop.f32.mrf.mxu0
      %v2095 = vadd.f32 0.0, %v2094
      %2096 = vmatmul.f32.gmra.mxu0 %v1892
      %v2097 = vpop.f32.mrf.mxu0
      %v2098 = vadd.f32 0.0, %v2097
      %2099 = vmatmul.f32.gmra.mxu0 %v1895
      %v2100 = vpop.f32.mrf.mxu0
      %v2101 = vadd.f32 0.0, %v2100
      %2102 = vmatmul.f32.gmra.mxu0 %v1898
      %v2103 = vpop.f32.mrf.mxu0
      %v2104 = vadd.f32 0.0, %v2103
      %2105 = vmatmul.f32.gmra.mxu0 %v1901
      %v2106 = vpop.f32.mrf.mxu0
      %v2107 = vadd.f32 0.0, %v2106
      %2108 = vmatmul.f32.gmra.mxu0 %v1904
      %v2109 = vpop.f32.mrf.mxu0
      %v2110 = vadd.f32 0.0, %v2109
      %2111 = vmatmul.f32.gmra.mxu0 %v1907
      %v2112 = vpop.f32.mrf.mxu0
      %v2113 = vadd.f32 0.0, %v2112
      %2114 = vmatmul.f32.gmra.mxu0 %v1910
      %v2115 = vpop.f32.mrf.mxu0
      %v2116 = vadd.f32 0.0, %v2115
      %2117 = vmatmul.f32.gmra.mxu0 %v1913
      %v2118 = vpop.f32.mrf.mxu0
      %v2119 = vadd.f32 0.0, %v2118
      %2120 = vmatmul.f32.gmra.mxu0 %v1916
      %v2121 = vpop.f32.mrf.mxu0
      %v2122 = vadd.f32 0.0, %v2121
      %2123 = vmatmul.f32.gmra.mxu0 %v1919
      %v2124 = vpop.f32.mrf.mxu0
      %v2125 = vadd.f32 0.0, %v2124
      %2126 = vmatmul.f32.gmra.mxu0 %v1922
      %v2127 = vpop.f32.mrf.mxu0
      %v2128 = vadd.f32 0.0, %v2127
      %2129 = vmatmul.f32.gmra.mxu0 %v1925
      %v2130 = vpop.f32.mrf.mxu0
      %v2131 = vadd.f32 0.0, %v2130
      %2132 = vmatmul.f32.gmra.mxu0 %v1928
      %v2133 = vpop.f32.mrf.mxu0
      %v2134 = vadd.f32 0.0, %v2133
      %2135 = vmatmul.f32.gmra.mxu0 %v1931
      %v2136 = vpop.f32.mrf.mxu0
      %v2137 = vadd.f32 0.0, %v2136
      %2138 = vmatmul.f32.gmra.mxu0 %v1934
      %v2139 = vpop.f32.mrf.mxu0
      %v2140 = vadd.f32 0.0, %v2139
      %2141 = vmatmul.f32.gmra.mxu0 %v1937
      %v2142 = vpop.f32.mrf.mxu0
      %v2143 = vadd.f32 0.0, %v2142
      %2144 = vmatmul.f32.gmra.mxu0 %v1940
      %v2145 = vpop.f32.mrf.mxu0
      %v2146 = vadd.f32 0.0, %v2145
      %2147 = vmatmul.f32.gmra.mxu0 %v1943
      %v2148 = vpop.f32.mrf.mxu0
      %v2149 = vadd.f32 0.0, %v2148
      %2150 = vmatmul.f32.gmra.mxu0 %v1946
      %v2151 = vpop.f32.mrf.mxu0
      %v2152 = vadd.f32 0.0, %v2151
      %2153 = vmatmul.f32.gmra.mxu0 %v1949
      %v2154 = vpop.f32.mrf.mxu0
      %v2155 = vadd.f32 0.0, %v2154
      %2156 = vmatmul.f32.gmra.mxu0 %v1952
      %v2157 = vpop.f32.mrf.mxu0
      %v2158 = vadd.f32 0.0, %v2157
      %2159 = vmatmul.f32.gmra.mxu0 %v1955
      %v2160 = vpop.f32.mrf.mxu0
      %v2161 = vadd.f32 0.0, %v2160
      %2162 = vmatmul.f32.gmra.mxu0 %v1958
      %v2163 = vpop.f32.mrf.mxu0
      %v2164 = vadd.f32 0.0, %v2163
      %2165 = vdwg.mxu0
      %v2166 = vadd.f32 %v1648, %v1981
      %v2167 = vadd.f32 %v1649, %v1984
      %v2168 = vadd.f32 %v1650, %v1987
      %v2169 = vadd.f32 %v1651, %v1990
      %v2170 = vadd.f32 %v1652, %v1993
      %v2171 = vadd.f32 %v1653, %v1996
      %v2172 = vadd.f32 %v1654, %v1999
      %v2173 = vadd.f32 %v1655, %v2002
      %v2174 = vadd.f32 %v1656, %v2005
      %v2175 = vadd.f32 %v1657, %v2008
      %v2176 = vadd.f32 %v1658, %v2011
      %v2177 = vadd.f32 %v1659, %v2014
      %v2178 = vadd.f32 %v1660, %v2017
      %v2179 = vadd.f32 %v1661, %v2020
      %v2180 = vadd.f32 %v1662, %v2023
      %v2181 = vadd.f32 %v1663, %v2026
      %v2182 = vadd.f32 %v1664, %v2029
      %v2183 = vadd.f32 %v1665, %v2032
      %v2184 = vadd.f32 %v1666, %v2035
      %v2185 = vadd.f32 %v1667, %v2038
      %v2186 = vadd.f32 %v1668, %v2041
      %v2187 = vadd.f32 %v1669, %v2044
      %v2188 = vadd.f32 %v1670, %v2047
      %v2189 = vadd.f32 %v1671, %v2050
      %v2190 = vadd.f32 %v1672, %v2053
      %v2191 = vadd.f32 %v1673, %v2056
      %v2192 = vadd.f32 %v1674, %v2059
      %v2193 = vadd.f32 %v1675, %v2062
      %v2194 = vadd.f32 %v1676, %v2065
      %v2195 = vadd.f32 %v1677, %v2068
      %v2196 = vadd.f32 %v1678, %v2071
      %v2197 = vadd.f32 %v1679, %v2074
      %v2198 = vadd.f32 %v1680, %v2077
      %v2199 = vadd.f32 %v1681, %v2080
      %v2200 = vadd.f32 %v1682, %v2083
      %v2201 = vadd.f32 %v1683, %v2086
      %v2202 = vadd.f32 %v1684, %v2089
      %v2203 = vadd.f32 %v1685, %v2092
      %v2204 = vadd.f32 %v1686, %v2095
      %v2205 = vadd.f32 %v1687, %v2098
      %v2206 = vadd.f32 %v1688, %v2101
      %v2207 = vadd.f32 %v1689, %v2104
      %v2208 = vadd.f32 %v1690, %v2107
      %v2209 = vadd.f32 %v1691, %v2110
      %v2210 = vadd.f32 %v1692, %v2113
      %v2211 = vadd.f32 %v1693, %v2116
      %v2212 = vadd.f32 %v1694, %v2119
      %v2213 = vadd.f32 %v1695, %v2122
      %v2214 = vadd.f32 %v1696, %v2125
      %v2215 = vadd.f32 %v1697, %v2128
      %v2216 = vadd.f32 %v1698, %v2131
      %v2217 = vadd.f32 %v1699, %v2134
      %v2218 = vadd.f32 %v1700, %v2137
      %v2219 = vadd.f32 %v1701, %v2140
      %v2220 = vadd.f32 %v1702, %v2143
      %v2221 = vadd.f32 %v1703, %v2146
      %v2222 = vadd.f32 %v1704, %v2149
      %v2223 = vadd.f32 %v1705, %v2152
      %v2224 = vadd.f32 %v1706, %v2155
      %v2225 = vadd.f32 %v1707, %v2158
      %v2226 = vadd.f32 %v1708, %v2161
      %v2227 = vadd.f32 %v1709, %v2164
      %v2228 = vld [vmem:[%s273 + $0x4] sm:$0xff]
      %v2229 = vld [vmem:[%s273 + $0xc] sm:$0xff]
      %v2230 = vld [vmem:[%s273 + $0x14] sm:$0xff]
      %v2231 = vld [vmem:[%s273 + $0x1c] sm:$0xff]
      %v2232 = vld [vmem:[%s273 + $0x24] sm:$0xff]
      %v2233 = vld [vmem:[%s273 + $0x2c] sm:$0xff]
      %v2234 = vld [vmem:[%s273 + $0x34] sm:$0xff]
      %v2235 = vld [vmem:[%s273 + $0x3c] sm:$0xff]
      %v2236 = vld [vmem:[%s273 + $0x44] sm:$0xff]
      %v2237 = vld [vmem:[%s273 + $0x4c] sm:$0xff]
      %v2238 = vld [vmem:[%s273 + $0x54] sm:$0xff]
      %v2239 = vld [vmem:[%s273 + $0x5c] sm:$0xff]
      %v2240 = vld [vmem:[%s273 + $0x64] sm:$0xff]
      %v2241 = vld [vmem:[%s273 + $0x6c] sm:$0xff]
      %v2242 = vld [vmem:[%s273 + $0x74] sm:$0xff]
      %v2243 = vld [vmem:[%s273 + $0x7c] sm:$0xff]
      %v2244 = vld [vmem:[%s273 + $0x84] sm:$0xff]
      %v2245 = vld [vmem:[%s273 + $0x8c] sm:$0xff]
      %v2246 = vld [vmem:[%s273 + $0x94] sm:$0xff]
      %v2247 = vld [vmem:[%s273 + $0x9c] sm:$0xff]
      %v2248 = vld [vmem:[%s273 + $0xa4] sm:$0xff]
      %v2249 = vld [vmem:[%s273 + $0xac] sm:$0xff]
      %v2250 = vld [vmem:[%s273 + $0xb4] sm:$0xff]
      %v2251 = vld [vmem:[%s273 + $0xbc] sm:$0xff]
      %v2252 = vld [vmem:[%s273 + $0xc4] sm:$0xff]
      %v2253 = vld [vmem:[%s273 + $0xcc] sm:$0xff]
      %v2254 = vld [vmem:[%s273 + $0xd4] sm:$0xff]
      %v2255 = vld [vmem:[%s273 + $0xdc] sm:$0xff]
      %v2256 = vld [vmem:[%s273 + $0xe4] sm:$0xff]
      %v2257 = vld [vmem:[%s273 + $0xec] sm:$0xff]
      %v2258 = vld [vmem:[%s273 + $0xf4] sm:$0xff]
      %v2259 = vld [vmem:[%s273 + $0xfc] sm:$0xff]
      %v2260 = vld [vmem:[%s273 + $0x104] sm:$0xff]
      %v2261 = vld [vmem:[%s273 + $0x10c] sm:$0xff]
      %v2262 = vld [vmem:[%s273 + $0x114] sm:$0xff]
      %v2263 = vld [vmem:[%s273 + $0x11c] sm:$0xff]
      %v2264 = vld [vmem:[%s273 + $0x124] sm:$0xff]
      %v2265 = vld [vmem:[%s273 + $0x12c] sm:$0xff]
      %v2266 = vld [vmem:[%s273 + $0x134] sm:$0xff]
      %v2267 = vld [vmem:[%s273 + $0x13c] sm:$0xff]
      %v2268 = vld [vmem:[%s273 + $0x144] sm:$0xff]
      %v2269 = vld [vmem:[%s273 + $0x14c] sm:$0xff]
      %v2270 = vld [vmem:[%s273 + $0x154] sm:$0xff]
      %v2271 = vld [vmem:[%s273 + $0x15c] sm:$0xff]
      %v2272 = vld [vmem:[%s273 + $0x164] sm:$0xff]
      %v2273 = vld [vmem:[%s273 + $0x16c] sm:$0xff]
      %v2274 = vld [vmem:[%s273 + $0x174] sm:$0xff]
      %v2275 = vld [vmem:[%s273 + $0x17c] sm:$0xff]
      %v2276 = vld [vmem:[%s273 + $0x184] sm:$0xff]
      %v2277 = vld [vmem:[%s273 + $0x18c] sm:$0xff]
      %v2278 = vld [vmem:[%s273 + $0x194] sm:$0xff]
      %v2279 = vld [vmem:[%s273 + $0x19c] sm:$0xff]
      %v2280 = vld [vmem:[%s273 + $0x1a4] sm:$0xff]
      %v2281 = vld [vmem:[%s273 + $0x1ac] sm:$0xff]
      %v2282 = vld [vmem:[%s273 + $0x1b4] sm:$0xff]
      %v2283 = vld [vmem:[%s273 + $0x1bc] sm:$0xff]
      %v2284 = vld [vmem:[%s273 + $0x1c4] sm:$0xff]
      %v2285 = vld [vmem:[%s273 + $0x1cc] sm:$0xff]
      %v2286 = vld [vmem:[%s273 + $0x1d4] sm:$0xff]
      %v2287 = vld [vmem:[%s273 + $0x1dc] sm:$0xff]
      %v2288 = vld [vmem:[%s273 + $0x1e4] sm:$0xff]
      %v2289 = vld [vmem:[%s273 + $0x1ec] sm:$0xff]
      %s2290 = scalar_lea.vmem %s1, 16
      %v2291 = vld [vmem:[%s2290] sm:$0xf]
      %v2293 = vsel %vm406, %v2228, 0
      %v2296 = vsel %vm406, %v2229, 0
      %v2299 = vsel %vm406, %v2230, 0
      %v2302 = vsel %vm406, %v2231, 0
      %v2305 = vsel %vm406, %v2232, 0
      %v2308 = vsel %vm406, %v2233, 0
      %v2311 = vsel %vm406, %v2234, 0
      %v2314 = vsel %vm406, %v2235, 0
      %v2317 = vsel %vm406, %v2236, 0
      %v2320 = vsel %vm406, %v2237, 0
      %v2323 = vsel %vm406, %v2238, 0
      %v2326 = vsel %vm406, %v2239, 0
      %v2329 = vsel %vm406, %v2240, 0
      %v2332 = vsel %vm406, %v2241, 0
      %v2335 = vsel %vm406, %v2242, 0
      %v2338 = vsel %vm406, %v2243, 0
      %v2341 = vsel %vm406, %v2244, 0
      %v2344 = vsel %vm406, %v2245, 0
      %v2347 = vsel %vm406, %v2246, 0
      %v2350 = vsel %vm406, %v2247, 0
      %v2353 = vsel %vm406, %v2248, 0
      %v2356 = vsel %vm406, %v2249, 0
      %v2359 = vsel %vm406, %v2250, 0
      %v2362 = vsel %vm406, %v2251, 0
      %v2365 = vsel %vm406, %v2252, 0
      %v2368 = vsel %vm406, %v2253, 0
      %v2371 = vsel %vm406, %v2254, 0
      %v2374 = vsel %vm406, %v2255, 0
      %v2377 = vsel %vm406, %v2256, 0
      %v2380 = vsel %vm406, %v2257, 0
      %v2383 = vsel %vm406, %v2258, 0
      %v2386 = vsel %vm406, %v2259, 0
      %v2389 = vsel %vm406, %v2260, 0
      %v2392 = vsel %vm406, %v2261, 0
      %v2395 = vsel %vm406, %v2262, 0
      %v2398 = vsel %vm406, %v2263, 0
      %v2401 = vsel %vm406, %v2264, 0
      %v2404 = vsel %vm406, %v2265, 0
      %v2407 = vsel %vm406, %v2266, 0
      %v2410 = vsel %vm406, %v2267, 0
      %v2413 = vsel %vm406, %v2268, 0
      %v2416 = vsel %vm406, %v2269, 0
      %v2419 = vsel %vm406, %v2270, 0
      %v2422 = vsel %vm406, %v2271, 0
      %v2425 = vsel %vm406, %v2272, 0
      %v2428 = vsel %vm406, %v2273, 0
      %v2431 = vsel %vm406, %v2274, 0
      %v2434 = vsel %vm406, %v2275, 0
      %v2437 = vsel %vm406, %v2276, 0
      %v2440 = vsel %vm406, %v2277, 0
      %v2443 = vsel %vm406, %v2278, 0
      %v2446 = vsel %vm406, %v2279, 0
      %v2449 = vsel %vm406, %v2280, 0
      %v2452 = vsel %vm406, %v2281, 0
      %v2455 = vsel %vm406, %v2282, 0
      %v2458 = vsel %vm406, %v2283, 0
      %v2461 = vsel %vm406, %v2284, 0
      %v2464 = vsel %vm406, %v2285, 0
      %v2467 = vsel %vm406, %v2286, 0
      %v2470 = vsel %vm406, %v2287, 0
      %v2473 = vsel %vm406, %v2288, 0
      %v2476 = vsel %vm406, %v2289, 0
      %v2479 = vsel %vm593, %v2291, 0
      %2481 = vmatpush.msra.mxu0 0.0
      %2482 = vmatpush.msra.mxu0 0.0
      %2483 = vmatpush.msra.mxu0 0.0
      %2484 = vmatpush.msra.mxu0 0.0
      %2485 = vmatpush.msra.mxu0 0.0
      %2486 = vmatpush.msra.mxu0 0.0
      %2487 = vmatpush.msra.mxu0 0.0
      %2488 = vmatpush.msra.mxu0 0.0
      %2489 = vmatpush.msra.mxu0 0.0
      %2490 = vmatpush.msra.mxu0 0.0
      %2491 = vmatpush.msra.mxu0 0.0
      %2492 = vmatpush.msra.mxu0 0.0
      %2493 = vmatpush.msra.mxu0 0.0
      %2494 = vmatpush.msra.mxu0 0.0
      %2495 = vmatpush.msra.mxu0 0.0
      %2496 = vmatpush.msra.mxu0 %v2479
      %2497 = vmatmul.f32.gmra.mxu0 %v2293
      %v2498 = vpop.f32.mrf.mxu0
      %v2499 = vadd.f32 0.0, %v2498
      %2500 = vmatmul.f32.gmra.mxu0 %v2296
      %v2501 = vpop.f32.mrf.mxu0
      %v2502 = vadd.f32 0.0, %v2501
      %2503 = vmatmul.f32.gmra.mxu0 %v2299
      %v2504 = vpop.f32.mrf.mxu0
      %v2505 = vadd.f32 0.0, %v2504
      %2506 = vmatmul.f32.gmra.mxu0 %v2302
      %v2507 = vpop.f32.mrf.mxu0
      %v2508 = vadd.f32 0.0, %v2507
      %2509 = vmatmul.f32.gmra.mxu0 %v2305
      %v2510 = vpop.f32.mrf.mxu0
      %v2511 = vadd.f32 0.0, %v2510
      %2512 = vmatmul.f32.gmra.mxu0 %v2308
      %v2513 = vpop.f32.mrf.mxu0
      %v2514 = vadd.f32 0.0, %v2513
      %2515 = vmatmul.f32.gmra.mxu0 %v2311
      %v2516 = vpop.f32.mrf.mxu0
      %v2517 = vadd.f32 0.0, %v2516
      %2518 = vmatmul.f32.gmra.mxu0 %v2314
      %v2519 = vpop.f32.mrf.mxu0
      %v2520 = vadd.f32 0.0, %v2519
      %2521 = vmatmul.f32.gmra.mxu0 %v2317
      %v2522 = vpop.f32.mrf.mxu0
      %v2523 = vadd.f32 0.0, %v2522
      %2524 = vmatmul.f32.gmra.mxu0 %v2320
      %v2525 = vpop.f32.mrf.mxu0
      %v2526 = vadd.f32 0.0, %v2525
      %2527 = vmatmul.f32.gmra.mxu0 %v2323
      %v2528 = vpop.f32.mrf.mxu0
      %v2529 = vadd.f32 0.0, %v2528
      %2530 = vmatmul.f32.gmra.mxu0 %v2326
      %v2531 = vpop.f32.mrf.mxu0
      %v2532 = vadd.f32 0.0, %v2531
      %2533 = vmatmul.f32.gmra.mxu0 %v2329
      %v2534 = vpop.f32.mrf.mxu0
      %v2535 = vadd.f32 0.0, %v2534
      %2536 = vmatmul.f32.gmra.mxu0 %v2332
      %v2537 = vpop.f32.mrf.mxu0
      %v2538 = vadd.f32 0.0, %v2537
      %2539 = vmatmul.f32.gmra.mxu0 %v2335
      %v2540 = vpop.f32.mrf.mxu0
      %v2541 = vadd.f32 0.0, %v2540
      %2542 = vmatmul.f32.gmra.mxu0 %v2338
      %v2543 = vpop.f32.mrf.mxu0
      %v2544 = vadd.f32 0.0, %v2543
      %2545 = vmatmul.f32.gmra.mxu0 %v2341
      %v2546 = vpop.f32.mrf.mxu0
      %v2547 = vadd.f32 0.0, %v2546
      %2548 = vmatmul.f32.gmra.mxu0 %v2344
      %v2549 = vpop.f32.mrf.mxu0
      %v2550 = vadd.f32 0.0, %v2549
      %2551 = vmatmul.f32.gmra.mxu0 %v2347
      %v2552 = vpop.f32.mrf.mxu0
      %v2553 = vadd.f32 0.0, %v2552
      %2554 = vmatmul.f32.gmra.mxu0 %v2350
      %v2555 = vpop.f32.mrf.mxu0
      %v2556 = vadd.f32 0.0, %v2555
      %2557 = vmatmul.f32.gmra.mxu0 %v2353
      %v2558 = vpop.f32.mrf.mxu0
      %v2559 = vadd.f32 0.0, %v2558
      %2560 = vmatmul.f32.gmra.mxu0 %v2356
      %v2561 = vpop.f32.mrf.mxu0
      %v2562 = vadd.f32 0.0, %v2561
      %2563 = vmatmul.f32.gmra.mxu0 %v2359
      %v2564 = vpop.f32.mrf.mxu0
      %v2565 = vadd.f32 0.0, %v2564
      %2566 = vmatmul.f32.gmra.mxu0 %v2362
      %v2567 = vpop.f32.mrf.mxu0
      %v2568 = vadd.f32 0.0, %v2567
      %2569 = vmatmul.f32.gmra.mxu0 %v2365
      %v2570 = vpop.f32.mrf.mxu0
      %v2571 = vadd.f32 0.0, %v2570
      %2572 = vmatmul.f32.gmra.mxu0 %v2368
      %v2573 = vpop.f32.mrf.mxu0
      %v2574 = vadd.f32 0.0, %v2573
      %2575 = vmatmul.f32.gmra.mxu0 %v2371
      %v2576 = vpop.f32.mrf.mxu0
      %v2577 = vadd.f32 0.0, %v2576
      %2578 = vmatmul.f32.gmra.mxu0 %v2374
      %v2579 = vpop.f32.mrf.mxu0
      %v2580 = vadd.f32 0.0, %v2579
      %2581 = vmatmul.f32.gmra.mxu0 %v2377
      %v2582 = vpop.f32.mrf.mxu0
      %v2583 = vadd.f32 0.0, %v2582
      %2584 = vmatmul.f32.gmra.mxu0 %v2380
      %v2585 = vpop.f32.mrf.mxu0
      %v2586 = vadd.f32 0.0, %v2585
      %2587 = vmatmul.f32.gmra.mxu0 %v2383
      %v2588 = vpop.f32.mrf.mxu0
      %v2589 = vadd.f32 0.0, %v2588
      %2590 = vmatmul.f32.gmra.mxu0 %v2386
      %v2591 = vpop.f32.mrf.mxu0
      %v2592 = vadd.f32 0.0, %v2591
      %2593 = vmatmul.f32.gmra.mxu0 %v2389
      %v2594 = vpop.f32.mrf.mxu0
      %v2595 = vadd.f32 0.0, %v2594
      %2596 = vmatmul.f32.gmra.mxu0 %v2392
      %v2597 = vpop.f32.mrf.mxu0
      %v2598 = vadd.f32 0.0, %v2597
      %2599 = vmatmul.f32.gmra.mxu0 %v2395
      %v2600 = vpop.f32.mrf.mxu0
      %v2601 = vadd.f32 0.0, %v2600
      %2602 = vmatmul.f32.gmra.mxu0 %v2398
      %v2603 = vpop.f32.mrf.mxu0
      %v2604 = vadd.f32 0.0, %v2603
      %2605 = vmatmul.f32.gmra.mxu0 %v2401
      %v2606 = vpop.f32.mrf.mxu0
      %v2607 = vadd.f32 0.0, %v2606
      %2608 = vmatmul.f32.gmra.mxu0 %v2404
      %v2609 = vpop.f32.mrf.mxu0
      %v2610 = vadd.f32 0.0, %v2609
      %2611 = vmatmul.f32.gmra.mxu0 %v2407
      %v2612 = vpop.f32.mrf.mxu0
      %v2613 = vadd.f32 0.0, %v2612
      %2614 = vmatmul.f32.gmra.mxu0 %v2410
      %v2615 = vpop.f32.mrf.mxu0
      %v2616 = vadd.f32 0.0, %v2615
      %2617 = vmatmul.f32.gmra.mxu0 %v2413
      %v2618 = vpop.f32.mrf.mxu0
      %v2619 = vadd.f32 0.0, %v2618
      %2620 = vmatmul.f32.gmra.mxu0 %v2416
      %v2621 = vpop.f32.mrf.mxu0
      %v2622 = vadd.f32 0.0, %v2621
      %2623 = vmatmul.f32.gmra.mxu0 %v2419
      %v2624 = vpop.f32.mrf.mxu0
      %v2625 = vadd.f32 0.0, %v2624
      %2626 = vmatmul.f32.gmra.mxu0 %v2422
      %v2627 = vpop.f32.mrf.mxu0
      %v2628 = vadd.f32 0.0, %v2627
      %2629 = vmatmul.f32.gmra.mxu0 %v2425
      %v2630 = vpop.f32.mrf.mxu0
      %v2631 = vadd.f32 0.0, %v2630
      %2632 = vmatmul.f32.gmra.mxu0 %v2428
      %v2633 = vpop.f32.mrf.mxu0
      %v2634 = vadd.f32 0.0, %v2633
      %2635 = vmatmul.f32.gmra.mxu0 %v2431
      %v2636 = vpop.f32.mrf.mxu0
      %v2637 = vadd.f32 0.0, %v2636
      %2638 = vmatmul.f32.gmra.mxu0 %v2434
      %v2639 = vpop.f32.mrf.mxu0
      %v2640 = vadd.f32 0.0, %v2639
      %2641 = vmatmul.f32.gmra.mxu0 %v2437
      %v2642 = vpop.f32.mrf.mxu0
      %v2643 = vadd.f32 0.0, %v2642
      %2644 = vmatmul.f32.gmra.mxu0 %v2440
      %v2645 = vpop.f32.mrf.mxu0
      %v2646 = vadd.f32 0.0, %v2645
      %2647 = vmatmul.f32.gmra.mxu0 %v2443
      %v2648 = vpop.f32.mrf.mxu0
      %v2649 = vadd.f32 0.0, %v2648
      %2650 = vmatmul.f32.gmra.mxu0 %v2446
      %v2651 = vpop.f32.mrf.mxu0
      %v2652 = vadd.f32 0.0, %v2651
      %2653 = vmatmul.f32.gmra.mxu0 %v2449
      %v2654 = vpop.f32.mrf.mxu0
      %v2655 = vadd.f32 0.0, %v2654
      %2656 = vmatmul.f32.gmra.mxu0 %v2452
      %v2657 = vpop.f32.mrf.mxu0
      %v2658 = vadd.f32 0.0, %v2657
      %2659 = vmatmul.f32.gmra.mxu0 %v2455
      %v2660 = vpop.f32.mrf.mxu0
      %v2661 = vadd.f32 0.0, %v2660
      %2662 = vmatmul.f32.gmra.mxu0 %v2458
      %v2663 = vpop.f32.mrf.mxu0
      %v2664 = vadd.f32 0.0, %v2663
      %2665 = vmatmul.f32.gmra.mxu0 %v2461
      %v2666 = vpop.f32.mrf.mxu0
      %v2667 = vadd.f32 0.0, %v2666
      %2668 = vmatmul.f32.gmra.mxu0 %v2464
      %v2669 = vpop.f32.mrf.mxu0
      %v2670 = vadd.f32 0.0, %v2669
      %2671 = vmatmul.f32.gmra.mxu0 %v2467
      %v2672 = vpop.f32.mrf.mxu0
      %v2673 = vadd.f32 0.0, %v2672
      %2674 = vmatmul.f32.gmra.mxu0 %v2470
      %v2675 = vpop.f32.mrf.mxu0
      %v2676 = vadd.f32 0.0, %v2675
      %2677 = vmatmul.f32.gmra.mxu0 %v2473
      %v2678 = vpop.f32.mrf.mxu0
      %v2679 = vadd.f32 0.0, %v2678
      %2680 = vmatmul.f32.gmra.mxu0 %v2476
      %v2681 = vpop.f32.mrf.mxu0
      %v2682 = vadd.f32 0.0, %v2681
      %2683 = vdwg.mxu0
      %v2684 = vadd.f32 %v2166, %v2499
      %v2685 = vadd.f32 %v2167, %v2502
      %v2686 = vadd.f32 %v2168, %v2505
      %v2687 = vadd.f32 %v2169, %v2508
      %v2688 = vadd.f32 %v2170, %v2511
      %v2689 = vadd.f32 %v2171, %v2514
      %v2690 = vadd.f32 %v2172, %v2517
      %v2691 = vadd.f32 %v2173, %v2520
      %v2692 = vadd.f32 %v2174, %v2523
      %v2693 = vadd.f32 %v2175, %v2526
      %v2694 = vadd.f32 %v2176, %v2529
      %v2695 = vadd.f32 %v2177, %v2532
      %v2696 = vadd.f32 %v2178, %v2535
      %v2697 = vadd.f32 %v2179, %v2538
      %v2698 = vadd.f32 %v2180, %v2541
      %v2699 = vadd.f32 %v2181, %v2544
      %v2700 = vadd.f32 %v2182, %v2547
      %v2701 = vadd.f32 %v2183, %v2550
      %v2702 = vadd.f32 %v2184, %v2553
      %v2703 = vadd.f32 %v2185, %v2556
      %v2704 = vadd.f32 %v2186, %v2559
      %v2705 = vadd.f32 %v2187, %v2562
      %v2706 = vadd.f32 %v2188, %v2565
      %v2707 = vadd.f32 %v2189, %v2568
      %v2708 = vadd.f32 %v2190, %v2571
      %v2709 = vadd.f32 %v2191, %v2574
      %v2710 = vadd.f32 %v2192, %v2577
      %v2711 = vadd.f32 %v2193, %v2580
      %v2712 = vadd.f32 %v2194, %v2583
      %v2713 = vadd.f32 %v2195, %v2586
      %v2714 = vadd.f32 %v2196, %v2589
      %v2715 = vadd.f32 %v2197, %v2592
      %v2716 = vadd.f32 %v2198, %v2595
      %v2717 = vadd.f32 %v2199, %v2598
      %v2718 = vadd.f32 %v2200, %v2601
      %v2719 = vadd.f32 %v2201, %v2604
      %v2720 = vadd.f32 %v2202, %v2607
      %v2721 = vadd.f32 %v2203, %v2610
      %v2722 = vadd.f32 %v2204, %v2613
      %v2723 = vadd.f32 %v2205, %v2616
      %v2724 = vadd.f32 %v2206, %v2619
      %v2725 = vadd.f32 %v2207, %v2622
      %v2726 = vadd.f32 %v2208, %v2625
      %v2727 = vadd.f32 %v2209, %v2628
      %v2728 = vadd.f32 %v2210, %v2631
      %v2729 = vadd.f32 %v2211, %v2634
      %v2730 = vadd.f32 %v2212, %v2637
      %v2731 = vadd.f32 %v2213, %v2640
      %v2732 = vadd.f32 %v2214, %v2643
      %v2733 = vadd.f32 %v2215, %v2646
      %v2734 = vadd.f32 %v2216, %v2649
      %v2735 = vadd.f32 %v2217, %v2652
      %v2736 = vadd.f32 %v2218, %v2655
      %v2737 = vadd.f32 %v2219, %v2658
      %v2738 = vadd.f32 %v2220, %v2661
      %v2739 = vadd.f32 %v2221, %v2664
      %v2740 = vadd.f32 %v2222, %v2667
      %v2741 = vadd.f32 %v2223, %v2670
      %v2742 = vadd.f32 %v2224, %v2673
      %v2743 = vadd.f32 %v2225, %v2676
      %v2744 = vadd.f32 %v2226, %v2679
      %v2745 = vadd.f32 %v2227, %v2682
      %v2746 = vld [vmem:[%s2] sm:$0x1]
      %v2748 = vperm.slane %v2746, 0
      %v2750 = vadd.f32 %v2684, %v2748
      %v2751 = vadd.f32 %v2685, %v2748
      %v2752 = vadd.f32 %v2686, %v2748
      %v2753 = vadd.f32 %v2687, %v2748
      %v2754 = vadd.f32 %v2688, %v2748
      %v2755 = vadd.f32 %v2689, %v2748
      %v2756 = vadd.f32 %v2690, %v2748
      %v2757 = vadd.f32 %v2691, %v2748
      %v2758 = vadd.f32 %v2692, %v2748
      %v2759 = vadd.f32 %v2693, %v2748
      %v2760 = vadd.f32 %v2694, %v2748
      %v2761 = vadd.f32 %v2695, %v2748
      %v2762 = vadd.f32 %v2696, %v2748
      %v2763 = vadd.f32 %v2697, %v2748
      %v2764 = vadd.f32 %v2698, %v2748
      %v2765 = vadd.f32 %v2699, %v2748
      %v2766 = vadd.f32 %v2700, %v2748
      %v2767 = vadd.f32 %v2701, %v2748
      %v2768 = vadd.f32 %v2702, %v2748
      %v2769 = vadd.f32 %v2703, %v2748
      %v2770 = vadd.f32 %v2704, %v2748
      %v2771 = vadd.f32 %v2705, %v2748
      %v2772 = vadd.f32 %v2706, %v2748
      %v2773 = vadd.f32 %v2707, %v2748
      %v2774 = vadd.f32 %v2708, %v2748
      %v2775 = vadd.f32 %v2709, %v2748
      %v2776 = vadd.f32 %v2710, %v2748
      %v2777 = vadd.f32 %v2711, %v2748
      %v2778 = vadd.f32 %v2712, %v2748
      %v2779 = vadd.f32 %v2713, %v2748
      %v2780 = vadd.f32 %v2714, %v2748
      %v2781 = vadd.f32 %v2715, %v2748
      %v2782 = vadd.f32 %v2716, %v2748
      %v2783 = vadd.f32 %v2717, %v2748
      %v2784 = vadd.f32 %v2718, %v2748
      %v2785 = vadd.f32 %v2719, %v2748
      %v2786 = vadd.f32 %v2720, %v2748
      %v2787 = vadd.f32 %v2721, %v2748
      %v2788 = vadd.f32 %v2722, %v2748
      %v2789 = vadd.f32 %v2723, %v2748
      %v2790 = vadd.f32 %v2724, %v2748
      %v2791 = vadd.f32 %v2725, %v2748
      %v2792 = vadd.f32 %v2726, %v2748
      %v2793 = vadd.f32 %v2727, %v2748
      %v2794 = vadd.f32 %v2728, %v2748
      %v2795 = vadd.f32 %v2729, %v2748
      %v2796 = vadd.f32 %v2730, %v2748
      %v2797 = vadd.f32 %v2731, %v2748
      %v2798 = vadd.f32 %v2732, %v2748
      %v2799 = vadd.f32 %v2733, %v2748
      %v2800 = vadd.f32 %v2734, %v2748
      %v2801 = vadd.f32 %v2735, %v2748
      %v2802 = vadd.f32 %v2736, %v2748
      %v2803 = vadd.f32 %v2737, %v2748
      %v2804 = vadd.f32 %v2738, %v2748
      %v2805 = vadd.f32 %v2739, %v2748
      %v2806 = vadd.f32 %v2740, %v2748
      %v2807 = vadd.f32 %v2741, %v2748
      %v2808 = vadd.f32 %v2742, %v2748
      %v2809 = vadd.f32 %v2743, %v2748
      %v2810 = vadd.f32 %v2744, %v2748
      %v2811 = vadd.f32 %v2745, %v2748
      %vm2812 = vcmask 261120
      %2813 = vst.msk [vmem:[#allocation2] sm:$0xff] %vm2812, %v2750
      %2814 = vst.msk [vmem:[#allocation2 + $0x8] sm:$0xff] %vm2812, %v2751
      %2815 = vst.msk [vmem:[#allocation2 + $0x10] sm:$0xff] %vm2812, %v2752
      %2816 = vst.msk [vmem:[#allocation2 + $0x18] sm:$0xff] %vm2812, %v2753
      %2817 = vst.msk [vmem:[#allocation2 + $0x20] sm:$0xff] %vm2812, %v2754
      %2818 = vst.msk [vmem:[#allocation2 + $0x28] sm:$0xff] %vm2812, %v2755
      %2819 = vst.msk [vmem:[#allocation2 + $0x30] sm:$0xff] %vm2812, %v2756
      %2820 = vst.msk [vmem:[#allocation2 + $0x38] sm:$0xff] %vm2812, %v2757
      %2821 = vst.msk [vmem:[#allocation2 + $0x40] sm:$0xff] %vm2812, %v2758
      %2822 = vst.msk [vmem:[#allocation2 + $0x48] sm:$0xff] %vm2812, %v2759
      %2823 = vst.msk [vmem:[#allocation2 + $0x50] sm:$0xff] %vm2812, %v2760
      %2824 = vst.msk [vmem:[#allocation2 + $0x58] sm:$0xff] %vm2812, %v2761
      %2825 = vst.msk [vmem:[#allocation2 + $0x60] sm:$0xff] %vm2812, %v2762
      %2826 = vst.msk [vmem:[#allocation2 + $0x68] sm:$0xff] %vm2812, %v2763
      %2827 = vst.msk [vmem:[#allocation2 + $0x70] sm:$0xff] %vm2812, %v2764
      %2828 = vst.msk [vmem:[#allocation2 + $0x78] sm:$0xff] %vm2812, %v2765
      %2829 = vst.msk [vmem:[#allocation2 + $0x80] sm:$0xff] %vm2812, %v2766
      %2830 = vst.msk [vmem:[#allocation2 + $0x88] sm:$0xff] %vm2812, %v2767
      %2831 = vst.msk [vmem:[#allocation2 + $0x90] sm:$0xff] %vm2812, %v2768
      %2832 = vst.msk [vmem:[#allocation2 + $0x98] sm:$0xff] %vm2812, %v2769
      %2833 = vst.msk [vmem:[#allocation2 + $0xa0] sm:$0xff] %vm2812, %v2770
      %2834 = vst.msk [vmem:[#allocation2 + $0xa8] sm:$0xff] %vm2812, %v2771
      %2835 = vst.msk [vmem:[#allocation2 + $0xb0] sm:$0xff] %vm2812, %v2772
      %2836 = vst.msk [vmem:[#allocation2 + $0xb8] sm:$0xff] %vm2812, %v2773
      %2837 = vst.msk [vmem:[#allocation2 + $0xc0] sm:$0xff] %vm2812, %v2774
      %2838 = vst.msk [vmem:[#allocation2 + $0xc8] sm:$0xff] %vm2812, %v2775
      %2839 = vst.msk [vmem:[#allocation2 + $0xd0] sm:$0xff] %vm2812, %v2776
      %2840 = vst.msk [vmem:[#allocation2 + $0xd8] sm:$0xff] %vm2812, %v2777
      %2841 = vst.msk [vmem:[#allocation2 + $0xe0] sm:$0xff] %vm2812, %v2778
      %2842 = vst.msk [vmem:[#allocation2 + $0xe8] sm:$0xff] %vm2812, %v2779
      %2843 = vst.msk [vmem:[#allocation2 + $0xf0] sm:$0xff] %vm2812, %v2780
      %2844 = vst.msk [vmem:[#allocation2 + $0xf8] sm:$0xff] %vm2812, %v2781
      %2845 = vst.msk [vmem:[#allocation2 + $0x100] sm:$0xff] %vm2812, %v2782
      %2846 = vst.msk [vmem:[#allocation2 + $0x108] sm:$0xff] %vm2812, %v2783
      %2847 = vst.msk [vmem:[#allocation2 + $0x110] sm:$0xff] %vm2812, %v2784
      %2848 = vst.msk [vmem:[#allocation2 + $0x118] sm:$0xff] %vm2812, %v2785
      %2849 = vst.msk [vmem:[#allocation2 + $0x120] sm:$0xff] %vm2812, %v2786
      %2850 = vst.msk [vmem:[#allocation2 + $0x128] sm:$0xff] %vm2812, %v2787
      %2851 = vst.msk [vmem:[#allocation2 + $0x130] sm:$0xff] %vm2812, %v2788
      %2852 = vst.msk [vmem:[#allocation2 + $0x138] sm:$0xff] %vm2812, %v2789
      %2853 = vst.msk [vmem:[#allocation2 + $0x140] sm:$0xff] %vm2812, %v2790
      %2854 = vst.msk [vmem:[#allocation2 + $0x148] sm:$0xff] %vm2812, %v2791
      %2855 = vst.msk [vmem:[#allocation2 + $0x150] sm:$0xff] %vm2812, %v2792
      %2856 = vst.msk [vmem:[#allocation2 + $0x158] sm:$0xff] %vm2812, %v2793
      %2857 = vst.msk [vmem:[#allocation2 + $0x160] sm:$0xff] %vm2812, %v2794
      %2858 = vst.msk [vmem:[#allocation2 + $0x168] sm:$0xff] %vm2812, %v2795
      %2859 = vst.msk [vmem:[#allocation2 + $0x170] sm:$0xff] %vm2812, %v2796
      %2860 = vst.msk [vmem:[#allocation2 + $0x178] sm:$0xff] %vm2812, %v2797
      %2861 = vst.msk [vmem:[#allocation2 + $0x180] sm:$0xff] %vm2812, %v2798
      %2862 = vst.msk [vmem:[#allocation2 + $0x188] sm:$0xff] %vm2812, %v2799
      %2863 = vst.msk [vmem:[#allocation2 + $0x190] sm:$0xff] %vm2812, %v2800
      %2864 = vst.msk [vmem:[#allocation2 + $0x198] sm:$0xff] %vm2812, %v2801
      %2865 = vst.msk [vmem:[#allocation2 + $0x1a0] sm:$0xff] %vm2812, %v2802
      %2866 = vst.msk [vmem:[#allocation2 + $0x1a8] sm:$0xff] %vm2812, %v2803
      %2867 = vst.msk [vmem:[#allocation2 + $0x1b0] sm:$0xff] %vm2812, %v2804
      %2868 = vst.msk [vmem:[#allocation2 + $0x1b8] sm:$0xff] %vm2812, %v2805
      %2869 = vst.msk [vmem:[#allocation2 + $0x1c0] sm:$0xff] %vm2812, %v2806
      %2870 = vst.msk [vmem:[#allocation2 + $0x1c8] sm:$0xff] %vm2812, %v2807
      %2871 = vst.msk [vmem:[#allocation2 + $0x1d0] sm:$0xff] %vm2812, %v2808
      %2872 = vst.msk [vmem:[#allocation2 + $0x1d8] sm:$0xff] %vm2812, %v2809
      %2873 = vst.msk [vmem:[#allocation2 + $0x1e0] sm:$0xff] %vm2812, %v2810
      %2874 = vst.msk [vmem:[#allocation2 + $0x1e8] sm:$0xff] %vm2812, %v2811
      %v2875 = vld [vmem:[#allocation2] sm:$0xff]
      %v2876 = vld [vmem:[#allocation2 + $0x8] sm:$0xff]
      %v2877 = vld [vmem:[#allocation2 + $0x10] sm:$0xff]
      %v2878 = vld [vmem:[#allocation2 + $0x18] sm:$0xff]
      %v2879 = vld [vmem:[#allocation2 + $0x20] sm:$0xff]
      %v2880 = vld [vmem:[#allocation2 + $0x28] sm:$0xff]
      %v2881 = vld [vmem:[#allocation2 + $0x30] sm:$0xff]
      %v2882 = vld [vmem:[#allocation2 + $0x38] sm:$0xff]
      %v2883 = vld [vmem:[#allocation2 + $0x40] sm:$0xff]
      %v2884 = vld [vmem:[#allocation2 + $0x48] sm:$0xff]
      %v2885 = vld [vmem:[#allocation2 + $0x50] sm:$0xff]
      %v2886 = vld [vmem:[#allocation2 + $0x58] sm:$0xff]
      %v2887 = vld [vmem:[#allocation2 + $0x60] sm:$0xff]
      %v2888 = vld [vmem:[#allocation2 + $0x68] sm:$0xff]
      %v2889 = vld [vmem:[#allocation2 + $0x70] sm:$0xff]
      %v2890 = vld [vmem:[#allocation2 + $0x78] sm:$0xff]
      %v2891 = vld [vmem:[#allocation2 + $0x80] sm:$0xff]
      %v2892 = vld [vmem:[#allocation2 + $0x88] sm:$0xff]
      %v2893 = vld [vmem:[#allocation2 + $0x90] sm:$0xff]
      %v2894 = vld [vmem:[#allocation2 + $0x98] sm:$0xff]
      %v2895 = vld [vmem:[#allocation2 + $0xa0] sm:$0xff]
      %v2896 = vld [vmem:[#allocation2 + $0xa8] sm:$0xff]
      %v2897 = vld [vmem:[#allocation2 + $0xb0] sm:$0xff]
      %v2898 = vld [vmem:[#allocation2 + $0xb8] sm:$0xff]
      %v2899 = vld [vmem:[#allocation2 + $0xc0] sm:$0xff]
      %v2900 = vld [vmem:[#allocation2 + $0xc8] sm:$0xff]
      %v2901 = vld [vmem:[#allocation2 + $0xd0] sm:$0xff]
      %v2902 = vld [vmem:[#allocation2 + $0xd8] sm:$0xff]
      %v2903 = vld [vmem:[#allocation2 + $0xe0] sm:$0xff]
      %v2904 = vld [vmem:[#allocation2 + $0xe8] sm:$0xff]
      %v2905 = vld [vmem:[#allocation2 + $0xf0] sm:$0xff]
      %v2906 = vld [vmem:[#allocation2 + $0xf8] sm:$0xff]
      %v2907 = vld [vmem:[#allocation2 + $0x100] sm:$0xff]
      %v2908 = vld [vmem:[#allocation2 + $0x108] sm:$0xff]
      %v2909 = vld [vmem:[#allocation2 + $0x110] sm:$0xff]
      %v2910 = vld [vmem:[#allocation2 + $0x118] sm:$0xff]
      %v2911 = vld [vmem:[#allocation2 + $0x120] sm:$0xff]
      %v2912 = vld [vmem:[#allocation2 + $0x128] sm:$0xff]
      %v2913 = vld [vmem:[#allocation2 + $0x130] sm:$0xff]
      %v2914 = vld [vmem:[#allocation2 + $0x138] sm:$0xff]
      %v2915 = vld [vmem:[#allocation2 + $0x140] sm:$0xff]
      %v2916 = vld [vmem:[#allocation2 + $0x148] sm:$0xff]
      %v2917 = vld [vmem:[#allocation2 + $0x150] sm:$0xff]
      %v2918 = vld [vmem:[#allocation2 + $0x158] sm:$0xff]
      %v2919 = vld [vmem:[#allocation2 + $0x160] sm:$0xff]
      %v2920 = vld [vmem:[#allocation2 + $0x168] sm:$0xff]
      %v2921 = vld [vmem:[#allocation2 + $0x170] sm:$0xff]
      %v2922 = vld [vmem:[#allocation2 + $0x178] sm:$0xff]
      %v2923 = vld [vmem:[#allocation2 + $0x180] sm:$0xff]
      %v2924 = vld [vmem:[#allocation2 + $0x188] sm:$0xff]
      %v2925 = vld [vmem:[#allocation2 + $0x190] sm:$0xff]
      %v2926 = vld [vmem:[#allocation2 + $0x198] sm:$0xff]
      %v2927 = vld [vmem:[#allocation2 + $0x1a0] sm:$0xff]
      %v2928 = vld [vmem:[#allocation2 + $0x1a8] sm:$0xff]
      %v2929 = vld [vmem:[#allocation2 + $0x1b0] sm:$0xff]
      %v2930 = vld [vmem:[#allocation2 + $0x1b8] sm:$0xff]
      %v2931 = vld [vmem:[#allocation2 + $0x1c0] sm:$0xff]
      %v2932 = vld [vmem:[#allocation2 + $0x1c8] sm:$0xff]
      %v2933 = vld [vmem:[#allocation2 + $0x1d0] sm:$0xff]
      %v2934 = vld [vmem:[#allocation2 + $0x1d8] sm:$0xff]
      %v2935 = vld [vmem:[#allocation2 + $0x1e0] sm:$0xff]
      %v2936 = vld [vmem:[#allocation2 + $0x1e8] sm:$0x7f]
      %v2937 = vld [vmem:[#allocation2 + $0x1] sm:$0xff]
      %v2938 = vld [vmem:[#allocation2 + $0x9] sm:$0xff]
      %v2939 = vld [vmem:[#allocation2 + $0x11] sm:$0xff]
      %v2940 = vld [vmem:[#allocation2 + $0x19] sm:$0xff]
      %v2941 = vld [vmem:[#allocation2 + $0x21] sm:$0xff]
      %v2942 = vld [vmem:[#allocation2 + $0x29] sm:$0xff]
      %v2943 = vld [vmem:[#allocation2 + $0x31] sm:$0xff]
      %v2944 = vld [vmem:[#allocation2 + $0x39] sm:$0xff]
      %v2945 = vld [vmem:[#allocation2 + $0x41] sm:$0xff]
      %v2946 = vld [vmem:[#allocation2 + $0x49] sm:$0xff]
      %v2947 = vld [vmem:[#allocation2 + $0x51] sm:$0xff]
      %v2948 = vld [vmem:[#allocation2 + $0x59] sm:$0xff]
      %v2949 = vld [vmem:[#allocation2 + $0x61] sm:$0xff]
      %v2950 = vld [vmem:[#allocation2 + $0x69] sm:$0xff]
      %v2951 = vld [vmem:[#allocation2 + $0x71] sm:$0xff]
      %v2952 = vld [vmem:[#allocation2 + $0x79] sm:$0xff]
      %v2953 = vld [vmem:[#allocation2 + $0x81] sm:$0xff]
      %v2954 = vld [vmem:[#allocation2 + $0x89] sm:$0xff]
      %v2955 = vld [vmem:[#allocation2 + $0x91] sm:$0xff]
      %v2956 = vld [vmem:[#allocation2 + $0x99] sm:$0xff]
      %v2957 = vld [vmem:[#allocation2 + $0xa1] sm:$0xff]
      %v2958 = vld [vmem:[#allocation2 + $0xa9] sm:$0xff]
      %v2959 = vld [vmem:[#allocation2 + $0xb1] sm:$0xff]
      %v2960 = vld [vmem:[#allocation2 + $0xb9] sm:$0xff]
      %v2961 = vld [vmem:[#allocation2 + $0xc1] sm:$0xff]
      %v2962 = vld [vmem:[#allocation2 + $0xc9] sm:$0xff]
      %v2963 = vld [vmem:[#allocation2 + $0xd1] sm:$0xff]
      %v2964 = vld [vmem:[#allocation2 + $0xd9] sm:$0xff]
      %v2965 = vld [vmem:[#allocation2 + $0xe1] sm:$0xff]
      %v2966 = vld [vmem:[#allocation2 + $0xe9] sm:$0xff]
      %v2967 = vld [vmem:[#allocation2 + $0xf1] sm:$0xff]
      %v2968 = vld [vmem:[#allocation2 + $0xf9] sm:$0xff]
      %v2969 = vld [vmem:[#allocation2 + $0x101] sm:$0xff]
      %v2970 = vld [vmem:[#allocation2 + $0x109] sm:$0xff]
      %v2971 = vld [vmem:[#allocation2 + $0x111] sm:$0xff]
      %v2972 = vld [vmem:[#allocation2 + $0x119] sm:$0xff]
      %v2973 = vld [vmem:[#allocation2 + $0x121] sm:$0xff]
      %v2974 = vld [vmem:[#allocation2 + $0x129] sm:$0xff]
      %v2975 = vld [vmem:[#allocation2 + $0x131] sm:$0xff]
      %v2976 = vld [vmem:[#allocation2 + $0x139] sm:$0xff]
      %v2977 = vld [vmem:[#allocation2 + $0x141] sm:$0xff]
      %v2978 = vld [vmem:[#allocation2 + $0x149] sm:$0xff]
      %v2979 = vld [vmem:[#allocation2 + $0x151] sm:$0xff]
      %v2980 = vld [vmem:[#allocation2 + $0x159] sm:$0xff]
      %v2981 = vld [vmem:[#allocation2 + $0x161] sm:$0xff]
      %v2982 = vld [vmem:[#allocation2 + $0x169] sm:$0xff]
      %v2983 = vld [vmem:[#allocation2 + $0x171] sm:$0xff]
      %v2984 = vld [vmem:[#allocation2 + $0x179] sm:$0xff]
      %v2985 = vld [vmem:[#allocation2 + $0x181] sm:$0xff]
      %v2986 = vld [vmem:[#allocation2 + $0x189] sm:$0xff]
      %v2987 = vld [vmem:[#allocation2 + $0x191] sm:$0xff]
      %v2988 = vld [vmem:[#allocation2 + $0x199] sm:$0xff]
      %v2989 = vld [vmem:[#allocation2 + $0x1a1] sm:$0xff]
      %v2990 = vld [vmem:[#allocation2 + $0x1a9] sm:$0xff]
      %v2991 = vld [vmem:[#allocation2 + $0x1b1] sm:$0xff]
      %v2992 = vld [vmem:[#allocation2 + $0x1b9] sm:$0xff]
      %v2993 = vld [vmem:[#allocation2 + $0x1c1] sm:$0xff]
      %v2994 = vld [vmem:[#allocation2 + $0x1c9] sm:$0xff]
      %v2995 = vld [vmem:[#allocation2 + $0x1d1] sm:$0xff]
      %v2996 = vld [vmem:[#allocation2 + $0x1d9] sm:$0xff]
      %v2997 = vld [vmem:[#allocation2 + $0x1e1] sm:$0xff]
      %v2998 = vld [vmem:[#allocation2 + $0x1e9] sm:$0x7f]
      %v2999 = vmax.f32 %v2875, %v2937
      %v3000 = vmax.f32 %v2876, %v2938
      %v3001 = vmax.f32 %v2877, %v2939
      %v3002 = vmax.f32 %v2878, %v2940
      %v3003 = vmax.f32 %v2879, %v2941
      %v3004 = vmax.f32 %v2880, %v2942
      %v3005 = vmax.f32 %v2881, %v2943
      %v3006 = vmax.f32 %v2882, %v2944
      %v3007 = vmax.f32 %v2883, %v2945
      %v3008 = vmax.f32 %v2884, %v2946
      %v3009 = vmax.f32 %v2885, %v2947
      %v3010 = vmax.f32 %v2886, %v2948
      %v3011 = vmax.f32 %v2887, %v2949
      %v3012 = vmax.f32 %v2888, %v2950
      %v3013 = vmax.f32 %v2889, %v2951
      %v3014 = vmax.f32 %v2890, %v2952
      %v3015 = vmax.f32 %v2891, %v2953
      %v3016 = vmax.f32 %v2892, %v2954
      %v3017 = vmax.f32 %v2893, %v2955
      %v3018 = vmax.f32 %v2894, %v2956
      %v3019 = vmax.f32 %v2895, %v2957
      %v3020 = vmax.f32 %v2896, %v2958
      %v3021 = vmax.f32 %v2897, %v2959
      %v3022 = vmax.f32 %v2898, %v2960
      %v3023 = vmax.f32 %v2899, %v2961
      %v3024 = vmax.f32 %v2900, %v2962
      %v3025 = vmax.f32 %v2901, %v2963
      %v3026 = vmax.f32 %v2902, %v2964
      %v3027 = vmax.f32 %v2903, %v2965
      %v3028 = vmax.f32 %v2904, %v2966
      %v3029 = vmax.f32 %v2905, %v2967
      %v3030 = vmax.f32 %v2906, %v2968
      %v3031 = vmax.f32 %v2907, %v2969
      %v3032 = vmax.f32 %v2908, %v2970
      %v3033 = vmax.f32 %v2909, %v2971
      %v3034 = vmax.f32 %v2910, %v2972
      %v3035 = vmax.f32 %v2911, %v2973
      %v3036 = vmax.f32 %v2912, %v2974
      %v3037 = vmax.f32 %v2913, %v2975
      %v3038 = vmax.f32 %v2914, %v2976
      %v3039 = vmax.f32 %v2915, %v2977
      %v3040 = vmax.f32 %v2916, %v2978
      %v3041 = vmax.f32 %v2917, %v2979
      %v3042 = vmax.f32 %v2918, %v2980
      %v3043 = vmax.f32 %v2919, %v2981
      %v3044 = vmax.f32 %v2920, %v2982
      %v3045 = vmax.f32 %v2921, %v2983
      %v3046 = vmax.f32 %v2922, %v2984
      %v3047 = vmax.f32 %v2923, %v2985
      %v3048 = vmax.f32 %v2924, %v2986
      %v3049 = vmax.f32 %v2925, %v2987
      %v3050 = vmax.f32 %v2926, %v2988
      %v3051 = vmax.f32 %v2927, %v2989
      %v3052 = vmax.f32 %v2928, %v2990
      %v3053 = vmax.f32 %v2929, %v2991
      %v3054 = vmax.f32 %v2930, %v2992
      %v3055 = vmax.f32 %v2931, %v2993
      %v3056 = vmax.f32 %v2932, %v2994
      %v3057 = vmax.f32 %v2933, %v2995
      %v3058 = vmax.f32 %v2934, %v2996
      %v3059 = vmax.f32 %v2935, %v2997
      %v3060 = vmax.f32 %v2936, %v2998
      %3061 = vst.msk [vmem:[#allocation3] sm:$0xff] %vm2812, %v2999
      %3062 = vst.msk [vmem:[#allocation3 + $0x8] sm:$0xff] %vm2812, %v3000
      %3063 = vst.msk [vmem:[#allocation3 + $0x10] sm:$0xff] %vm2812, %v3001
      %3064 = vst.msk [vmem:[#allocation3 + $0x18] sm:$0xff] %vm2812, %v3002
      %3065 = vst.msk [vmem:[#allocation3 + $0x20] sm:$0xff] %vm2812, %v3003
      %3066 = vst.msk [vmem:[#allocation3 + $0x28] sm:$0xff] %vm2812, %v3004
      %3067 = vst.msk [vmem:[#allocation3 + $0x30] sm:$0xff] %vm2812, %v3005
      %3068 = vst.msk [vmem:[#allocation3 + $0x38] sm:$0xff] %vm2812, %v3006
      %3069 = vst.msk [vmem:[#allocation3 + $0x40] sm:$0xff] %vm2812, %v3007
      %3070 = vst.msk [vmem:[#allocation3 + $0x48] sm:$0xff] %vm2812, %v3008
      %3071 = vst.msk [vmem:[#allocation3 + $0x50] sm:$0xff] %vm2812, %v3009
      %3072 = vst.msk [vmem:[#allocation3 + $0x58] sm:$0xff] %vm2812, %v3010
      %3073 = vst.msk [vmem:[#allocation3 + $0x60] sm:$0xff] %vm2812, %v3011
      %3074 = vst.msk [vmem:[#allocation3 + $0x68] sm:$0xff] %vm2812, %v3012
      %3075 = vst.msk [vmem:[#allocation3 + $0x70] sm:$0xff] %vm2812, %v3013
      %3076 = vst.msk [vmem:[#allocation3 + $0x78] sm:$0xff] %vm2812, %v3014
      %3077 = vst.msk [vmem:[#allocation3 + $0x80] sm:$0xff] %vm2812, %v3015
      %3078 = vst.msk [vmem:[#allocation3 + $0x88] sm:$0xff] %vm2812, %v3016
      %3079 = vst.msk [vmem:[#allocation3 + $0x90] sm:$0xff] %vm2812, %v3017
      %3080 = vst.msk [vmem:[#allocation3 + $0x98] sm:$0xff] %vm2812, %v3018
      %3081 = vst.msk [vmem:[#allocation3 + $0xa0] sm:$0xff] %vm2812, %v3019
      %3082 = vst.msk [vmem:[#allocation3 + $0xa8] sm:$0xff] %vm2812, %v3020
      %3083 = vst.msk [vmem:[#allocation3 + $0xb0] sm:$0xff] %vm2812, %v3021
      %3084 = vst.msk [vmem:[#allocation3 + $0xb8] sm:$0xff] %vm2812, %v3022
      %3085 = vst.msk [vmem:[#allocation3 + $0xc0] sm:$0xff] %vm2812, %v3023
      %3086 = vst.msk [vmem:[#allocation3 + $0xc8] sm:$0xff] %vm2812, %v3024
      %3087 = vst.msk [vmem:[#allocation3 + $0xd0] sm:$0xff] %vm2812, %v3025
      %3088 = vst.msk [vmem:[#allocation3 + $0xd8] sm:$0xff] %vm2812, %v3026
      %3089 = vst.msk [vmem:[#allocation3 + $0xe0] sm:$0xff] %vm2812, %v3027
      %3090 = vst.msk [vmem:[#allocation3 + $0xe8] sm:$0xff] %vm2812, %v3028
      %3091 = vst.msk [vmem:[#allocation3 + $0xf0] sm:$0xff] %vm2812, %v3029
      %3092 = vst.msk [vmem:[#allocation3 + $0xf8] sm:$0xff] %vm2812, %v3030
      %3093 = vst.msk [vmem:[#allocation3 + $0x100] sm:$0xff] %vm2812, %v3031
      %3094 = vst.msk [vmem:[#allocation3 + $0x108] sm:$0xff] %vm2812, %v3032
      %3095 = vst.msk [vmem:[#allocation3 + $0x110] sm:$0xff] %vm2812, %v3033
      %3096 = vst.msk [vmem:[#allocation3 + $0x118] sm:$0xff] %vm2812, %v3034
      %3097 = vst.msk [vmem:[#allocation3 + $0x120] sm:$0xff] %vm2812, %v3035
      %3098 = vst.msk [vmem:[#allocation3 + $0x128] sm:$0xff] %vm2812, %v3036
      %3099 = vst.msk [vmem:[#allocation3 + $0x130] sm:$0xff] %vm2812, %v3037
      %3100 = vst.msk [vmem:[#allocation3 + $0x138] sm:$0xff] %vm2812, %v3038
      %3101 = vst.msk [vmem:[#allocation3 + $0x140] sm:$0xff] %vm2812, %v3039
      %3102 = vst.msk [vmem:[#allocation3 + $0x148] sm:$0xff] %vm2812, %v3040
      %3103 = vst.msk [vmem:[#allocation3 + $0x150] sm:$0xff] %vm2812, %v3041
      %3104 = vst.msk [vmem:[#allocation3 + $0x158] sm:$0xff] %vm2812, %v3042
      %3105 = vst.msk [vmem:[#allocation3 + $0x160] sm:$0xff] %vm2812, %v3043
      %3106 = vst.msk [vmem:[#allocation3 + $0x168] sm:$0xff] %vm2812, %v3044
      %3107 = vst.msk [vmem:[#allocation3 + $0x170] sm:$0xff] %vm2812, %v3045
      %3108 = vst.msk [vmem:[#allocation3 + $0x178] sm:$0xff] %vm2812, %v3046
      %3109 = vst.msk [vmem:[#allocation3 + $0x180] sm:$0xff] %vm2812, %v3047
      %3110 = vst.msk [vmem:[#allocation3 + $0x188] sm:$0xff] %vm2812, %v3048
      %3111 = vst.msk [vmem:[#allocation3 + $0x190] sm:$0xff] %vm2812, %v3049
      %3112 = vst.msk [vmem:[#allocation3 + $0x198] sm:$0xff] %vm2812, %v3050
      %3113 = vst.msk [vmem:[#allocation3 + $0x1a0] sm:$0xff] %vm2812, %v3051
      %3114 = vst.msk [vmem:[#allocation3 + $0x1a8] sm:$0xff] %vm2812, %v3052
      %3115 = vst.msk [vmem:[#allocation3 + $0x1b0] sm:$0xff] %vm2812, %v3053
      %3116 = vst.msk [vmem:[#allocation3 + $0x1b8] sm:$0xff] %vm2812, %v3054
      %3117 = vst.msk [vmem:[#allocation3 + $0x1c0] sm:$0xff] %vm2812, %v3055
      %3118 = vst.msk [vmem:[#allocation3 + $0x1c8] sm:$0xff] %vm2812, %v3056
      %3119 = vst.msk [vmem:[#allocation3 + $0x1d0] sm:$0xff] %vm2812, %v3057
      %3120 = vst.msk [vmem:[#allocation3 + $0x1d8] sm:$0xff] %vm2812, %v3058
      %3121 = vst.msk [vmem:[#allocation3 + $0x1e0] sm:$0xff] %vm2812, %v3059
      %vm3122 = vcmask 260096
      %3123 = vst.msk [vmem:[#allocation3 + $0x1e8] sm:$0x7f] %vm3122, %v3060
      %v3124 = vld [vmem:[#allocation3] ss:$2 sm:$0xff]
      %s3125 = scalar_lea.vmem [#allocation3], 16
      %v3126 = vld [vmem:[%s3125] ss:$2 sm:$0xff]
      %s3127 = scalar_lea.vmem [#allocation3], 32
      %v3128 = vld [vmem:[%s3127] ss:$2 sm:$0xff]
      %s3129 = scalar_lea.vmem [#allocation3], 48
      %v3130 = vld [vmem:[%s3129] ss:$2 sm:$0xff]
      %s3131 = scalar_lea.vmem [#allocation3], 64
      %v3132 = vld [vmem:[%s3131] ss:$2 sm:$0xff]
      %s3133 = scalar_lea.vmem [#allocation3], 80
      %v3134 = vld [vmem:[%s3133] ss:$2 sm:$0xff]
      %s3135 = scalar_lea.vmem [#allocation3], 96
      %v3136 = vld [vmem:[%s3135] ss:$2 sm:$0xff]
      %s3137 = scalar_lea.vmem [#allocation3], 112
      %v3138 = vld [vmem:[%s3137] ss:$2 sm:$0xff]
      %s3139 = scalar_lea.vmem [#allocation3], 128
      %v3140 = vld [vmem:[%s3139] ss:$2 sm:$0xff]
      %s3141 = scalar_lea.vmem [#allocation3], 144
      %v3142 = vld [vmem:[%s3141] ss:$2 sm:$0xff]
      %s3143 = scalar_lea.vmem [#allocation3], 160
      %v3144 = vld [vmem:[%s3143] ss:$2 sm:$0xff]
      %s3145 = scalar_lea.vmem [#allocation3], 176
      %v3146 = vld [vmem:[%s3145] ss:$2 sm:$0xff]
      %s3147 = scalar_lea.vmem [#allocation3], 192
      %v3148 = vld [vmem:[%s3147] ss:$2 sm:$0xff]
      %s3149 = scalar_lea.vmem [#allocation3], 208
      %v3150 = vld [vmem:[%s3149] ss:$2 sm:$0xff]
      %s3151 = scalar_lea.vmem [#allocation3], 224
      %v3152 = vld [vmem:[%s3151] ss:$2 sm:$0xff]
      %s3153 = scalar_lea.vmem [#allocation3], 240
      %v3154 = vld [vmem:[%s3153] ss:$2 sm:$0xff]
      %s3155 = scalar_lea.vmem [#allocation3], 256
      %v3156 = vld [vmem:[%s3155] ss:$2 sm:$0xff]
      %s3157 = scalar_lea.vmem [#allocation3], 272
      %v3158 = vld [vmem:[%s3157] ss:$2 sm:$0xff]
      %s3159 = scalar_lea.vmem [#allocation3], 288
      %v3160 = vld [vmem:[%s3159] ss:$2 sm:$0xff]
      %s3161 = scalar_lea.vmem [#allocation3], 304
      %v3162 = vld [vmem:[%s3161] ss:$2 sm:$0xff]
      %s3163 = scalar_lea.vmem [#allocation3], 320
      %v3164 = vld [vmem:[%s3163] ss:$2 sm:$0xff]
      %s3165 = scalar_lea.vmem [#allocation3], 336
      %v3166 = vld [vmem:[%s3165] ss:$2 sm:$0xff]
      %s3167 = scalar_lea.vmem [#allocation3], 352
      %v3168 = vld [vmem:[%s3167] ss:$2 sm:$0xff]
      %s3169 = scalar_lea.vmem [#allocation3], 368
      %v3170 = vld [vmem:[%s3169] ss:$2 sm:$0xff]
      %s3171 = scalar_lea.vmem [#allocation3], 384
      %v3172 = vld [vmem:[%s3171] ss:$2 sm:$0xff]
      %s3173 = scalar_lea.vmem [#allocation3], 400
      %v3174 = vld [vmem:[%s3173] ss:$2 sm:$0xff]
      %s3175 = scalar_lea.vmem [#allocation3], 416
      %v3176 = vld [vmem:[%s3175] ss:$2 sm:$0xff]
      %s3177 = scalar_lea.vmem [#allocation3], 432
      %v3178 = vld [vmem:[%s3177] ss:$2 sm:$0xff]
      %s3179 = scalar_lea.vmem [#allocation3], 448
      %v3180 = vld [vmem:[%s3179] ss:$2 sm:$0xff]
      %s3181 = scalar_lea.vmem [#allocation3], 464
      %v3182 = vld [vmem:[%s3181] ss:$2 sm:$0xff]
      %s3183 = scalar_lea.vmem [#allocation3], 480
      %v3184 = vld [vmem:[%s3183] ss:$2 sm:$0xff]
      %v3185 = vmax.f32 %v3124, 0.0
      %v3186 = vmax.f32 %v3126, 0.0
      %v3187 = vmax.f32 %v3128, 0.0
      %v3188 = vmax.f32 %v3130, 0.0
      %v3189 = vmax.f32 %v3132, 0.0
      %v3190 = vmax.f32 %v3134, 0.0
      %v3191 = vmax.f32 %v3136, 0.0
      %v3192 = vmax.f32 %v3138, 0.0
      %v3193 = vmax.f32 %v3140, 0.0
      %v3194 = vmax.f32 %v3142, 0.0
      %v3195 = vmax.f32 %v3144, 0.0
      %v3196 = vmax.f32 %v3146, 0.0
      %v3197 = vmax.f32 %v3148, 0.0
      %v3198 = vmax.f32 %v3150, 0.0
      %v3199 = vmax.f32 %v3152, 0.0
      %v3200 = vmax.f32 %v3154, 0.0
      %v3201 = vmax.f32 %v3156, 0.0
      %v3202 = vmax.f32 %v3158, 0.0
      %v3203 = vmax.f32 %v3160, 0.0
      %v3204 = vmax.f32 %v3162, 0.0
      %v3205 = vmax.f32 %v3164, 0.0
      %v3206 = vmax.f32 %v3166, 0.0
      %v3207 = vmax.f32 %v3168, 0.0
      %v3208 = vmax.f32 %v3170, 0.0
      %v3209 = vmax.f32 %v3172, 0.0
      %v3210 = vmax.f32 %v3174, 0.0
      %v3211 = vmax.f32 %v3176, 0.0
      %v3212 = vmax.f32 %v3178, 0.0
      %v3213 = vmax.f32 %v3180, 0.0
      %v3214 = vmax.f32 %v3182, 0.0
      %v3215 = vmax.f32 %v3184, 0.0
      %3216 = vst.msk [vmem:[#allocation4] sm:$0xff] %vm2812, %v3185
      %3217 = vst.msk [vmem:[#allocation4 + $0x8] sm:$0xff] %vm2812, %v3186
      %3218 = vst.msk [vmem:[#allocation4 + $0x10] sm:$0xff] %vm2812, %v3187
      %3219 = vst.msk [vmem:[#allocation4 + $0x18] sm:$0xff] %vm2812, %v3188
      %3220 = vst.msk [vmem:[#allocation4 + $0x20] sm:$0xff] %vm2812, %v3189
      %3221 = vst.msk [vmem:[#allocation4 + $0x28] sm:$0xff] %vm2812, %v3190
      %3222 = vst.msk [vmem:[#allocation4 + $0x30] sm:$0xff] %vm2812, %v3191
      %3223 = vst.msk [vmem:[#allocation4 + $0x38] sm:$0xff] %vm2812, %v3192
      %3224 = vst.msk [vmem:[#allocation4 + $0x40] sm:$0xff] %vm2812, %v3193
      %3225 = vst.msk [vmem:[#allocation4 + $0x48] sm:$0xff] %vm2812, %v3194
      %3226 = vst.msk [vmem:[#allocation4 + $0x50] sm:$0xff] %vm2812, %v3195
      %3227 = vst.msk [vmem:[#allocation4 + $0x58] sm:$0xff] %vm2812, %v3196
      %3228 = vst.msk [vmem:[#allocation4 + $0x60] sm:$0xff] %vm2812, %v3197
      %3229 = vst.msk [vmem:[#allocation4 + $0x68] sm:$0xff] %vm2812, %v3198
      %3230 = vst.msk [vmem:[#allocation4 + $0x70] sm:$0xff] %vm2812, %v3199
      %3231 = vst.msk [vmem:[#allocation4 + $0x78] sm:$0xff] %vm2812, %v3200
      %3232 = vst.msk [vmem:[#allocation4 + $0x80] sm:$0xff] %vm2812, %v3201
      %3233 = vst.msk [vmem:[#allocation4 + $0x88] sm:$0xff] %vm2812, %v3202
      %3234 = vst.msk [vmem:[#allocation4 + $0x90] sm:$0xff] %vm2812, %v3203
      %3235 = vst.msk [vmem:[#allocation4 + $0x98] sm:$0xff] %vm2812, %v3204
      %3236 = vst.msk [vmem:[#allocation4 + $0xa0] sm:$0xff] %vm2812, %v3205
      %3237 = vst.msk [vmem:[#allocation4 + $0xa8] sm:$0xff] %vm2812, %v3206
      %3238 = vst.msk [vmem:[#allocation4 + $0xb0] sm:$0xff] %vm2812, %v3207
      %3239 = vst.msk [vmem:[#allocation4 + $0xb8] sm:$0xff] %vm2812, %v3208
      %3240 = vst.msk [vmem:[#allocation4 + $0xc0] sm:$0xff] %vm2812, %v3209
      %3241 = vst.msk [vmem:[#allocation4 + $0xc8] sm:$0xff] %vm2812, %v3210
      %3242 = vst.msk [vmem:[#allocation4 + $0xd0] sm:$0xff] %vm2812, %v3211
      %3243 = vst.msk [vmem:[#allocation4 + $0xd8] sm:$0xff] %vm2812, %v3212
      %3244 = vst.msk [vmem:[#allocation4 + $0xe0] sm:$0xff] %vm2812, %v3213
      %3245 = vst.msk [vmem:[#allocation4 + $0xe8] sm:$0xff] %vm2812, %v3214
      %3246 = vst.msk [vmem:[#allocation4 + $0xf0] sm:$0xff] %vm2812, %v3215
      %v3247 = vld [vmem:[#allocation4] sm:$0xff]
      %v3248 = vld [vmem:[#allocation4 + $0x8] sm:$0xff]
      %v3249 = vld [vmem:[#allocation4 + $0x10] sm:$0xff]
      %v3250 = vld [vmem:[#allocation4 + $0x18] sm:$0xff]
      %v3251 = vld [vmem:[#allocation4 + $0x20] sm:$0xff]
      %v3252 = vld [vmem:[#allocation4 + $0x28] sm:$0xff]
      %v3253 = vld [vmem:[#allocation4 + $0x30] sm:$0xff]
      %v3254 = vld [vmem:[#allocation4 + $0x38] sm:$0xff]
      %v3255 = vld [vmem:[#allocation4 + $0x40] sm:$0xff]
      %v3256 = vld [vmem:[#allocation4 + $0x48] sm:$0xff]
      %v3257 = vld [vmem:[#allocation4 + $0x50] sm:$0xff]
      %v3258 = vld [vmem:[#allocation4 + $0x58] sm:$0xff]
      %v3259 = vld [vmem:[#allocation4 + $0x60] sm:$0xff]
      %v3260 = vld [vmem:[#allocation4 + $0x68] sm:$0xff]
      %v3261 = vld [vmem:[#allocation4 + $0x70] sm:$0xff]
      %v3262 = vld [vmem:[#allocation4 + $0x78] sm:$0xff]
      %v3263 = vld [vmem:[#allocation4 + $0x80] sm:$0xff]
      %v3264 = vld [vmem:[#allocation4 + $0x88] sm:$0xff]
      %v3265 = vld [vmem:[#allocation4 + $0x90] sm:$0xff]
      %v3266 = vld [vmem:[#allocation4 + $0x98] sm:$0xff]
      %v3267 = vld [vmem:[#allocation4 + $0xa0] sm:$0xff]
      %v3268 = vld [vmem:[#allocation4 + $0xa8] sm:$0xff]
      %v3269 = vld [vmem:[#allocation4 + $0xb0] sm:$0xff]
      %v3270 = vld [vmem:[#allocation4 + $0xb8] sm:$0xff]
      %v3271 = vld [vmem:[#allocation4 + $0xc0] sm:$0xff]
      %v3272 = vld [vmem:[#allocation4 + $0xc8] sm:$0xff]
      %v3273 = vld [vmem:[#allocation4 + $0xd0] sm:$0xff]
      %v3274 = vld [vmem:[#allocation4 + $0xd8] sm:$0xff]
      %v3275 = vld [vmem:[#allocation4 + $0xe0] sm:$0xff]
      %v3276 = vld [vmem:[#allocation4 + $0xe8] sm:$0xff]
      %v3277 = vld [vmem:[#allocation4 + $0xf0] sm:$0xf]
      %v3278 = vld [vmem:[%s3] sm:$0xff]
      %v3279 = vld [vmem:[%s3 + $0x8] sm:$0xff]
      %v3280 = vld [vmem:[%s3 + $0x10] sm:$0xff]
      %v3281 = vld [vmem:[%s3 + $0x18] sm:$0xff]
      %v3282 = vld [vmem:[#allocation4 + $0x1] sm:$0xff]
      %v3283 = vld [vmem:[#allocation4 + $0x9] sm:$0xff]
      %v3284 = vld [vmem:[#allocation4 + $0x11] sm:$0xff]
      %v3285 = vld [vmem:[#allocation4 + $0x19] sm:$0xff]
      %v3286 = vld [vmem:[#allocation4 + $0x21] sm:$0xff]
      %v3287 = vld [vmem:[#allocation4 + $0x29] sm:$0xff]
      %v3288 = vld [vmem:[#allocation4 + $0x31] sm:$0xff]
      %v3289 = vld [vmem:[#allocation4 + $0x39] sm:$0xff]
      %v3290 = vld [vmem:[#allocation4 + $0x41] sm:$0xff]
      %v3291 = vld [vmem:[#allocation4 + $0x49] sm:$0xff]
      %v3292 = vld [vmem:[#allocation4 + $0x51] sm:$0xff]
      %v3293 = vld [vmem:[#allocation4 + $0x59] sm:$0xff]
      %v3294 = vld [vmem:[#allocation4 + $0x61] sm:$0xff]
      %v3295 = vld [vmem:[#allocation4 + $0x69] sm:$0xff]
      %v3296 = vld [vmem:[#allocation4 + $0x71] sm:$0xff]
      %v3297 = vld [vmem:[#allocation4 + $0x79] sm:$0xff]
      %v3298 = vld [vmem:[#allocation4 + $0x81] sm:$0xff]
      %v3299 = vld [vmem:[#allocation4 + $0x89] sm:$0xff]
      %v3300 = vld [vmem:[#allocation4 + $0x91] sm:$0xff]
      %v3301 = vld [vmem:[#allocation4 + $0x99] sm:$0xff]
      %v3302 = vld [vmem:[#allocation4 + $0xa1] sm:$0xff]
      %v3303 = vld [vmem:[#allocation4 + $0xa9] sm:$0xff]
      %v3304 = vld [vmem:[#allocation4 + $0xb1] sm:$0xff]
      %v3305 = vld [vmem:[#allocation4 + $0xb9] sm:$0xff]
      %v3306 = vld [vmem:[#allocation4 + $0xc1] sm:$0xff]
      %v3307 = vld [vmem:[#allocation4 + $0xc9] sm:$0xff]
      %v3308 = vld [vmem:[#allocation4 + $0xd1] sm:$0xff]
      %v3309 = vld [vmem:[#allocation4 + $0xd9] sm:$0xff]
      %v3310 = vld [vmem:[#allocation4 + $0xe1] sm:$0xff]
      %v3311 = vld [vmem:[#allocation4 + $0xe9] sm:$0xff]
      %v3312 = vld [vmem:[#allocation4 + $0xf1] sm:$0xf]
      %s3313 = scalar_lea.vmem %s3, 32
      %v3314 = vld [vmem:[%s3313] sm:$0xff]
      %v3315 = vld [vmem:[%s3313 + $0x8] sm:$0xff]
      %v3316 = vld [vmem:[%s3313 + $0x10] sm:$0xff]
      %v3317 = vld [vmem:[%s3313 + $0x18] sm:$0xff]
      %v3319 = vsel %vm2812, %v3282, 0
      %v3322 = vsel %vm2812, %v3283, 0
      %v3325 = vsel %vm2812, %v3284, 0
      %v3328 = vsel %vm2812, %v3285, 0
      %v3331 = vsel %vm2812, %v3286, 0
      %v3334 = vsel %vm2812, %v3287, 0
      %v3337 = vsel %vm2812, %v3288, 0
      %v3340 = vsel %vm2812, %v3289, 0
      %v3343 = vsel %vm2812, %v3290, 0
      %v3346 = vsel %vm2812, %v3291, 0
      %v3349 = vsel %vm2812, %v3292, 0
      %v3352 = vsel %vm2812, %v3293, 0
      %v3355 = vsel %vm2812, %v3294, 0
      %v3358 = vsel %vm2812, %v3295, 0
      %v3361 = vsel %vm2812, %v3296, 0
      %v3364 = vsel %vm2812, %v3297, 0
      %v3367 = vsel %vm2812, %v3298, 0
      %v3370 = vsel %vm2812, %v3299, 0
      %v3373 = vsel %vm2812, %v3300, 0
      %v3376 = vsel %vm2812, %v3301, 0
      %v3379 = vsel %vm2812, %v3302, 0
      %v3382 = vsel %vm2812, %v3303, 0
      %v3385 = vsel %vm2812, %v3304, 0
      %v3388 = vsel %vm2812, %v3305, 0
      %v3391 = vsel %vm2812, %v3306, 0
      %v3394 = vsel %vm2812, %v3307, 0
      %v3397 = vsel %vm2812, %v3308, 0
      %v3400 = vsel %vm2812, %v3309, 0
      %v3403 = vsel %vm2812, %v3310, 0
      %v3406 = vsel %vm2812, %v3311, 0
      %v3409 = vsel %vm2812, %v3312, 0
      %3411 = vmatpush.msra.mxu0 0.0
      %3412 = vmatpush.msra.mxu0 0.0
      %3413 = vmatpush.msra.mxu0 0.0
      %3414 = vmatpush.msra.mxu0 0.0
      %3415 = vmatpush.msra.mxu0 0.0
      %3416 = vmatpush.msra.mxu0 0.0
      %3417 = vmatpush.msra.mxu0 0.0
      %3418 = vmatpush.msra.mxu0 0.0
      %3419 = vmatpush.msra.mxu0 0.0
      %3420 = vmatpush.msra.mxu0 0.0
      %3421 = vmatpush.msra.mxu0 0.0
      %3422 = vmatpush.msra.mxu0 0.0
      %3423 = vmatpush.msra.mxu0 %v3317
      %3424 = vmatpush.msra.mxu0 %v3316
      %3425 = vmatpush.msra.mxu0 %v3315
      %3426 = vmatpush.msra.mxu0 %v3314
      %3427 = vmatmul.f32.gmra.mxu0 %v3319
      %v3428 = vpop.f32.mrf.mxu0
      %v3429 = vadd.f32 0.0, %v3428
      %3430 = vmatmul.f32.gmra.mxu0 %v3322
      %v3431 = vpop.f32.mrf.mxu0
      %v3432 = vadd.f32 0.0, %v3431
      %3433 = vmatmul.f32.gmra.mxu0 %v3325
      %v3434 = vpop.f32.mrf.mxu0
      %v3435 = vadd.f32 0.0, %v3434
      %3436 = vmatmul.f32.gmra.mxu0 %v3328
      %v3437 = vpop.f32.mrf.mxu0
      %v3438 = vadd.f32 0.0, %v3437
      %3439 = vmatmul.f32.gmra.mxu0 %v3331
      %v3440 = vpop.f32.mrf.mxu0
      %v3441 = vadd.f32 0.0, %v3440
      %3442 = vmatmul.f32.gmra.mxu0 %v3334
      %v3443 = vpop.f32.mrf.mxu0
      %v3444 = vadd.f32 0.0, %v3443
      %3445 = vmatmul.f32.gmra.mxu0 %v3337
      %v3446 = vpop.f32.mrf.mxu0
      %v3447 = vadd.f32 0.0, %v3446
      %3448 = vmatmul.f32.gmra.mxu0 %v3340
      %v3449 = vpop.f32.mrf.mxu0
      %v3450 = vadd.f32 0.0, %v3449
      %3451 = vmatmul.f32.gmra.mxu0 %v3343
      %v3452 = vpop.f32.mrf.mxu0
      %v3453 = vadd.f32 0.0, %v3452
      %3454 = vmatmul.f32.gmra.mxu0 %v3346
      %v3455 = vpop.f32.mrf.mxu0
      %v3456 = vadd.f32 0.0, %v3455
      %3457 = vmatmul.f32.gmra.mxu0 %v3349
      %v3458 = vpop.f32.mrf.mxu0
      %v3459 = vadd.f32 0.0, %v3458
      %3460 = vmatmul.f32.gmra.mxu0 %v3352
      %v3461 = vpop.f32.mrf.mxu0
      %v3462 = vadd.f32 0.0, %v3461
      %3463 = vmatmul.f32.gmra.mxu0 %v3355
      %v3464 = vpop.f32.mrf.mxu0
      %v3465 = vadd.f32 0.0, %v3464
      %3466 = vmatmul.f32.gmra.mxu0 %v3358
      %v3467 = vpop.f32.mrf.mxu0
      %v3468 = vadd.f32 0.0, %v3467
      %3469 = vmatmul.f32.gmra.mxu0 %v3361
      %v3470 = vpop.f32.mrf.mxu0
      %v3471 = vadd.f32 0.0, %v3470
      %3472 = vmatmul.f32.gmra.mxu0 %v3364
      %v3473 = vpop.f32.mrf.mxu0
      %v3474 = vadd.f32 0.0, %v3473
      %3475 = vmatmul.f32.gmra.mxu0 %v3367
      %v3476 = vpop.f32.mrf.mxu0
      %v3477 = vadd.f32 0.0, %v3476
      %3478 = vmatmul.f32.gmra.mxu0 %v3370
      %v3479 = vpop.f32.mrf.mxu0
      %v3480 = vadd.f32 0.0, %v3479
      %3481 = vmatmul.f32.gmra.mxu0 %v3373
      %v3482 = vpop.f32.mrf.mxu0
      %v3483 = vadd.f32 0.0, %v3482
      %3484 = vmatmul.f32.gmra.mxu0 %v3376
      %v3485 = vpop.f32.mrf.mxu0
      %v3486 = vadd.f32 0.0, %v3485
      %3487 = vmatmul.f32.gmra.mxu0 %v3379
      %v3488 = vpop.f32.mrf.mxu0
      %v3489 = vadd.f32 0.0, %v3488
      %3490 = vmatmul.f32.gmra.mxu0 %v3382
      %v3491 = vpop.f32.mrf.mxu0
      %v3492 = vadd.f32 0.0, %v3491
      %3493 = vmatmul.f32.gmra.mxu0 %v3385
      %v3494 = vpop.f32.mrf.mxu0
      %v3495 = vadd.f32 0.0, %v3494
      %3496 = vmatmul.f32.gmra.mxu0 %v3388
      %v3497 = vpop.f32.mrf.mxu0
      %v3498 = vadd.f32 0.0, %v3497
      %3499 = vmatmul.f32.gmra.mxu0 %v3391
      %v3500 = vpop.f32.mrf.mxu0
      %v3501 = vadd.f32 0.0, %v3500
      %3502 = vmatmul.f32.gmra.mxu0 %v3394
      %v3503 = vpop.f32.mrf.mxu0
      %v3504 = vadd.f32 0.0, %v3503
      %3505 = vmatmul.f32.gmra.mxu0 %v3397
      %v3506 = vpop.f32.mrf.mxu0
      %v3507 = vadd.f32 0.0, %v3506
      %3508 = vmatmul.f32.gmra.mxu0 %v3400
      %v3509 = vpop.f32.mrf.mxu0
      %v3510 = vadd.f32 0.0, %v3509
      %3511 = vmatmul.f32.gmra.mxu0 %v3403
      %v3512 = vpop.f32.mrf.mxu0
      %v3513 = vadd.f32 0.0, %v3512
      %3514 = vmatmul.f32.gmra.mxu0 %v3406
      %v3515 = vpop.f32.mrf.mxu0
      %v3516 = vadd.f32 0.0, %v3515
      %3517 = vmatmul.f32.gmra.mxu0 %v3409
      %v3518 = vpop.f32.mrf.mxu0
      %v3519 = vadd.f32 0.0, %v3518
      %3520 = vdwg.mxu0
      %v3522 = vsel %vm2812, %v3247, 0
      %v3525 = vsel %vm2812, %v3248, 0
      %v3528 = vsel %vm2812, %v3249, 0
      %v3531 = vsel %vm2812, %v3250, 0
      %v3534 = vsel %vm2812, %v3251, 0
      %v3537 = vsel %vm2812, %v3252, 0
      %v3540 = vsel %vm2812, %v3253, 0
      %v3543 = vsel %vm2812, %v3254, 0
      %v3546 = vsel %vm2812, %v3255, 0
      %v3549 = vsel %vm2812, %v3256, 0
      %v3552 = vsel %vm2812, %v3257, 0
      %v3555 = vsel %vm2812, %v3258, 0
      %v3558 = vsel %vm2812, %v3259, 0
      %v3561 = vsel %vm2812, %v3260, 0
      %v3564 = vsel %vm2812, %v3261, 0
      %v3567 = vsel %vm2812, %v3262, 0
      %v3570 = vsel %vm2812, %v3263, 0
      %v3573 = vsel %vm2812, %v3264, 0
      %v3576 = vsel %vm2812, %v3265, 0
      %v3579 = vsel %vm2812, %v3266, 0
      %v3582 = vsel %vm2812, %v3267, 0
      %v3585 = vsel %vm2812, %v3268, 0
      %v3588 = vsel %vm2812, %v3269, 0
      %v3591 = vsel %vm2812, %v3270, 0
      %v3594 = vsel %vm2812, %v3271, 0
      %v3597 = vsel %vm2812, %v3272, 0
      %v3600 = vsel %vm2812, %v3273, 0
      %v3603 = vsel %vm2812, %v3274, 0
      %v3606 = vsel %vm2812, %v3275, 0
      %v3609 = vsel %vm2812, %v3276, 0
      %v3612 = vsel %vm2812, %v3277, 0
      %3614 = vmatpush.msra.mxu0 0.0
      %3615 = vmatpush.msra.mxu0 0.0
      %3616 = vmatpush.msra.mxu0 0.0
      %3617 = vmatpush.msra.mxu0 0.0
      %3618 = vmatpush.msra.mxu0 0.0
      %3619 = vmatpush.msra.mxu0 0.0
      %3620 = vmatpush.msra.mxu0 0.0
      %3621 = vmatpush.msra.mxu0 0.0
      %3622 = vmatpush.msra.mxu0 0.0
      %3623 = vmatpush.msra.mxu0 0.0
      %3624 = vmatpush.msra.mxu0 0.0
      %3625 = vmatpush.msra.mxu0 0.0
      %3626 = vmatpush.msra.mxu0 %v3281
      %3627 = vmatpush.msra.mxu0 %v3280
      %3628 = vmatpush.msra.mxu0 %v3279
      %3629 = vmatpush.msra.mxu0 %v3278
      %3630 = vmatmul.f32.gmra.mxu0 %v3522
      %v3631 = vpop.f32.mrf.mxu0
      %v3632 = vadd.f32 %v3429, %v3631
      %3633 = vmatmul.f32.gmra.mxu0 %v3525
      %v3634 = vpop.f32.mrf.mxu0
      %v3635 = vadd.f32 %v3432, %v3634
      %3636 = vmatmul.f32.gmra.mxu0 %v3528
      %v3637 = vpop.f32.mrf.mxu0
      %v3638 = vadd.f32 %v3435, %v3637
      %3639 = vmatmul.f32.gmra.mxu0 %v3531
      %v3640 = vpop.f32.mrf.mxu0
      %v3641 = vadd.f32 %v3438, %v3640
      %3642 = vmatmul.f32.gmra.mxu0 %v3534
      %v3643 = vpop.f32.mrf.mxu0
      %v3644 = vadd.f32 %v3441, %v3643
      %3645 = vmatmul.f32.gmra.mxu0 %v3537
      %v3646 = vpop.f32.mrf.mxu0
      %v3647 = vadd.f32 %v3444, %v3646
      %3648 = vmatmul.f32.gmra.mxu0 %v3540
      %v3649 = vpop.f32.mrf.mxu0
      %v3650 = vadd.f32 %v3447, %v3649
      %3651 = vmatmul.f32.gmra.mxu0 %v3543
      %v3652 = vpop.f32.mrf.mxu0
      %v3653 = vadd.f32 %v3450, %v3652
      %3654 = vmatmul.f32.gmra.mxu0 %v3546
      %v3655 = vpop.f32.mrf.mxu0
      %v3656 = vadd.f32 %v3453, %v3655
      %3657 = vmatmul.f32.gmra.mxu0 %v3549
      %v3658 = vpop.f32.mrf.mxu0
      %v3659 = vadd.f32 %v3456, %v3658
      %3660 = vmatmul.f32.gmra.mxu0 %v3552
      %v3661 = vpop.f32.mrf.mxu0
      %v3662 = vadd.f32 %v3459, %v3661
      %3663 = vmatmul.f32.gmra.mxu0 %v3555
      %v3664 = vpop.f32.mrf.mxu0
      %v3665 = vadd.f32 %v3462, %v3664
      %3666 = vmatmul.f32.gmra.mxu0 %v3558
      %v3667 = vpop.f32.mrf.mxu0
      %v3668 = vadd.f32 %v3465, %v3667
      %3669 = vmatmul.f32.gmra.mxu0 %v3561
      %v3670 = vpop.f32.mrf.mxu0
      %v3671 = vadd.f32 %v3468, %v3670
      %3672 = vmatmul.f32.gmra.mxu0 %v3564
      %v3673 = vpop.f32.mrf.mxu0
      %v3674 = vadd.f32 %v3471, %v3673
      %3675 = vmatmul.f32.gmra.mxu0 %v3567
      %v3676 = vpop.f32.mrf.mxu0
      %v3677 = vadd.f32 %v3474, %v3676
      %3678 = vmatmul.f32.gmra.mxu0 %v3570
      %v3679 = vpop.f32.mrf.mxu0
      %v3680 = vadd.f32 %v3477, %v3679
      %3681 = vmatmul.f32.gmra.mxu0 %v3573
      %v3682 = vpop.f32.mrf.mxu0
      %v3683 = vadd.f32 %v3480, %v3682
      %3684 = vmatmul.f32.gmra.mxu0 %v3576
      %v3685 = vpop.f32.mrf.mxu0
      %v3686 = vadd.f32 %v3483, %v3685
      %3687 = vmatmul.f32.gmra.mxu0 %v3579
      %v3688 = vpop.f32.mrf.mxu0
      %v3689 = vadd.f32 %v3486, %v3688
      %3690 = vmatmul.f32.gmra.mxu0 %v3582
      %v3691 = vpop.f32.mrf.mxu0
      %v3692 = vadd.f32 %v3489, %v3691
      %3693 = vmatmul.f32.gmra.mxu0 %v3585
      %v3694 = vpop.f32.mrf.mxu0
      %v3695 = vadd.f32 %v3492, %v3694
      %3696 = vmatmul.f32.gmra.mxu0 %v3588
      %v3697 = vpop.f32.mrf.mxu0
      %v3698 = vadd.f32 %v3495, %v3697
      %3699 = vmatmul.f32.gmra.mxu0 %v3591
      %v3700 = vpop.f32.mrf.mxu0
      %v3701 = vadd.f32 %v3498, %v3700
      %3702 = vmatmul.f32.gmra.mxu0 %v3594
      %v3703 = vpop.f32.mrf.mxu0
      %v3704 = vadd.f32 %v3501, %v3703
      %3705 = vmatmul.f32.gmra.mxu0 %v3597
      %v3706 = vpop.f32.mrf.mxu0
      %v3707 = vadd.f32 %v3504, %v3706
      %3708 = vmatmul.f32.gmra.mxu0 %v3600
      %v3709 = vpop.f32.mrf.mxu0
      %v3710 = vadd.f32 %v3507, %v3709
      %3711 = vmatmul.f32.gmra.mxu0 %v3603
      %v3712 = vpop.f32.mrf.mxu0
      %v3713 = vadd.f32 %v3510, %v3712
      %3714 = vmatmul.f32.gmra.mxu0 %v3606
      %v3715 = vpop.f32.mrf.mxu0
      %v3716 = vadd.f32 %v3513, %v3715
      %3717 = vmatmul.f32.gmra.mxu0 %v3609
      %v3718 = vpop.f32.mrf.mxu0
      %v3719 = vadd.f32 %v3516, %v3718
      %3720 = vmatmul.f32.gmra.mxu0 %v3612
      %v3721 = vpop.f32.mrf.mxu0
      %v3722 = vadd.f32 %v3519, %v3721
      %3723 = vdwg.mxu0
      %v3724 = vld [vmem:[#allocation4 + $0x2] sm:$0xff]
      %v3725 = vld [vmem:[#allocation4 + $0xa] sm:$0xff]
      %v3726 = vld [vmem:[#allocation4 + $0x12] sm:$0xff]
      %v3727 = vld [vmem:[#allocation4 + $0x1a] sm:$0xff]
      %v3728 = vld [vmem:[#allocation4 + $0x22] sm:$0xff]
      %v3729 = vld [vmem:[#allocation4 + $0x2a] sm:$0xff]
      %v3730 = vld [vmem:[#allocation4 + $0x32] sm:$0xff]
      %v3731 = vld [vmem:[#allocation4 + $0x3a] sm:$0xff]
      %v3732 = vld [vmem:[#allocation4 + $0x42] sm:$0xff]
      %v3733 = vld [vmem:[#allocation4 + $0x4a] sm:$0xff]
      %v3734 = vld [vmem:[#allocation4 + $0x52] sm:$0xff]
      %v3735 = vld [vmem:[#allocation4 + $0x5a] sm:$0xff]
      %v3736 = vld [vmem:[#allocation4 + $0x62] sm:$0xff]
      %v3737 = vld [vmem:[#allocation4 + $0x6a] sm:$0xff]
      %v3738 = vld [vmem:[#allocation4 + $0x72] sm:$0xff]
      %v3739 = vld [vmem:[#allocation4 + $0x7a] sm:$0xff]
      %v3740 = vld [vmem:[#allocation4 + $0x82] sm:$0xff]
      %v3741 = vld [vmem:[#allocation4 + $0x8a] sm:$0xff]
      %v3742 = vld [vmem:[#allocation4 + $0x92] sm:$0xff]
      %v3743 = vld [vmem:[#allocation4 + $0x9a] sm:$0xff]
      %v3744 = vld [vmem:[#allocation4 + $0xa2] sm:$0xff]
      %v3745 = vld [vmem:[#allocation4 + $0xaa] sm:$0xff]
      %v3746 = vld [vmem:[#allocation4 + $0xb2] sm:$0xff]
      %v3747 = vld [vmem:[#allocation4 + $0xba] sm:$0xff]
      %v3748 = vld [vmem:[#allocation4 + $0xc2] sm:$0xff]
      %v3749 = vld [vmem:[#allocation4 + $0xca] sm:$0xff]
      %v3750 = vld [vmem:[#allocation4 + $0xd2] sm:$0xff]
      %v3751 = vld [vmem:[#allocation4 + $0xda] sm:$0xff]
      %v3752 = vld [vmem:[#allocation4 + $0xe2] sm:$0xff]
      %v3753 = vld [vmem:[#allocation4 + $0xea] sm:$0xff]
      %v3754 = vld [vmem:[#allocation4 + $0xf2] sm:$0xf]
      %s3755 = scalar_lea.vmem %s3, 64
      %v3756 = vld [vmem:[%s3755] sm:$0xff]
      %v3757 = vld [vmem:[%s3755 + $0x8] sm:$0xff]
      %v3758 = vld [vmem:[%s3755 + $0x10] sm:$0xff]
      %v3759 = vld [vmem:[%s3755 + $0x18] sm:$0xff]
      %v3761 = vsel %vm2812, %v3724, 0
      %v3764 = vsel %vm2812, %v3725, 0
      %v3767 = vsel %vm2812, %v3726, 0
      %v3770 = vsel %vm2812, %v3727, 0
      %v3773 = vsel %vm2812, %v3728, 0
      %v3776 = vsel %vm2812, %v3729, 0
      %v3779 = vsel %vm2812, %v3730, 0
      %v3782 = vsel %vm2812, %v3731, 0
      %v3785 = vsel %vm2812, %v3732, 0
      %v3788 = vsel %vm2812, %v3733, 0
      %v3791 = vsel %vm2812, %v3734, 0
      %v3794 = vsel %vm2812, %v3735, 0
      %v3797 = vsel %vm2812, %v3736, 0
      %v3800 = vsel %vm2812, %v3737, 0
      %v3803 = vsel %vm2812, %v3738, 0
      %v3806 = vsel %vm2812, %v3739, 0
      %v3809 = vsel %vm2812, %v3740, 0
      %v3812 = vsel %vm2812, %v3741, 0
      %v3815 = vsel %vm2812, %v3742, 0
      %v3818 = vsel %vm2812, %v3743, 0
      %v3821 = vsel %vm2812, %v3744, 0
      %v3824 = vsel %vm2812, %v3745, 0
      %v3827 = vsel %vm2812, %v3746, 0
      %v3830 = vsel %vm2812, %v3747, 0
      %v3833 = vsel %vm2812, %v3748, 0
      %v3836 = vsel %vm2812, %v3749, 0
      %v3839 = vsel %vm2812, %v3750, 0
      %v3842 = vsel %vm2812, %v3751, 0
      %v3845 = vsel %vm2812, %v3752, 0
      %v3848 = vsel %vm2812, %v3753, 0
      %v3851 = vsel %vm2812, %v3754, 0
      %3853 = vmatpush.msra.mxu0 0.0
      %3854 = vmatpush.msra.mxu0 0.0
      %3855 = vmatpush.msra.mxu0 0.0
      %3856 = vmatpush.msra.mxu0 0.0
      %3857 = vmatpush.msra.mxu0 0.0
      %3858 = vmatpush.msra.mxu0 0.0
      %3859 = vmatpush.msra.mxu0 0.0
      %3860 = vmatpush.msra.mxu0 0.0
      %3861 = vmatpush.msra.mxu0 0.0
      %3862 = vmatpush.msra.mxu0 0.0
      %3863 = vmatpush.msra.mxu0 0.0
      %3864 = vmatpush.msra.mxu0 0.0
      %3865 = vmatpush.msra.mxu0 %v3759
      %3866 = vmatpush.msra.mxu0 %v3758
      %3867 = vmatpush.msra.mxu0 %v3757
      %3868 = vmatpush.msra.mxu0 %v3756
      %3869 = vmatmul.f32.gmra.mxu0 %v3761
      %v3870 = vpop.f32.mrf.mxu0
      %v3871 = vadd.f32 0.0, %v3870
      %3872 = vmatmul.f32.gmra.mxu0 %v3764
      %v3873 = vpop.f32.mrf.mxu0
      %v3874 = vadd.f32 0.0, %v3873
      %3875 = vmatmul.f32.gmra.mxu0 %v3767
      %v3876 = vpop.f32.mrf.mxu0
      %v3877 = vadd.f32 0.0, %v3876
      %3878 = vmatmul.f32.gmra.mxu0 %v3770
      %v3879 = vpop.f32.mrf.mxu0
      %v3880 = vadd.f32 0.0, %v3879
      %3881 = vmatmul.f32.gmra.mxu0 %v3773
      %v3882 = vpop.f32.mrf.mxu0
      %v3883 = vadd.f32 0.0, %v3882
      %3884 = vmatmul.f32.gmra.mxu0 %v3776
      %v3885 = vpop.f32.mrf.mxu0
      %v3886 = vadd.f32 0.0, %v3885
      %3887 = vmatmul.f32.gmra.mxu0 %v3779
      %v3888 = vpop.f32.mrf.mxu0
      %v3889 = vadd.f32 0.0, %v3888
      %3890 = vmatmul.f32.gmra.mxu0 %v3782
      %v3891 = vpop.f32.mrf.mxu0
      %v3892 = vadd.f32 0.0, %v3891
      %3893 = vmatmul.f32.gmra.mxu0 %v3785
      %v3894 = vpop.f32.mrf.mxu0
      %v3895 = vadd.f32 0.0, %v3894
      %3896 = vmatmul.f32.gmra.mxu0 %v3788
      %v3897 = vpop.f32.mrf.mxu0
      %v3898 = vadd.f32 0.0, %v3897
      %3899 = vmatmul.f32.gmra.mxu0 %v3791
      %v3900 = vpop.f32.mrf.mxu0
      %v3901 = vadd.f32 0.0, %v3900
      %3902 = vmatmul.f32.gmra.mxu0 %v3794
      %v3903 = vpop.f32.mrf.mxu0
      %v3904 = vadd.f32 0.0, %v3903
      %3905 = vmatmul.f32.gmra.mxu0 %v3797
      %v3906 = vpop.f32.mrf.mxu0
      %v3907 = vadd.f32 0.0, %v3906
      %3908 = vmatmul.f32.gmra.mxu0 %v3800
      %v3909 = vpop.f32.mrf.mxu0
      %v3910 = vadd.f32 0.0, %v3909
      %3911 = vmatmul.f32.gmra.mxu0 %v3803
      %v3912 = vpop.f32.mrf.mxu0
      %v3913 = vadd.f32 0.0, %v3912
      %3914 = vmatmul.f32.gmra.mxu0 %v3806
      %v3915 = vpop.f32.mrf.mxu0
      %v3916 = vadd.f32 0.0, %v3915
      %3917 = vmatmul.f32.gmra.mxu0 %v3809
      %v3918 = vpop.f32.mrf.mxu0
      %v3919 = vadd.f32 0.0, %v3918
      %3920 = vmatmul.f32.gmra.mxu0 %v3812
      %v3921 = vpop.f32.mrf.mxu0
      %v3922 = vadd.f32 0.0, %v3921
      %3923 = vmatmul.f32.gmra.mxu0 %v3815
      %v3924 = vpop.f32.mrf.mxu0
      %v3925 = vadd.f32 0.0, %v3924
      %3926 = vmatmul.f32.gmra.mxu0 %v3818
      %v3927 = vpop.f32.mrf.mxu0
      %v3928 = vadd.f32 0.0, %v3927
      %3929 = vmatmul.f32.gmra.mxu0 %v3821
      %v3930 = vpop.f32.mrf.mxu0
      %v3931 = vadd.f32 0.0, %v3930
      %3932 = vmatmul.f32.gmra.mxu0 %v3824
      %v3933 = vpop.f32.mrf.mxu0
      %v3934 = vadd.f32 0.0, %v3933
      %3935 = vmatmul.f32.gmra.mxu0 %v3827
      %v3936 = vpop.f32.mrf.mxu0
      %v3937 = vadd.f32 0.0, %v3936
      %3938 = vmatmul.f32.gmra.mxu0 %v3830
      %v3939 = vpop.f32.mrf.mxu0
      %v3940 = vadd.f32 0.0, %v3939
      %3941 = vmatmul.f32.gmra.mxu0 %v3833
      %v3942 = vpop.f32.mrf.mxu0
      %v3943 = vadd.f32 0.0, %v3942
      %3944 = vmatmul.f32.gmra.mxu0 %v3836
      %v3945 = vpop.f32.mrf.mxu0
      %v3946 = vadd.f32 0.0, %v3945
      %3947 = vmatmul.f32.gmra.mxu0 %v3839
      %v3948 = vpop.f32.mrf.mxu0
      %v3949 = vadd.f32 0.0, %v3948
      %3950 = vmatmul.f32.gmra.mxu0 %v3842
      %v3951 = vpop.f32.mrf.mxu0
      %v3952 = vadd.f32 0.0, %v3951
      %3953 = vmatmul.f32.gmra.mxu0 %v3845
      %v3954 = vpop.f32.mrf.mxu0
      %v3955 = vadd.f32 0.0, %v3954
      %3956 = vmatmul.f32.gmra.mxu0 %v3848
      %v3957 = vpop.f32.mrf.mxu0
      %v3958 = vadd.f32 0.0, %v3957
      %3959 = vmatmul.f32.gmra.mxu0 %v3851
      %v3960 = vpop.f32.mrf.mxu0
      %v3961 = vadd.f32 0.0, %v3960
      %3962 = vdwg.mxu0
      %v3963 = vadd.f32 %v3632, %v3871
      %v3964 = vadd.f32 %v3635, %v3874
      %v3965 = vadd.f32 %v3638, %v3877
      %v3966 = vadd.f32 %v3641, %v3880
      %v3967 = vadd.f32 %v3644, %v3883
      %v3968 = vadd.f32 %v3647, %v3886
      %v3969 = vadd.f32 %v3650, %v3889
      %v3970 = vadd.f32 %v3653, %v3892
      %v3971 = vadd.f32 %v3656, %v3895
      %v3972 = vadd.f32 %v3659, %v3898
      %v3973 = vadd.f32 %v3662, %v3901
      %v3974 = vadd.f32 %v3665, %v3904
      %v3975 = vadd.f32 %v3668, %v3907
      %v3976 = vadd.f32 %v3671, %v3910
      %v3977 = vadd.f32 %v3674, %v3913
      %v3978 = vadd.f32 %v3677, %v3916
      %v3979 = vadd.f32 %v3680, %v3919
      %v3980 = vadd.f32 %v3683, %v3922
      %v3981 = vadd.f32 %v3686, %v3925
      %v3982 = vadd.f32 %v3689, %v3928
      %v3983 = vadd.f32 %v3692, %v3931
      %v3984 = vadd.f32 %v3695, %v3934
      %v3985 = vadd.f32 %v3698, %v3937
      %v3986 = vadd.f32 %v3701, %v3940
      %v3987 = vadd.f32 %v3704, %v3943
      %v3988 = vadd.f32 %v3707, %v3946
      %v3989 = vadd.f32 %v3710, %v3949
      %v3990 = vadd.f32 %v3713, %v3952
      %v3991 = vadd.f32 %v3716, %v3955
      %v3992 = vadd.f32 %v3719, %v3958
      %v3993 = vadd.f32 %v3722, %v3961
      %v3994 = vld [vmem:[#allocation4 + $0x3] sm:$0xff]
      %v3995 = vld [vmem:[#allocation4 + $0xb] sm:$0xff]
      %v3996 = vld [vmem:[#allocation4 + $0x13] sm:$0xff]
      %v3997 = vld [vmem:[#allocation4 + $0x1b] sm:$0xff]
      %v3998 = vld [vmem:[#allocation4 + $0x23] sm:$0xff]
      %v3999 = vld [vmem:[#allocation4 + $0x2b] sm:$0xff]
      %v4000 = vld [vmem:[#allocation4 + $0x33] sm:$0xff]
      %v4001 = vld [vmem:[#allocation4 + $0x3b] sm:$0xff]
      %v4002 = vld [vmem:[#allocation4 + $0x43] sm:$0xff]
      %v4003 = vld [vmem:[#allocation4 + $0x4b] sm:$0xff]
      %v4004 = vld [vmem:[#allocation4 + $0x53] sm:$0xff]
      %v4005 = vld [vmem:[#allocation4 + $0x5b] sm:$0xff]
      %v4006 = vld [vmem:[#allocation4 + $0x63] sm:$0xff]
      %v4007 = vld [vmem:[#allocation4 + $0x6b] sm:$0xff]
      %v4008 = vld [vmem:[#allocation4 + $0x73] sm:$0xff]
      %v4009 = vld [vmem:[#allocation4 + $0x7b] sm:$0xff]
      %v4010 = vld [vmem:[#allocation4 + $0x83] sm:$0xff]
      %v4011 = vld [vmem:[#allocation4 + $0x8b] sm:$0xff]
      %v4012 = vld [vmem:[#allocation4 + $0x93] sm:$0xff]
      %v4013 = vld [vmem:[#allocation4 + $0x9b] sm:$0xff]
      %v4014 = vld [vmem:[#allocation4 + $0xa3] sm:$0xff]
      %v4015 = vld [vmem:[#allocation4 + $0xab] sm:$0xff]
      %v4016 = vld [vmem:[#allocation4 + $0xb3] sm:$0xff]
      %v4017 = vld [vmem:[#allocation4 + $0xbb] sm:$0xff]
      %v4018 = vld [vmem:[#allocation4 + $0xc3] sm:$0xff]
      %v4019 = vld [vmem:[#allocation4 + $0xcb] sm:$0xff]
      %v4020 = vld [vmem:[#allocation4 + $0xd3] sm:$0xff]
      %v4021 = vld [vmem:[#allocation4 + $0xdb] sm:$0xff]
      %v4022 = vld [vmem:[#allocation4 + $0xe3] sm:$0xff]
      %v4023 = vld [vmem:[#allocation4 + $0xeb] sm:$0xff]
      %v4024 = vld [vmem:[#allocation4 + $0xf3] sm:$0xf]
      %s4025 = scalar_lea.vmem %s3, 96
      %v4026 = vld [vmem:[%s4025] sm:$0xff]
      %v4027 = vld [vmem:[%s4025 + $0x8] sm:$0xff]
      %v4028 = vld [vmem:[%s4025 + $0x10] sm:$0xff]
      %v4029 = vld [vmem:[%s4025 + $0x18] sm:$0xff]
      %v4031 = vsel %vm2812, %v3994, 0
      %v4034 = vsel %vm2812, %v3995, 0
      %v4037 = vsel %vm2812, %v3996, 0
      %v4040 = vsel %vm2812, %v3997, 0
      %v4043 = vsel %vm2812, %v3998, 0
      %v4046 = vsel %vm2812, %v3999, 0
      %v4049 = vsel %vm2812, %v4000, 0
      %v4052 = vsel %vm2812, %v4001, 0
      %v4055 = vsel %vm2812, %v4002, 0
      %v4058 = vsel %vm2812, %v4003, 0
      %v4061 = vsel %vm2812, %v4004, 0
      %v4064 = vsel %vm2812, %v4005, 0
      %v4067 = vsel %vm2812, %v4006, 0
      %v4070 = vsel %vm2812, %v4007, 0
      %v4073 = vsel %vm2812, %v4008, 0
      %v4076 = vsel %vm2812, %v4009, 0
      %v4079 = vsel %vm2812, %v4010, 0
      %v4082 = vsel %vm2812, %v4011, 0
      %v4085 = vsel %vm2812, %v4012, 0
      %v4088 = vsel %vm2812, %v4013, 0
      %v4091 = vsel %vm2812, %v4014, 0
      %v4094 = vsel %vm2812, %v4015, 0
      %v4097 = vsel %vm2812, %v4016, 0
      %v4100 = vsel %vm2812, %v4017, 0
      %v4103 = vsel %vm2812, %v4018, 0
      %v4106 = vsel %vm2812, %v4019, 0
      %v4109 = vsel %vm2812, %v4020, 0
      %v4112 = vsel %vm2812, %v4021, 0
      %v4115 = vsel %vm2812, %v4022, 0
      %v4118 = vsel %vm2812, %v4023, 0
      %v4121 = vsel %vm2812, %v4024, 0
      %4123 = vmatpush.msra.mxu0 0.0
      %4124 = vmatpush.msra.mxu0 0.0
      %4125 = vmatpush.msra.mxu0 0.0
      %4126 = vmatpush.msra.mxu0 0.0
      %4127 = vmatpush.msra.mxu0 0.0
      %4128 = vmatpush.msra.mxu0 0.0
      %4129 = vmatpush.msra.mxu0 0.0
      %4130 = vmatpush.msra.mxu0 0.0
      %4131 = vmatpush.msra.mxu0 0.0
      %4132 = vmatpush.msra.mxu0 0.0
      %4133 = vmatpush.msra.mxu0 0.0
      %4134 = vmatpush.msra.mxu0 0.0
      %4135 = vmatpush.msra.mxu0 %v4029
      %4136 = vmatpush.msra.mxu0 %v4028
      %4137 = vmatpush.msra.mxu0 %v4027
      %4138 = vmatpush.msra.mxu0 %v4026
      %4139 = vmatmul.f32.gmra.mxu0 %v4031
      %v4140 = vpop.f32.mrf.mxu0
      %v4141 = vadd.f32 0.0, %v4140
      %4142 = vmatmul.f32.gmra.mxu0 %v4034
      %v4143 = vpop.f32.mrf.mxu0
      %v4144 = vadd.f32 0.0, %v4143
      %4145 = vmatmul.f32.gmra.mxu0 %v4037
      %v4146 = vpop.f32.mrf.mxu0
      %v4147 = vadd.f32 0.0, %v4146
      %4148 = vmatmul.f32.gmra.mxu0 %v4040
      %v4149 = vpop.f32.mrf.mxu0
      %v4150 = vadd.f32 0.0, %v4149
      %4151 = vmatmul.f32.gmra.mxu0 %v4043
      %v4152 = vpop.f32.mrf.mxu0
      %v4153 = vadd.f32 0.0, %v4152
      %4154 = vmatmul.f32.gmra.mxu0 %v4046
      %v4155 = vpop.f32.mrf.mxu0
      %v4156 = vadd.f32 0.0, %v4155
      %4157 = vmatmul.f32.gmra.mxu0 %v4049
      %v4158 = vpop.f32.mrf.mxu0
      %v4159 = vadd.f32 0.0, %v4158
      %4160 = vmatmul.f32.gmra.mxu0 %v4052
      %v4161 = vpop.f32.mrf.mxu0
      %v4162 = vadd.f32 0.0, %v4161
      %4163 = vmatmul.f32.gmra.mxu0 %v4055
      %v4164 = vpop.f32.mrf.mxu0
      %v4165 = vadd.f32 0.0, %v4164
      %4166 = vmatmul.f32.gmra.mxu0 %v4058
      %v4167 = vpop.f32.mrf.mxu0
      %v4168 = vadd.f32 0.0, %v4167
      %4169 = vmatmul.f32.gmra.mxu0 %v4061
      %v4170 = vpop.f32.mrf.mxu0
      %v4171 = vadd.f32 0.0, %v4170
      %4172 = vmatmul.f32.gmra.mxu0 %v4064
      %v4173 = vpop.f32.mrf.mxu0
      %v4174 = vadd.f32 0.0, %v4173
      %4175 = vmatmul.f32.gmra.mxu0 %v4067
      %v4176 = vpop.f32.mrf.mxu0
      %v4177 = vadd.f32 0.0, %v4176
      %4178 = vmatmul.f32.gmra.mxu0 %v4070
      %v4179 = vpop.f32.mrf.mxu0
      %v4180 = vadd.f32 0.0, %v4179
      %4181 = vmatmul.f32.gmra.mxu0 %v4073
      %v4182 = vpop.f32.mrf.mxu0
      %v4183 = vadd.f32 0.0, %v4182
      %4184 = vmatmul.f32.gmra.mxu0 %v4076
      %v4185 = vpop.f32.mrf.mxu0
      %v4186 = vadd.f32 0.0, %v4185
      %4187 = vmatmul.f32.gmra.mxu0 %v4079
      %v4188 = vpop.f32.mrf.mxu0
      %v4189 = vadd.f32 0.0, %v4188
      %4190 = vmatmul.f32.gmra.mxu0 %v4082
      %v4191 = vpop.f32.mrf.mxu0
      %v4192 = vadd.f32 0.0, %v4191
      %4193 = vmatmul.f32.gmra.mxu0 %v4085
      %v4194 = vpop.f32.mrf.mxu0
      %v4195 = vadd.f32 0.0, %v4194
      %4196 = vmatmul.f32.gmra.mxu0 %v4088
      %v4197 = vpop.f32.mrf.mxu0
      %v4198 = vadd.f32 0.0, %v4197
      %4199 = vmatmul.f32.gmra.mxu0 %v4091
      %v4200 = vpop.f32.mrf.mxu0
      %v4201 = vadd.f32 0.0, %v4200
      %4202 = vmatmul.f32.gmra.mxu0 %v4094
      %v4203 = vpop.f32.mrf.mxu0
      %v4204 = vadd.f32 0.0, %v4203
      %4205 = vmatmul.f32.gmra.mxu0 %v4097
      %v4206 = vpop.f32.mrf.mxu0
      %v4207 = vadd.f32 0.0, %v4206
      %4208 = vmatmul.f32.gmra.mxu0 %v4100
      %v4209 = vpop.f32.mrf.mxu0
      %v4210 = vadd.f32 0.0, %v4209
      %4211 = vmatmul.f32.gmra.mxu0 %v4103
      %v4212 = vpop.f32.mrf.mxu0
      %v4213 = vadd.f32 0.0, %v4212
      %4214 = vmatmul.f32.gmra.mxu0 %v4106
      %v4215 = vpop.f32.mrf.mxu0
      %v4216 = vadd.f32 0.0, %v4215
      %4217 = vmatmul.f32.gmra.mxu0 %v4109
      %v4218 = vpop.f32.mrf.mxu0
      %v4219 = vadd.f32 0.0, %v4218
      %4220 = vmatmul.f32.gmra.mxu0 %v4112
      %v4221 = vpop.f32.mrf.mxu0
      %v4222 = vadd.f32 0.0, %v4221
      %4223 = vmatmul.f32.gmra.mxu0 %v4115
      %v4224 = vpop.f32.mrf.mxu0
      %v4225 = vadd.f32 0.0, %v4224
      %4226 = vmatmul.f32.gmra.mxu0 %v4118
      %v4227 = vpop.f32.mrf.mxu0
      %v4228 = vadd.f32 0.0, %v4227
      %4229 = vmatmul.f32.gmra.mxu0 %v4121
      %v4230 = vpop.f32.mrf.mxu0
      %v4231 = vadd.f32 0.0, %v4230
      %4232 = vdwg.mxu0
      %v4233 = vadd.f32 %v3963, %v4141
      %v4234 = vadd.f32 %v3964, %v4144
      %v4235 = vadd.f32 %v3965, %v4147
      %v4236 = vadd.f32 %v3966, %v4150
      %v4237 = vadd.f32 %v3967, %v4153
      %v4238 = vadd.f32 %v3968, %v4156
      %v4239 = vadd.f32 %v3969, %v4159
      %v4240 = vadd.f32 %v3970, %v4162
      %v4241 = vadd.f32 %v3971, %v4165
      %v4242 = vadd.f32 %v3972, %v4168
      %v4243 = vadd.f32 %v3973, %v4171
      %v4244 = vadd.f32 %v3974, %v4174
      %v4245 = vadd.f32 %v3975, %v4177
      %v4246 = vadd.f32 %v3976, %v4180
      %v4247 = vadd.f32 %v3977, %v4183
      %v4248 = vadd.f32 %v3978, %v4186
      %v4249 = vadd.f32 %v3979, %v4189
      %v4250 = vadd.f32 %v3980, %v4192
      %v4251 = vadd.f32 %v3981, %v4195
      %v4252 = vadd.f32 %v3982, %v4198
      %v4253 = vadd.f32 %v3983, %v4201
      %v4254 = vadd.f32 %v3984, %v4204
      %v4255 = vadd.f32 %v3985, %v4207
      %v4256 = vadd.f32 %v3986, %v4210
      %v4257 = vadd.f32 %v3987, %v4213
      %v4258 = vadd.f32 %v3988, %v4216
      %v4259 = vadd.f32 %v3989, %v4219
      %v4260 = vadd.f32 %v3990, %v4222
      %v4261 = vadd.f32 %v3991, %v4225
      %v4262 = vadd.f32 %v3992, %v4228
      %v4263 = vadd.f32 %v3993, %v4231
      %v4264 = vld [vmem:[#allocation4 + $0x4] sm:$0xff]
      %v4265 = vld [vmem:[#allocation4 + $0xc] sm:$0xff]
      %v4266 = vld [vmem:[#allocation4 + $0x14] sm:$0xff]
      %v4267 = vld [vmem:[#allocation4 + $0x1c] sm:$0xff]
      %v4268 = vld [vmem:[#allocation4 + $0x24] sm:$0xff]
      %v4269 = vld [vmem:[#allocation4 + $0x2c] sm:$0xff]
      %v4270 = vld [vmem:[#allocation4 + $0x34] sm:$0xff]
      %v4271 = vld [vmem:[#allocation4 + $0x3c] sm:$0xff]
      %v4272 = vld [vmem:[#allocation4 + $0x44] sm:$0xff]
      %v4273 = vld [vmem:[#allocation4 + $0x4c] sm:$0xff]
      %v4274 = vld [vmem:[#allocation4 + $0x54] sm:$0xff]
      %v4275 = vld [vmem:[#allocation4 + $0x5c] sm:$0xff]
      %v4276 = vld [vmem:[#allocation4 + $0x64] sm:$0xff]
      %v4277 = vld [vmem:[#allocation4 + $0x6c] sm:$0xff]
      %v4278 = vld [vmem:[#allocation4 + $0x74] sm:$0xff]
      %v4279 = vld [vmem:[#allocation4 + $0x7c] sm:$0xff]
      %v4280 = vld [vmem:[#allocation4 + $0x84] sm:$0xff]
      %v4281 = vld [vmem:[#allocation4 + $0x8c] sm:$0xff]
      %v4282 = vld [vmem:[#allocation4 + $0x94] sm:$0xff]
      %v4283 = vld [vmem:[#allocation4 + $0x9c] sm:$0xff]
      %v4284 = vld [vmem:[#allocation4 + $0xa4] sm:$0xff]
      %v4285 = vld [vmem:[#allocation4 + $0xac] sm:$0xff]
      %v4286 = vld [vmem:[#allocation4 + $0xb4] sm:$0xff]
      %v4287 = vld [vmem:[#allocation4 + $0xbc] sm:$0xff]
      %v4288 = vld [vmem:[#allocation4 + $0xc4] sm:$0xff]
      %v4289 = vld [vmem:[#allocation4 + $0xcc] sm:$0xff]
      %v4290 = vld [vmem:[#allocation4 + $0xd4] sm:$0xff]
      %v4291 = vld [vmem:[#allocation4 + $0xdc] sm:$0xff]
      %v4292 = vld [vmem:[#allocation4 + $0xe4] sm:$0xff]
      %v4293 = vld [vmem:[#allocation4 + $0xec] sm:$0xff]
      %v4294 = vld [vmem:[#allocation4 + $0xf4] sm:$0xf]
      %s4295 = scalar_lea.vmem %s3, 128
      %v4296 = vld [vmem:[%s4295] sm:$0xff]
      %v4297 = vld [vmem:[%s4295 + $0x8] sm:$0xff]
      %v4298 = vld [vmem:[%s4295 + $0x10] sm:$0xff]
      %v4299 = vld [vmem:[%s4295 + $0x18] sm:$0xff]
      %v4301 = vsel %vm2812, %v4264, 0
      %v4304 = vsel %vm2812, %v4265, 0
      %v4307 = vsel %vm2812, %v4266, 0
      %v4310 = vsel %vm2812, %v4267, 0
      %v4313 = vsel %vm2812, %v4268, 0
      %v4316 = vsel %vm2812, %v4269, 0
      %v4319 = vsel %vm2812, %v4270, 0
      %v4322 = vsel %vm2812, %v4271, 0
      %v4325 = vsel %vm2812, %v4272, 0
      %v4328 = vsel %vm2812, %v4273, 0
      %v4331 = vsel %vm2812, %v4274, 0
      %v4334 = vsel %vm2812, %v4275, 0
      %v4337 = vsel %vm2812, %v4276, 0
      %v4340 = vsel %vm2812, %v4277, 0
      %v4343 = vsel %vm2812, %v4278, 0
      %v4346 = vsel %vm2812, %v4279, 0
      %v4349 = vsel %vm2812, %v4280, 0
      %v4352 = vsel %vm2812, %v4281, 0
      %v4355 = vsel %vm2812, %v4282, 0
      %v4358 = vsel %vm2812, %v4283, 0
      %v4361 = vsel %vm2812, %v4284, 0
      %v4364 = vsel %vm2812, %v4285, 0
      %v4367 = vsel %vm2812, %v4286, 0
      %v4370 = vsel %vm2812, %v4287, 0
      %v4373 = vsel %vm2812, %v4288, 0
      %v4376 = vsel %vm2812, %v4289, 0
      %v4379 = vsel %vm2812, %v4290, 0
      %v4382 = vsel %vm2812, %v4291, 0
      %v4385 = vsel %vm2812, %v4292, 0
      %v4388 = vsel %vm2812, %v4293, 0
      %v4391 = vsel %vm2812, %v4294, 0
      %4393 = vmatpush.msra.mxu0 0.0
      %4394 = vmatpush.msra.mxu0 0.0
      %4395 = vmatpush.msra.mxu0 0.0
      %4396 = vmatpush.msra.mxu0 0.0
      %4397 = vmatpush.msra.mxu0 0.0
      %4398 = vmatpush.msra.mxu0 0.0
      %4399 = vmatpush.msra.mxu0 0.0
      %4400 = vmatpush.msra.mxu0 0.0
      %4401 = vmatpush.msra.mxu0 0.0
      %4402 = vmatpush.msra.mxu0 0.0
      %4403 = vmatpush.msra.mxu0 0.0
      %4404 = vmatpush.msra.mxu0 0.0
      %4405 = vmatpush.msra.mxu0 %v4299
      %4406 = vmatpush.msra.mxu0 %v4298
      %4407 = vmatpush.msra.mxu0 %v4297
      %4408 = vmatpush.msra.mxu0 %v4296
      %4409 = vmatmul.f32.gmra.mxu0 %v4301
      %v4410 = vpop.f32.mrf.mxu0
      %v4411 = vadd.f32 0.0, %v4410
      %4412 = vmatmul.f32.gmra.mxu0 %v4304
      %v4413 = vpop.f32.mrf.mxu0
      %v4414 = vadd.f32 0.0, %v4413
      %4415 = vmatmul.f32.gmra.mxu0 %v4307
      %v4416 = vpop.f32.mrf.mxu0
      %v4417 = vadd.f32 0.0, %v4416
      %4418 = vmatmul.f32.gmra.mxu0 %v4310
      %v4419 = vpop.f32.mrf.mxu0
      %v4420 = vadd.f32 0.0, %v4419
      %4421 = vmatmul.f32.gmra.mxu0 %v4313
      %v4422 = vpop.f32.mrf.mxu0
      %v4423 = vadd.f32 0.0, %v4422
      %4424 = vmatmul.f32.gmra.mxu0 %v4316
      %v4425 = vpop.f32.mrf.mxu0
      %v4426 = vadd.f32 0.0, %v4425
      %4427 = vmatmul.f32.gmra.mxu0 %v4319
      %v4428 = vpop.f32.mrf.mxu0
      %v4429 = vadd.f32 0.0, %v4428
      %4430 = vmatmul.f32.gmra.mxu0 %v4322
      %v4431 = vpop.f32.mrf.mxu0
      %v4432 = vadd.f32 0.0, %v4431
      %4433 = vmatmul.f32.gmra.mxu0 %v4325
      %v4434 = vpop.f32.mrf.mxu0
      %v4435 = vadd.f32 0.0, %v4434
      %4436 = vmatmul.f32.gmra.mxu0 %v4328
      %v4437 = vpop.f32.mrf.mxu0
      %v4438 = vadd.f32 0.0, %v4437
      %4439 = vmatmul.f32.gmra.mxu0 %v4331
      %v4440 = vpop.f32.mrf.mxu0
      %v4441 = vadd.f32 0.0, %v4440
      %4442 = vmatmul.f32.gmra.mxu0 %v4334
      %v4443 = vpop.f32.mrf.mxu0
      %v4444 = vadd.f32 0.0, %v4443
      %4445 = vmatmul.f32.gmra.mxu0 %v4337
      %v4446 = vpop.f32.mrf.mxu0
      %v4447 = vadd.f32 0.0, %v4446
      %4448 = vmatmul.f32.gmra.mxu0 %v4340
      %v4449 = vpop.f32.mrf.mxu0
      %v4450 = vadd.f32 0.0, %v4449
      %4451 = vmatmul.f32.gmra.mxu0 %v4343
      %v4452 = vpop.f32.mrf.mxu0
      %v4453 = vadd.f32 0.0, %v4452
      %4454 = vmatmul.f32.gmra.mxu0 %v4346
      %v4455 = vpop.f32.mrf.mxu0
      %v4456 = vadd.f32 0.0, %v4455
      %4457 = vmatmul.f32.gmra.mxu0 %v4349
      %v4458 = vpop.f32.mrf.mxu0
      %v4459 = vadd.f32 0.0, %v4458
      %4460 = vmatmul.f32.gmra.mxu0 %v4352
      %v4461 = vpop.f32.mrf.mxu0
      %v4462 = vadd.f32 0.0, %v4461
      %4463 = vmatmul.f32.gmra.mxu0 %v4355
      %v4464 = vpop.f32.mrf.mxu0
      %v4465 = vadd.f32 0.0, %v4464
      %4466 = vmatmul.f32.gmra.mxu0 %v4358
      %v4467 = vpop.f32.mrf.mxu0
      %v4468 = vadd.f32 0.0, %v4467
      %4469 = vmatmul.f32.gmra.mxu0 %v4361
      %v4470 = vpop.f32.mrf.mxu0
      %v4471 = vadd.f32 0.0, %v4470
      %4472 = vmatmul.f32.gmra.mxu0 %v4364
      %v4473 = vpop.f32.mrf.mxu0
      %v4474 = vadd.f32 0.0, %v4473
      %4475 = vmatmul.f32.gmra.mxu0 %v4367
      %v4476 = vpop.f32.mrf.mxu0
      %v4477 = vadd.f32 0.0, %v4476
      %4478 = vmatmul.f32.gmra.mxu0 %v4370
      %v4479 = vpop.f32.mrf.mxu0
      %v4480 = vadd.f32 0.0, %v4479
      %4481 = vmatmul.f32.gmra.mxu0 %v4373
      %v4482 = vpop.f32.mrf.mxu0
      %v4483 = vadd.f32 0.0, %v4482
      %4484 = vmatmul.f32.gmra.mxu0 %v4376
      %v4485 = vpop.f32.mrf.mxu0
      %v4486 = vadd.f32 0.0, %v4485
      %4487 = vmatmul.f32.gmra.mxu0 %v4379
      %v4488 = vpop.f32.mrf.mxu0
      %v4489 = vadd.f32 0.0, %v4488
      %4490 = vmatmul.f32.gmra.mxu0 %v4382
      %v4491 = vpop.f32.mrf.mxu0
      %v4492 = vadd.f32 0.0, %v4491
      %4493 = vmatmul.f32.gmra.mxu0 %v4385
      %v4494 = vpop.f32.mrf.mxu0
      %v4495 = vadd.f32 0.0, %v4494
      %4496 = vmatmul.f32.gmra.mxu0 %v4388
      %v4497 = vpop.f32.mrf.mxu0
      %v4498 = vadd.f32 0.0, %v4497
      %4499 = vmatmul.f32.gmra.mxu0 %v4391
      %v4500 = vpop.f32.mrf.mxu0
      %v4501 = vadd.f32 0.0, %v4500
      %4502 = vdwg.mxu0
      %v4503 = vadd.f32 %v4233, %v4411
      %v4504 = vadd.f32 %v4234, %v4414
      %v4505 = vadd.f32 %v4235, %v4417
      %v4506 = vadd.f32 %v4236, %v4420
      %v4507 = vadd.f32 %v4237, %v4423
      %v4508 = vadd.f32 %v4238, %v4426
      %v4509 = vadd.f32 %v4239, %v4429
      %v4510 = vadd.f32 %v4240, %v4432
      %v4511 = vadd.f32 %v4241, %v4435
      %v4512 = vadd.f32 %v4242, %v4438
      %v4513 = vadd.f32 %v4243, %v4441
      %v4514 = vadd.f32 %v4244, %v4444
      %v4515 = vadd.f32 %v4245, %v4447
      %v4516 = vadd.f32 %v4246, %v4450
      %v4517 = vadd.f32 %v4247, %v4453
      %v4518 = vadd.f32 %v4248, %v4456
      %v4519 = vadd.f32 %v4249, %v4459
      %v4520 = vadd.f32 %v4250, %v4462
      %v4521 = vadd.f32 %v4251, %v4465
      %v4522 = vadd.f32 %v4252, %v4468
      %v4523 = vadd.f32 %v4253, %v4471
      %v4524 = vadd.f32 %v4254, %v4474
      %v4525 = vadd.f32 %v4255, %v4477
      %v4526 = vadd.f32 %v4256, %v4480
      %v4527 = vadd.f32 %v4257, %v4483
      %v4528 = vadd.f32 %v4258, %v4486
      %v4529 = vadd.f32 %v4259, %v4489
      %v4530 = vadd.f32 %v4260, %v4492
      %v4531 = vadd.f32 %v4261, %v4495
      %v4532 = vadd.f32 %v4262, %v4498
      %v4533 = vadd.f32 %v4263, %v4501
      %v4534 = vld [vmem:[%s4] sm:$0x1]
      %v4536 = vperm.slane %v4534, 0
      %v4538 = vadd.f32 %v4503, %v4536
      %v4539 = vadd.f32 %v4504, %v4536
      %v4540 = vadd.f32 %v4505, %v4536
      %v4541 = vadd.f32 %v4506, %v4536
      %v4542 = vadd.f32 %v4507, %v4536
      %v4543 = vadd.f32 %v4508, %v4536
      %v4544 = vadd.f32 %v4509, %v4536
      %v4545 = vadd.f32 %v4510, %v4536
      %v4546 = vadd.f32 %v4511, %v4536
      %v4547 = vadd.f32 %v4512, %v4536
      %v4548 = vadd.f32 %v4513, %v4536
      %v4549 = vadd.f32 %v4514, %v4536
      %v4550 = vadd.f32 %v4515, %v4536
      %v4551 = vadd.f32 %v4516, %v4536
      %v4552 = vadd.f32 %v4517, %v4536
      %v4553 = vadd.f32 %v4518, %v4536
      %v4554 = vadd.f32 %v4519, %v4536
      %v4555 = vadd.f32 %v4520, %v4536
      %v4556 = vadd.f32 %v4521, %v4536
      %v4557 = vadd.f32 %v4522, %v4536
      %v4558 = vadd.f32 %v4523, %v4536
      %v4559 = vadd.f32 %v4524, %v4536
      %v4560 = vadd.f32 %v4525, %v4536
      %v4561 = vadd.f32 %v4526, %v4536
      %v4562 = vadd.f32 %v4527, %v4536
      %v4563 = vadd.f32 %v4528, %v4536
      %v4564 = vadd.f32 %v4529, %v4536
      %v4565 = vadd.f32 %v4530, %v4536
      %v4566 = vadd.f32 %v4531, %v4536
      %v4567 = vadd.f32 %v4532, %v4536
      %v4568 = vadd.f32 %v4533, %v4536
      %vm4569 = vcmask 523264
      %4570 = vst.msk [vmem:[#allocation5] sm:$0xff] %vm4569, %v4538
      %4571 = vst.msk [vmem:[#allocation5 + $0x8] sm:$0xff] %vm4569, %v4539
      %4572 = vst.msk [vmem:[#allocation5 + $0x10] sm:$0xff] %vm4569, %v4540
      %4573 = vst.msk [vmem:[#allocation5 + $0x18] sm:$0xff] %vm4569, %v4541
      %4574 = vst.msk [vmem:[#allocation5 + $0x20] sm:$0xff] %vm4569, %v4542
      %4575 = vst.msk [vmem:[#allocation5 + $0x28] sm:$0xff] %vm4569, %v4543
      %4576 = vst.msk [vmem:[#allocation5 + $0x30] sm:$0xff] %vm4569, %v4544
      %4577 = vst.msk [vmem:[#allocation5 + $0x38] sm:$0xff] %vm4569, %v4545
      %4578 = vst.msk [vmem:[#allocation5 + $0x40] sm:$0xff] %vm4569, %v4546
      %4579 = vst.msk [vmem:[#allocation5 + $0x48] sm:$0xff] %vm4569, %v4547
      %4580 = vst.msk [vmem:[#allocation5 + $0x50] sm:$0xff] %vm4569, %v4548
      %4581 = vst.msk [vmem:[#allocation5 + $0x58] sm:$0xff] %vm4569, %v4549
      %4582 = vst.msk [vmem:[#allocation5 + $0x60] sm:$0xff] %vm4569, %v4550
      %4583 = vst.msk [vmem:[#allocation5 + $0x68] sm:$0xff] %vm4569, %v4551
      %4584 = vst.msk [vmem:[#allocation5 + $0x70] sm:$0xff] %vm4569, %v4552
      %4585 = vst.msk [vmem:[#allocation5 + $0x78] sm:$0xff] %vm4569, %v4553
      %4586 = vst.msk [vmem:[#allocation5 + $0x80] sm:$0xff] %vm4569, %v4554
      %4587 = vst.msk [vmem:[#allocation5 + $0x88] sm:$0xff] %vm4569, %v4555
      %4588 = vst.msk [vmem:[#allocation5 + $0x90] sm:$0xff] %vm4569, %v4556
      %4589 = vst.msk [vmem:[#allocation5 + $0x98] sm:$0xff] %vm4569, %v4557
      %4590 = vst.msk [vmem:[#allocation5 + $0xa0] sm:$0xff] %vm4569, %v4558
      %4591 = vst.msk [vmem:[#allocation5 + $0xa8] sm:$0xff] %vm4569, %v4559
      %4592 = vst.msk [vmem:[#allocation5 + $0xb0] sm:$0xff] %vm4569, %v4560
      %4593 = vst.msk [vmem:[#allocation5 + $0xb8] sm:$0xff] %vm4569, %v4561
      %4594 = vst.msk [vmem:[#allocation5 + $0xc0] sm:$0xff] %vm4569, %v4562
      %4595 = vst.msk [vmem:[#allocation5 + $0xc8] sm:$0xff] %vm4569, %v4563
      %4596 = vst.msk [vmem:[#allocation5 + $0xd0] sm:$0xff] %vm4569, %v4564
      %4597 = vst.msk [vmem:[#allocation5 + $0xd8] sm:$0xff] %vm4569, %v4565
      %4598 = vst.msk [vmem:[#allocation5 + $0xe0] sm:$0xff] %vm4569, %v4566
      %4599 = vst.msk [vmem:[#allocation5 + $0xe8] sm:$0xff] %vm4569, %v4567
      %vm4600 = vcmask 519168
      %4601 = vst.msk [vmem:[#allocation5 + $0xf0] sm:$0xf] %vm4600, %v4568
      %v4602 = vld [vmem:[#allocation5] sm:$0xff]
      %v4603 = vld [vmem:[#allocation5 + $0x8] sm:$0xff]
      %v4604 = vld [vmem:[#allocation5 + $0x10] sm:$0xff]
      %v4605 = vld [vmem:[#allocation5 + $0x18] sm:$0xff]
      %v4606 = vld [vmem:[#allocation5 + $0x20] sm:$0xff]
      %v4607 = vld [vmem:[#allocation5 + $0x28] sm:$0xff]
      %v4608 = vld [vmem:[#allocation5 + $0x30] sm:$0xff]
      %v4609 = vld [vmem:[#allocation5 + $0x38] sm:$0xff]
      %v4610 = vld [vmem:[#allocation5 + $0x40] sm:$0xff]
      %v4611 = vld [vmem:[#allocation5 + $0x48] sm:$0xff]
      %v4612 = vld [vmem:[#allocation5 + $0x50] sm:$0xff]
      %v4613 = vld [vmem:[#allocation5 + $0x58] sm:$0xff]
      %v4614 = vld [vmem:[#allocation5 + $0x60] sm:$0xff]
      %v4615 = vld [vmem:[#allocation5 + $0x68] sm:$0xff]
      %v4616 = vld [vmem:[#allocation5 + $0x70] sm:$0xff]
      %v4617 = vld [vmem:[#allocation5 + $0x78] sm:$0xff]
      %v4618 = vld [vmem:[#allocation5 + $0x80] sm:$0xff]
      %v4619 = vld [vmem:[#allocation5 + $0x88] sm:$0xff]
      %v4620 = vld [vmem:[#allocation5 + $0x90] sm:$0xff]
      %v4621 = vld [vmem:[#allocation5 + $0x98] sm:$0xff]
      %v4622 = vld [vmem:[#allocation5 + $0xa0] sm:$0xff]
      %v4623 = vld [vmem:[#allocation5 + $0xa8] sm:$0xff]
      %v4624 = vld [vmem:[#allocation5 + $0xb0] sm:$0xff]
      %v4625 = vld [vmem:[#allocation5 + $0xb8] sm:$0xff]
      %v4626 = vld [vmem:[#allocation5 + $0xc0] sm:$0xff]
      %v4627 = vld [vmem:[#allocation5 + $0xc8] sm:$0xff]
      %v4628 = vld [vmem:[#allocation5 + $0xd0] sm:$0xff]
      %v4629 = vld [vmem:[#allocation5 + $0xd8] sm:$0xff]
      %v4630 = vld [vmem:[#allocation5 + $0xe0] sm:$0xff]
      %v4631 = vld [vmem:[#allocation5 + $0xe8] sm:$0xff]
      %v4632 = vld [vmem:[#allocation5 + $0xf0] sm:$0x7]
      %v4633 = vld [vmem:[#allocation5 + $0x1] sm:$0xff]
      %v4634 = vld [vmem:[#allocation5 + $0x9] sm:$0xff]
      %v4635 = vld [vmem:[#allocation5 + $0x11] sm:$0xff]
      %v4636 = vld [vmem:[#allocation5 + $0x19] sm:$0xff]
      %v4637 = vld [vmem:[#allocation5 + $0x21] sm:$0xff]
      %v4638 = vld [vmem:[#allocation5 + $0x29] sm:$0xff]
      %v4639 = vld [vmem:[#allocation5 + $0x31] sm:$0xff]
      %v4640 = vld [vmem:[#allocation5 + $0x39] sm:$0xff]
      %v4641 = vld [vmem:[#allocation5 + $0x41] sm:$0xff]
      %v4642 = vld [vmem:[#allocation5 + $0x49] sm:$0xff]
      %v4643 = vld [vmem:[#allocation5 + $0x51] sm:$0xff]
      %v4644 = vld [vmem:[#allocation5 + $0x59] sm:$0xff]
      %v4645 = vld [vmem:[#allocation5 + $0x61] sm:$0xff]
      %v4646 = vld [vmem:[#allocation5 + $0x69] sm:$0xff]
      %v4647 = vld [vmem:[#allocation5 + $0x71] sm:$0xff]
      %v4648 = vld [vmem:[#allocation5 + $0x79] sm:$0xff]
      %v4649 = vld [vmem:[#allocation5 + $0x81] sm:$0xff]
      %v4650 = vld [vmem:[#allocation5 + $0x89] sm:$0xff]
      %v4651 = vld [vmem:[#allocation5 + $0x91] sm:$0xff]
      %v4652 = vld [vmem:[#allocation5 + $0x99] sm:$0xff]
      %v4653 = vld [vmem:[#allocation5 + $0xa1] sm:$0xff]
      %v4654 = vld [vmem:[#allocation5 + $0xa9] sm:$0xff]
      %v4655 = vld [vmem:[#allocation5 + $0xb1] sm:$0xff]
      %v4656 = vld [vmem:[#allocation5 + $0xb9] sm:$0xff]
      %v4657 = vld [vmem:[#allocation5 + $0xc1] sm:$0xff]
      %v4658 = vld [vmem:[#allocation5 + $0xc9] sm:$0xff]
      %v4659 = vld [vmem:[#allocation5 + $0xd1] sm:$0xff]
      %v4660 = vld [vmem:[#allocation5 + $0xd9] sm:$0xff]
      %v4661 = vld [vmem:[#allocation5 + $0xe1] sm:$0xff]
      %v4662 = vld [vmem:[#allocation5 + $0xe9] sm:$0xff]
      %v4663 = vld [vmem:[#allocation5 + $0xf1] sm:$0x7]
      %v4664 = vmax.f32 %v4602, %v4633
      %v4665 = vmax.f32 %v4603, %v4634
      %v4666 = vmax.f32 %v4604, %v4635
      %v4667 = vmax.f32 %v4605, %v4636
      %v4668 = vmax.f32 %v4606, %v4637
      %v4669 = vmax.f32 %v4607, %v4638
      %v4670 = vmax.f32 %v4608, %v4639
      %v4671 = vmax.f32 %v4609, %v4640
      %v4672 = vmax.f32 %v4610, %v4641
      %v4673 = vmax.f32 %v4611, %v4642
      %v4674 = vmax.f32 %v4612, %v4643
      %v4675 = vmax.f32 %v4613, %v4644
      %v4676 = vmax.f32 %v4614, %v4645
      %v4677 = vmax.f32 %v4615, %v4646
      %v4678 = vmax.f32 %v4616, %v4647
      %v4679 = vmax.f32 %v4617, %v4648
      %v4680 = vmax.f32 %v4618, %v4649
      %v4681 = vmax.f32 %v4619, %v4650
      %v4682 = vmax.f32 %v4620, %v4651
      %v4683 = vmax.f32 %v4621, %v4652
      %v4684 = vmax.f32 %v4622, %v4653
      %v4685 = vmax.f32 %v4623, %v4654
      %v4686 = vmax.f32 %v4624, %v4655
      %v4687 = vmax.f32 %v4625, %v4656
      %v4688 = vmax.f32 %v4626, %v4657
      %v4689 = vmax.f32 %v4627, %v4658
      %v4690 = vmax.f32 %v4628, %v4659
      %v4691 = vmax.f32 %v4629, %v4660
      %v4692 = vmax.f32 %v4630, %v4661
      %v4693 = vmax.f32 %v4631, %v4662
      %v4694 = vmax.f32 %v4632, %v4663
      %4695 = vst.msk [vmem:[#allocation6] sm:$0xff] %vm4569, %v4664
      %4696 = vst.msk [vmem:[#allocation6 + $0x8] sm:$0xff] %vm4569, %v4665
      %4697 = vst.msk [vmem:[#allocation6 + $0x10] sm:$0xff] %vm4569, %v4666
      %4698 = vst.msk [vmem:[#allocation6 + $0x18] sm:$0xff] %vm4569, %v4667
      %4699 = vst.msk [vmem:[#allocation6 + $0x20] sm:$0xff] %vm4569, %v4668
      %4700 = vst.msk [vmem:[#allocation6 + $0x28] sm:$0xff] %vm4569, %v4669
      %4701 = vst.msk [vmem:[#allocation6 + $0x30] sm:$0xff] %vm4569, %v4670
      %4702 = vst.msk [vmem:[#allocation6 + $0x38] sm:$0xff] %vm4569, %v4671
      %4703 = vst.msk [vmem:[#allocation6 + $0x40] sm:$0xff] %vm4569, %v4672
      %4704 = vst.msk [vmem:[#allocation6 + $0x48] sm:$0xff] %vm4569, %v4673
      %4705 = vst.msk [vmem:[#allocation6 + $0x50] sm:$0xff] %vm4569, %v4674
      %4706 = vst.msk [vmem:[#allocation6 + $0x58] sm:$0xff] %vm4569, %v4675
      %4707 = vst.msk [vmem:[#allocation6 + $0x60] sm:$0xff] %vm4569, %v4676
      %4708 = vst.msk [vmem:[#allocation6 + $0x68] sm:$0xff] %vm4569, %v4677
      %4709 = vst.msk [vmem:[#allocation6 + $0x70] sm:$0xff] %vm4569, %v4678
      %4710 = vst.msk [vmem:[#allocation6 + $0x78] sm:$0xff] %vm4569, %v4679
      %4711 = vst.msk [vmem:[#allocation6 + $0x80] sm:$0xff] %vm4569, %v4680
      %4712 = vst.msk [vmem:[#allocation6 + $0x88] sm:$0xff] %vm4569, %v4681
      %4713 = vst.msk [vmem:[#allocation6 + $0x90] sm:$0xff] %vm4569, %v4682
      %4714 = vst.msk [vmem:[#allocation6 + $0x98] sm:$0xff] %vm4569, %v4683
      %4715 = vst.msk [vmem:[#allocation6 + $0xa0] sm:$0xff] %vm4569, %v4684
      %4716 = vst.msk [vmem:[#allocation6 + $0xa8] sm:$0xff] %vm4569, %v4685
      %4717 = vst.msk [vmem:[#allocation6 + $0xb0] sm:$0xff] %vm4569, %v4686
      %4718 = vst.msk [vmem:[#allocation6 + $0xb8] sm:$0xff] %vm4569, %v4687
      %4719 = vst.msk [vmem:[#allocation6 + $0xc0] sm:$0xff] %vm4569, %v4688
      %4720 = vst.msk [vmem:[#allocation6 + $0xc8] sm:$0xff] %vm4569, %v4689
      %4721 = vst.msk [vmem:[#allocation6 + $0xd0] sm:$0xff] %vm4569, %v4690
      %4722 = vst.msk [vmem:[#allocation6 + $0xd8] sm:$0xff] %vm4569, %v4691
      %4723 = vst.msk [vmem:[#allocation6 + $0xe0] sm:$0xff] %vm4569, %v4692
      %4724 = vst.msk [vmem:[#allocation6 + $0xe8] sm:$0xff] %vm4569, %v4693
      %vm4725 = vcmask 518144
      %4726 = vst.msk [vmem:[#allocation6 + $0xf0] sm:$0x7] %vm4725, %v4694
      %v4727 = vld [vmem:[#allocation6] ss:$2 sm:$0xff]
      %s4728 = scalar_lea.vmem [#allocation6], 16
      %v4729 = vld [vmem:[%s4728] ss:$2 sm:$0xff]
      %s4730 = scalar_lea.vmem [#allocation6], 32
      %v4731 = vld [vmem:[%s4730] ss:$2 sm:$0xff]
      %s4732 = scalar_lea.vmem [#allocation6], 48
      %v4733 = vld [vmem:[%s4732] ss:$2 sm:$0xff]
      %s4734 = scalar_lea.vmem [#allocation6], 64
      %v4735 = vld [vmem:[%s4734] ss:$2 sm:$0xff]
      %s4736 = scalar_lea.vmem [#allocation6], 80
      %v4737 = vld [vmem:[%s4736] ss:$2 sm:$0xff]
      %s4738 = scalar_lea.vmem [#allocation6], 96
      %v4739 = vld [vmem:[%s4738] ss:$2 sm:$0xff]
      %s4740 = scalar_lea.vmem [#allocation6], 112
      %v4741 = vld [vmem:[%s4740] ss:$2 sm:$0xff]
      %s4742 = scalar_lea.vmem [#allocation6], 128
      %v4743 = vld [vmem:[%s4742] ss:$2 sm:$0xff]
      %s4744 = scalar_lea.vmem [#allocation6], 144
      %v4745 = vld [vmem:[%s4744] ss:$2 sm:$0xff]
      %s4746 = scalar_lea.vmem [#allocation6], 160
      %v4747 = vld [vmem:[%s4746] ss:$2 sm:$0xff]
      %s4748 = scalar_lea.vmem [#allocation6], 176
      %v4749 = vld [vmem:[%s4748] ss:$2 sm:$0xff]
      %s4750 = scalar_lea.vmem [#allocation6], 192
      %v4751 = vld [vmem:[%s4750] ss:$2 sm:$0xff]
      %s4752 = scalar_lea.vmem [#allocation6], 208
      %v4753 = vld [vmem:[%s4752] ss:$2 sm:$0xff]
      %s4754 = scalar_lea.vmem [#allocation6], 224
      %v4755 = vld [vmem:[%s4754] ss:$2 sm:$0xff]
      %s4756 = scalar_lea.vmem [#allocation6], 240
      %v4757 = vld [vmem:[%s4756] ss:$2 sm:$0x3]
      %v4758 = vmax.f32 %v4727, 0.0
      %v4759 = vmax.f32 %v4729, 0.0
      %v4760 = vmax.f32 %v4731, 0.0
      %v4761 = vmax.f32 %v4733, 0.0
      %v4762 = vmax.f32 %v4735, 0.0
      %v4763 = vmax.f32 %v4737, 0.0
      %v4764 = vmax.f32 %v4739, 0.0
      %v4765 = vmax.f32 %v4741, 0.0
      %v4766 = vmax.f32 %v4743, 0.0
      %v4767 = vmax.f32 %v4745, 0.0
      %v4768 = vmax.f32 %v4747, 0.0
      %v4769 = vmax.f32 %v4749, 0.0
      %v4770 = vmax.f32 %v4751, 0.0
      %v4771 = vmax.f32 %v4753, 0.0
      %v4772 = vmax.f32 %v4755, 0.0
      %v4773 = vmax.f32 %v4757, 0.0
      %4774 = vst.msk [vmem:[#allocation7] sm:$0xff] %vm4569, %v4758
      %4775 = vst.msk [vmem:[#allocation7 + $0x8] sm:$0xff] %vm4569, %v4759
      %4776 = vst.msk [vmem:[#allocation7 + $0x10] sm:$0xff] %vm4569, %v4760
      %4777 = vst.msk [vmem:[#allocation7 + $0x18] sm:$0xff] %vm4569, %v4761
      %4778 = vst.msk [vmem:[#allocation7 + $0x20] sm:$0xff] %vm4569, %v4762
      %4779 = vst.msk [vmem:[#allocation7 + $0x28] sm:$0xff] %vm4569, %v4763
      %4780 = vst.msk [vmem:[#allocation7 + $0x30] sm:$0xff] %vm4569, %v4764
      %4781 = vst.msk [vmem:[#allocation7 + $0x38] sm:$0xff] %vm4569, %v4765
      %4782 = vst.msk [vmem:[#allocation7 + $0x40] sm:$0xff] %vm4569, %v4766
      %4783 = vst.msk [vmem:[#allocation7 + $0x48] sm:$0xff] %vm4569, %v4767
      %4784 = vst.msk [vmem:[#allocation7 + $0x50] sm:$0xff] %vm4569, %v4768
      %4785 = vst.msk [vmem:[#allocation7 + $0x58] sm:$0xff] %vm4569, %v4769
      %4786 = vst.msk [vmem:[#allocation7 + $0x60] sm:$0xff] %vm4569, %v4770
      %4787 = vst.msk [vmem:[#allocation7 + $0x68] sm:$0xff] %vm4569, %v4771
      %4788 = vst.msk [vmem:[#allocation7 + $0x70] sm:$0xff] %vm4569, %v4772
      %vm4789 = vcmask 517120
      %4790 = vst.msk [vmem:[#allocation7 + $0x78] sm:$0x3] %vm4789, %v4773
      %v4791 = vld [vmem:[#allocation7] sm:$0xff]
      %v4792 = vld [vmem:[#allocation7 + $0x8] sm:$0xff]
      %v4793 = vld [vmem:[#allocation7 + $0x10] sm:$0xff]
      %v4794 = vld [vmem:[#allocation7 + $0x18] sm:$0xff]
      %v4795 = vld [vmem:[#allocation7 + $0x20] sm:$0xff]
      %v4796 = vld [vmem:[#allocation7 + $0x28] sm:$0xff]
      %v4797 = vld [vmem:[#allocation7 + $0x30] sm:$0xff]
      %v4798 = vld [vmem:[#allocation7 + $0x38] sm:$0xff]
      %v4799 = vld [vmem:[#allocation7 + $0x40] sm:$0xff]
      %v4800 = vld [vmem:[#allocation7 + $0x48] sm:$0xff]
      %v4801 = vld [vmem:[#allocation7 + $0x50] sm:$0xff]
      %v4802 = vld [vmem:[#allocation7 + $0x58] sm:$0xff]
      %v4803 = vld [vmem:[#allocation7 + $0x60] sm:$0xff]
      %v4804 = vld [vmem:[#allocation7 + $0x68] sm:$0xff]
      %v4805 = vld [vmem:[#allocation7 + $0x70] sm:$0x3f]
      %v4806 = vld [vmem:[%s5] sm:$0xff]
      %v4807 = vld [vmem:[%s5 + $0x8] sm:$0xff]
      %v4808 = vld [vmem:[%s5 + $0x10] sm:$0xff]
      %v4809 = vld [vmem:[%s5 + $0x18] sm:$0xff]
      %v4810 = vld [vmem:[%s5 + $0x20] sm:$0xff]
      %v4811 = vld [vmem:[%s5 + $0x28] sm:$0xff]
      %v4812 = vld [vmem:[%s5 + $0x30] sm:$0xff]
      %v4813 = vld [vmem:[%s5 + $0x38] sm:$0xff]
      %v4814 = vld [vmem:[#allocation7 + $0x1] sm:$0xff]
      %v4815 = vld [vmem:[#allocation7 + $0x9] sm:$0xff]
      %v4816 = vld [vmem:[#allocation7 + $0x11] sm:$0xff]
      %v4817 = vld [vmem:[#allocation7 + $0x19] sm:$0xff]
      %v4818 = vld [vmem:[#allocation7 + $0x21] sm:$0xff]
      %v4819 = vld [vmem:[#allocation7 + $0x29] sm:$0xff]
      %v4820 = vld [vmem:[#allocation7 + $0x31] sm:$0xff]
      %v4821 = vld [vmem:[#allocation7 + $0x39] sm:$0xff]
      %v4822 = vld [vmem:[#allocation7 + $0x41] sm:$0xff]
      %v4823 = vld [vmem:[#allocation7 + $0x49] sm:$0xff]
      %v4824 = vld [vmem:[#allocation7 + $0x51] sm:$0xff]
      %v4825 = vld [vmem:[#allocation7 + $0x59] sm:$0xff]
      %v4826 = vld [vmem:[#allocation7 + $0x61] sm:$0xff]
      %v4827 = vld [vmem:[#allocation7 + $0x69] sm:$0xff]
      %v4828 = vld [vmem:[#allocation7 + $0x71] sm:$0x3f]
      %s4829 = scalar_lea.vmem %s5, 64
      %v4830 = vld [vmem:[%s4829] sm:$0xff]
      %v4831 = vld [vmem:[%s4829 + $0x8] sm:$0xff]
      %v4832 = vld [vmem:[%s4829 + $0x10] sm:$0xff]
      %v4833 = vld [vmem:[%s4829 + $0x18] sm:$0xff]
      %v4834 = vld [vmem:[%s4829 + $0x20] sm:$0xff]
      %v4835 = vld [vmem:[%s4829 + $0x28] sm:$0xff]
      %v4836 = vld [vmem:[%s4829 + $0x30] sm:$0xff]
      %v4837 = vld [vmem:[%s4829 + $0x38] sm:$0xff]
      %v4839 = vsel %vm4569, %v4814, 0
      %v4842 = vsel %vm4569, %v4815, 0
      %v4845 = vsel %vm4569, %v4816, 0
      %v4848 = vsel %vm4569, %v4817, 0
      %v4851 = vsel %vm4569, %v4818, 0
      %v4854 = vsel %vm4569, %v4819, 0
      %v4857 = vsel %vm4569, %v4820, 0
      %v4860 = vsel %vm4569, %v4821, 0
      %v4863 = vsel %vm4569, %v4822, 0
      %v4866 = vsel %vm4569, %v4823, 0
      %v4869 = vsel %vm4569, %v4824, 0
      %v4872 = vsel %vm4569, %v4825, 0
      %v4875 = vsel %vm4569, %v4826, 0
      %v4878 = vsel %vm4569, %v4827, 0
      %v4881 = vsel %vm4569, %v4828, 0
      %4883 = vmatpush.msra.mxu0 0.0
      %4884 = vmatpush.msra.mxu0 0.0
      %4885 = vmatpush.msra.mxu0 0.0
      %4886 = vmatpush.msra.mxu0 0.0
      %4887 = vmatpush.msra.mxu0 0.0
      %4888 = vmatpush.msra.mxu0 0.0
      %4889 = vmatpush.msra.mxu0 0.0
      %4890 = vmatpush.msra.mxu0 0.0
      %4891 = vmatpush.msra.mxu0 %v4837
      %4892 = vmatpush.msra.mxu0 %v4836
      %4893 = vmatpush.msra.mxu0 %v4835
      %4894 = vmatpush.msra.mxu0 %v4834
      %4895 = vmatpush.msra.mxu0 %v4833
      %4896 = vmatpush.msra.mxu0 %v4832
      %4897 = vmatpush.msra.mxu0 %v4831
      %4898 = vmatpush.msra.mxu0 %v4830
      %4899 = vmatmul.f32.gmra.mxu0 %v4839
      %v4900 = vpop.f32.mrf.mxu0
      %v4901 = vadd.f32 0.0, %v4900
      %4902 = vmatmul.f32.gmra.mxu0 %v4842
      %v4903 = vpop.f32.mrf.mxu0
      %v4904 = vadd.f32 0.0, %v4903
      %4905 = vmatmul.f32.gmra.mxu0 %v4845
      %v4906 = vpop.f32.mrf.mxu0
      %v4907 = vadd.f32 0.0, %v4906
      %4908 = vmatmul.f32.gmra.mxu0 %v4848
      %v4909 = vpop.f32.mrf.mxu0
      %v4910 = vadd.f32 0.0, %v4909
      %4911 = vmatmul.f32.gmra.mxu0 %v4851
      %v4912 = vpop.f32.mrf.mxu0
      %v4913 = vadd.f32 0.0, %v4912
      %4914 = vmatmul.f32.gmra.mxu0 %v4854
      %v4915 = vpop.f32.mrf.mxu0
      %v4916 = vadd.f32 0.0, %v4915
      %4917 = vmatmul.f32.gmra.mxu0 %v4857
      %v4918 = vpop.f32.mrf.mxu0
      %v4919 = vadd.f32 0.0, %v4918
      %4920 = vmatmul.f32.gmra.mxu0 %v4860
      %v4921 = vpop.f32.mrf.mxu0
      %v4922 = vadd.f32 0.0, %v4921
      %4923 = vmatmul.f32.gmra.mxu0 %v4863
      %v4924 = vpop.f32.mrf.mxu0
      %v4925 = vadd.f32 0.0, %v4924
      %4926 = vmatmul.f32.gmra.mxu0 %v4866
      %v4927 = vpop.f32.mrf.mxu0
      %v4928 = vadd.f32 0.0, %v4927
      %4929 = vmatmul.f32.gmra.mxu0 %v4869
      %v4930 = vpop.f32.mrf.mxu0
      %v4931 = vadd.f32 0.0, %v4930
      %4932 = vmatmul.f32.gmra.mxu0 %v4872
      %v4933 = vpop.f32.mrf.mxu0
      %v4934 = vadd.f32 0.0, %v4933
      %4935 = vmatmul.f32.gmra.mxu0 %v4875
      %v4936 = vpop.f32.mrf.mxu0
      %v4937 = vadd.f32 0.0, %v4936
      %4938 = vmatmul.f32.gmra.mxu0 %v4878
      %v4939 = vpop.f32.mrf.mxu0
      %v4940 = vadd.f32 0.0, %v4939
      %4941 = vmatmul.f32.gmra.mxu0 %v4881
      %v4942 = vpop.f32.mrf.mxu0
      %v4943 = vadd.f32 0.0, %v4942
      %4944 = vdwg.mxu0
      %v4946 = vsel %vm4569, %v4791, 0
      %v4949 = vsel %vm4569, %v4792, 0
      %v4952 = vsel %vm4569, %v4793, 0
      %v4955 = vsel %vm4569, %v4794, 0
      %v4958 = vsel %vm4569, %v4795, 0
      %v4961 = vsel %vm4569, %v4796, 0
      %v4964 = vsel %vm4569, %v4797, 0
      %v4967 = vsel %vm4569, %v4798, 0
      %v4970 = vsel %vm4569, %v4799, 0
      %v4973 = vsel %vm4569, %v4800, 0
      %v4976 = vsel %vm4569, %v4801, 0
      %v4979 = vsel %vm4569, %v4802, 0
      %v4982 = vsel %vm4569, %v4803, 0
      %v4985 = vsel %vm4569, %v4804, 0
      %v4988 = vsel %vm4569, %v4805, 0
      %4990 = vmatpush.msra.mxu0 0.0
      %4991 = vmatpush.msra.mxu0 0.0
      %4992 = vmatpush.msra.mxu0 0.0
      %4993 = vmatpush.msra.mxu0 0.0
      %4994 = vmatpush.msra.mxu0 0.0
      %4995 = vmatpush.msra.mxu0 0.0
      %4996 = vmatpush.msra.mxu0 0.0
      %4997 = vmatpush.msra.mxu0 0.0
      %4998 = vmatpush.msra.mxu0 %v4813
      %4999 = vmatpush.msra.mxu0 %v4812
      %5000 = vmatpush.msra.mxu0 %v4811
      %5001 = vmatpush.msra.mxu0 %v4810
      %5002 = vmatpush.msra.mxu0 %v4809
      %5003 = vmatpush.msra.mxu0 %v4808
      %5004 = vmatpush.msra.mxu0 %v4807
      %5005 = vmatpush.msra.mxu0 %v4806
      %5006 = vmatmul.f32.gmra.mxu0 %v4946
      %v5007 = vpop.f32.mrf.mxu0
      %v5008 = vadd.f32 %v4901, %v5007
      %5009 = vmatmul.f32.gmra.mxu0 %v4949
      %v5010 = vpop.f32.mrf.mxu0
      %v5011 = vadd.f32 %v4904, %v5010
      %5012 = vmatmul.f32.gmra.mxu0 %v4952
      %v5013 = vpop.f32.mrf.mxu0
      %v5014 = vadd.f32 %v4907, %v5013
      %5015 = vmatmul.f32.gmra.mxu0 %v4955
      %v5016 = vpop.f32.mrf.mxu0
      %v5017 = vadd.f32 %v4910, %v5016
      %5018 = vmatmul.f32.gmra.mxu0 %v4958
      %v5019 = vpop.f32.mrf.mxu0
      %v5020 = vadd.f32 %v4913, %v5019
      %5021 = vmatmul.f32.gmra.mxu0 %v4961
      %v5022 = vpop.f32.mrf.mxu0
      %v5023 = vadd.f32 %v4916, %v5022
      %5024 = vmatmul.f32.gmra.mxu0 %v4964
      %v5025 = vpop.f32.mrf.mxu0
      %v5026 = vadd.f32 %v4919, %v5025
      %5027 = vmatmul.f32.gmra.mxu0 %v4967
      %v5028 = vpop.f32.mrf.mxu0
      %v5029 = vadd.f32 %v4922, %v5028
      %5030 = vmatmul.f32.gmra.mxu0 %v4970
      %v5031 = vpop.f32.mrf.mxu0
      %v5032 = vadd.f32 %v4925, %v5031
      %5033 = vmatmul.f32.gmra.mxu0 %v4973
      %v5034 = vpop.f32.mrf.mxu0
      %v5035 = vadd.f32 %v4928, %v5034
      %5036 = vmatmul.f32.gmra.mxu0 %v4976
      %v5037 = vpop.f32.mrf.mxu0
      %v5038 = vadd.f32 %v4931, %v5037
      %5039 = vmatmul.f32.gmra.mxu0 %v4979
      %v5040 = vpop.f32.mrf.mxu0
      %v5041 = vadd.f32 %v4934, %v5040
      %5042 = vmatmul.f32.gmra.mxu0 %v4982
      %v5043 = vpop.f32.mrf.mxu0
      %v5044 = vadd.f32 %v4937, %v5043
      %5045 = vmatmul.f32.gmra.mxu0 %v4985
      %v5046 = vpop.f32.mrf.mxu0
      %v5047 = vadd.f32 %v4940, %v5046
      %5048 = vmatmul.f32.gmra.mxu0 %v4988
      %v5049 = vpop.f32.mrf.mxu0
      %v5050 = vadd.f32 %v4943, %v5049
      %5051 = vdwg.mxu0
      %v5052 = vld [vmem:[#allocation7 + $0x2] sm:$0xff]
      %v5053 = vld [vmem:[#allocation7 + $0xa] sm:$0xff]
      %v5054 = vld [vmem:[#allocation7 + $0x12] sm:$0xff]
      %v5055 = vld [vmem:[#allocation7 + $0x1a] sm:$0xff]
      %v5056 = vld [vmem:[#allocation7 + $0x22] sm:$0xff]
      %v5057 = vld [vmem:[#allocation7 + $0x2a] sm:$0xff]
      %v5058 = vld [vmem:[#allocation7 + $0x32] sm:$0xff]
      %v5059 = vld [vmem:[#allocation7 + $0x3a] sm:$0xff]
      %v5060 = vld [vmem:[#allocation7 + $0x42] sm:$0xff]
      %v5061 = vld [vmem:[#allocation7 + $0x4a] sm:$0xff]
      %v5062 = vld [vmem:[#allocation7 + $0x52] sm:$0xff]
      %v5063 = vld [vmem:[#allocation7 + $0x5a] sm:$0xff]
      %v5064 = vld [vmem:[#allocation7 + $0x62] sm:$0xff]
      %v5065 = vld [vmem:[#allocation7 + $0x6a] sm:$0xff]
      %v5066 = vld [vmem:[#allocation7 + $0x72] sm:$0x3f]
      %s5067 = scalar_lea.vmem %s5, 128
      %v5068 = vld [vmem:[%s5067] sm:$0xff]
      %v5069 = vld [vmem:[%s5067 + $0x8] sm:$0xff]
      %v5070 = vld [vmem:[%s5067 + $0x10] sm:$0xff]
      %v5071 = vld [vmem:[%s5067 + $0x18] sm:$0xff]
      %v5072 = vld [vmem:[%s5067 + $0x20] sm:$0xff]
      %v5073 = vld [vmem:[%s5067 + $0x28] sm:$0xff]
      %v5074 = vld [vmem:[%s5067 + $0x30] sm:$0xff]
      %v5075 = vld [vmem:[%s5067 + $0x38] sm:$0xff]
      %v5077 = vsel %vm4569, %v5052, 0
      %v5080 = vsel %vm4569, %v5053, 0
      %v5083 = vsel %vm4569, %v5054, 0
      %v5086 = vsel %vm4569, %v5055, 0
      %v5089 = vsel %vm4569, %v5056, 0
      %v5092 = vsel %vm4569, %v5057, 0
      %v5095 = vsel %vm4569, %v5058, 0
      %v5098 = vsel %vm4569, %v5059, 0
      %v5101 = vsel %vm4569, %v5060, 0
      %v5104 = vsel %vm4569, %v5061, 0
      %v5107 = vsel %vm4569, %v5062, 0
      %v5110 = vsel %vm4569, %v5063, 0
      %v5113 = vsel %vm4569, %v5064, 0
      %v5116 = vsel %vm4569, %v5065, 0
      %v5119 = vsel %vm4569, %v5066, 0
      %5121 = vmatpush.msra.mxu0 0.0
      %5122 = vmatpush.msra.mxu0 0.0
      %5123 = vmatpush.msra.mxu0 0.0
      %5124 = vmatpush.msra.mxu0 0.0
      %5125 = vmatpush.msra.mxu0 0.0
      %5126 = vmatpush.msra.mxu0 0.0
      %5127 = vmatpush.msra.mxu0 0.0
      %5128 = vmatpush.msra.mxu0 0.0
      %5129 = vmatpush.msra.mxu0 %v5075
      %5130 = vmatpush.msra.mxu0 %v5074
      %5131 = vmatpush.msra.mxu0 %v5073
      %5132 = vmatpush.msra.mxu0 %v5072
      %5133 = vmatpush.msra.mxu0 %v5071
      %5134 = vmatpush.msra.mxu0 %v5070
      %5135 = vmatpush.msra.mxu0 %v5069
      %5136 = vmatpush.msra.mxu0 %v5068
      %5137 = vmatmul.f32.gmra.mxu0 %v5077
      %v5138 = vpop.f32.mrf.mxu0
      %v5139 = vadd.f32 0.0, %v5138
      %5140 = vmatmul.f32.gmra.mxu0 %v5080
      %v5141 = vpop.f32.mrf.mxu0
      %v5142 = vadd.f32 0.0, %v5141
      %5143 = vmatmul.f32.gmra.mxu0 %v5083
      %v5144 = vpop.f32.mrf.mxu0
      %v5145 = vadd.f32 0.0, %v5144
      %5146 = vmatmul.f32.gmra.mxu0 %v5086
      %v5147 = vpop.f32.mrf.mxu0
      %v5148 = vadd.f32 0.0, %v5147
      %5149 = vmatmul.f32.gmra.mxu0 %v5089
      %v5150 = vpop.f32.mrf.mxu0
      %v5151 = vadd.f32 0.0, %v5150
      %5152 = vmatmul.f32.gmra.mxu0 %v5092
      %v5153 = vpop.f32.mrf.mxu0
      %v5154 = vadd.f32 0.0, %v5153
      %5155 = vmatmul.f32.gmra.mxu0 %v5095
      %v5156 = vpop.f32.mrf.mxu0
      %v5157 = vadd.f32 0.0, %v5156
      %5158 = vmatmul.f32.gmra.mxu0 %v5098
      %v5159 = vpop.f32.mrf.mxu0
      %v5160 = vadd.f32 0.0, %v5159
      %5161 = vmatmul.f32.gmra.mxu0 %v5101
      %v5162 = vpop.f32.mrf.mxu0
      %v5163 = vadd.f32 0.0, %v5162
      %5164 = vmatmul.f32.gmra.mxu0 %v5104
      %v5165 = vpop.f32.mrf.mxu0
      %v5166 = vadd.f32 0.0, %v5165
      %5167 = vmatmul.f32.gmra.mxu0 %v5107
      %v5168 = vpop.f32.mrf.mxu0
      %v5169 = vadd.f32 0.0, %v5168
      %5170 = vmatmul.f32.gmra.mxu0 %v5110
      %v5171 = vpop.f32.mrf.mxu0
      %v5172 = vadd.f32 0.0, %v5171
      %5173 = vmatmul.f32.gmra.mxu0 %v5113
      %v5174 = vpop.f32.mrf.mxu0
      %v5175 = vadd.f32 0.0, %v5174
      %5176 = vmatmul.f32.gmra.mxu0 %v5116
      %v5177 = vpop.f32.mrf.mxu0
      %v5178 = vadd.f32 0.0, %v5177
      %5179 = vmatmul.f32.gmra.mxu0 %v5119
      %v5180 = vpop.f32.mrf.mxu0
      %v5181 = vadd.f32 0.0, %v5180
      %5182 = vdwg.mxu0
      %v5183 = vadd.f32 %v5008, %v5139
      %v5184 = vadd.f32 %v5011, %v5142
      %v5185 = vadd.f32 %v5014, %v5145
      %v5186 = vadd.f32 %v5017, %v5148
      %v5187 = vadd.f32 %v5020, %v5151
      %v5188 = vadd.f32 %v5023, %v5154
      %v5189 = vadd.f32 %v5026, %v5157
      %v5190 = vadd.f32 %v5029, %v5160
      %v5191 = vadd.f32 %v5032, %v5163
      %v5192 = vadd.f32 %v5035, %v5166
      %v5193 = vadd.f32 %v5038, %v5169
      %v5194 = vadd.f32 %v5041, %v5172
      %v5195 = vadd.f32 %v5044, %v5175
      %v5196 = vadd.f32 %v5047, %v5178
      %v5197 = vadd.f32 %v5050, %v5181
      %v5198 = vld [vmem:[#allocation7 + $0x3] sm:$0xff]
      %v5199 = vld [vmem:[#allocation7 + $0xb] sm:$0xff]
      %v5200 = vld [vmem:[#allocation7 + $0x13] sm:$0xff]
      %v5201 = vld [vmem:[#allocation7 + $0x1b] sm:$0xff]
      %v5202 = vld [vmem:[#allocation7 + $0x23] sm:$0xff]
      %v5203 = vld [vmem:[#allocation7 + $0x2b] sm:$0xff]
      %v5204 = vld [vmem:[#allocation7 + $0x33] sm:$0xff]
      %v5205 = vld [vmem:[#allocation7 + $0x3b] sm:$0xff]
      %v5206 = vld [vmem:[#allocation7 + $0x43] sm:$0xff]
      %v5207 = vld [vmem:[#allocation7 + $0x4b] sm:$0xff]
      %v5208 = vld [vmem:[#allocation7 + $0x53] sm:$0xff]
      %v5209 = vld [vmem:[#allocation7 + $0x5b] sm:$0xff]
      %v5210 = vld [vmem:[#allocation7 + $0x63] sm:$0xff]
      %v5211 = vld [vmem:[#allocation7 + $0x6b] sm:$0xff]
      %v5212 = vld [vmem:[#allocation7 + $0x73] sm:$0x3f]
      %s5213 = scalar_lea.vmem %s5, 192
      %v5214 = vld [vmem:[%s5213] sm:$0xff]
      %v5215 = vld [vmem:[%s5213 + $0x8] sm:$0xff]
      %v5216 = vld [vmem:[%s5213 + $0x10] sm:$0xff]
      %v5217 = vld [vmem:[%s5213 + $0x18] sm:$0xff]
      %v5218 = vld [vmem:[%s5213 + $0x20] sm:$0xff]
      %v5219 = vld [vmem:[%s5213 + $0x28] sm:$0xff]
      %v5220 = vld [vmem:[%s5213 + $0x30] sm:$0xff]
      %v5221 = vld [vmem:[%s5213 + $0x38] sm:$0xff]
      %v5223 = vsel %vm4569, %v5198, 0
      %v5226 = vsel %vm4569, %v5199, 0
      %v5229 = vsel %vm4569, %v5200, 0
      %v5232 = vsel %vm4569, %v5201, 0
      %v5235 = vsel %vm4569, %v5202, 0
      %v5238 = vsel %vm4569, %v5203, 0
      %v5241 = vsel %vm4569, %v5204, 0
      %v5244 = vsel %vm4569, %v5205, 0
      %v5247 = vsel %vm4569, %v5206, 0
      %v5250 = vsel %vm4569, %v5207, 0
      %v5253 = vsel %vm4569, %v5208, 0
      %v5256 = vsel %vm4569, %v5209, 0
      %v5259 = vsel %vm4569, %v5210, 0
      %v5262 = vsel %vm4569, %v5211, 0
      %v5265 = vsel %vm4569, %v5212, 0
      %5267 = vmatpush.msra.mxu0 0.0
      %5268 = vmatpush.msra.mxu0 0.0
      %5269 = vmatpush.msra.mxu0 0.0
      %5270 = vmatpush.msra.mxu0 0.0
      %5271 = vmatpush.msra.mxu0 0.0
      %5272 = vmatpush.msra.mxu0 0.0
      %5273 = vmatpush.msra.mxu0 0.0
      %5274 = vmatpush.msra.mxu0 0.0
      %5275 = vmatpush.msra.mxu0 %v5221
      %5276 = vmatpush.msra.mxu0 %v5220
      %5277 = vmatpush.msra.mxu0 %v5219
      %5278 = vmatpush.msra.mxu0 %v5218
      %5279 = vmatpush.msra.mxu0 %v5217
      %5280 = vmatpush.msra.mxu0 %v5216
      %5281 = vmatpush.msra.mxu0 %v5215
      %5282 = vmatpush.msra.mxu0 %v5214
      %5283 = vmatmul.f32.gmra.mxu0 %v5223
      %v5284 = vpop.f32.mrf.mxu0
      %v5285 = vadd.f32 0.0, %v5284
      %5286 = vmatmul.f32.gmra.mxu0 %v5226
      %v5287 = vpop.f32.mrf.mxu0
      %v5288 = vadd.f32 0.0, %v5287
      %5289 = vmatmul.f32.gmra.mxu0 %v5229
      %v5290 = vpop.f32.mrf.mxu0
      %v5291 = vadd.f32 0.0, %v5290
      %5292 = vmatmul.f32.gmra.mxu0 %v5232
      %v5293 = vpop.f32.mrf.mxu0
      %v5294 = vadd.f32 0.0, %v5293
      %5295 = vmatmul.f32.gmra.mxu0 %v5235
      %v5296 = vpop.f32.mrf.mxu0
      %v5297 = vadd.f32 0.0, %v5296
      %5298 = vmatmul.f32.gmra.mxu0 %v5238
      %v5299 = vpop.f32.mrf.mxu0
      %v5300 = vadd.f32 0.0, %v5299
      %5301 = vmatmul.f32.gmra.mxu0 %v5241
      %v5302 = vpop.f32.mrf.mxu0
      %v5303 = vadd.f32 0.0, %v5302
      %5304 = vmatmul.f32.gmra.mxu0 %v5244
      %v5305 = vpop.f32.mrf.mxu0
      %v5306 = vadd.f32 0.0, %v5305
      %5307 = vmatmul.f32.gmra.mxu0 %v5247
      %v5308 = vpop.f32.mrf.mxu0
      %v5309 = vadd.f32 0.0, %v5308
      %5310 = vmatmul.f32.gmra.mxu0 %v5250
      %v5311 = vpop.f32.mrf.mxu0
      %v5312 = vadd.f32 0.0, %v5311
      %5313 = vmatmul.f32.gmra.mxu0 %v5253
      %v5314 = vpop.f32.mrf.mxu0
      %v5315 = vadd.f32 0.0, %v5314
      %5316 = vmatmul.f32.gmra.mxu0 %v5256
      %v5317 = vpop.f32.mrf.mxu0
      %v5318 = vadd.f32 0.0, %v5317
      %5319 = vmatmul.f32.gmra.mxu0 %v5259
      %v5320 = vpop.f32.mrf.mxu0
      %v5321 = vadd.f32 0.0, %v5320
      %5322 = vmatmul.f32.gmra.mxu0 %v5262
      %v5323 = vpop.f32.mrf.mxu0
      %v5324 = vadd.f32 0.0, %v5323
      %5325 = vmatmul.f32.gmra.mxu0 %v5265
      %v5326 = vpop.f32.mrf.mxu0
      %v5327 = vadd.f32 0.0, %v5326
      %5328 = vdwg.mxu0
      %v5329 = vadd.f32 %v5183, %v5285
      %v5330 = vadd.f32 %v5184, %v5288
      %v5331 = vadd.f32 %v5185, %v5291
      %v5332 = vadd.f32 %v5186, %v5294
      %v5333 = vadd.f32 %v5187, %v5297
      %v5334 = vadd.f32 %v5188, %v5300
      %v5335 = vadd.f32 %v5189, %v5303
      %v5336 = vadd.f32 %v5190, %v5306
      %v5337 = vadd.f32 %v5191, %v5309
      %v5338 = vadd.f32 %v5192, %v5312
      %v5339 = vadd.f32 %v5193, %v5315
      %v5340 = vadd.f32 %v5194, %v5318
      %v5341 = vadd.f32 %v5195, %v5321
      %v5342 = vadd.f32 %v5196, %v5324
      %v5343 = vadd.f32 %v5197, %v5327
      %v5344 = vld [vmem:[#allocation7 + $0x4] sm:$0xff]
      %v5345 = vld [vmem:[#allocation7 + $0xc] sm:$0xff]
      %v5346 = vld [vmem:[#allocation7 + $0x14] sm:$0xff]
      %v5347 = vld [vmem:[#allocation7 + $0x1c] sm:$0xff]
      %v5348 = vld [vmem:[#allocation7 + $0x24] sm:$0xff]
      %v5349 = vld [vmem:[#allocation7 + $0x2c] sm:$0xff]
      %v5350 = vld [vmem:[#allocation7 + $0x34] sm:$0xff]
      %v5351 = vld [vmem:[#allocation7 + $0x3c] sm:$0xff]
      %v5352 = vld [vmem:[#allocation7 + $0x44] sm:$0xff]
      %v5353 = vld [vmem:[#allocation7 + $0x4c] sm:$0xff]
      %v5354 = vld [vmem:[#allocation7 + $0x54] sm:$0xff]
      %v5355 = vld [vmem:[#allocation7 + $0x5c] sm:$0xff]
      %v5356 = vld [vmem:[#allocation7 + $0x64] sm:$0xff]
      %v5357 = vld [vmem:[#allocation7 + $0x6c] sm:$0xff]
      %v5358 = vld [vmem:[#allocation7 + $0x74] sm:$0x3f]
      %s5359 = scalar_lea.vmem %s5, 256
      %v5360 = vld [vmem:[%s5359] sm:$0xff]
      %v5361 = vld [vmem:[%s5359 + $0x8] sm:$0xff]
      %v5362 = vld [vmem:[%s5359 + $0x10] sm:$0xff]
      %v5363 = vld [vmem:[%s5359 + $0x18] sm:$0xff]
      %v5364 = vld [vmem:[%s5359 + $0x20] sm:$0xff]
      %v5365 = vld [vmem:[%s5359 + $0x28] sm:$0xff]
      %v5366 = vld [vmem:[%s5359 + $0x30] sm:$0xff]
      %v5367 = vld [vmem:[%s5359 + $0x38] sm:$0xff]
      %v5369 = vsel %vm4569, %v5344, 0
      %v5372 = vsel %vm4569, %v5345, 0
      %v5375 = vsel %vm4569, %v5346, 0
      %v5378 = vsel %vm4569, %v5347, 0
      %v5381 = vsel %vm4569, %v5348, 0
      %v5384 = vsel %vm4569, %v5349, 0
      %v5387 = vsel %vm4569, %v5350, 0
      %v5390 = vsel %vm4569, %v5351, 0
      %v5393 = vsel %vm4569, %v5352, 0
      %v5396 = vsel %vm4569, %v5353, 0
      %v5399 = vsel %vm4569, %v5354, 0
      %v5402 = vsel %vm4569, %v5355, 0
      %v5405 = vsel %vm4569, %v5356, 0
      %v5408 = vsel %vm4569, %v5357, 0
      %v5411 = vsel %vm4569, %v5358, 0
      %5413 = vmatpush.msra.mxu0 0.0
      %5414 = vmatpush.msra.mxu0 0.0
      %5415 = vmatpush.msra.mxu0 0.0
      %5416 = vmatpush.msra.mxu0 0.0
      %5417 = vmatpush.msra.mxu0 0.0
      %5418 = vmatpush.msra.mxu0 0.0
      %5419 = vmatpush.msra.mxu0 0.0
      %5420 = vmatpush.msra.mxu0 0.0
      %5421 = vmatpush.msra.mxu0 %v5367
      %5422 = vmatpush.msra.mxu0 %v5366
      %5423 = vmatpush.msra.mxu0 %v5365
      %5424 = vmatpush.msra.mxu0 %v5364
      %5425 = vmatpush.msra.mxu0 %v5363
      %5426 = vmatpush.msra.mxu0 %v5362
      %5427 = vmatpush.msra.mxu0 %v5361
      %5428 = vmatpush.msra.mxu0 %v5360
      %5429 = vmatmul.f32.gmra.mxu0 %v5369
      %v5430 = vpop.f32.mrf.mxu0
      %v5431 = vadd.f32 0.0, %v5430
      %5432 = vmatmul.f32.gmra.mxu0 %v5372
      %v5433 = vpop.f32.mrf.mxu0
      %v5434 = vadd.f32 0.0, %v5433
      %5435 = vmatmul.f32.gmra.mxu0 %v5375
      %v5436 = vpop.f32.mrf.mxu0
      %v5437 = vadd.f32 0.0, %v5436
      %5438 = vmatmul.f32.gmra.mxu0 %v5378
      %v5439 = vpop.f32.mrf.mxu0
      %v5440 = vadd.f32 0.0, %v5439
      %5441 = vmatmul.f32.gmra.mxu0 %v5381
      %v5442 = vpop.f32.mrf.mxu0
      %v5443 = vadd.f32 0.0, %v5442
      %5444 = vmatmul.f32.gmra.mxu0 %v5384
      %v5445 = vpop.f32.mrf.mxu0
      %v5446 = vadd.f32 0.0, %v5445
      %5447 = vmatmul.f32.gmra.mxu0 %v5387
      %v5448 = vpop.f32.mrf.mxu0
      %v5449 = vadd.f32 0.0, %v5448
      %5450 = vmatmul.f32.gmra.mxu0 %v5390
      %v5451 = vpop.f32.mrf.mxu0
      %v5452 = vadd.f32 0.0, %v5451
      %5453 = vmatmul.f32.gmra.mxu0 %v5393
      %v5454 = vpop.f32.mrf.mxu0
      %v5455 = vadd.f32 0.0, %v5454
      %5456 = vmatmul.f32.gmra.mxu0 %v5396
      %v5457 = vpop.f32.mrf.mxu0
      %v5458 = vadd.f32 0.0, %v5457
      %5459 = vmatmul.f32.gmra.mxu0 %v5399
      %v5460 = vpop.f32.mrf.mxu0
      %v5461 = vadd.f32 0.0, %v5460
      %5462 = vmatmul.f32.gmra.mxu0 %v5402
      %v5463 = vpop.f32.mrf.mxu0
      %v5464 = vadd.f32 0.0, %v5463
      %5465 = vmatmul.f32.gmra.mxu0 %v5405
      %v5466 = vpop.f32.mrf.mxu0
      %v5467 = vadd.f32 0.0, %v5466
      %5468 = vmatmul.f32.gmra.mxu0 %v5408
      %v5469 = vpop.f32.mrf.mxu0
      %v5470 = vadd.f32 0.0, %v5469
      %5471 = vmatmul.f32.gmra.mxu0 %v5411
      %v5472 = vpop.f32.mrf.mxu0
      %v5473 = vadd.f32 0.0, %v5472
      %5474 = vdwg.mxu0
      %v5475 = vadd.f32 %v5329, %v5431
      %v5476 = vadd.f32 %v5330, %v5434
      %v5477 = vadd.f32 %v5331, %v5437
      %v5478 = vadd.f32 %v5332, %v5440
      %v5479 = vadd.f32 %v5333, %v5443
      %v5480 = vadd.f32 %v5334, %v5446
      %v5481 = vadd.f32 %v5335, %v5449
      %v5482 = vadd.f32 %v5336, %v5452
      %v5483 = vadd.f32 %v5337, %v5455
      %v5484 = vadd.f32 %v5338, %v5458
      %v5485 = vadd.f32 %v5339, %v5461
      %v5486 = vadd.f32 %v5340, %v5464
      %v5487 = vadd.f32 %v5341, %v5467
      %v5488 = vadd.f32 %v5342, %v5470
      %v5489 = vadd.f32 %v5343, %v5473
      %v5490 = vld [vmem:[%s6] sm:$0x1]
      %v5492 = vperm.slane %v5490, 0
      %v5494 = vadd.f32 %v5475, %v5492
      %v5495 = vadd.f32 %v5476, %v5492
      %v5496 = vadd.f32 %v5477, %v5492
      %v5497 = vadd.f32 %v5478, %v5492
      %v5498 = vadd.f32 %v5479, %v5492
      %v5499 = vadd.f32 %v5480, %v5492
      %v5500 = vadd.f32 %v5481, %v5492
      %v5501 = vadd.f32 %v5482, %v5492
      %v5502 = vadd.f32 %v5483, %v5492
      %v5503 = vadd.f32 %v5484, %v5492
      %v5504 = vadd.f32 %v5485, %v5492
      %v5505 = vadd.f32 %v5486, %v5492
      %v5506 = vadd.f32 %v5487, %v5492
      %v5507 = vadd.f32 %v5488, %v5492
      %v5508 = vadd.f32 %v5489, %v5492
      %5509 = vst [vmem:[#allocation8] sm:$0xff] %v5494
      %5510 = vst [vmem:[#allocation8 + $0x8] sm:$0xff] %v5495
      %5511 = vst [vmem:[#allocation8 + $0x10] sm:$0xff] %v5496
      %5512 = vst [vmem:[#allocation8 + $0x18] sm:$0xff] %v5497
      %5513 = vst [vmem:[#allocation8 + $0x20] sm:$0xff] %v5498
      %5514 = vst [vmem:[#allocation8 + $0x28] sm:$0xff] %v5499
      %5515 = vst [vmem:[#allocation8 + $0x30] sm:$0xff] %v5500
      %5516 = vst [vmem:[#allocation8 + $0x38] sm:$0xff] %v5501
      %5517 = vst [vmem:[#allocation8 + $0x40] sm:$0xff] %v5502
      %5518 = vst [vmem:[#allocation8 + $0x48] sm:$0xff] %v5503
      %5519 = vst [vmem:[#allocation8 + $0x50] sm:$0xff] %v5504
      %5520 = vst [vmem:[#allocation8 + $0x58] sm:$0xff] %v5505
      %5521 = vst [vmem:[#allocation8 + $0x60] sm:$0xff] %v5506
      %5522 = vst [vmem:[#allocation8 + $0x68] sm:$0xff] %v5507
      %5523 = vst [vmem:[#allocation8 + $0x70] sm:$0x3f] %v5508
      %v5524 = vld [vmem:[#allocation8] sm:$0xff]
      %v5525 = vld [vmem:[#allocation8 + $0x8] sm:$0xff]
      %v5526 = vld [vmem:[#allocation8 + $0x10] sm:$0xff]
      %v5527 = vld [vmem:[#allocation8 + $0x18] sm:$0xff]
      %v5528 = vld [vmem:[#allocation8 + $0x20] sm:$0xff]
      %v5529 = vld [vmem:[#allocation8 + $0x28] sm:$0xff]
      %v5530 = vld [vmem:[#allocation8 + $0x30] sm:$0xff]
      %v5531 = vld [vmem:[#allocation8 + $0x38] sm:$0xff]
      %v5532 = vld [vmem:[#allocation8 + $0x40] sm:$0xff]
      %v5533 = vld [vmem:[#allocation8 + $0x48] sm:$0xff]
      %v5534 = vld [vmem:[#allocation8 + $0x50] sm:$0xff]
      %v5535 = vld [vmem:[#allocation8 + $0x58] sm:$0xff]
      %v5536 = vld [vmem:[#allocation8 + $0x60] sm:$0xff]
      %v5537 = vld [vmem:[#allocation8 + $0x68] sm:$0xff]
      %v5538 = vld [vmem:[#allocation8 + $0x70] sm:$0x1f]
      %v5539 = vld [vmem:[#allocation8 + $0x1] sm:$0xff]
      %v5540 = vld [vmem:[#allocation8 + $0x9] sm:$0xff]
      %v5541 = vld [vmem:[#allocation8 + $0x11] sm:$0xff]
      %v5542 = vld [vmem:[#allocation8 + $0x19] sm:$0xff]
      %v5543 = vld [vmem:[#allocation8 + $0x21] sm:$0xff]
      %v5544 = vld [vmem:[#allocation8 + $0x29] sm:$0xff]
      %v5545 = vld [vmem:[#allocation8 + $0x31] sm:$0xff]
      %v5546 = vld [vmem:[#allocation8 + $0x39] sm:$0xff]
      %v5547 = vld [vmem:[#allocation8 + $0x41] sm:$0xff]
      %v5548 = vld [vmem:[#allocation8 + $0x49] sm:$0xff]
      %v5549 = vld [vmem:[#allocation8 + $0x51] sm:$0xff]
      %v5550 = vld [vmem:[#allocation8 + $0x59] sm:$0xff]
      %v5551 = vld [vmem:[#allocation8 + $0x61] sm:$0xff]
      %v5552 = vld [vmem:[#allocation8 + $0x69] sm:$0xff]
      %v5553 = vld [vmem:[#allocation8 + $0x71] sm:$0x1f]
      %v5554 = vmax.f32 %v5524, %v5539
      %v5555 = vmax.f32 %v5525, %v5540
      %v5556 = vmax.f32 %v5526, %v5541
      %v5557 = vmax.f32 %v5527, %v5542
      %v5558 = vmax.f32 %v5528, %v5543
      %v5559 = vmax.f32 %v5529, %v5544
      %v5560 = vmax.f32 %v5530, %v5545
      %v5561 = vmax.f32 %v5531, %v5546
      %v5562 = vmax.f32 %v5532, %v5547
      %v5563 = vmax.f32 %v5533, %v5548
      %v5564 = vmax.f32 %v5534, %v5549
      %v5565 = vmax.f32 %v5535, %v5550
      %v5566 = vmax.f32 %v5536, %v5551
      %v5567 = vmax.f32 %v5537, %v5552
      %v5568 = vmax.f32 %v5538, %v5553
      %5569 = vst [vmem:[#allocation9] sm:$0xff] %v5554
      %5570 = vst [vmem:[#allocation9 + $0x8] sm:$0xff] %v5555
      %5571 = vst [vmem:[#allocation9 + $0x10] sm:$0xff] %v5556
      %5572 = vst [vmem:[#allocation9 + $0x18] sm:$0xff] %v5557
      %5573 = vst [vmem:[#allocation9 + $0x20] sm:$0xff] %v5558
      %5574 = vst [vmem:[#allocation9 + $0x28] sm:$0xff] %v5559
      %5575 = vst [vmem:[#allocation9 + $0x30] sm:$0xff] %v5560
      %5576 = vst [vmem:[#allocation9 + $0x38] sm:$0xff] %v5561
      %5577 = vst [vmem:[#allocation9 + $0x40] sm:$0xff] %v5562
      %5578 = vst [vmem:[#allocation9 + $0x48] sm:$0xff] %v5563
      %5579 = vst [vmem:[#allocation9 + $0x50] sm:$0xff] %v5564
      %5580 = vst [vmem:[#allocation9 + $0x58] sm:$0xff] %v5565
      %5581 = vst [vmem:[#allocation9 + $0x60] sm:$0xff] %v5566
      %5582 = vst [vmem:[#allocation9 + $0x68] sm:$0xff] %v5567
      %5583 = vst [vmem:[#allocation9 + $0x70] sm:$0x1f] %v5568
      %v5584 = vld [vmem:[#allocation9] ss:$2 sm:$0xff]
      %s5585 = scalar_lea.vmem [#allocation9], 16
      %v5586 = vld [vmem:[%s5585] ss:$2 sm:$0xff]
      %s5587 = scalar_lea.vmem [#allocation9], 32
      %v5588 = vld [vmem:[%s5587] ss:$2 sm:$0xff]
      %s5589 = scalar_lea.vmem [#allocation9], 48
      %v5590 = vld [vmem:[%s5589] ss:$2 sm:$0xff]
      %s5591 = scalar_lea.vmem [#allocation9], 64
      %v5592 = vld [vmem:[%s5591] ss:$2 sm:$0xff]
      %s5593 = scalar_lea.vmem [#allocation9], 80
      %v5594 = vld [vmem:[%s5593] ss:$2 sm:$0xff]
      %s5595 = scalar_lea.vmem [#allocation9], 96
      %v5596 = vld [vmem:[%s5595] ss:$2 sm:$0xff]
      %s5597 = scalar_lea.vmem [#allocation9], 112
      %v5598 = vld [vmem:[%s5597] ss:$2 sm:$0x7]
      %v5599 = vmax.f32 %v5584, 0.0
      %v5600 = vmax.f32 %v5586, 0.0
      %v5601 = vmax.f32 %v5588, 0.0
      %v5602 = vmax.f32 %v5590, 0.0
      %v5603 = vmax.f32 %v5592, 0.0
      %v5604 = vmax.f32 %v5594, 0.0
      %v5605 = vmax.f32 %v5596, 0.0
      %v5606 = vmax.f32 %v5598, 0.0
      %5607 = vst [vmem:[%s278] sm:$0xff] %v5599
      %5608 = vst [vmem:[%s278 + $0x8] sm:$0xff] %v5600
      %5609 = vst [vmem:[%s278 + $0x10] sm:$0xff] %v5601
      %5610 = vst [vmem:[%s278 + $0x18] sm:$0xff] %v5602
      %5611 = vst [vmem:[%s278 + $0x20] sm:$0xff] %v5603
      %5612 = vst [vmem:[%s278 + $0x28] sm:$0xff] %v5604
      %5613 = vst [vmem:[%s278 + $0x30] sm:$0xff] %v5605
      %5614 = vst [vmem:[%s278 + $0x38] sm:$0x7] %v5606
      %p5615 = scmp.lt.s32.totalorder %s18, 1
      %s5616 = scalar_select %p5615, %s18, 1
      %s5617 = smul.addr %s5616, 8
      %s5618 = smul.addr %s5617, 8
      %s5619 = scalar_lea.vmem %s7, %s5618
      // Predicated region
      $region49: #{pixelnet_forward.2} parent=47 // pred_check
        %p5620 = pneg %p188
      $region50: #{pixelnet_forward.2} parent=47 // pred_check_branch
        %5622 = sbr.rel (%p5620) target = $region52
      $region51: #{pixelnet_forward.2} parent=47 // pred_region
        _
      $region52: #{pixelnet_forward.2} parent=47 // pred_fallthru
        _
    $region48: #{pixelnet_forward.2} parent=5 // pred_fallthru
      _
    %p5623 = scmp.le.s32.totalorder 2, %s13
    // Predicated region
    $region53: #{pixelnet_forward.2} parent=5 // pred_check
      %p5624 = pneg %p5623
    $region54: #{pixelnet_forward.2} parent=5 // pred_check_branch
      %5626 = sbr.rel (%p5624) target = $region56
    $region55: #{pixelnet_forward.2} parent=5 // pred_region
      %s5627 = ssub.s32 %s13, 2
      // Predicated region
      $region57: #{pixelnet_forward.2} parent=55 // pred_check
        %p5628 = pneg %p194
      $region58: #{pixelnet_forward.2} parent=55 // pred_check_branch
        %5630 = sbr.rel (%p5628) target = $region60
      $region59: #{pixelnet_forward.2} parent=55 // pred_region
        %p5631 = scmp.lt.s32.totalorder %s19, 1
        %s5632 = scalar_select %p5631, %s19, 1
        %s5633 = smul.addr %s5632, 8
        %s5634 = smul.addr %s5633, 8
        %s5635 = scalar_lea.vmem %s7, %s5634
      $region60: #{pixelnet_forward.2} parent=55 // pred_fallthru
        _
    $region56: #{pixelnet_forward.2} parent=5 // pred_fallthru
      _
  $region6: #{pixelnet_forward.2} parent=0 // loop_footer
    %s17 = sadd.s32 1, %s13
  $region7: #{pixelnet_forward.2} parent=0 // loop_footer_branch
    %12 = sbr.rel target = $region3
  $region8: #{pixelnet_forward.2} parent=0 // loop_exit
    _

</llo_original>
